<compile_context>
chip_gen: v6e
topology: v6e:2x2x1
jax: 0.10.0
libtpu: 0.0.40
codegen_flags: <defaults>
</compile_context>

<pallas_src>
import functools
import math

import jax
import jax.numpy as jnp
from jax.experimental import pallas as pl
from jax.experimental.pallas import tpu as pltpu


# ----------------------------------------------------------------------------
# In-kernel helpers (operate on values, not refs)
# ----------------------------------------------------------------------------

def _recip(x):
    # EUP reciprocal (near-free slot); fall back to a VALU divide on older jax.
    if hasattr(pl, "reciprocal"):
        return pl.reciprocal(x, approx=True)
    return 1.0 / x


def _layernorm(x, g, b, eps=1e-5):
    mu = jnp.mean(x, axis=-1, keepdims=True)
    var = jnp.mean((x - mu) ** 2, axis=-1, keepdims=True)
    return (x - mu) * jax.lax.rsqrt(var + eps) * g + b


def _attention(q, k, v, bias, num_heads):
    """Multi-head attention on [S, D] slabs using lane head-masks.

    Avoids any [S,H,Dh] reshape/transpose: head h is selected by multiplying
    q/k/v with a 0/1 lane mask, keeping every matmul full-width (MXU friendly)
    and every intermediate in vregs.  Returns the concatenated context [S, D].
    """
    S, D = q.shape
    Dh = D // num_heads
    scale = 1.0 / math.sqrt(Dh)
    lane = jax.lax.broadcasted_iota(jnp.int32, (1, D), 1)
    ctx = jnp.zeros((S, D), jnp.float32)
    for h in range(num_heads):  # static unroll (num_heads=4)
        hmask = jnp.logical_and(lane >= h * Dh, lane < (h + 1) * Dh)
        hmask = hmask.astype(jnp.float32)
        qh = q * hmask
        kh = k * hmask
        logits = jax.lax.dot_general(
            qh, kh, (((1,), (1,)), ((), ())),
            preferred_element_type=jnp.float32) * scale
        logits = logits + bias                      # additive key-padding bias
        logits = logits - jnp.max(logits, axis=-1, keepdims=True)
        p = jnp.exp(logits)
        p = p * _recip(jnp.sum(p, axis=-1, keepdims=True))
        ctx = ctx + jnp.dot(p, v * hmask, preferred_element_type=jnp.float32)
    return ctx


# ----------------------------------------------------------------------------
# Fused kernels
# ----------------------------------------------------------------------------

def _input_proj_kernel(x_ref, w_ref, b_ref, o_ref):
    y = jnp.dot(x_ref[...], w_ref[...],
                preferred_element_type=jnp.float32) + b_ref[...]
    o_ref[...] = y.astype(o_ref.dtype)


def _encoder_layer_kernel(x_ref, bias_ref,
                          ln1_g, ln1_b, wqkv, bqkv, wo, bo,
                          ln2_g, ln2_b, w1, b1, w2, b2,
                          o_ref, *, num_heads):
    # One full pre-norm transformer encoder layer, fused.
    x = x_ref[...].astype(jnp.float32)                       # [S, D]
    D = x.shape[-1]
    xn = _layernorm(x, ln1_g[...], ln1_b[...])
    qkv = jnp.dot(xn, wqkv[...],
                  preferred_element_type=jnp.float32) + bqkv[...]   # [S, 3D]
    q, k, v = qkv[:, :D], qkv[:, D:2 * D], qkv[:, 2 * D:]
    ctx = _attention(q, k, v, bias_ref[...], num_heads)
    attn = jnp.dot(ctx, wo[...], preferred_element_type=jnp.float32) + bo[...]
    h1 = x + attn
    hn = _layernorm(h1, ln2_g[...], ln2_b[...])
    m = jnp.maximum(jnp.dot(hn, w1[...],
                            preferred_element_type=jnp.float32) + b1[...], 0.0)
    m = jnp.dot(m, w2[...], preferred_element_type=jnp.float32) + b2[...]
    o_ref[...] = (h1 + m).astype(o_ref.dtype)


def _cross_layer_kernel(q_ref, kv_ref, bias_ref,
                        lnq_g, lnq_b, lnkv_g, lnkv_b,
                        wq, bq, wkv, bkv, wo, bo,
                        ln2_g, ln2_b, w1, b1, w2, b2,
                        o_ref, *, num_heads):
    # TODO(synk): CrossAttention source not provided; implemented as one
    # pre-norm cross-attention layer (+ MLP), keys masked by kv-modality mask.
    xq = q_ref[...].astype(jnp.float32)                      # [S, D]
    xkv = kv_ref[...].astype(jnp.float32)
    D = xq.shape[-1]
    qn = _layernorm(xq, lnq_g[...], lnq_b[...])
    kvn = _layernorm(xkv, lnkv_g[...], lnkv_b[...])
    q = jnp.dot(qn, wq[...], preferred_element_type=jnp.float32) + bq[...]
    kv = jnp.dot(kvn, wkv[...], preferred_element_type=jnp.float32) + bkv[...]
    k, v = kv[:, :D], kv[:, D:]
    ctx = _attention(q, k, v, bias_ref[...], num_heads)
    attn = jnp.dot(ctx, wo[...], preferred_element_type=jnp.float32) + bo[...]
    h1 = xq + attn
    hn = _layernorm(h1, ln2_g[...], ln2_b[...])
    m = jnp.maximum(jnp.dot(hn, w1[...],
                            preferred_element_type=jnp.float32) + b1[...], 0.0)
    m = jnp.dot(m, w2[...], preferred_element_type=jnp.float32) + b2[...]
    o_ref[...] = (h1 + m).astype(o_ref.dtype)


def _tail_kernel(x_ref, mask_ref,
                 wh3, bh3, wp1, bp1, wh, bh, wd1, bd1, wd2, bd2,
                 heads_ref, out_ref, rec_ref):
    # Fused: per-modality heads (block-diag) + mask-zeroing + proj1(+ReLU) +
    # residual + fusion head + 2-layer autoencoder decoder.
    x = x_ref[...].astype(jnp.float32)                       # [S, 3*D_e]
    heads_ref[...] = (jnp.dot(x, wh3[...], preferred_element_type=jnp.float32)
                      + bh3[...]).astype(heads_ref.dtype)
    xj = x * mask_ref[...]                                   # x[attn_mask==0]=0
    u = jnp.maximum(jnp.dot(xj, wp1[...],
                            preferred_element_type=jnp.float32) + bp1[...], 0.0)
    hidden = u + xj                                          # dropout = identity
    out_ref[...] = (jnp.dot(hidden, wh[...],
                            preferred_element_type=jnp.float32)
                    + bh[...]).astype(out_ref.dtype)
    r = jnp.maximum(jnp.dot(hidden, wd1[...],
                            preferred_element_type=jnp.float32) + bd1[...], 0.0)
    rec_ref[...] = (jnp.dot(r, wd2[...], preferred_element_type=jnp.float32)
                    + bd2[...]).astype(rec_ref.dtype)


# ----------------------------------------------------------------------------
# pallas_call wrappers
# ----------------------------------------------------------------------------

def _full_spec(shape):
    # Un-tiled (whole-array) block reused at every grid step.
    return pl.BlockSpec(shape, lambda *_: (0,) * len(shape))


def input_projection(feats, w, b):
    B, S, F = feats.shape
    Dout = w.shape[1]
    return pl.pallas_call(
        _input_proj_kernel,
        out_shape=jax.ShapeDtypeStruct((B, S, Dout), jnp.float32),
        grid=(B,),
        in_specs=[pl.BlockSpec((None, S, F), lambda i: (i, 0, 0)),
                  _full_spec((F, Dout)),
                  _full_spec((1, Dout))],
        out_specs=pl.BlockSpec((None, S, Dout), lambda i: (i, 0, 0)),
        compiler_params=pltpu.CompilerParams(
            dimension_semantics=("parallel",)),
    )(feats, w, b)


def encoder_layer(x_all, bias_all, p, num_heads):
    """One shared encoder layer over the (modality*batch)-stacked input."""
    M, S, D = x_all.shape
    H = p['w1'].shape[1]
    return pl.pallas_call(
        functools.partial(_encoder_layer_kernel, num_heads=num_heads),
        out_shape=jax.ShapeDtypeStruct((M, S, D), jnp.float32),
        grid=(M,),
        in_specs=[
            pl.BlockSpec((None, S, D), lambda i: (i, 0, 0)),
            pl.BlockSpec((None, 1, S), lambda i: (i, 0, 0)),
            _full_spec((1, D)), _full_spec((1, D)),
            _full_spec((D, 3 * D)), _full_spec((1, 3 * D)),
            _full_spec((D, D)), _full_spec((1, D)),
            _full_spec((1, D)), _full_spec((1, D)),
            _full_spec((D, H)), _full_spec((1, H)),
            _full_spec((H, D)), _full_spec((1, D)),
        ],
        out_specs=pl.BlockSpec((None, S, D), lambda i: (i, 0, 0)),
        compiler_params=pltpu.CompilerParams(
            dimension_semantics=("parallel",)),
    )(x_all, bias_all,
      p['ln1_g'], p['ln1_b'], p['wqkv'], p['bqkv'], p['wo'], p['bo'],
      p['ln2_g'], p['ln2_b'], p['w1'], p['b1'], p['w2'], p['b2'])


def cross_attention_all(q_stack, kv_stack, bias_stack, p, num_heads):
    """All 6 cross-attention blocks in one call; weights stacked on axis 0."""
    P, B, S, D = q_stack.shape
    H = p['w1'].shape[-1]
    xspec = pl.BlockSpec((None, None, S, D), lambda pi, b: (pi, b, 0, 0))
    bspec = pl.BlockSpec((None, None, 1, S), lambda pi, b: (pi, b, 0, 0))

    def wspec(shape):  # per-pair weight: indexed by the pair grid axis
        return pl.BlockSpec((None,) + shape,
                            lambda pi, b: (pi,) + (0,) * len(shape))

    return pl.pallas_call(
        functools.partial(_cross_layer_kernel, num_heads=num_heads),
        out_shape=jax.ShapeDtypeStruct((P, B, S, D), jnp.float32),
        grid=(P, B),
        in_specs=[
            xspec, xspec, bspec,
            wspec((1, D)), wspec((1, D)), wspec((1, D)), wspec((1, D)),
            wspec((D, D)), wspec((1, D)), wspec((D, 2 * D)), wspec((1, 2 * D)),
            wspec((D, D)), wspec((1, D)),
            wspec((1, D)), wspec((1, D)),
            wspec((D, H)), wspec((1, H)), wspec((H, D)), wspec((1, D)),
        ],
        out_specs=pl.BlockSpec((None, None, S, D),
                               lambda pi, b: (pi, b, 0, 0)),
        compiler_params=pltpu.CompilerParams(
            dimension_semantics=("parallel", "parallel")),
    )(q_stack, kv_stack, bias_stack,
      p['lnq_g'], p['lnq_b'], p['lnkv_g'], p['lnkv_b'],
      p['wq'], p['bq'], p['wkv'], p['bkv'], p['wo'], p['bo'],
      p['ln2_g'], p['ln2_b'], p['w1'], p['b1'], p['w2'], p['b2'])


def fusion_tail(xraw, maskmul, p):
    B, S, D3 = xraw.shape
    nc3 = p['wh3'].shape[1]
    nc = p['wh'].shape[1]
    hid = p['wd1'].shape[1]
    rec_dim = p['wd2'].shape[1]
    xspec = pl.BlockSpec((None, S, D3), lambda i: (i, 0, 0))
    return pl.pallas_call(
        _tail_kernel,
        out_shape=(jax.ShapeDtypeStruct((B, S, nc3), jnp.float32),
                   jax.ShapeDtypeStruct((B, S, nc), jnp.float32),
                   jax.ShapeDtypeStruct((B, S, rec_dim), jnp.float32)),
        grid=(B,),
        in_specs=[xspec, xspec,
                  _full_spec((D3, nc3)), _full_spec((1, nc3)),
                  _full_spec((D3, D3)), _full_spec((1, D3)),
                  _full_spec((D3, nc)), _full_spec((1, nc)),
                  _full_spec((D3, hid)), _full_spec((1, hid)),
                  _full_spec((hid, rec_dim)), _full_spec((1, rec_dim))],
        out_specs=(pl.BlockSpec((None, S, nc3), lambda i: (i, 0, 0)),
                   pl.BlockSpec((None, S, nc), lambda i: (i, 0, 0)),
                   pl.BlockSpec((None, S, rec_dim), lambda i: (i, 0, 0))),
        compiler_params=pltpu.CompilerParams(
            dimension_semantics=("parallel",)),
    )(xraw, maskmul, p['wh3'], p['bh3'], p['wp1'], p['bp1'],
      p['wh'], p['bh'], p['wd1'], p['bd1'], p['wd2'], p['bd2'])


# ----------------------------------------------------------------------------
# MI estimate (tiny reductions; left in plain XLA)
# ----------------------------------------------------------------------------

def mutual_information(a, b, joint):
    # TODO(synk): original mutual_information() not provided; using a
    # Donsker-Varadhan style lower bound with a fixed inner-product critic.
    t_joint = jnp.mean(jnp.sum(a * joint, axis=-1))
    shuffled = jnp.roll(b, shift=1, axis=0)
    n = shuffled.shape[0] * shuffled.shape[1]
    t_marg = jax.nn.logsumexp(jnp.sum(shuffled * joint, axis=-1)) - jnp.log(float(n))
    return t_joint - t_marg


# ----------------------------------------------------------------------------
# Parameter initialization (deterministic, synthetic; fused/stacked layouts)
# ----------------------------------------------------------------------------

def init_teacher_params(key, adim, tdim, vdim, D_e, n_classes, depth, mlp_ratio):
    D = 3 * D_e
    hidden = D_e * mlp_ratio
    ks = jax.random.split(key, 12)

    def lin(k, din, dout, scale=0.02):
        return jax.random.normal(k, (din, dout), jnp.float32) * scale

    p = {}

    # fused (block-diagonal) input projection: one lane-dense 48 -> 3*D_e matmul
    w_in = jnp.zeros((adim + tdim + vdim, D), jnp.float32)
    w_in = w_in.at[:adim, :D_e].set(lin(ks[0], adim, D_e))
    w_in = w_in.at[adim:adim + tdim, D_e:2 * D_e].set(lin(ks[1], tdim, D_e))
    w_in = w_in.at[adim + tdim:, 2 * D_e:].set(lin(ks[2], vdim, D_e))
    p['w_in'] = w_in
    p['b_in'] = jnp.zeros((1, D), jnp.float32)

    # shared transformer block (PyTorch forward uses self.block for a/t/v)
    # TODO(synk): Block source not provided; implemented as `depth` pre-norm
    # transformer encoder layers with key-padding masking per modality slice.
    def layer_params(k):
        kk = jax.random.split(k, 6)
        return dict(
            ln1_g=jnp.ones((1, D_e), jnp.float32),
            ln1_b=jnp.zeros((1, D_e), jnp.float32),
            wqkv=jnp.concatenate([lin(kk[0], D_e, D_e), lin(kk[1], D_e, D_e),
                                  lin(kk[2], D_e, D_e)], axis=1),
            bqkv=jnp.zeros((1, 3 * D_e), jnp.float32),
            wo=lin(kk[3], D_e, D_e), bo=jnp.zeros((1, D_e), jnp.float32),
            ln2_g=jnp.ones((1, D_e), jnp.float32),
            ln2_b=jnp.zeros((1, D_e), jnp.float32),
            w1=lin(kk[4], D_e, hidden), b1=jnp.zeros((1, hidden), jnp.float32),
            w2=lin(kk[5], hidden, D_e), b2=jnp.zeros((1, D_e), jnp.float32),
        )
    p['block'] = [layer_params(k) for k in jax.random.split(ks[3], depth)]

    # six cross-attention blocks, stacked on a leading axis (order matches the
    # PyTorch forward: at, ta, va, av, tv, vt — va/av intentionally crossed,
    # mirroring the source).
    def cross_params(k):
        kk = jax.random.split(k, 6)
        return dict(
            lnq_g=jnp.ones((1, D_e), jnp.float32),
            lnq_b=jnp.zeros((1, D_e), jnp.float32),
            lnkv_g=jnp.ones((1, D_e), jnp.float32),
            lnkv_b=jnp.zeros((1, D_e), jnp.float32),
            wq=lin(kk[0], D_e, D_e), bq=jnp.zeros((1, D_e), jnp.float32),
            wkv=jnp.concatenate([lin(kk[1], D_e, D_e),
                                 lin(kk[2], D_e, D_e)], axis=1),
            bkv=jnp.zeros((1, 2 * D_e), jnp.float32),
            wo=lin(kk[3], D_e, D_e), bo=jnp.zeros((1, D_e), jnp.float32),
            ln2_g=jnp.ones((1, D_e), jnp.float32),
            ln2_b=jnp.zeros((1, D_e), jnp.float32),
            w1=lin(kk[4], D_e, hidden), b1=jnp.zeros((1, hidden), jnp.float32),
            w2=lin(kk[5], hidden, D_e), b2=jnp.zeros((1, D_e), jnp.float32),
        )
    cross_list = [cross_params(k) for k in jax.random.split(ks[4], 6)]
    p['cross'] = jax.tree_util.tree_map(lambda *xs: jnp.stack(xs, axis=0),
                                        *cross_list)

    # fused per-modality heads (block diagonal): [3*D_e, 3*n_classes]
    wh3 = jnp.zeros((D, 3 * n_classes), jnp.float32)
    wh3 = wh3.at[:D_e, :n_classes].set(lin(ks[5], D_e, n_classes))
    wh3 = wh3.at[D_e:2 * D_e, n_classes:2 * n_classes].set(
        lin(ks[6], D_e, n_classes))
    wh3 = wh3.at[2 * D_e:, 2 * n_classes:].set(lin(ks[7], D_e, n_classes))

    p['tail'] = dict(
        wh3=wh3, bh3=jnp.zeros((1, 3 * n_classes), jnp.float32),
        wp1=lin(ks[8], D, D), bp1=jnp.zeros((1, D), jnp.float32),
        wh=lin(ks[9], D, n_classes), bh=jnp.zeros((1, n_classes), jnp.float32),
        wd1=lin(ks[10], D, 1024), bd1=jnp.zeros((1, 1024), jnp.float32),
        wd2=lin(ks[11], 1024, adim + tdim + vdim),
        bd2=jnp.zeros((1, adim + tdim + vdim), jnp.float32),
    )
    return p


# ----------------------------------------------------------------------------
# Forward (eval mode, first_stage=True)
# ----------------------------------------------------------------------------

def teacher_forward(params, inputfeats, input_features_mask, umask,
                    adim, tdim, vdim, num_heads):
    S, B, _ = inputfeats.shape
    D_e = params['block'][0]['wo'].shape[0]
    nc = params['tail']['wh'].shape[1]

    feats = jnp.transpose(inputfeats, (1, 0, 2))                  # [B,S,a+t+v]

    input_mask = jnp.transpose(input_features_mask, (1, 0, 2))    # [B,S,3]
    input_mask = jnp.where(umask[..., None] == 0, 0.0, input_mask)
    attn_mask = jnp.transpose(input_mask, (0, 2, 1)).reshape(B, 3 * S)
    mask_a = attn_mask[:, :S]
    mask_t = attn_mask[:, S:2 * S]
    mask_v = attn_mask[:, 2 * S:]

    # additive key biases, computed once per modality (shared by all kernels)
    def key_bias(m):
        return ((1.0 - m) * (-1e9)).astype(jnp.float32).reshape(B, 1, S)
    bias_a, bias_t, bias_v = key_bias(mask_a), key_bias(mask_t), key_bias(mask_v)

    # 1 launch: fused block-diagonal input projection (lane-dense 3*D_e out)
    proj_cat = input_projection(feats, params['w_in'], params['b_in'])

    # stack the three modalities on the batch axis: shared encoder block runs
    # as a single pallas_call (grid=3*B) per layer.
    x_all = jnp.concatenate([proj_cat[..., :D_e],
                             proj_cat[..., D_e:2 * D_e],
                             proj_cat[..., 2 * D_e:]], axis=0)    # [3B,S,D_e]
    bias_all = jnp.concatenate([bias_a, bias_t, bias_v], axis=0)  # [3B,1,S]

    for layer_p in params['block']:
        x_all = encoder_layer(x_all, bias_all, layer_p, num_heads)

    x_a, x_t, x_v = x_all[:B], x_all[B:2 * B], x_all[2 * B:]
    mi_a, mi_t, mi_v = x_a, x_t, x_v                              # first_stage

    # all six cross-attention blocks in one pallas_call (grid=(6,B)); the
    # query/kv/param/mask ordering mirrors the PyTorch forward.
    q_stack = jnp.stack([mi_a, mi_t, mi_a, mi_v, mi_t, mi_v], axis=0)
    kv_stack = jnp.stack([mi_t, mi_a, mi_v, mi_a, mi_v, mi_t], axis=0)
    bias_stack = jnp.stack([bias_t, bias_a, bias_v, bias_a, bias_v, bias_t],
                           axis=0)
    cross_out = cross_attention_all(q_stack, kv_stack, bias_stack,
                                    params['cross'], num_heads)
    joint_at = cross_out[0] + cross_out[1]
    joint_av = cross_out[2] + cross_out[3]
    joint_tv = cross_out[4] + cross_out[5]

    mi_at = mutual_information(mi_a, mi_t, joint_at)
    mi_av = mutual_information(mi_a, mi_v, joint_av)
    mi_tv = mutual_information(mi_t, mi_v, joint_tv)

    # fused tail: heads + mask-zeroing + proj1 + residual + head + decoder
    xraw = jnp.concatenate([x_a, x_t, x_v], axis=-1)              # [B,S,3D_e]

    def keepmask(m):
        return jnp.broadcast_to((m != 0).astype(jnp.float32)[..., None],
                                (B, S, D_e))
    maskmul = jnp.concatenate([keepmask(mask_a), keepmask(mask_t),
                               keepmask(mask_v)], axis=-1)        # [B,S,3D_e]

    out_heads, out, rec = fusion_tail(xraw, maskmul, params['tail'])
    out_a = out_heads[..., :nc]
    out_t = out_heads[..., nc:2 * nc]
    out_v = out_heads[..., 2 * nc:]
    rec_feats = jnp.transpose(rec, (1, 0, 2))                     # [S,B,a+t+v]

    return {'out': out, 'out_a': out_a, 'out_t': out_t, 'out_v': out_v,
            'rec_feats': rec_feats, 'mi_at': mi_at, 'mi_av': mi_av,
            'mi_tv': mi_tv}


# ----------------------------------------------------------------------------
# Main
# ----------------------------------------------------------------------------

if __name__ == "__main__":
    adim, tdim, vdim = 12, 16, 20
    D_e = 32
    n_classes = 4
    num_heads = 4
    depth = 2
    mlp_ratio = 1
    S, B = 8, 2

    key = jax.random.PRNGKey(0)
    k_param, k_feat = jax.random.split(key)

    params = init_teacher_params(k_param, adim, tdim, vdim, D_e, n_classes,
                                 depth, mlp_ratio)

    inputfeats = jax.random.normal(k_feat, (S, B, adim + tdim + vdim),
                                   jnp.float32)
    input_features_mask = jnp.ones((S, B, 3), jnp.float32)
    umask = jnp.ones((B, S), jnp.int32).at[1, S - 1].set(0)

    fwd = jax.jit(lambda p, f, fm, um: teacher_forward(
        p, f, fm, um, adim, tdim, vdim, num_heads))

    outs = fwd(params, inputfeats, input_features_mask, umask)
    outs = jax.block_until_ready(outs)

    assert outs['out'].shape == (B, S, n_classes)
    assert outs['out_a'].shape == (B, S, n_classes)
    assert outs['out_t'].shape == (B, S, n_classes)
    assert outs['out_v'].shape == (B, S, n_classes)
    assert outs['rec_feats'].shape == (S, B, adim + tdim + vdim)
    for v in jax.tree_util.tree_leaves(outs):
        assert bool(jnp.all(jnp.isfinite(v)))

    print("KERNEL_OK")
</pallas_src>

<mosaic_0001>
module attributes {stable_mosaic.version = 11 : i64} {
  func.func @_input_proj_kernel(%arg0: i32, %arg1: memref<1x8x48xf32, #tpu.memory_space<vmem>>, %arg2: memref<48x96xf32, #tpu.memory_space<vmem>>, %arg3: memref<1x96xf32, #tpu.memory_space<vmem>>, %arg4: memref<1x8x96xf32, #tpu.memory_space<vmem>>) attributes {dimension_semantics = [#tpu.dimension_semantics<parallel>], iteration_bounds = array<i64: 2>, scalar_prefetch = 0 : i64, scratch_operands = 0 : i64, tpu.core_type = #tpu.core_type<tc>, window_params = [{transform_indices = @transform_0, window_bounds = array<i64: 1, 8, 48>}, {pipeline_mode = #tpu.pipeline_mode<synchronous>, transform_indices = @transform_1, window_bounds = array<i64: 48, 96>}, {pipeline_mode = #tpu.pipeline_mode<synchronous>, transform_indices = @transform_2, window_bounds = array<i64: 1, 96>}, {transform_indices = @transform_3, window_bounds = array<i64: 1, 8, 96>}]} {
    %c0 = arith.constant 0 : index
    %c0_0 = arith.constant 0 : index
    %c0_1 = arith.constant 0 : index
    %0 = vector.load %arg1[%c0, %c0_0, %c0_1] : memref<1x8x48xf32, #tpu.memory_space<vmem>>, vector<1x8x48xf32>
    %1 = vector.shape_cast %0 : vector<1x8x48xf32> to vector<8x48xf32>
    %c0_2 = arith.constant 0 : index
    %c0_3 = arith.constant 0 : index
    %2 = vector.load %arg2[%c0_2, %c0_3] : memref<48x96xf32, #tpu.memory_space<vmem>>, vector<48x96xf32>
    %cst = arith.constant dense<0.000000e+00> : vector<8x96xf32>
    %3 = tpu.matmul %1, %2, %cst {dimension_numbers = #tpu.dot_dimension_numbers<[1], [0], [0], [1], [0, 0, 1, 1], [], []>} : vector<8x48xf32>, vector<48x96xf32>, vector<8x96xf32> -> vector<8x96xf32>
    %c0_4 = arith.constant 0 : index
    %c0_5 = arith.constant 0 : index
    %4 = vector.load %arg3[%c0_4, %c0_5] : memref<1x96xf32, #tpu.memory_space<vmem>>, vector<1x96xf32>
    %5 = vector.broadcast %4 : vector<1x96xf32> to vector<8x96xf32>
    %6 = arith.addf %3, %5 : vector<8x96xf32>
    %c0_6 = arith.constant 0 : index
    %c0_7 = arith.constant 0 : index
    %c0_8 = arith.constant 0 : index
    %7 = vector.load %arg4[%c0_6, %c0_7, %c0_8] : memref<1x8x96xf32, #tpu.memory_space<vmem>>, vector<1x8x96xf32>
    %8 = vector.shape_cast %7 : vector<1x8x96xf32> to vector<8x96xf32>
    %9 = vector.shape_cast %6 : vector<8x96xf32> to vector<1x8x96xf32>
    tpu.vector_store %arg4[%c0_6, %c0_7, %c0_8], %9 {strides = array<i32>} : memref<1x8x96xf32, #tpu.memory_space<vmem>>, vector<1x8x96xf32>,
    return
  }
  func.func @transform_0(%arg0: i32) -> (i32, i32, i32) {
    %c0_i32 = arith.constant 0 : i32
    %c0_i32_0 = arith.constant 0 : i32
    %c0_i32_1 = arith.constant 0 : i32
    return %arg0, %c0_i32, %c0_i32_0 : i32, i32, i32
  }
  func.func @transform_1(%arg0: i32) -> (i32, i32) {
    %c0_i32 = arith.constant 0 : i32
    %c0_i32_0 = arith.constant 0 : i32
    %c0_i32_1 = arith.constant 0 : i32
    return %c0_i32, %c0_i32_0 : i32, i32
  }
  func.func @transform_2(%arg0: i32) -> (i32, i32) {
    %c0_i32 = arith.constant 0 : i32
    %c0_i32_0 = arith.constant 0 : i32
    %c0_i32_1 = arith.constant 0 : i32
    return %c0_i32, %c0_i32_0 : i32, i32
  }
  func.func @transform_3(%arg0: i32) -> (i32, i32, i32) {
    %c0_i32 = arith.constant 0 : i32
    %c0_i32_0 = arith.constant 0 : i32
    %c0_i32_1 = arith.constant 0 : i32
    return %arg0, %c0_i32, %c0_i32_0 : i32, i32, i32
  }
}

module attributes {stable_mosaic.version = 11 : i64} {
  func.func @_encoder_layer_kernel(%arg0: i32, %arg1: memref<1x8x32xf32, #tpu.memory_space<vmem>>, %arg2: memref<1x1x8xf32, #tpu.memory_space<vmem>>, %arg3: memref<1x32xf32, #tpu.memory_space<vmem>>, %arg4: memref<1x32xf32, #tpu.memory_space<vmem>>, %arg5: memref<32x96xf32, #tpu.memory_space<vmem>>, %arg6: memref<1x96xf32, #tpu.memory_space<vmem>>, %arg7: memref<32x32xf32, #tpu.memory_space<vmem>>, %arg8: memref<1x32xf32, #tpu.memory_space<vmem>>, %arg9: memref<1x32xf32, #tpu.memory_space<vmem>>, %arg10: memref<1x32xf32, #tpu.memory_space<vmem>>, %arg11: memref<32x32xf32, #tpu.memory_space<vmem>>, %arg12: memref<1x32xf32, #tpu.memory_space<vmem>>, %arg13: memref<32x32xf32, #tpu.memory_space<vmem>>, %arg14: memref<1x32xf32, #tpu.memory_space<vmem>>, %arg15: memref<1x8x32xf32, #tpu.memory_space<vmem>>) attributes {dimension_semantics = [#tpu.dimension_semantics<parallel>], iteration_bounds = array<i64: 6>, scalar_prefetch = 0 : i64, scratch_operands = 0 : i64, tpu.core_type = #tpu.core_type<tc>, window_params = [{transform_indices = @transform_0, window_bounds = array<i64: 1, 8, 32>}, {transform_indices = @transform_1, window_bounds = array<i64: 1, 1, 8>}, {pipeline_mode = #tpu.pipeline_mode<synchronous>, transform_indices = @transform_2, window_bounds = array<i64: 1, 32>}, {pipeline_mode = #tpu.pipeline_mode<synchronous>, transform_indices = @transform_3, window_bounds = array<i64: 1, 32>}, {pipeline_mode = #tpu.pipeline_mode<synchronous>, transform_indices = @transform_4, window_bounds = array<i64: 32, 96>}, {pipeline_mode = #tpu.pipeline_mode<synchronous>, transform_indices = @transform_5, window_bounds = array<i64: 1, 96>}, {pipeline_mode = #tpu.pipeline_mode<synchronous>, transform_indices = @transform_6, window_bounds = array<i64: 32, 32>}, {pipeline_mode = #tpu.pipeline_mode<synchronous>, transform_indices = @transform_7, window_bounds = array<i64: 1, 32>}, {pipeline_mode = #tpu.pipeline_mode<synchronous>, transform_indices = @transform_8, window_bounds = array<i64: 1, 32>}, {pipeline_mode = #tpu.pipeline_mode<synchronous>, transform_indices = @transform_9, window_bounds = array<i64: 1, 32>}, {pipeline_mode = #tpu.pipeline_mode<synchronous>, transform_indices = @transform_10, window_bounds = array<i64: 32, 32>}, {pipeline_mode = #tpu.pipeline_mode<synchronous>, transform_indices = @transform_11, window_bounds = array<i64: 1, 32>}, {pipeline_mode = #tpu.pipeline_mode<synchronous>, transform_indices = @transform_12, window_bounds = array<i64: 32, 32>}, {pipeline_mode = #tpu.pipeline_mode<synchronous>, transform_indices = @transform_13, window_bounds = array<i64: 1, 32>}, {transform_indices = @transform_14, window_bounds = array<i64: 1, 8, 32>}]} {
    %c0 = arith.constant 0 : index
    %c0_0 = arith.constant 0 : index
    %c0_1 = arith.constant 0 : index
    %0 = vector.load %arg1[%c0, %c0_0, %c0_1] : memref<1x8x32xf32, #tpu.memory_space<vmem>>, vector<1x8x32xf32>
    %1 = vector.shape_cast %0 : vector<1x8x32xf32> to vector<8x32xf32>
    %c0_2 = arith.constant 0 : index
    %c0_3 = arith.constant 0 : index
    %2 = vector.load %arg3[%c0_2, %c0_3] : memref<1x32xf32, #tpu.memory_space<vmem>>, vector<1x32xf32>
    %c0_4 = arith.constant 0 : index
    %c0_5 = arith.constant 0 : index
    %3 = vector.load %arg4[%c0_4, %c0_5] : memref<1x32xf32, #tpu.memory_space<vmem>>, vector<1x32xf32>
    %cst = arith.constant dense<0.000000e+00> : vector<8xf32>
    %4 = vector.multi_reduction <add>, %1, %cst [1] : vector<8x32xf32> to vector<8xf32>
    %5 = vector.shape_cast %4 : vector<8xf32> to vector<8x1xf32>
    %cst_6 = arith.constant 3.200000e+01 : f32
    %6 = vector.broadcast %cst_6 : f32 to vector<8x1xf32>
    %7 = arith.divf %5, %6 : vector<8x1xf32>
    %8 = vector.broadcast %7 : vector<8x1xf32> to vector<8x32xf32>
    %9 = arith.subf %1, %8 : vector<8x32xf32>
    %10 = arith.mulf %9, %9 : vector<8x32xf32>
    %cst_7 = arith.constant dense<0.000000e+00> : vector<8xf32>
    %11 = vector.multi_reduction <add>, %10, %cst_7 [1] : vector<8x32xf32> to vector<8xf32>
    %12 = vector.shape_cast %11 : vector<8xf32> to vector<8x1xf32>
    %cst_8 = arith.constant 3.200000e+01 : f32
    %13 = vector.broadcast %cst_8 : f32 to vector<8x1xf32>
    %14 = arith.divf %12, %13 : vector<8x1xf32>
    %15 = vector.broadcast %7 : vector<8x1xf32> to vector<8x32xf32>
    %16 = arith.subf %1, %15 : vector<8x32xf32>
    %cst_9 = arith.constant 9.99999974E-6 : f32
    %17 = vector.broadcast %cst_9 : f32 to vector<8x1xf32>
    %18 = arith.addf %14, %17 : vector<8x1xf32>
    %19 = math.rsqrt %18 : vector<8x1xf32>
    %20 = vector.broadcast %19 : vector<8x1xf32> to vector<8x32xf32>
    %21 = arith.mulf %16, %20 : vector<8x32xf32>
    %22 = vector.broadcast %2 : vector<1x32xf32> to vector<8x32xf32>
    %23 = arith.mulf %21, %22 : vector<8x32xf32>
    %24 = vector.broadcast %3 : vector<1x32xf32> to vector<8x32xf32>
    %25 = arith.addf %23, %24 : vector<8x32xf32>
    %c0_10 = arith.constant 0 : index
    %c0_11 = arith.constant 0 : index
    %26 = vector.load %arg5[%c0_10, %c0_11] : memref<32x96xf32, #tpu.memory_space<vmem>>, vector<32x96xf32>
    %cst_12 = arith.constant dense<0.000000e+00> : vector<8x96xf32>
    %27 = tpu.matmul %25, %26, %cst_12 {dimension_numbers = #tpu.dot_dimension_numbers<[1], [0], [0], [1], [0, 0, 1, 1], [], []>} : vector<8x32xf32>, vector<32x96xf32>, vector<8x96xf32> -> vector<8x96xf32>
    %c0_13 = arith.constant 0 : index
    %c0_14 = arith.constant 0 : index
    %28 = vector.load %arg6[%c0_13, %c0_14] : memref<1x96xf32, #tpu.memory_space<vmem>>, vector<1x96xf32>
    %29 = vector.broadcast %28 : vector<1x96xf32> to vector<8x96xf32>
    %30 = arith.addf %27, %29 : vector<8x96xf32>
    %31 = vector.extract_strided_slice %30 {offsets = [0, 0], sizes = [8, 32], strides = [1, 1]} : vector<8x96xf32> to vector<8x32xf32>
    %32 = vector.extract_strided_slice %30 {offsets = [0, 32], sizes = [8, 32], strides = [1, 1]} : vector<8x96xf32> to vector<8x32xf32>
    %33 = vector.extract_strided_slice %30 {offsets = [0, 64], sizes = [8, 32], strides = [1, 1]} : vector<8x96xf32> to vector<8x32xf32>
    %c0_15 = arith.constant 0 : index
    %c0_16 = arith.constant 0 : index
    %c0_17 = arith.constant 0 : index
    %34 = vector.load %arg2[%c0_15, %c0_16, %c0_17] : memref<1x1x8xf32, #tpu.memory_space<vmem>>, vector<1x1x8xf32>
    %35 = vector.shape_cast %34 : vector<1x1x8xf32> to vector<1x8xf32>
    %36 = tpu.iota {dimensions = array<i32: 1>} : vector<1x32xi32>
    %cst_18 = arith.constant 0.000000e+00 : f32
    %37 = vector.broadcast %cst_18 : f32 to vector<8x32xf32>
    %c0_i32 = arith.constant 0 : i32
    %38 = vector.broadcast %c0_i32 : i32 to vector<1x32xi32>
    %39 = arith.cmpi sge, %36, %38 : vector<1x32xi32>
    %c8_i32 = arith.constant 8 : i32
    %40 = vector.broadcast %c8_i32 : i32 to vector<1x32xi32>
    %41 = arith.cmpi slt, %36, %40 : vector<1x32xi32>
    %42 = arith.andi %39, %41 : vector<1x32xi1>
    %43 = arith.extui %42 : vector<1x32xi1> to vector<1x32xi32>
    %44 = arith.sitofp %43 : vector<1x32xi32> to vector<1x32xf32>
    %45 = vector.broadcast %44 : vector<1x32xf32> to vector<8x32xf32>
    %46 = arith.mulf %31, %45 : vector<8x32xf32>
    %47 = vector.broadcast %44 : vector<1x32xf32> to vector<8x32xf32>
    %48 = arith.mulf %32, %47 : vector<8x32xf32>
    %cst_19 = arith.constant dense<0.000000e+00> : vector<8x8xf32>
    %49 = tpu.matmul %46, %48, %cst_19 {dimension_numbers = #tpu.dot_dimension_numbers<[1], [1], [0], [0], [0, 0, 1, 0], [], []>} : vector<8x32xf32>, vector<8x32xf32>, vector<8x8xf32> -> vector<8x8xf32>
    %cst_20 = arith.constant 0.353553385 : f32
    %50 = vector.broadcast %cst_20 : f32 to vector<8x8xf32>
    %51 = arith.mulf %49, %50 : vector<8x8xf32>
    %52 = vector.broadcast %35 : vector<1x8xf32> to vector<8x8xf32>
    %53 = arith.addf %51, %52 : vector<8x8xf32>
    %cst_21 = arith.constant dense<0xFF800000> : vector<8xf32>
    %54 = vector.multi_reduction <maximumf>, %53, %cst_21 [1] : vector<8x8xf32> to vector<8xf32>
    %55 = vector.shape_cast %54 : vector<8xf32> to vector<8x1xf32>
    %56 = vector.broadcast %55 : vector<8x1xf32> to vector<8x8xf32>
    %57 = arith.subf %53, %56 : vector<8x8xf32>
    %58 = math.exp %57 : vector<8x8xf32>
    %cst_22 = arith.constant dense<0.000000e+00> : vector<8xf32>
    %59 = vector.multi_reduction <add>, %58, %cst_22 [1] : vector<8x8xf32> to vector<8xf32>
    %60 = vector.shape_cast %59 : vector<8xf32> to vector<8x1xf32>
    %61 = tpu.reciprocal %60 {approx = true} : vector<8x1xf32> -> vector<8x1xf32>
    %62 = vector.broadcast %61 : vector<8x1xf32> to vector<8x8xf32>
    %63 = arith.mulf %58, %62 : vector<8x8xf32>
    %64 = vector.broadcast %44 : vector<1x32xf32> to vector<8x32xf32>
    %65 = arith.mulf %33, %64 : vector<8x32xf32>
    %cst_23 = arith.constant dense<0.000000e+00> : vector<8x32xf32>
    %66 = tpu.matmul %63, %65, %cst_23 {dimension_numbers = #tpu.dot_dimension_numbers<[1], [0], [0], [1], [0, 0, 1, 1], [], []>} : vector<8x8xf32>, vector<8x32xf32>, vector<8x32xf32> -> vector<8x32xf32>
    %67 = arith.addf %37, %66 : vector<8x32xf32>
    %c8_i32_24 = arith.constant 8 : i32
    %68 = vector.broadcast %c8_i32_24 : i32 to vector<1x32xi32>
    %69 = arith.cmpi sge, %36, %68 : vector<1x32xi32>
    %c16_i32 = arith.constant 16 : i32
    %70 = vector.broadcast %c16_i32 : i32 to vector<1x32xi32>
    %71 = arith.cmpi slt, %36, %70 : vector<1x32xi32>
    %72 = arith.andi %69, %71 : vector<1x32xi1>
    %73 = arith.extui %72 : vector<1x32xi1> to vector<1x32xi32>
    %74 = arith.sitofp %73 : vector<1x32xi32> to vector<1x32xf32>
    %75 = vector.broadcast %74 : vector<1x32xf32> to vector<8x32xf32>
    %76 = arith.mulf %31, %75 : vector<8x32xf32>
    %77 = vector.broadcast %74 : vector<1x32xf32> to vector<8x32xf32>
    %78 = arith.mulf %32, %77 : vector<8x32xf32>
    %cst_25 = arith.constant dense<0.000000e+00> : vector<8x8xf32>
    %79 = tpu.matmul %76, %78, %cst_25 {dimension_numbers = #tpu.dot_dimension_numbers<[1], [1], [0], [0], [0, 0, 1, 0], [], []>} : vector<8x32xf32>, vector<8x32xf32>, vector<8x8xf32> -> vector<8x8xf32>
    %cst_26 = arith.constant 0.353553385 : f32
    %80 = vector.broadcast %cst_26 : f32 to vector<8x8xf32>
    %81 = arith.mulf %79, %80 : vector<8x8xf32>
    %82 = vector.broadcast %35 : vector<1x8xf32> to vector<8x8xf32>
    %83 = arith.addf %81, %82 : vector<8x8xf32>
    %cst_27 = arith.constant dense<0xFF800000> : vector<8xf32>
    %84 = vector.multi_reduction <maximumf>, %83, %cst_27 [1] : vector<8x8xf32> to vector<8xf32>
    %85 = vector.shape_cast %84 : vector<8xf32> to vector<8x1xf32>
    %86 = vector.broadcast %85 : vector<8x1xf32> to vector<8x8xf32>
    %87 = arith.subf %83, %86 : vector<8x8xf32>
    %88 = math.exp %87 : vector<8x8xf32>
    %cst_28 = arith.constant dense<0.000000e+00> : vector<8xf32>
    %89 = vector.multi_reduction <add>, %88, %cst_28 [1] : vector<8x8xf32> to vector<8xf32>
    %90 = vector.shape_cast %89 : vector<8xf32> to vector<8x1xf32>
    %91 = tpu.reciprocal %90 {approx = true} : vector<8x1xf32> -> vector<8x1xf32>
    %92 = vector.broadcast %91 : vector<8x1xf32> to vector<8x8xf32>
    %93 = arith.mulf %88, %92 : vector<8x8xf32>
    %94 = vector.broadcast %74 : vector<1x32xf32> to vector<8x32xf32>
    %95 = arith.mulf %33, %94 : vector<8x32xf32>
    %cst_29 = arith.constant dense<0.000000e+00> : vector<8x32xf32>
    %96 = tpu.matmul %93, %95, %cst_29 {dimension_numbers = #tpu.dot_dimension_numbers<[1], [0], [0], [1], [0, 0, 1, 1], [], []>} : vector<8x8xf32>, vector<8x32xf32>, vector<8x32xf32> -> vector<8x32xf32>
    %97 = arith.addf %67, %96 : vector<8x32xf32>
    %c16_i32_30 = arith.constant 16 : i32
    %98 = vector.broadcast %c16_i32_30 : i32 to vector<1x32xi32>
    %99 = arith.cmpi sge, %36, %98 : vector<1x32xi32>
    %c24_i32 = arith.constant 24 : i32
    %100 = vector.broadcast %c24_i32 : i32 to vector<1x32xi32>
    %101 = arith.cmpi slt, %36, %100 : vector<1x32xi32>
    %102 = arith.andi %99, %101 : vector<1x32xi1>
    %103 = arith.extui %102 : vector<1x32xi1> to vector<1x32xi32>
    %104 = arith.sitofp %103 : vector<1x32xi32> to vector<1x32xf32>
    %105 = vector.broadcast %104 : vector<1x32xf32> to vector<8x32xf32>
    %106 = arith.mulf %31, %105 : vector<8x32xf32>
    %107 = vector.broadcast %104 : vector<1x32xf32> to vector<8x32xf32>
    %108 = arith.mulf %32, %107 : vector<8x32xf32>
    %cst_31 = arith.constant dense<0.000000e+00> : vector<8x8xf32>
    %109 = tpu.matmul %106, %108, %cst_31 {dimension_numbers = #tpu.dot_dimension_numbers<[1], [1], [0], [0], [0, 0, 1, 0], [], []>} : vector<8x32xf32>, vector<8x32xf32>, vector<8x8xf32> -> vector<8x8xf32>
    %cst_32 = arith.constant 0.353553385 : f32
    %110 = vector.broadcast %cst_32 : f32 to vector<8x8xf32>
    %111 = arith.mulf %109, %110 : vector<8x8xf32>
    %112 = vector.broadcast %35 : vector<1x8xf32> to vector<8x8xf32>
    %113 = arith.addf %111, %112 : vector<8x8xf32>
    %cst_33 = arith.constant dense<0xFF800000> : vector<8xf32>
    %114 = vector.multi_reduction <maximumf>, %113, %cst_33 [1] : vector<8x8xf32> to vector<8xf32>
    %115 = vector.shape_cast %114 : vector<8xf32> to vector<8x1xf32>
    %116 = vector.broadcast %115 : vector<8x1xf32> to vector<8x8xf32>
    %117 = arith.subf %113, %116 : vector<8x8xf32>
    %118 = math.exp %117 : vector<8x8xf32>
    %cst_34 = arith.constant dense<0.000000e+00> : vector<8xf32>
    %119 = vector.multi_reduction <add>, %118, %cst_34 [1] : vector<8x8xf32> to vector<8xf32>
    %120 = vector.shape_cast %119 : vector<8xf32> to vector<8x1xf32>
    %121 = tpu.reciprocal %120 {approx = true} : vector<8x1xf32> -> vector<8x1xf32>
    %122 = vector.broadcast %121 : vector<8x1xf32> to vector<8x8xf32>
    %123 = arith.mulf %118, %122 : vector<8x8xf32>
    %124 = vector.broadcast %104 : vector<1x32xf32> to vector<8x32xf32>
    %125 = arith.mulf %33, %124 : vector<8x32xf32>
    %cst_35 = arith.constant dense<0.000000e+00> : vector<8x32xf32>
    %126 = tpu.matmul %123, %125, %cst_35 {dimension_numbers = #tpu.dot_dimension_numbers<[1], [0], [0], [1], [0, 0, 1, 1], [], []>} : vector<8x8xf32>, vector<8x32xf32>, vector<8x32xf32> -> vector<8x32xf32>
    %127 = arith.addf %97, %126 : vector<8x32xf32>
    %c24_i32_36 = arith.constant 24 : i32
    %128 = vector.broadcast %c24_i32_36 : i32 to vector<1x32xi32>
    %129 = arith.cmpi sge, %36, %128 : vector<1x32xi32>
    %c32_i32 = arith.constant 32 : i32
    %130 = vector.broadcast %c32_i32 : i32 to vector<1x32xi32>
    %131 = arith.cmpi slt, %36, %130 : vector<1x32xi32>
    %132 = arith.andi %129, %131 : vector<1x32xi1>
    %133 = arith.extui %132 : vector<1x32xi1> to vector<1x32xi32>
    %134 = arith.sitofp %133 : vector<1x32xi32> to vector<1x32xf32>
    %135 = vector.broadcast %134 : vector<1x32xf32> to vector<8x32xf32>
    %136 = arith.mulf %31, %135 : vector<8x32xf32>
    %137 = vector.broadcast %134 : vector<1x32xf32> to vector<8x32xf32>
    %138 = arith.mulf %32, %137 : vector<8x32xf32>
    %cst_37 = arith.constant dense<0.000000e+00> : vector<8x8xf32>
    %139 = tpu.matmul %136, %138, %cst_37 {dimension_numbers = #tpu.dot_dimension_numbers<[1], [1], [0], [0], [0, 0, 1, 0], [], []>} : vector<8x32xf32>, vector<8x32xf32>, vector<8x8xf32> -> vector<8x8xf32>
    %cst_38 = arith.constant 0.353553385 : f32
    %140 = vector.broadcast %cst_38 : f32 to vector<8x8xf32>
    %141 = arith.mulf %139, %140 : vector<8x8xf32>
    %142 = vector.broadcast %35 : vector<1x8xf32> to vector<8x8xf32>
    %143 = arith.addf %141, %142 : vector<8x8xf32>
    %cst_39 = arith.constant dense<0xFF800000> : vector<8xf32>
    %144 = vector.multi_reduction <maximumf>, %143, %cst_39 [1] : vector<8x8xf32> to vector<8xf32>
    %145 = vector.shape_cast %144 : vector<8xf32> to vector<8x1xf32>
    %146 = vector.broadcast %145 : vector<8x1xf32> to vector<8x8xf32>
    %147 = arith.subf %143, %146 : vector<8x8xf32>
    %148 = math.exp %147 : vector<8x8xf32>
    %cst_40 = arith.constant dense<0.000000e+00> : vector<8xf32>
    %149 = vector.multi_reduction <add>, %148, %cst_40 [1] : vector<8x8xf32> to vector<8xf32>
    %150 = vector.shape_cast %149 : vector<8xf32> to vector<8x1xf32>
    %151 = tpu.reciprocal %150 {approx = true} : vector<8x1xf32> -> vector<8x1xf32>
    %152 = vector.broadcast %151 : vector<8x1xf32> to vector<8x8xf32>
    %153 = arith.mulf %148, %152 : vector<8x8xf32>
    %154 = vector.broadcast %134 : vector<1x32xf32> to vector<8x32xf32>
    %155 = arith.mulf %33, %154 : vector<8x32xf32>
    %cst_41 = arith.constant dense<0.000000e+00> : vector<8x32xf32>
    %156 = tpu.matmul %153, %155, %cst_41 {dimension_numbers = #tpu.dot_dimension_numbers<[1], [0], [0], [1], [0, 0, 1, 1], [], []>} : vector<8x8xf32>, vector<8x32xf32>, vector<8x32xf32> -> vector<8x32xf32>
    %157 = arith.addf %127, %156 : vector<8x32xf32>
    %c0_42 = arith.constant 0 : index
    %c0_43 = arith.constant 0 : index
    %158 = vector.load %arg7[%c0_42, %c0_43] : memref<32x32xf32, #tpu.memory_space<vmem>>, vector<32x32xf32>
    %cst_44 = arith.constant dense<0.000000e+00> : vector<8x32xf32>
    %159 = tpu.matmul %157, %158, %cst_44 {dimension_numbers = #tpu.dot_dimension_numbers<[1], [0], [0], [1], [0, 0, 1, 1], [], []>} : vector<8x32xf32>, vector<32x32xf32>, vector<8x32xf32> -> vector<8x32xf32>
    %c0_45 = arith.constant 0 : index
    %c0_46 = arith.constant 0 : index
    %160 = vector.load %arg8[%c0_45, %c0_46] : memref<1x32xf32, #tpu.memory_space<vmem>>, vector<1x32xf32>
    %161 = vector.broadcast %160 : vector<1x32xf32> to vector<8x32xf32>
    %162 = arith.addf %159, %161 : vector<8x32xf32>
    %163 = arith.addf %1, %162 : vector<8x32xf32>
    %c0_47 = arith.constant 0 : index
    %c0_48 = arith.constant 0 : index
    %164 = vector.load %arg9[%c0_47, %c0_48] : memref<1x32xf32, #tpu.memory_space<vmem>>, vector<1x32xf32>
    %c0_49 = arith.constant 0 : index
    %c0_50 = arith.constant 0 : index
    %165 = vector.load %arg10[%c0_49, %c0_50] : memref<1x32xf32, #tpu.memory_space<vmem>>, vector<1x32xf32>
    %cst_51 = arith.constant dense<0.000000e+00> : vector<8xf32>
    %166 = vector.multi_reduction <add>, %163, %cst_51 [1] : vector<8x32xf32> to vector<8xf32>
    %167 = vector.shape_cast %166 : vector<8xf32> to vector<8x1xf32>
    %cst_52 = arith.constant 3.200000e+01 : f32
    %168 = vector.broadcast %cst_52 : f32 to vector<8x1xf32>
    %169 = arith.divf %167, %168 : vector<8x1xf32>
    %170 = vector.broadcast %169 : vector<8x1xf32> to vector<8x32xf32>
    %171 = arith.subf %163, %170 : vector<8x32xf32>
    %172 = arith.mulf %171, %171 : vector<8x32xf32>
    %cst_53 = arith.constant dense<0.000000e+00> : vector<8xf32>
    %173 = vector.multi_reduction <add>, %172, %cst_53 [1] : vector<8x32xf32> to vector<8xf32>
    %174 = vector.shape_cast %173 : vector<8xf32> to vector<8x1xf32>
    %cst_54 = arith.constant 3.200000e+01 : f32
    %175 = vector.broadcast %cst_54 : f32 to vector<8x1xf32>
    %176 = arith.divf %174, %175 : vector<8x1xf32>
    %177 = vector.broadcast %169 : vector<8x1xf32> to vector<8x32xf32>
    %178 = arith.subf %163, %177 : vector<8x32xf32>
    %cst_55 = arith.constant 9.99999974E-6 : f32
    %179 = vector.broadcast %cst_55 : f32 to vector<8x1xf32>
    %180 = arith.addf %176, %179 : vector<8x1xf32>
    %181 = math.rsqrt %180 : vector<8x1xf32>
    %182 = vector.broadcast %181 : vector<8x1xf32> to vector<8x32xf32>
    %183 = arith.mulf %178, %182 : vector<8x32xf32>
    %184 = vector.broadcast %164 : vector<1x32xf32> to vector<8x32xf32>
    %185 = arith.mulf %183, %184 : vector<8x32xf32>
    %186 = vector.broadcast %165 : vector<1x32xf32> to vector<8x32xf32>
    %187 = arith.addf %185, %186 : vector<8x32xf32>
    %c0_56 = arith.constant 0 : index
    %c0_57 = arith.constant 0 : index
    %188 = vector.load %arg11[%c0_56, %c0_57] : memref<32x32xf32, #tpu.memory_space<vmem>>, vector<32x32xf32>
    %cst_58 = arith.constant dense<0.000000e+00> : vector<8x32xf32>
    %189 = tpu.matmul %187, %188, %cst_58 {dimension_numbers = #tpu.dot_dimension_numbers<[1], [0], [0], [1], [0, 0, 1, 1], [], []>} : vector<8x32xf32>, vector<32x32xf32>, vector<8x32xf32> -> vector<8x32xf32>
    %c0_59 = arith.constant 0 : index
    %c0_60 = arith.constant 0 : index
    %190 = vector.load %arg12[%c0_59, %c0_60] : memref<1x32xf32, #tpu.memory_space<vmem>>, vector<1x32xf32>
    %191 = vector.broadcast %190 : vector<1x32xf32> to vector<8x32xf32>
    %192 = arith.addf %189, %191 : vector<8x32xf32>
    %cst_61 = arith.constant 0.000000e+00 : f32
    %193 = vector.broadcast %cst_61 : f32 to vector<8x32xf32>
    %194 = arith.maximumf %192, %193 : vector<8x32xf32>
    %c0_62 = arith.constant 0 : index
    %c0_63 = arith.constant 0 : index
    %195 = vector.load %arg13[%c0_62, %c0_63] : memref<32x32xf32, #tpu.memory_space<vmem>>, vector<32x32xf32>
    %cst_64 = arith.constant dense<0.000000e+00> : vector<8x32xf32>
    %196 = tpu.matmul %194, %195, %cst_64 {dimension_numbers = #tpu.dot_dimension_numbers<[1], [0], [0], [1], [0, 0, 1, 1], [], []>} : vector<8x32xf32>, vector<32x32xf32>, vector<8x32xf32> -> vector<8x32xf32>
    %c0_65 = arith.constant 0 : index
    %c0_66 = arith.constant 0 : index
    %197 = vector.load %arg14[%c0_65, %c0_66] : memref<1x32xf32, #tpu.memory_space<vmem>>, vector<1x32xf32>
    %198 = vector.broadcast %197 : vector<1x32xf32> to vector<8x32xf32>
    %199 = arith.addf %196, %198 : vector<8x32xf32>
    %200 = arith.addf %163, %199 : vector<8x32xf32>
    %c0_67 = arith.constant 0 : index
    %c0_68 = arith.constant 0 : index
    %c0_69 = arith.constant 0 : index
    %201 = vector.load %arg15[%c0_67, %c0_68, %c0_69] : memref<1x8x32xf32, #tpu.memory_space<vmem>>, vector<1x8x32xf32>
    %202 = vector.shape_cast %201 : vector<1x8x32xf32> to vector<8x32xf32>
    %203 = vector.shape_cast %200 : vector<8x32xf32> to vector<1x8x32xf32>
    tpu.vector_store %arg15[%c0_67, %c0_68, %c0_69], %203 {strides = array<i32>} : memref<1x8x32xf32, #tpu.memory_space<vmem>>, vector<1x8x32xf32>,
    return
  }
  func.func @transform_0(%arg0: i32) -> (i32, i32, i32) {
    %c0_i32 = arith.constant 0 : i32
    %c0_i32_0 = arith.constant 0 : i32
    %c0_i32_1 = arith.constant 0 : i32
    return %arg0, %c0_i32, %c0_i32_0 : i32, i32, i32
  }
  func.func @transform_1(%arg0: i32) -> (i32, i32, i32) {
    %c0_i32 = arith.constant 0 : i32
    %c0_i32_0 = arith.constant 0 : i32
    %c0_i32_1 = arith.constant 0 : i32
    return %arg0, %c0_i32, %c0_i32_0 : i32, i32, i32
  }
  func.func @transform_2(%arg0: i32) -> (i32, i32) {
    %c0_i32 = arith.constant 0 : i32
    %c0_i32_0 = arith.constant 0 : i32
    %c0_i32_1 = arith.constant 0 : i32
    return %c0_i32, %c0_i32_0 : i32, i32
  }
  func.func @transform_3(%arg0: i32) -> (i32, i32) {
    %c0_i32 = arith.constant 0 : i32
    %c0_i32_0 = arith.constant 0 : i32
    %c0_i32_1 = arith.constant 0 : i32
    return %c0_i32, %c0_i32_0 : i32, i32
  }
  func.func @transform_4(%arg0: i32) -> (i32, i32) {
    %c0_i32 = arith.constant 0 : i32
    %c0_i32_0 = arith.constant 0 : i32
    %c0_i32_1 = arith.constant 0 : i32
    return %c0_i32, %c0_i32_0 : i32, i32
  }
  func.func @transform_5(%arg0: i32) -> (i32, i32) {
    %c0_i32 = arith.constant 0 : i32
    %c0_i32_0 = arith.constant 0 : i32
    %c0_i32_1 = arith.constant 0 : i32
    return %c0_i32, %c0_i32_0 : i32, i32
  }
  func.func @transform_6(%arg0: i32) -> (i32, i32) {
    %c0_i32 = arith.constant 0 : i32
    %c0_i32_0 = arith.constant 0 : i32
    %c0_i32_1 = arith.constant 0 : i32
    return %c0_i32, %c0_i32_0 : i32, i32
  }
  func.func @transform_7(%arg0: i32) -> (i32, i32) {
    %c0_i32 = arith.constant 0 : i32
    %c0_i32_0 = arith.constant 0 : i32
    %c0_i32_1 = arith.constant 0 : i32
    return %c0_i32, %c0_i32_0 : i32, i32
  }
  func.func @transform_8(%arg0: i32) -> (i32, i32) {
    %c0_i32 = arith.constant 0 : i32
    %c0_i32_0 = arith.constant 0 : i32
    %c0_i32_1 = arith.constant 0 : i32
    return %c0_i32, %c0_i32_0 : i32, i32
  }
  func.func @transform_9(%arg0: i32) -> (i32, i32) {
    %c0_i32 = arith.constant 0 : i32
    %c0_i32_0 = arith.constant 0 : i32
    %c0_i32_1 = arith.constant 0 : i32
    return %c0_i32, %c0_i32_0 : i32, i32
  }
  func.func @transform_10(%arg0: i32) -> (i32, i32) {
    %c0_i32 = arith.constant 0 : i32
    %c0_i32_0 = arith.constant 0 : i32
    %c0_i32_1 = arith.constant 0 : i32
    return %c0_i32, %c0_i32_0 : i32, i32
  }
  func.func @transform_11(%arg0: i32) -> (i32, i32) {
    %c0_i32 = arith.constant 0 : i32
    %c0_i32_0 = arith.constant 0 : i32
    %c0_i32_1 = arith.constant 0 : i32
    return %c0_i32, %c0_i32_0 : i32, i32
  }
  func.func @transform_12(%arg0: i32) -> (i32, i32) {
    %c0_i32 = arith.constant 0 : i32
    %c0_i32_0 = arith.constant 0 : i32
    %c0_i32_1 = arith.constant 0 : i32
    return %c0_i32, %c0_i32_0 : i32, i32
  }
  func.func @transform_13(%arg0: i32) -> (i32, i32) {
    %c0_i32 = arith.constant 0 : i32
    %c0_i32_0 = arith.constant 0 : i32
    %c0_i32_1 = arith.constant 0 : i32
    return %c0_i32, %c0_i32_0 : i32, i32
  }
  func.func @transform_14(%arg0: i32) -> (i32, i32, i32) {
    %c0_i32 = arith.constant 0 : i32
    %c0_i32_0 = arith.constant 0 : i32
    %c0_i32_1 = arith.constant 0 : i32
    return %arg0, %c0_i32, %c0_i32_0 : i32, i32, i32
  }
}

module attributes {stable_mosaic.version = 11 : i64} {
  func.func @_cross_layer_kernel(%arg0: i32, %arg1: i32, %arg2: memref<1x1x8x32xf32, #tpu.memory_space<vmem>>, %arg3: memref<1x1x8x32xf32, #tpu.memory_space<vmem>>, %arg4: memref<1x1x1x8xf32, #tpu.memory_space<vmem>>, %arg5: memref<1x1x32xf32, #tpu.memory_space<vmem>>, %arg6: memref<1x1x32xf32, #tpu.memory_space<vmem>>, %arg7: memref<1x1x32xf32, #tpu.memory_space<vmem>>, %arg8: memref<1x1x32xf32, #tpu.memory_space<vmem>>, %arg9: memref<1x32x32xf32, #tpu.memory_space<vmem>>, %arg10: memref<1x1x32xf32, #tpu.memory_space<vmem>>, %arg11: memref<1x32x64xf32, #tpu.memory_space<vmem>>, %arg12: memref<1x1x64xf32, #tpu.memory_space<vmem>>, %arg13: memref<1x32x32xf32, #tpu.memory_space<vmem>>, %arg14: memref<1x1x32xf32, #tpu.memory_space<vmem>>, %arg15: memref<1x1x32xf32, #tpu.memory_space<vmem>>, %arg16: memref<1x1x32xf32, #tpu.memory_space<vmem>>, %arg17: memref<1x32x32xf32, #tpu.memory_space<vmem>>, %arg18: memref<1x1x32xf32, #tpu.memory_space<vmem>>, %arg19: memref<1x32x32xf32, #tpu.memory_space<vmem>>, %arg20: memref<1x1x32xf32, #tpu.memory_space<vmem>>, %arg21: memref<1x1x8x32xf32, #tpu.memory_space<vmem>>) attributes {dimension_semantics = [#tpu.dimension_semantics<parallel>, #tpu.dimension_semantics<parallel>], iteration_bounds = array<i64: 6, 2>, scalar_prefetch = 0 : i64, scratch_operands = 0 : i64, tpu.core_type = #tpu.core_type<tc>, window_params = [{transform_indices = @transform_0, window_bounds = array<i64: 1, 1, 8, 32>}, {transform_indices = @transform_1, window_bounds = array<i64: 1, 1, 8, 32>}, {transform_indices = @transform_2, window_bounds = array<i64: 1, 1, 1, 8>}, {transform_indices = @transform_3, window_bounds = array<i64: 1, 1, 32>}, {transform_indices = @transform_4, window_bounds = array<i64: 1, 1, 32>}, {transform_indices = @transform_5, window_bounds = array<i64: 1, 1, 32>}, {transform_indices = @transform_6, window_bounds = array<i64: 1, 1, 32>}, {transform_indices = @transform_7, window_bounds = array<i64: 1, 32, 32>}, {transform_indices = @transform_8, window_bounds = array<i64: 1, 1, 32>}, {transform_indices = @transform_9, window_bounds = array<i64: 1, 32, 64>}, {transform_indices = @transform_10, window_bounds = array<i64: 1, 1, 64>}, {transform_indices = @transform_11, window_bounds = array<i64: 1, 32, 32>}, {transform_indices = @transform_12, window_bounds = array<i64: 1, 1, 32>}, {transform_indices = @transform_13, window_bounds = array<i64: 1, 1, 32>}, {transform_indices = @transform_14, window_bounds = array<i64: 1, 1, 32>}, {transform_indices = @transform_15, window_bounds = array<i64: 1, 32, 32>}, {transform_indices = @transform_16, window_bounds = array<i64: 1, 1, 32>}, {transform_indices = @transform_17, window_bounds = array<i64: 1, 32, 32>}, {transform_indices = @transform_18, window_bounds = array<i64: 1, 1, 32>}, {transform_indices = @transform_19, window_bounds = array<i64: 1, 1, 8, 32>}]} {
    %c0 = arith.constant 0 : index
    %c0_0 = arith.constant 0 : index
    %c0_1 = arith.constant 0 : index
    %c0_2 = arith.constant 0 : index
    %0 = vector.load %arg2[%c0, %c0_0, %c0_1, %c0_2] : memref<1x1x8x32xf32, #tpu.memory_space<vmem>>, vector<1x1x8x32xf32>
    %1 = vector.shape_cast %0 : vector<1x1x8x32xf32> to vector<8x32xf32>
    %c0_3 = arith.constant 0 : index
    %c0_4 = arith.constant 0 : index
    %c0_5 = arith.constant 0 : index
    %c0_6 = arith.constant 0 : index
    %2 = vector.load %arg3[%c0_3, %c0_4, %c0_5, %c0_6] : memref<1x1x8x32xf32, #tpu.memory_space<vmem>>, vector<1x1x8x32xf32>
    %3 = vector.shape_cast %2 : vector<1x1x8x32xf32> to vector<8x32xf32>
    %c0_7 = arith.constant 0 : index
    %c0_8 = arith.constant 0 : index
    %c0_9 = arith.constant 0 : index
    %4 = vector.load %arg5[%c0_7, %c0_8, %c0_9] : memref<1x1x32xf32, #tpu.memory_space<vmem>>, vector<1x1x32xf32>
    %5 = vector.shape_cast %4 : vector<1x1x32xf32> to vector<1x32xf32>
    %c0_10 = arith.constant 0 : index
    %c0_11 = arith.constant 0 : index
    %c0_12 = arith.constant 0 : index
    %6 = vector.load %arg6[%c0_10, %c0_11, %c0_12] : memref<1x1x32xf32, #tpu.memory_space<vmem>>, vector<1x1x32xf32>
    %7 = vector.shape_cast %6 : vector<1x1x32xf32> to vector<1x32xf32>
    %cst = arith.constant dense<0.000000e+00> : vector<8xf32>
    %8 = vector.multi_reduction <add>, %1, %cst [1] : vector<8x32xf32> to vector<8xf32>
    %9 = vector.shape_cast %8 : vector<8xf32> to vector<8x1xf32>
    %cst_13 = arith.constant 3.200000e+01 : f32
    %10 = vector.broadcast %cst_13 : f32 to vector<8x1xf32>
    %11 = arith.divf %9, %10 : vector<8x1xf32>
    %12 = vector.broadcast %11 : vector<8x1xf32> to vector<8x32xf32>
    %13 = arith.subf %1, %12 : vector<8x32xf32>
    %14 = arith.mulf %13, %13 : vector<8x32xf32>
    %cst_14 = arith.constant dense<0.000000e+00> : vector<8xf32>
    %15 = vector.multi_reduction <add>, %14, %cst_14 [1] : vector<8x32xf32> to vector<8xf32>
    %16 = vector.shape_cast %15 : vector<8xf32> to vector<8x1xf32>
    %cst_15 = arith.constant 3.200000e+01 : f32
    %17 = vector.broadcast %cst_15 : f32 to vector<8x1xf32>
    %18 = arith.divf %16, %17 : vector<8x1xf32>
    %19 = vector.broadcast %11 : vector<8x1xf32> to vector<8x32xf32>
    %20 = arith.subf %1, %19 : vector<8x32xf32>
    %cst_16 = arith.constant 9.99999974E-6 : f32
    %21 = vector.broadcast %cst_16 : f32 to vector<8x1xf32>
    %22 = arith.addf %18, %21 : vector<8x1xf32>
    %23 = math.rsqrt %22 : vector<8x1xf32>
    %24 = vector.broadcast %23 : vector<8x1xf32> to vector<8x32xf32>
    %25 = arith.mulf %20, %24 : vector<8x32xf32>
    %26 = vector.broadcast %5 : vector<1x32xf32> to vector<8x32xf32>
    %27 = arith.mulf %25, %26 : vector<8x32xf32>
    %28 = vector.broadcast %7 : vector<1x32xf32> to vector<8x32xf32>
    %29 = arith.addf %27, %28 : vector<8x32xf32>
    %c0_17 = arith.constant 0 : index
    %c0_18 = arith.constant 0 : index
    %c0_19 = arith.constant 0 : index
    %30 = vector.load %arg7[%c0_17, %c0_18, %c0_19] : memref<1x1x32xf32, #tpu.memory_space<vmem>>, vector<1x1x32xf32>
    %31 = vector.shape_cast %30 : vector<1x1x32xf32> to vector<1x32xf32>
    %c0_20 = arith.constant 0 : index
    %c0_21 = arith.constant 0 : index
    %c0_22 = arith.constant 0 : index
    %32 = vector.load %arg8[%c0_20, %c0_21, %c0_22] : memref<1x1x32xf32, #tpu.memory_space<vmem>>, vector<1x1x32xf32>
    %33 = vector.shape_cast %32 : vector<1x1x32xf32> to vector<1x32xf32>
    %cst_23 = arith.constant dense<0.000000e+00> : vector<8xf32>
    %34 = vector.multi_reduction <add>, %3, %cst_23 [1] : vector<8x32xf32> to vector<8xf32>
    %35 = vector.shape_cast %34 : vector<8xf32> to vector<8x1xf32>
    %cst_24 = arith.constant 3.200000e+01 : f32
    %36 = vector.broadcast %cst_24 : f32 to vector<8x1xf32>
    %37 = arith.divf %35, %36 : vector<8x1xf32>
    %38 = vector.broadcast %37 : vector<8x1xf32> to vector<8x32xf32>
    %39 = arith.subf %3, %38 : vector<8x32xf32>
    %40 = arith.mulf %39, %39 : vector<8x32xf32>
    %cst_25 = arith.constant dense<0.000000e+00> : vector<8xf32>
    %41 = vector.multi_reduction <add>, %40, %cst_25 [1] : vector<8x32xf32> to vector<8xf32>
    %42 = vector.shape_cast %41 : vector<8xf32> to vector<8x1xf32>
    %cst_26 = arith.constant 3.200000e+01 : f32
    %43 = vector.broadcast %cst_26 : f32 to vector<8x1xf32>
    %44 = arith.divf %42, %43 : vector<8x1xf32>
    %45 = vector.broadcast %37 : vector<8x1xf32> to vector<8x32xf32>
    %46 = arith.subf %3, %45 : vector<8x32xf32>
    %cst_27 = arith.constant 9.99999974E-6 : f32
    %47 = vector.broadcast %cst_27 : f32 to vector<8x1xf32>
    %48 = arith.addf %44, %47 : vector<8x1xf32>
    %49 = math.rsqrt %48 : vector<8x1xf32>
    %50 = vector.broadcast %49 : vector<8x1xf32> to vector<8x32xf32>
    %51 = arith.mulf %46, %50 : vector<8x32xf32>
    %52 = vector.broadcast %31 : vector<1x32xf32> to vector<8x32xf32>
    %53 = arith.mulf %51, %52 : vector<8x32xf32>
    %54 = vector.broadcast %33 : vector<1x32xf32> to vector<8x32xf32>
    %55 = arith.addf %53, %54 : vector<8x32xf32>
    %c0_28 = arith.constant 0 : index
    %c0_29 = arith.constant 0 : index
    %c0_30 = arith.constant 0 : index
    %56 = vector.load %arg9[%c0_28, %c0_29, %c0_30] : memref<1x32x32xf32, #tpu.memory_space<vmem>>, vector<1x32x32xf32>
    %57 = vector.shape_cast %56 : vector<1x32x32xf32> to vector<32x32xf32>
    %cst_31 = arith.constant dense<0.000000e+00> : vector<8x32xf32>
    %58 = tpu.matmul %29, %57, %cst_31 {dimension_numbers = #tpu.dot_dimension_numbers<[1], [0], [0], [1], [0, 0, 1, 1], [], []>} : vector<8x32xf32>, vector<32x32xf32>, vector<8x32xf32> -> vector<8x32xf32>
    %c0_32 = arith.constant 0 : index
    %c0_33 = arith.constant 0 : index
    %c0_34 = arith.constant 0 : index
    %59 = vector.load %arg10[%c0_32, %c0_33, %c0_34] : memref<1x1x32xf32, #tpu.memory_space<vmem>>, vector<1x1x32xf32>
    %60 = vector.shape_cast %59 : vector<1x1x32xf32> to vector<1x32xf32>
    %61 = vector.broadcast %60 : vector<1x32xf32> to vector<8x32xf32>
    %62 = arith.addf %58, %61 : vector<8x32xf32>
    %c0_35 = arith.constant 0 : index
    %c0_36 = arith.constant 0 : index
    %c0_37 = arith.constant 0 : index
    %63 = vector.load %arg11[%c0_35, %c0_36, %c0_37] : memref<1x32x64xf32, #tpu.memory_space<vmem>>, vector<1x32x64xf32>
    %64 = vector.shape_cast %63 : vector<1x32x64xf32> to vector<32x64xf32>
    %cst_38 = arith.constant dense<0.000000e+00> : vector<8x64xf32>
    %65 = tpu.matmul %55, %64, %cst_38 {dimension_numbers = #tpu.dot_dimension_numbers<[1], [0], [0], [1], [0, 0, 1, 1], [], []>} : vector<8x32xf32>, vector<32x64xf32>, vector<8x64xf32> -> vector<8x64xf32>
    %c0_39 = arith.constant 0 : index
    %c0_40 = arith.constant 0 : index
    %c0_41 = arith.constant 0 : index
    %66 = vector.load %arg12[%c0_39, %c0_40, %c0_41] : memref<1x1x64xf32, #tpu.memory_space<vmem>>, vector<1x1x64xf32>
    %67 = vector.shape_cast %66 : vector<1x1x64xf32> to vector<1x64xf32>
    %68 = vector.broadcast %67 : vector<1x64xf32> to vector<8x64xf32>
    %69 = arith.addf %65, %68 : vector<8x64xf32>
    %70 = vector.extract_strided_slice %69 {offsets = [0, 0], sizes = [8, 32], strides = [1, 1]} : vector<8x64xf32> to vector<8x32xf32>
    %71 = vector.extract_strided_slice %69 {offsets = [0, 32], sizes = [8, 32], strides = [1, 1]} : vector<8x64xf32> to vector<8x32xf32>
    %c0_42 = arith.constant 0 : index
    %c0_43 = arith.constant 0 : index
    %c0_44 = arith.constant 0 : index
    %c0_45 = arith.constant 0 : index
    %72 = vector.load %arg4[%c0_42, %c0_43, %c0_44, %c0_45] : memref<1x1x1x8xf32, #tpu.memory_space<vmem>>, vector<1x1x1x8xf32>
    %73 = vector.shape_cast %72 : vector<1x1x1x8xf32> to vector<1x8xf32>
    %74 = tpu.iota {dimensions = array<i32: 1>} : vector<1x32xi32>
    %cst_46 = arith.constant 0.000000e+00 : f32
    %75 = vector.broadcast %cst_46 : f32 to vector<8x32xf32>
    %c0_i32 = arith.constant 0 : i32
    %76 = vector.broadcast %c0_i32 : i32 to vector<1x32xi32>
    %77 = arith.cmpi sge, %74, %76 : vector<1x32xi32>
    %c8_i32 = arith.constant 8 : i32
    %78 = vector.broadcast %c8_i32 : i32 to vector<1x32xi32>
    %79 = arith.cmpi slt, %74, %78 : vector<1x32xi32>
    %80 = arith.andi %77, %79 : vector<1x32xi1>
    %81 = arith.extui %80 : vector<1x32xi1> to vector<1x32xi32>
    %82 = arith.sitofp %81 : vector<1x32xi32> to vector<1x32xf32>
    %83 = vector.broadcast %82 : vector<1x32xf32> to vector<8x32xf32>
    %84 = arith.mulf %62, %83 : vector<8x32xf32>
    %85 = vector.broadcast %82 : vector<1x32xf32> to vector<8x32xf32>
    %86 = arith.mulf %70, %85 : vector<8x32xf32>
    %cst_47 = arith.constant dense<0.000000e+00> : vector<8x8xf32>
    %87 = tpu.matmul %84, %86, %cst_47 {dimension_numbers = #tpu.dot_dimension_numbers<[1], [1], [0], [0], [0, 0, 1, 0], [], []>} : vector<8x32xf32>, vector<8x32xf32>, vector<8x8xf32> -> vector<8x8xf32>
    %cst_48 = arith.constant 0.353553385 : f32
    %88 = vector.broadcast %cst_48 : f32 to vector<8x8xf32>
    %89 = arith.mulf %87, %88 : vector<8x8xf32>
    %90 = vector.broadcast %73 : vector<1x8xf32> to vector<8x8xf32>
    %91 = arith.addf %89, %90 : vector<8x8xf32>
    %cst_49 = arith.constant dense<0xFF800000> : vector<8xf32>
    %92 = vector.multi_reduction <maximumf>, %91, %cst_49 [1] : vector<8x8xf32> to vector<8xf32>
    %93 = vector.shape_cast %92 : vector<8xf32> to vector<8x1xf32>
    %94 = vector.broadcast %93 : vector<8x1xf32> to vector<8x8xf32>
    %95 = arith.subf %91, %94 : vector<8x8xf32>
    %96 = math.exp %95 : vector<8x8xf32>
    %cst_50 = arith.constant dense<0.000000e+00> : vector<8xf32>
    %97 = vector.multi_reduction <add>, %96, %cst_50 [1] : vector<8x8xf32> to vector<8xf32>
    %98 = vector.shape_cast %97 : vector<8xf32> to vector<8x1xf32>
    %99 = tpu.reciprocal %98 {approx = true} : vector<8x1xf32> -> vector<8x1xf32>
    %100 = vector.broadcast %99 : vector<8x1xf32> to vector<8x8xf32>
    %101 = arith.mulf %96, %100 : vector<8x8xf32>
    %102 = vector.broadcast %82 : vector<1x32xf32> to vector<8x32xf32>
    %103 = arith.mulf %71, %102 : vector<8x32xf32>
    %cst_51 = arith.constant dense<0.000000e+00> : vector<8x32xf32>
    %104 = tpu.matmul %101, %103, %cst_51 {dimension_numbers = #tpu.dot_dimension_numbers<[1], [0], [0], [1], [0, 0, 1, 1], [], []>} : vector<8x8xf32>, vector<8x32xf32>, vector<8x32xf32> -> vector<8x32xf32>
    %105 = arith.addf %75, %104 : vector<8x32xf32>
    %c8_i32_52 = arith.constant 8 : i32
    %106 = vector.broadcast %c8_i32_52 : i32 to vector<1x32xi32>
    %107 = arith.cmpi sge, %74, %106 : vector<1x32xi32>
    %c16_i32 = arith.constant 16 : i32
    %108 = vector.broadcast %c16_i32 : i32 to vector<1x32xi32>
    %109 = arith.cmpi slt, %74, %108 : vector<1x32xi32>
    %110 = arith.andi %107, %109 : vector<1x32xi1>
    %111 = arith.extui %110 : vector<1x32xi1> to vector<1x32xi32>
    %112 = arith.sitofp %111 : vector<1x32xi32> to vector<1x32xf32>
    %113 = vector.broadcast %112 : vector<1x32xf32> to vector<8x32xf32>
    %114 = arith.mulf %62, %113 : vector<8x32xf32>
    %115 = vector.broadcast %112 : vector<1x32xf32> to vector<8x32xf32>
    %116 = arith.mulf %70, %115 : vector<8x32xf32>
    %cst_53 = arith.constant dense<0.000000e+00> : vector<8x8xf32>
    %117 = tpu.matmul %114, %116, %cst_53 {dimension_numbers = #tpu.dot_dimension_numbers<[1], [1], [0], [0], [0, 0, 1, 0], [], []>} : vector<8x32xf32>, vector<8x32xf32>, vector<8x8xf32> -> vector<8x8xf32>
    %cst_54 = arith.constant 0.353553385 : f32
    %118 = vector.broadcast %cst_54 : f32 to vector<8x8xf32>
    %119 = arith.mulf %117, %118 : vector<8x8xf32>
    %120 = vector.broadcast %73 : vector<1x8xf32> to vector<8x8xf32>
    %121 = arith.addf %119, %120 : vector<8x8xf32>
    %cst_55 = arith.constant dense<0xFF800000> : vector<8xf32>
    %122 = vector.multi_reduction <maximumf>, %121, %cst_55 [1] : vector<8x8xf32> to vector<8xf32>
    %123 = vector.shape_cast %122 : vector<8xf32> to vector<8x1xf32>
    %124 = vector.broadcast %123 : vector<8x1xf32> to vector<8x8xf32>
    %125 = arith.subf %121, %124 : vector<8x8xf32>
    %126 = math.exp %125 : vector<8x8xf32>
    %cst_56 = arith.constant dense<0.000000e+00> : vector<8xf32>
    %127 = vector.multi_reduction <add>, %126, %cst_56 [1] : vector<8x8xf32> to vector<8xf32>
    %128 = vector.shape_cast %127 : vector<8xf32> to vector<8x1xf32>
    %129 = tpu.reciprocal %128 {approx = true} : vector<8x1xf32> -> vector<8x1xf32>
    %130 = vector.broadcast %129 : vector<8x1xf32> to vector<8x8xf32>
    %131 = arith.mulf %126, %130 : vector<8x8xf32>
    %132 = vector.broadcast %112 : vector<1x32xf32> to vector<8x32xf32>
    %133 = arith.mulf %71, %132 : vector<8x32xf32>
    %cst_57 = arith.constant dense<0.000000e+00> : vector<8x32xf32>
    %134 = tpu.matmul %131, %133, %cst_57 {dimension_numbers = #tpu.dot_dimension_numbers<[1], [0], [0], [1], [0, 0, 1, 1], [], []>} : vector<8x8xf32>, vector<8x32xf32>, vector<8x32xf32> -> vector<8x32xf32>
    %135 = arith.addf %105, %134 : vector<8x32xf32>
    %c16_i32_58 = arith.constant 16 : i32
    %136 = vector.broadcast %c16_i32_58 : i32 to vector<1x32xi32>
    %137 = arith.cmpi sge, %74, %136 : vector<1x32xi32>
    %c24_i32 = arith.constant 24 : i32
    %138 = vector.broadcast %c24_i32 : i32 to vector<1x32xi32>
    %139 = arith.cmpi slt, %74, %138 : vector<1x32xi32>
    %140 = arith.andi %137, %139 : vector<1x32xi1>
    %141 = arith.extui %140 : vector<1x32xi1> to vector<1x32xi32>
    %142 = arith.sitofp %141 : vector<1x32xi32> to vector<1x32xf32>
    %143 = vector.broadcast %142 : vector<1x32xf32> to vector<8x32xf32>
    %144 = arith.mulf %62, %143 : vector<8x32xf32>
    %145 = vector.broadcast %142 : vector<1x32xf32> to vector<8x32xf32>
    %146 = arith.mulf %70, %145 : vector<8x32xf32>
    %cst_59 = arith.constant dense<0.000000e+00> : vector<8x8xf32>
    %147 = tpu.matmul %144, %146, %cst_59 {dimension_numbers = #tpu.dot_dimension_numbers<[1], [1], [0], [0], [0, 0, 1, 0], [], []>} : vector<8x32xf32>, vector<8x32xf32>, vector<8x8xf32> -> vector<8x8xf32>
    %cst_60 = arith.constant 0.353553385 : f32
    %148 = vector.broadcast %cst_60 : f32 to vector<8x8xf32>
    %149 = arith.mulf %147, %148 : vector<8x8xf32>
    %150 = vector.broadcast %73 : vector<1x8xf32> to vector<8x8xf32>
    %151 = arith.addf %149, %150 : vector<8x8xf32>
    %cst_61 = arith.constant dense<0xFF800000> : vector<8xf32>
    %152 = vector.multi_reduction <maximumf>, %151, %cst_61 [1] : vector<8x8xf32> to vector<8xf32>
    %153 = vector.shape_cast %152 : vector<8xf32> to vector<8x1xf32>
    %154 = vector.broadcast %153 : vector<8x1xf32> to vector<8x8xf32>
    %155 = arith.subf %151, %154 : vector<8x8xf32>
    %156 = math.exp %155 : vector<8x8xf32>
    %cst_62 = arith.constant dense<0.000000e+00> : vector<8xf32>
    %157 = vector.multi_reduction <add>, %156, %cst_62 [1] : vector<8x8xf32> to vector<8xf32>
    %158 = vector.shape_cast %157 : vector<8xf32> to vector<8x1xf32>
    %159 = tpu.reciprocal %158 {approx = true} : vector<8x1xf32> -> vector<8x1xf32>
    %160 = vector.broadcast %159 : vector<8x1xf32> to vector<8x8xf32>
    %161 = arith.mulf %156, %160 : vector<8x8xf32>
    %162 = vector.broadcast %142 : vector<1x32xf32> to vector<8x32xf32>
    %163 = arith.mulf %71, %162 : vector<8x32xf32>
    %cst_63 = arith.constant dense<0.000000e+00> : vector<8x32xf32>
    %164 = tpu.matmul %161, %163, %cst_63 {dimension_numbers = #tpu.dot_dimension_numbers<[1], [0], [0], [1], [0, 0, 1, 1], [], []>} : vector<8x8xf32>, vector<8x32xf32>, vector<8x32xf32> -> vector<8x32xf32>
    %165 = arith.addf %135, %164 : vector<8x32xf32>
    %c24_i32_64 = arith.constant 24 : i32
    %166 = vector.broadcast %c24_i32_64 : i32 to vector<1x32xi32>
    %167 = arith.cmpi sge, %74, %166 : vector<1x32xi32>
    %c32_i32 = arith.constant 32 : i32
    %168 = vector.broadcast %c32_i32 : i32 to vector<1x32xi32>
    %169 = arith.cmpi slt, %74, %168 : vector<1x32xi32>
    %170 = arith.andi %167, %169 : vector<1x32xi1>
    %171 = arith.extui %170 : vector<1x32xi1> to vector<1x32xi32>
    %172 = arith.sitofp %171 : vector<1x32xi32> to vector<1x32xf32>
    %173 = vector.broadcast %172 : vector<1x32xf32> to vector<8x32xf32>
    %174 = arith.mulf %62, %173 : vector<8x32xf32>
    %175 = vector.broadcast %172 : vector<1x32xf32> to vector<8x32xf32>
    %176 = arith.mulf %70, %175 : vector<8x32xf32>
    %cst_65 = arith.constant dense<0.000000e+00> : vector<8x8xf32>
    %177 = tpu.matmul %174, %176, %cst_65 {dimension_numbers = #tpu.dot_dimension_numbers<[1], [1], [0], [0], [0, 0, 1, 0], [], []>} : vector<8x32xf32>, vector<8x32xf32>, vector<8x8xf32> -> vector<8x8xf32>
    %cst_66 = arith.constant 0.353553385 : f32
    %178 = vector.broadcast %cst_66 : f32 to vector<8x8xf32>
    %179 = arith.mulf %177, %178 : vector<8x8xf32>
    %180 = vector.broadcast %73 : vector<1x8xf32> to vector<8x8xf32>
    %181 = arith.addf %179, %180 : vector<8x8xf32>
    %cst_67 = arith.constant dense<0xFF800000> : vector<8xf32>
    %182 = vector.multi_reduction <maximumf>, %181, %cst_67 [1] : vector<8x8xf32> to vector<8xf32>
    %183 = vector.shape_cast %182 : vector<8xf32> to vector<8x1xf32>
    %184 = vector.broadcast %183 : vector<8x1xf32> to vector<8x8xf32>
    %185 = arith.subf %181, %184 : vector<8x8xf32>
    %186 = math.exp %185 : vector<8x8xf32>
    %cst_68 = arith.constant dense<0.000000e+00> : vector<8xf32>
    %187 = vector.multi_reduction <add>, %186, %cst_68 [1] : vector<8x8xf32> to vector<8xf32>
    %188 = vector.shape_cast %187 : vector<8xf32> to vector<8x1xf32>
    %189 = tpu.reciprocal %188 {approx = true} : vector<8x1xf32> -> vector<8x1xf32>
    %190 = vector.broadcast %189 : vector<8x1xf32> to vector<8x8xf32>
    %191 = arith.mulf %186, %190 : vector<8x8xf32>
    %192 = vector.broadcast %172 : vector<1x32xf32> to vector<8x32xf32>
    %193 = arith.mulf %71, %192 : vector<8x32xf32>
    %cst_69 = arith.constant dense<0.000000e+00> : vector<8x32xf32>
    %194 = tpu.matmul %191, %193, %cst_69 {dimension_numbers = #tpu.dot_dimension_numbers<[1], [0], [0], [1], [0, 0, 1, 1], [], []>} : vector<8x8xf32>, vector<8x32xf32>, vector<8x32xf32> -> vector<8x32xf32>
    %195 = arith.addf %165, %194 : vector<8x32xf32>
    %c0_70 = arith.constant 0 : index
    %c0_71 = arith.constant 0 : index
    %c0_72 = arith.constant 0 : index
    %196 = vector.load %arg13[%c0_70, %c0_71, %c0_72] : memref<1x32x32xf32, #tpu.memory_space<vmem>>, vector<1x32x32xf32>
    %197 = vector.shape_cast %196 : vector<1x32x32xf32> to vector<32x32xf32>
    %cst_73 = arith.constant dense<0.000000e+00> : vector<8x32xf32>
    %198 = tpu.matmul %195, %197, %cst_73 {dimension_numbers = #tpu.dot_dimension_numbers<[1], [0], [0], [1], [0, 0, 1, 1], [], []>} : vector<8x32xf32>, vector<32x32xf32>, vector<8x32xf32> -> vector<8x32xf32>
    %c0_74 = arith.constant 0 : index
    %c0_75 = arith.constant 0 : index
    %c0_76 = arith.constant 0 : index
    %199 = vector.load %arg14[%c0_74, %c0_75, %c0_76] : memref<1x1x32xf32, #tpu.memory_space<vmem>>, vector<1x1x32xf32>
    %200 = vector.shape_cast %199 : vector<1x1x32xf32> to vector<1x32xf32>
    %201 = vector.broadcast %200 : vector<1x32xf32> to vector<8x32xf32>
    %202 = arith.addf %198, %201 : vector<8x32xf32>
    %203 = arith.addf %1, %202 : vector<8x32xf32>
    %c0_77 = arith.constant 0 : index
    %c0_78 = arith.constant 0 : index
    %c0_79 = arith.constant 0 : index
    %204 = vector.load %arg15[%c0_77, %c0_78, %c0_79] : memref<1x1x32xf32, #tpu.memory_space<vmem>>, vector<1x1x32xf32>
    %205 = vector.shape_cast %204 : vector<1x1x32xf32> to vector<1x32xf32>
    %c0_80 = arith.constant 0 : index
    %c0_81 = arith.constant 0 : index
    %c0_82 = arith.constant 0 : index
    %206 = vector.load %arg16[%c0_80, %c0_81, %c0_82] : memref<1x1x32xf32, #tpu.memory_space<vmem>>, vector<1x1x32xf32>
    %207 = vector.shape_cast %206 : vector<1x1x32xf32> to vector<1x32xf32>
    %cst_83 = arith.constant dense<0.000000e+00> : vector<8xf32>
    %208 = vector.multi_reduction <add>, %203, %cst_83 [1] : vector<8x32xf32> to vector<8xf32>
    %209 = vector.shape_cast %208 : vector<8xf32> to vector<8x1xf32>
    %cst_84 = arith.constant 3.200000e+01 : f32
    %210 = vector.broadcast %cst_84 : f32 to vector<8x1xf32>
    %211 = arith.divf %209, %210 : vector<8x1xf32>
    %212 = vector.broadcast %211 : vector<8x1xf32> to vector<8x32xf32>
    %213 = arith.subf %203, %212 : vector<8x32xf32>
    %214 = arith.mulf %213, %213 : vector<8x32xf32>
    %cst_85 = arith.constant dense<0.000000e+00> : vector<8xf32>
    %215 = vector.multi_reduction <add>, %214, %cst_85 [1] : vector<8x32xf32> to vector<8xf32>
    %216 = vector.shape_cast %215 : vector<8xf32> to vector<8x1xf32>
    %cst_86 = arith.constant 3.200000e+01 : f32
    %217 = vector.broadcast %cst_86 : f32 to vector<8x1xf32>
    %218 = arith.divf %216, %217 : vector<8x1xf32>
    %219 = vector.broadcast %211 : vector<8x1xf32> to vector<8x32xf32>
    %220 = arith.subf %203, %219 : vector<8x32xf32>
    %cst_87 = arith.constant 9.99999974E-6 : f32
    %221 = vector.broadcast %cst_87 : f32 to vector<8x1xf32>
    %222 = arith.addf %218, %221 : vector<8x1xf32>
    %223 = math.rsqrt %222 : vector<8x1xf32>
    %224 = vector.broadcast %223 : vector<8x1xf32> to vector<8x32xf32>
    %225 = arith.mulf %220, %224 : vector<8x32xf32>
    %226 = vector.broadcast %205 : vector<1x32xf32> to vector<8x32xf32>
    %227 = arith.mulf %225, %226 : vector<8x32xf32>
    %228 = vector.broadcast %207 : vector<1x32xf32> to vector<8x32xf32>
    %229 = arith.addf %227, %228 : vector<8x32xf32>
    %c0_88 = arith.constant 0 : index
    %c0_89 = arith.constant 0 : index
    %c0_90 = arith.constant 0 : index
    %230 = vector.load %arg17[%c0_88, %c0_89, %c0_90] : memref<1x32x32xf32, #tpu.memory_space<vmem>>, vector<1x32x32xf32>
    %231 = vector.shape_cast %230 : vector<1x32x32xf32> to vector<32x32xf32>
    %cst_91 = arith.constant dense<0.000000e+00> : vector<8x32xf32>
    %232 = tpu.matmul %229, %231, %cst_91 {dimension_numbers = #tpu.dot_dimension_numbers<[1], [0], [0], [1], [0, 0, 1, 1], [], []>} : vector<8x32xf32>, vector<32x32xf32>, vector<8x32xf32> -> vector<8x32xf32>
    %c0_92 = arith.constant 0 : index
    %c0_93 = arith.constant 0 : index
    %c0_94 = arith.constant 0 : index
    %233 = vector.load %arg18[%c0_92, %c0_93, %c0_94] : memref<1x1x32xf32, #tpu.memory_space<vmem>>, vector<1x1x32xf32>
    %234 = vector.shape_cast %233 : vector<1x1x32xf32> to vector<1x32xf32>
    %235 = vector.broadcast %234 : vector<1x32xf32> to vector<8x32xf32>
    %236 = arith.addf %232, %235 : vector<8x32xf32>
    %cst_95 = arith.constant 0.000000e+00 : f32
    %237 = vector.broadcast %cst_95 : f32 to vector<8x32xf32>
    %238 = arith.maximumf %236, %237 : vector<8x32xf32>
    %c0_96 = arith.constant 0 : index
    %c0_97 = arith.constant 0 : index
    %c0_98 = arith.constant 0 : index
    %239 = vector.load %arg19[%c0_96, %c0_97, %c0_98] : memref<1x32x32xf32, #tpu.memory_space<vmem>>, vector<1x32x32xf32>
    %240 = vector.shape_cast %239 : vector<1x32x32xf32> to vector<32x32xf32>
    %cst_99 = arith.constant dense<0.000000e+00> : vector<8x32xf32>
    %241 = tpu.matmul %238, %240, %cst_99 {dimension_numbers = #tpu.dot_dimension_numbers<[1], [0], [0], [1], [0, 0, 1, 1], [], []>} : vector<8x32xf32>, vector<32x32xf32>, vector<8x32xf32> -> vector<8x32xf32>
    %c0_100 = arith.constant 0 : index
    %c0_101 = arith.constant 0 : index
    %c0_102 = arith.constant 0 : index
    %242 = vector.load %arg20[%c0_100, %c0_101, %c0_102] : memref<1x1x32xf32, #tpu.memory_space<vmem>>, vector<1x1x32xf32>
    %243 = vector.shape_cast %242 : vector<1x1x32xf32> to vector<1x32xf32>
    %244 = vector.broadcast %243 : vector<1x32xf32> to vector<8x32xf32>
    %245 = arith.addf %241, %244 : vector<8x32xf32>
    %246 = arith.addf %203, %245 : vector<8x32xf32>
    %c0_103 = arith.constant 0 : index
    %c0_104 = arith.constant 0 : index
    %c0_105 = arith.constant 0 : index
    %c0_106 = arith.constant 0 : index
    %247 = vector.load %arg21[%c0_103, %c0_104, %c0_105, %c0_106] : memref<1x1x8x32xf32, #tpu.memory_space<vmem>>, vector<1x1x8x32xf32>
    %248 = vector.shape_cast %247 : vector<1x1x8x32xf32> to vector<8x32xf32>
    %249 = vector.shape_cast %246 : vector<8x32xf32> to vector<1x1x8x32xf32>
    tpu.vector_store %arg21[%c0_103, %c0_104, %c0_105, %c0_106], %249 {strides = array<i32>} : memref<1x1x8x32xf32, #tpu.memory_space<vmem>>, vector<1x1x8x32xf32>,
    return
  }
  func.func @transform_0(%arg0: i32, %arg1: i32) -> (i32, i32, i32, i32) {
    %c0_i32 = arith.constant 0 : i32
    %c0_i32_0 = arith.constant 0 : i32
    %c0_i32_1 = arith.constant 0 : i32
    return %arg0, %arg1, %c0_i32, %c0_i32_0 : i32, i32, i32, i32
  }
  func.func @transform_1(%arg0: i32, %arg1: i32) -> (i32, i32, i32, i32) {
    %c0_i32 = arith.constant 0 : i32
    %c0_i32_0 = arith.constant 0 : i32
    %c0_i32_1 = arith.constant 0 : i32
    return %arg0, %arg1, %c0_i32, %c0_i32_0 : i32, i32, i32, i32
  }
  func.func @transform_2(%arg0: i32, %arg1: i32) -> (i32, i32, i32, i32) {
    %c0_i32 = arith.constant 0 : i32
    %c0_i32_0 = arith.constant 0 : i32
    %c0_i32_1 = arith.constant 0 : i32
    return %arg0, %arg1, %c0_i32, %c0_i32_0 : i32, i32, i32, i32
  }
  func.func @transform_3(%arg0: i32, %arg1: i32) -> (i32, i32, i32) {
    %c0_i32 = arith.constant 0 : i32
    %c0_i32_0 = arith.constant 0 : i32
    %c0_i32_1 = arith.constant 0 : i32
    return %arg0, %c0_i32, %c0_i32_0 : i32, i32, i32
  }
  func.func @transform_4(%arg0: i32, %arg1: i32) -> (i32, i32, i32) {
    %c0_i32 = arith.constant 0 : i32
    %c0_i32_0 = arith.constant 0 : i32
    %c0_i32_1 = arith.constant 0 : i32
    return %arg0, %c0_i32, %c0_i32_0 : i32, i32, i32
  }
  func.func @transform_5(%arg0: i32, %arg1: i32) -> (i32, i32, i32) {
    %c0_i32 = arith.constant 0 : i32
    %c0_i32_0 = arith.constant 0 : i32
    %c0_i32_1 = arith.constant 0 : i32
    return %arg0, %c0_i32, %c0_i32_0 : i32, i32, i32
  }
  func.func @transform_6(%arg0: i32, %arg1: i32) -> (i32, i32, i32) {
    %c0_i32 = arith.constant 0 : i32
    %c0_i32_0 = arith.constant 0 : i32
    %c0_i32_1 = arith.constant 0 : i32
    return %arg0, %c0_i32, %c0_i32_0 : i32, i32, i32
  }
  func.func @transform_7(%arg0: i32, %arg1: i32) -> (i32, i32, i32) {
    %c0_i32 = arith.constant 0 : i32
    %c0_i32_0 = arith.constant 0 : i32
    %c0_i32_1 = arith.constant 0 : i32
    return %arg0, %c0_i32, %c0_i32_0 : i32, i32, i32
  }
  func.func @transform_8(%arg0: i32, %arg1: i32) -> (i32, i32, i32) {
    %c0_i32 = arith.constant 0 : i32
    %c0_i32_0 = arith.constant 0 : i32
    %c0_i32_1 = arith.constant 0 : i32
    return %arg0, %c0_i32, %c0_i32_0 : i32, i32, i32
  }
  func.func @transform_9(%arg0: i32, %arg1: i32) -> (i32, i32, i32) {
    %c0_i32 = arith.constant 0 : i32
    %c0_i32_0 = arith.constant 0 : i32
    %c0_i32_1 = arith.constant 0 : i32
    return %arg0, %c0_i32, %c0_i32_0 : i32, i32, i32
  }
  func.func @transform_10(%arg0: i32, %arg1: i32) -> (i32, i32, i32) {
    %c0_i32 = arith.constant 0 : i32
    %c0_i32_0 = arith.constant 0 : i32
    %c0_i32_1 = arith.constant 0 : i32
    return %arg0, %c0_i32, %c0_i32_0 : i32, i32, i32
  }
  func.func @transform_11(%arg0: i32, %arg1: i32) -> (i32, i32, i32) {
    %c0_i32 = arith.constant 0 : i32
    %c0_i32_0 = arith.constant 0 : i32
    %c0_i32_1 = arith.constant 0 : i32
    return %arg0, %c0_i32, %c0_i32_0 : i32, i32, i32
  }
  func.func @transform_12(%arg0: i32, %arg1: i32) -> (i32, i32, i32) {
    %c0_i32 = arith.constant 0 : i32
    %c0_i32_0 = arith.constant 0 : i32
    %c0_i32_1 = arith.constant 0 : i32
    return %arg0, %c0_i32, %c0_i32_0 : i32, i32, i32
  }
  func.func @transform_13(%arg0: i32, %arg1: i32) -> (i32, i32, i32) {
    %c0_i32 = arith.constant 0 : i32
    %c0_i32_0 = arith.constant 0 : i32
    %c0_i32_1 = arith.constant 0 : i32
    return %arg0, %c0_i32, %c0_i32_0 : i32, i32, i32
  }
  func.func @transform_14(%arg0: i32, %arg1: i32) -> (i32, i32, i32) {
    %c0_i32 = arith.constant 0 : i32
    %c0_i32_0 = arith.constant 0 : i32
    %c0_i32_1 = arith.constant 0 : i32
    return %arg0, %c0_i32, %c0_i32_0 : i32, i32, i32
  }
  func.func @transform_15(%arg0: i32, %arg1: i32) -> (i32, i32, i32) {
    %c0_i32 = arith.constant 0 : i32
    %c0_i32_0 = arith.constant 0 : i32
    %c0_i32_1 = arith.constant 0 : i32
    return %arg0, %c0_i32, %c0_i32_0 : i32, i32, i32
  }
  func.func @transform_16(%arg0: i32, %arg1: i32) -> (i32, i32, i32) {
    %c0_i32 = arith.constant 0 : i32
    %c0_i32_0 = arith.constant 0 : i32
    %c0_i32_1 = arith.constant 0 : i32
    return %arg0, %c0_i32, %c0_i32_0 : i32, i32, i32
  }
  func.func @transform_17(%arg0: i32, %arg1: i32) -> (i32, i32, i32) {
    %c0_i32 = arith.constant 0 : i32
    %c0_i32_0 = arith.constant 0 : i32
    %c0_i32_1 = arith.constant 0 : i32
    return %arg0, %c0_i32, %c0_i32_0 : i32, i32, i32
  }
  func.func @transform_18(%arg0: i32, %arg1: i32) -> (i32, i32, i32) {
    %c0_i32 = arith.constant 0 : i32
    %c0_i32_0 = arith.constant 0 : i32
    %c0_i32_1 = arith.constant 0 : i32
    return %arg0, %c0_i32, %c0_i32_0 : i32, i32, i32
  }
  func.func @transform_19(%arg0: i32, %arg1: i32) -> (i32, i32, i32, i32) {
    %c0_i32 = arith.constant 0 : i32
    %c0_i32_0 = arith.constant 0 : i32
    %c0_i32_1 = arith.constant 0 : i32
    return %arg0, %arg1, %c0_i32, %c0_i32_0 : i32, i32, i32, i32
  }
}

module attributes {stable_mosaic.version = 11 : i64} {
  func.func @_tail_kernel(%arg0: i32, %arg1: memref<1x8x96xf32, #tpu.memory_space<vmem>>, %arg2: memref<1x8x96xf32, #tpu.memory_space<vmem>>, %arg3: memref<96x12xf32, #tpu.memory_space<vmem>>, %arg4: memref<1x12xf32, #tpu.memory_space<vmem>>, %arg5: memref<96x96xf32, #tpu.memory_space<vmem>>, %arg6: memref<1x96xf32, #tpu.memory_space<vmem>>, %arg7: memref<96x4xf32, #tpu.memory_space<vmem>>, %arg8: memref<1x4xf32, #tpu.memory_space<vmem>>, %arg9: memref<96x1024xf32, #tpu.memory_space<vmem>>, %arg10: memref<1x1024xf32, #tpu.memory_space<vmem>>, %arg11: memref<1024x48xf32, #tpu.memory_space<vmem>>, %arg12: memref<1x48xf32, #tpu.memory_space<vmem>>, %arg13: memref<1x8x12xf32, #tpu.memory_space<vmem>>, %arg14: memref<1x8x4xf32, #tpu.memory_space<vmem>>, %arg15: memref<1x8x48xf32, #tpu.memory_space<vmem>>) attributes {dimension_semantics = [#tpu.dimension_semantics<parallel>], iteration_bounds = array<i64: 2>, scalar_prefetch = 0 : i64, scratch_operands = 0 : i64, tpu.core_type = #tpu.core_type<tc>, window_params = [{transform_indices = @transform_0, window_bounds = array<i64: 1, 8, 96>}, {transform_indices = @transform_1, window_bounds = array<i64: 1, 8, 96>}, {pipeline_mode = #tpu.pipeline_mode<synchronous>, transform_indices = @transform_2, window_bounds = array<i64: 96, 12>}, {pipeline_mode = #tpu.pipeline_mode<synchronous>, transform_indices = @transform_3, window_bounds = array<i64: 1, 12>}, {pipeline_mode = #tpu.pipeline_mode<synchronous>, transform_indices = @transform_4, window_bounds = array<i64: 96, 96>}, {pipeline_mode = #tpu.pipeline_mode<synchronous>, transform_indices = @transform_5, window_bounds = array<i64: 1, 96>}, {pipeline_mode = #tpu.pipeline_mode<synchronous>, transform_indices = @transform_6, window_bounds = array<i64: 96, 4>}, {pipeline_mode = #tpu.pipeline_mode<synchronous>, transform_indices = @transform_7, window_bounds = array<i64: 1, 4>}, {pipeline_mode = #tpu.pipeline_mode<synchronous>, transform_indices = @transform_8, window_bounds = array<i64: 96, 1024>}, {pipeline_mode = #tpu.pipeline_mode<synchronous>, transform_indices = @transform_9, window_bounds = array<i64: 1, 1024>}, {pipeline_mode = #tpu.pipeline_mode<synchronous>, transform_indices = @transform_10, window_bounds = array<i64: 1024, 48>}, {pipeline_mode = #tpu.pipeline_mode<synchronous>, transform_indices = @transform_11, window_bounds = array<i64: 1, 48>}, {transform_indices = @transform_12, window_bounds = array<i64: 1, 8, 12>}, {transform_indices = @transform_13, window_bounds = array<i64: 1, 8, 4>}, {transform_indices = @transform_14, window_bounds = array<i64: 1, 8, 48>}]} {
    %c0 = arith.constant 0 : index
    %c0_0 = arith.constant 0 : index
    %c0_1 = arith.constant 0 : index
    %0 = vector.load %arg1[%c0, %c0_0, %c0_1] : memref<1x8x96xf32, #tpu.memory_space<vmem>>, vector<1x8x96xf32>
    %1 = vector.shape_cast %0 : vector<1x8x96xf32> to vector<8x96xf32>
    %c0_2 = arith.constant 0 : index
    %c0_3 = arith.constant 0 : index
    %2 = vector.load %arg3[%c0_2, %c0_3] : memref<96x12xf32, #tpu.memory_space<vmem>>, vector<96x12xf32>
    %cst = arith.constant dense<0.000000e+00> : vector<8x12xf32>
    %3 = tpu.matmul %1, %2, %cst {dimension_numbers = #tpu.dot_dimension_numbers<[1], [0], [0], [1], [0, 0, 1, 1], [], []>} : vector<8x96xf32>, vector<96x12xf32>, vector<8x12xf32> -> vector<8x12xf32>
    %c0_4 = arith.constant 0 : index
    %c0_5 = arith.constant 0 : index
    %4 = vector.load %arg4[%c0_4, %c0_5] : memref<1x12xf32, #tpu.memory_space<vmem>>, vector<1x12xf32>
    %5 = vector.broadcast %4 : vector<1x12xf32> to vector<8x12xf32>
    %6 = arith.addf %3, %5 : vector<8x12xf32>
    %c0_6 = arith.constant 0 : index
    %c0_7 = arith.constant 0 : index
    %c0_8 = arith.constant 0 : index
    %7 = vector.load %arg13[%c0_6, %c0_7, %c0_8] : memref<1x8x12xf32, #tpu.memory_space<vmem>>, vector<1x8x12xf32>
    %8 = vector.shape_cast %7 : vector<1x8x12xf32> to vector<8x12xf32>
    %9 = vector.shape_cast %6 : vector<8x12xf32> to vector<1x8x12xf32>
    tpu.vector_store %arg13[%c0_6, %c0_7, %c0_8], %9 {strides = array<i32>} : memref<1x8x12xf32, #tpu.memory_space<vmem>>, vector<1x8x12xf32>,
    %c0_9 = arith.constant 0 : index
    %c0_10 = arith.constant 0 : index
    %c0_11 = arith.constant 0 : index
    %10 = vector.load %arg2[%c0_9, %c0_10, %c0_11] : memref<1x8x96xf32, #tpu.memory_space<vmem>>, vector<1x8x96xf32>
    %11 = vector.shape_cast %10 : vector<1x8x96xf32> to vector<8x96xf32>
    %12 = arith.mulf %1, %11 : vector<8x96xf32>
    %c0_12 = arith.constant 0 : index
    %c0_13 = arith.constant 0 : index
    %13 = vector.load %arg5[%c0_12, %c0_13] : memref<96x96xf32, #tpu.memory_space<vmem>>, vector<96x96xf32>
    %cst_14 = arith.constant dense<0.000000e+00> : vector<8x96xf32>
    %14 = tpu.matmul %12, %13, %cst_14 {dimension_numbers = #tpu.dot_dimension_numbers<[1], [0], [0], [1], [0, 0, 1, 1], [], []>} : vector<8x96xf32>, vector<96x96xf32>, vector<8x96xf32> -> vector<8x96xf32>
    %c0_15 = arith.constant 0 : index
    %c0_16 = arith.constant 0 : index
    %15 = vector.load %arg6[%c0_15, %c0_16] : memref<1x96xf32, #tpu.memory_space<vmem>>, vector<1x96xf32>
    %16 = vector.broadcast %15 : vector<1x96xf32> to vector<8x96xf32>
    %17 = arith.addf %14, %16 : vector<8x96xf32>
    %cst_17 = arith.constant 0.000000e+00 : f32
    %18 = vector.broadcast %cst_17 : f32 to vector<8x96xf32>
    %19 = arith.maximumf %17, %18 : vector<8x96xf32>
    %20 = arith.addf %19, %12 : vector<8x96xf32>
    %c0_18 = arith.constant 0 : index
    %c0_19 = arith.constant 0 : index
    %21 = vector.load %arg7[%c0_18, %c0_19] : memref<96x4xf32, #tpu.memory_space<vmem>>, vector<96x4xf32>
    %cst_20 = arith.constant dense<0.000000e+00> : vector<8x4xf32>
    %22 = tpu.matmul %20, %21, %cst_20 {dimension_numbers = #tpu.dot_dimension_numbers<[1], [0], [0], [1], [0, 0, 1, 1], [], []>} : vector<8x96xf32>, vector<96x4xf32>, vector<8x4xf32> -> vector<8x4xf32>
    %c0_21 = arith.constant 0 : index
    %c0_22 = arith.constant 0 : index
    %23 = vector.load %arg8[%c0_21, %c0_22] : memref<1x4xf32, #tpu.memory_space<vmem>>, vector<1x4xf32>
    %24 = vector.broadcast %23 : vector<1x4xf32> to vector<8x4xf32>
    %25 = arith.addf %22, %24 : vector<8x4xf32>
    %c0_23 = arith.constant 0 : index
    %c0_24 = arith.constant 0 : index
    %c0_25 = arith.constant 0 : index
    %26 = vector.load %arg14[%c0_23, %c0_24, %c0_25] : memref<1x8x4xf32, #tpu.memory_space<vmem>>, vector<1x8x4xf32>
    %27 = vector.shape_cast %26 : vector<1x8x4xf32> to vector<8x4xf32>
    %28 = vector.shape_cast %25 : vector<8x4xf32> to vector<1x8x4xf32>
    tpu.vector_store %arg14[%c0_23, %c0_24, %c0_25], %28 {strides = array<i32>} : memref<1x8x4xf32, #tpu.memory_space<vmem>>, vector<1x8x4xf32>,
    %c0_26 = arith.constant 0 : index
    %c0_27 = arith.constant 0 : index
    %29 = vector.load %arg9[%c0_26, %c0_27] : memref<96x1024xf32, #tpu.memory_space<vmem>>, vector<96x1024xf32>
    %cst_28 = arith.constant dense<0.000000e+00> : vector<8x1024xf32>
    %30 = tpu.matmul %20, %29, %cst_28 {dimension_numbers = #tpu.dot_dimension_numbers<[1], [0], [0], [1], [0, 0, 1, 1], [], []>} : vector<8x96xf32>, vector<96x1024xf32>, vector<8x1024xf32> -> vector<8x1024xf32>
    %c0_29 = arith.constant 0 : index
    %c0_30 = arith.constant 0 : index
    %31 = vector.load %arg10[%c0_29, %c0_30] : memref<1x1024xf32, #tpu.memory_space<vmem>>, vector<1x1024xf32>
    %32 = vector.broadcast %31 : vector<1x1024xf32> to vector<8x1024xf32>
    %33 = arith.addf %30, %32 : vector<8x1024xf32>
    %cst_31 = arith.constant 0.000000e+00 : f32
    %34 = vector.broadcast %cst_31 : f32 to vector<8x1024xf32>
    %35 = arith.maximumf %33, %34 : vector<8x1024xf32>
    %c0_32 = arith.constant 0 : index
    %c0_33 = arith.constant 0 : index
    %36 = vector.load %arg11[%c0_32, %c0_33] : memref<1024x48xf32, #tpu.memory_space<vmem>>, vector<1024x48xf32>
    %cst_34 = arith.constant dense<0.000000e+00> : vector<8x48xf32>
    %37 = tpu.matmul %35, %36, %cst_34 {dimension_numbers = #tpu.dot_dimension_numbers<[1], [0], [0], [1], [0, 0, 1, 1], [], []>} : vector<8x1024xf32>, vector<1024x48xf32>, vector<8x48xf32> -> vector<8x48xf32>
    %c0_35 = arith.constant 0 : index
    %c0_36 = arith.constant 0 : index
    %38 = vector.load %arg12[%c0_35, %c0_36] : memref<1x48xf32, #tpu.memory_space<vmem>>, vector<1x48xf32>
    %39 = vector.broadcast %38 : vector<1x48xf32> to vector<8x48xf32>
    %40 = arith.addf %37, %39 : vector<8x48xf32>
    %c0_37 = arith.constant 0 : index
    %c0_38 = arith.constant 0 : index
    %c0_39 = arith.constant 0 : index
    %41 = vector.load %arg15[%c0_37, %c0_38, %c0_39] : memref<1x8x48xf32, #tpu.memory_space<vmem>>, vector<1x8x48xf32>
    %42 = vector.shape_cast %41 : vector<1x8x48xf32> to vector<8x48xf32>
    %43 = vector.shape_cast %40 : vector<8x48xf32> to vector<1x8x48xf32>
    tpu.vector_store %arg15[%c0_37, %c0_38, %c0_39], %43 {strides = array<i32>} : memref<1x8x48xf32, #tpu.memory_space<vmem>>, vector<1x8x48xf32>,
    return
  }
  func.func @transform_0(%arg0: i32) -> (i32, i32, i32) {
    %c0_i32 = arith.constant 0 : i32
    %c0_i32_0 = arith.constant 0 : i32
    %c0_i32_1 = arith.constant 0 : i32
    return %arg0, %c0_i32, %c0_i32_0 : i32, i32, i32
  }
  func.func @transform_1(%arg0: i32) -> (i32, i32, i32) {
    %c0_i32 = arith.constant 0 : i32
    %c0_i32_0 = arith.constant 0 : i32
    %c0_i32_1 = arith.constant 0 : i32
    return %arg0, %c0_i32, %c0_i32_0 : i32, i32, i32
  }
  func.func @transform_2(%arg0: i32) -> (i32, i32) {
    %c0_i32 = arith.constant 0 : i32
    %c0_i32_0 = arith.constant 0 : i32
    %c0_i32_1 = arith.constant 0 : i32
    return %c0_i32, %c0_i32_0 : i32, i32
  }
  func.func @transform_3(%arg0: i32) -> (i32, i32) {
    %c0_i32 = arith.constant 0 : i32
    %c0_i32_0 = arith.constant 0 : i32
    %c0_i32_1 = arith.constant 0 : i32
    return %c0_i32, %c0_i32_0 : i32, i32
  }
  func.func @transform_4(%arg0: i32) -> (i32, i32) {
    %c0_i32 = arith.constant 0 : i32
    %c0_i32_0 = arith.constant 0 : i32
    %c0_i32_1 = arith.constant 0 : i32
    return %c0_i32, %c0_i32_0 : i32, i32
  }
  func.func @transform_5(%arg0: i32) -> (i32, i32) {
    %c0_i32 = arith.constant 0 : i32
    %c0_i32_0 = arith.constant 0 : i32
    %c0_i32_1 = arith.constant 0 : i32
    return %c0_i32, %c0_i32_0 : i32, i32
  }
  func.func @transform_6(%arg0: i32) -> (i32, i32) {
    %c0_i32 = arith.constant 0 : i32
    %c0_i32_0 = arith.constant 0 : i32
    %c0_i32_1 = arith.constant 0 : i32
    return %c0_i32, %c0_i32_0 : i32, i32
  }
  func.func @transform_7(%arg0: i32) -> (i32, i32) {
    %c0_i32 = arith.constant 0 : i32
    %c0_i32_0 = arith.constant 0 : i32
    %c0_i32_1 = arith.constant 0 : i32
    return %c0_i32, %c0_i32_0 : i32, i32
  }
  func.func @transform_8(%arg0: i32) -> (i32, i32) {
    %c0_i32 = arith.constant 0 : i32
    %c0_i32_0 = arith.constant 0 : i32
    %c0_i32_1 = arith.constant 0 : i32
    return %c0_i32, %c0_i32_0 : i32, i32
  }
  func.func @transform_9(%arg0: i32) -> (i32, i32) {
    %c0_i32 = arith.constant 0 : i32
    %c0_i32_0 = arith.constant 0 : i32
    %c0_i32_1 = arith.constant 0 : i32
    return %c0_i32, %c0_i32_0 : i32, i32
  }
  func.func @transform_10(%arg0: i32) -> (i32, i32) {
    %c0_i32 = arith.constant 0 : i32
    %c0_i32_0 = arith.constant 0 : i32
    %c0_i32_1 = arith.constant 0 : i32
    return %c0_i32, %c0_i32_0 : i32, i32
  }
  func.func @transform_11(%arg0: i32) -> (i32, i32) {
    %c0_i32 = arith.constant 0 : i32
    %c0_i32_0 = arith.constant 0 : i32
    %c0_i32_1 = arith.constant 0 : i32
    return %c0_i32, %c0_i32_0 : i32, i32
  }
  func.func @transform_12(%arg0: i32) -> (i32, i32, i32) {
    %c0_i32 = arith.constant 0 : i32
    %c0_i32_0 = arith.constant 0 : i32
    %c0_i32_1 = arith.constant 0 : i32
    return %arg0, %c0_i32, %c0_i32_0 : i32, i32, i32
  }
  func.func @transform_13(%arg0: i32) -> (i32, i32, i32) {
    %c0_i32 = arith.constant 0 : i32
    %c0_i32_0 = arith.constant 0 : i32
    %c0_i32_1 = arith.constant 0 : i32
    return %arg0, %c0_i32, %c0_i32_0 : i32, i32, i32
  }
  func.func @transform_14(%arg0: i32) -> (i32, i32, i32) {
    %c0_i32 = arith.constant 0 : i32
    %c0_i32_0 = arith.constant 0 : i32
    %c0_i32_1 = arith.constant 0 : i32
    return %arg0, %c0_i32, %c0_i32_0 : i32, i32, i32
  }
}

</mosaic_0001>

<llo_original>
// kernel: _lambda_.5
$region0: #{_lambda_.5}
  #allocation0 [shape = 'u32[]', space=smem, size = 0x4, offset = 0x4, fixed_abs, tag = 'smem constant byte address 0x4 - core index']
  #allocation1 [shape = 'u32[144,128]{1,0:T(1,128)}', space=vmem, size = 0x12000, scoped, tag = 'internal scratch']
  %s0 = inlined_call_operand.vmem [shape: f32[2,8,48], index: 0, kind: input, shape index: {}]
  %s1 = inlined_call_operand.vmem [shape: f32[48,96], index: 1, kind: input, shape index: {}]
  %s2 = inlined_call_operand.vmem [shape: f32[1,96], index: 2, kind: input, shape index: {}]
  %s3 = inlined_call_operand.vmem [shape: f32[2,8,96], index: 3, kind: output, shape index: {}]
  %s4 = sld [smem:[#allocation0]]
  $region45: #{_lambda_.5} parent=0
    _
  %s6 = ssub.s32 1, %s4
  %s7 = scalar_select 0, %s6, %s4
  loop: start=0, step=1, limit=4
  $region2: #{_lambda_.5} parent=0 // loop_pre_header
    _
  $region3: #{_lambda_.5} parent=0 // loop_header
    %s9 = sphi 0, %s13
    %p10 = scmp.ge.s32.totalorder %s9, 4
    %s19 = sphi 0, %s21
    %s22 = sphi 0, %s19
    %s23 = sphi 0, %s22
    %s39 = sphi 0, %s23
    %s43 = sphi 0, %s43
    %s45 = sphi 0, %s43
    %s46 = sphi 0, %s45
    %s60 = sphi 0, %s46
    %s64 = sphi 0, %s64
    %s66 = sphi 0, %s64
    %s67 = sphi 0, %s66
    %s81 = sphi 0, %s67
    %s87 = sphi 0, %s89
    %s90 = sphi 0, %s87
    %s91 = sphi 0, %s90
    %s107 = sphi 0, %s91
  $region4: #{_lambda_.5} parent=0 // loop_header_branch
    %12 = sbr.rel (%p10) target = $region8
  $region5: #{_lambda_.5} parent=0 // loop_body
    %s14 = ssub.s32 %s9, 1
    %s15 = ssub.s32 %s9, 2
    %s16 = sadd.s32 %s9, 1
    %s17 = ssub.s32 %s9, %s16
    %p18 = scmp.eq.s32.totalorder %s17, 0
    %s20 = sadd.s32 %s19, 1
    %s21 = scalar_select %p18, %s19, %s20
    %p24 = pneg %p18
    %p25 = scmp.eq.s32.totalorder %s9, 1
    %p26 = por %p24, %p25
    %p27 = scmp.ne.s32.totalorder %s19, %s22
    %p28 = scmp.eq.s32.totalorder %s9, 0
    %p29 = por %p27, %p28
    %p30 = scmp.ne.s32.totalorder %s19, %s22
    %p31 = scmp.eq.s32.totalorder %s14, 1
    %p32 = por %p30, %p31
    %p33 = scmp.ne.s32.totalorder %s22, %s23
    %p34 = scmp.eq.s32.totalorder %s14, 0
    %p35 = por %p33, %p34
    %p36 = scmp.ne.s32.totalorder %s22, %s23
    %p37 = scmp.eq.s32.totalorder %s15, 1
    %p38 = por %p36, %p37
    %p40 = scmp.ne.s32.totalorder %s23, %s39
    %p41 = scmp.eq.s32.totalorder %s15, 0
    %p42 = por %p40, %p41
    %s44 = sadd.s32 %s43, 1
    %p47 = scmp.eq.s32.totalorder %s9, 1
    %p48 = scmp.ne.s32.totalorder %s43, %s45
    %p49 = scmp.eq.s32.totalorder %s9, 0
    %p50 = por %p48, %p49
    %p51 = scmp.ne.s32.totalorder %s43, %s45
    %p52 = scmp.eq.s32.totalorder %s14, 1
    %p53 = por %p51, %p52
    %p54 = scmp.ne.s32.totalorder %s45, %s46
    %p55 = scmp.eq.s32.totalorder %s14, 0
    %p56 = por %p54, %p55
    %p57 = scmp.ne.s32.totalorder %s45, %s46
    %p58 = scmp.eq.s32.totalorder %s15, 1
    %p59 = por %p57, %p58
    %p61 = scmp.ne.s32.totalorder %s46, %s60
    %p62 = scmp.eq.s32.totalorder %s15, 0
    %p63 = por %p61, %p62
    %s65 = sadd.s32 %s64, 1
    %p68 = scmp.eq.s32.totalorder %s9, 1
    %p69 = scmp.ne.s32.totalorder %s64, %s66
    %p70 = scmp.eq.s32.totalorder %s9, 0
    %p71 = por %p69, %p70
    %p72 = scmp.ne.s32.totalorder %s64, %s66
    %p73 = scmp.eq.s32.totalorder %s14, 1
    %p74 = por %p72, %p73
    %p75 = scmp.ne.s32.totalorder %s66, %s67
    %p76 = scmp.eq.s32.totalorder %s14, 0
    %p77 = por %p75, %p76
    %p78 = scmp.ne.s32.totalorder %s66, %s67
    %p79 = scmp.eq.s32.totalorder %s15, 1
    %p80 = por %p78, %p79
    %p82 = scmp.ne.s32.totalorder %s67, %s81
    %p83 = scmp.eq.s32.totalorder %s15, 0
    %p84 = por %p82, %p83
    %s85 = ssub.s32 %s9, %s16
    %p86 = scmp.eq.s32.totalorder %s85, 0
    %s88 = sadd.s32 %s87, 1
    %s89 = scalar_select %p86, %s87, %s88
    %p92 = pneg %p86
    %p93 = scmp.eq.s32.totalorder %s9, 1
    %p94 = por %p92, %p93
    %p95 = scmp.ne.s32.totalorder %s87, %s90
    %p96 = scmp.eq.s32.totalorder %s9, 0
    %p97 = por %p95, %p96
    %p98 = scmp.ne.s32.totalorder %s87, %s90
    %p99 = scmp.eq.s32.totalorder %s14, 1
    %p100 = por %p98, %p99
    %p101 = scmp.ne.s32.totalorder %s90, %s91
    %p102 = scmp.eq.s32.totalorder %s14, 0
    %p103 = por %p101, %p102
    %p104 = scmp.ne.s32.totalorder %s90, %s91
    %p105 = scmp.eq.s32.totalorder %s15, 1
    %p106 = por %p104, %p105
    %p108 = scmp.ne.s32.totalorder %s91, %s107
    %p109 = scmp.eq.s32.totalorder %s15, 0
    %p110 = por %p108, %p109
    %p111 = scmp.le.s32.totalorder 1, %s9
    %p112 = scmp.lt.s32.totalorder %s9, 3
    %p113 = pnand %p111, %p112
    %p114 = pneg %p113
    // Predicated region
    $region9: #{_lambda_.5} parent=5 // pred_check
      _
    $region10: #{_lambda_.5} parent=5 // pred_check_branch
      %116 = sbr.rel (%p113) target = $region12
    $region11: #{_lambda_.5} parent=5 // pred_region
      %s117 = ssub.s32 %s9, 1
      // Predicated region
      $region13: #{_lambda_.5} parent=11 // pred_check
        %p118 = pneg %p56
      $region14: #{_lambda_.5} parent=11 // pred_check_branch
        %120 = sbr.rel (%p118) target = $region16
      $region15: #{_lambda_.5} parent=11 // pred_region
        _
      $region16: #{_lambda_.5} parent=11 // pred_fallthru
        _
      // Predicated region
      $region17: #{_lambda_.5} parent=11 // pred_check
        %p121 = pneg %p77
      $region18: #{_lambda_.5} parent=11 // pred_check_branch
        %123 = sbr.rel (%p121) target = $region20
      $region19: #{_lambda_.5} parent=11 // pred_region
        _
      $region20: #{_lambda_.5} parent=11 // pred_fallthru
        _
    $region12: #{_lambda_.5} parent=5 // pred_fallthru
      _
    %p124 = scmp.lt.s32.totalorder %s9, 2
    // Predicated region
    $region21: #{_lambda_.5} parent=5 // pred_check
      %p125 = pneg %p124
    $region22: #{_lambda_.5} parent=5 // pred_check_branch
      %127 = sbr.rel (%p125) target = $region24
    $region23: #{_lambda_.5} parent=5 // pred_region
      // Predicated region
      $region25: #{_lambda_.5} parent=23 // pred_check
        %p128 = pneg %p29
      $region26: #{_lambda_.5} parent=23 // pred_check_branch
        %130 = sbr.rel (%p128) target = $region28
      $region27: #{_lambda_.5} parent=23 // pred_region
        %p131 = scmp.lt.s32.totalorder %s9, 1
        %s132 = scalar_select %p131, %s9, 1
        %s133 = smul.addr %s132, 8
        %s134 = scalar_lea.vmem %s0, %s133
      $region28: #{_lambda_.5} parent=23 // pred_fallthru
        _
    $region24: #{_lambda_.5} parent=5 // pred_fallthru
      _
    %p135 = scmp.le.s32.totalorder 1, %s9
    %p136 = scmp.lt.s32.totalorder %s9, 3
    %p137 = pnand %p135, %p136
    %p138 = pneg %p137
    // Predicated region
    $region29: #{_lambda_.5} parent=5 // pred_check
      _
    $region30: #{_lambda_.5} parent=5 // pred_check_branch
      %140 = sbr.rel (%p137) target = $region32
    $region31: #{_lambda_.5} parent=5 // pred_region
      %s141 = ssub.s32 %s9, 1
      %p142 = scmp.lt.s32.totalorder %s14, 1
      %s143 = scalar_select %p142, %s14, 1
      %s144 = smul.addr %s143, 8
      %s145 = scalar_lea.vmem %s0, %s144
      %p146 = pneg %p35
      %p147 = pneg %p32
      %p148 = pneg %p56
      %p149 = pneg %p53
      %p150 = pneg %p77
      %p151 = pneg %p74
      %p152 = pneg %p103
      %p153 = pneg %p100
      %p154 = scmp.lt.s32.totalorder %s14, 1
      %s155 = scalar_select %p154, %s14, 1
      %s156 = smul.addr %s155, 8
      %s157 = scalar_lea.vmem %s3, %s156
      %p158 = scmp.lt.s32.totalorder %s14, 1
      %s159 = scalar_select %p158, %s14, 1
      %s160 = smul.addr %s159, 8
      %s161 = scalar_lea.vmem %s0, %s160
      %p162 = scmp.lt.s32.totalorder %s14, 1
      %s163 = scalar_select %p162, %s14, 1
      %s164 = smul.addr %s163, 8
      %s165 = scalar_lea.vmem %s3, %s164
      %v166 = vld [vmem:[%s161] sm:$0xff]
      %v167 = vld [vmem:[%s1] sm:$0xff]
      %v168 = vld [vmem:[%s1 + $0x8] sm:$0xff]
      %v169 = vld [vmem:[%s1 + $0x10] sm:$0xff]
      %v170 = vld [vmem:[%s1 + $0x18] sm:$0xff]
      %v171 = vld [vmem:[%s1 + $0x20] sm:$0xff]
      %v172 = vld [vmem:[%s1 + $0x28] sm:$0xff]
      %v173 = vld [vmem:[%s2] sm:$0x1]
      %v175 = vlaneseq
      %v176 = vshrl.u32 %v175, 7
      %v177 = vsub.s32 0, %v176
      %v178 = vrot.slane %v173, %v177
      %vm180 = vcmask 392192
      %v182 = vsel %vm180, %v166, 0
      %184 = vmatprep.subr.mxu0 0.0
      %185 = vmatpush1.msra.mxu0 0.0
      %186 = vmatprep.subr.mxu0 0.0
      %187 = vmatpush1.msra.mxu0 0.0
      %188 = vmatprep.subr.mxu0 0.0
      %189 = vmatpush1.msra.mxu0 0.0
      %190 = vmatprep.subr.mxu0 0.0
      %191 = vmatpush1.msra.mxu0 0.0
      %192 = vmatprep.subr.mxu0 0.0
      %193 = vmatpush1.msra.mxu0 0.0
      %194 = vmatprep.subr.mxu0 0.0
      %195 = vmatpush1.msra.mxu0 0.0
      %196 = vmatprep.subr.mxu0 0.0
      %197 = vmatpush1.msra.mxu0 0.0
      %198 = vmatprep.subr.mxu0 0.0
      %199 = vmatpush1.msra.mxu0 0.0
      %200 = vmatprep.subr.mxu0 0.0
      %201 = vmatpush1.msra.mxu0 0.0
      %202 = vmatprep.subr.mxu0 0.0
      %203 = vmatpush1.msra.mxu0 0.0
      %204 = vmatprep.subr.mxu0 0.0
      %205 = vmatpush1.msra.mxu0 %v172
      %206 = vmatprep.subr.mxu0 0.0
      %207 = vmatpush1.msra.mxu0 %v171
      %208 = vmatprep.subr.mxu0 0.0
      %209 = vmatpush1.msra.mxu0 %v170
      %210 = vmatprep.subr.mxu0 0.0
      %211 = vmatpush1.msra.mxu0 %v169
      %212 = vmatprep.subr.mxu0 0.0
      %213 = vmatpush1.msra.mxu0 %v168
      %214 = vmatprep.subr.mxu0 0.0
      %215 = vmatpush1.msra.mxu0 %v167
      %216 = vmatprep.subr.mxu0 0.0
      %217 = vmatpush2.msra.mxu0 0.0
      %218 = vmatprep.subr.mxu0 0.0
      %219 = vmatpush2.msra.mxu0 0.0
      %220 = vmatprep.subr.mxu0 0.0
      %221 = vmatpush2.msra.mxu0 0.0
      %222 = vmatprep.subr.mxu0 0.0
      %223 = vmatpush2.msra.mxu0 0.0
      %224 = vmatprep.subr.mxu0 0.0
      %225 = vmatpush2.msra.mxu0 0.0
      %226 = vmatprep.subr.mxu0 0.0
      %227 = vmatpush2.msra.mxu0 0.0
      %228 = vmatprep.subr.mxu0 0.0
      %229 = vmatpush2.msra.mxu0 0.0
      %230 = vmatprep.subr.mxu0 0.0
      %231 = vmatpush2.msra.mxu0 0.0
      %232 = vmatprep.subr.mxu0 0.0
      %233 = vmatpush2.msra.mxu0 0.0
      %234 = vmatprep.subr.mxu0 0.0
      %235 = vmatpush2.msra.mxu0 0.0
      %236 = vmatprep.subr.mxu0 0.0
      %237 = vmatpush2.msra.mxu0 0.0
      %238 = vmatprep.subr.mxu0 0.0
      %239 = vmatpush2.msra.mxu0 0.0
      %240 = vmatprep.subr.mxu0 0.0
      %241 = vmatpush2.msra.mxu0 0.0
      %242 = vmatprep.subr.mxu0 0.0
      %243 = vmatpush2.msra.mxu0 0.0
      %244 = vmatprep.subr.mxu0 0.0
      %245 = vmatpush2.msra.mxu0 0.0
      %246 = vmatprep.subr.mxu0 0.0
      %247 = vmatpush2.msra.mxu0 0.0
      %248 = vmatprep.mubr.f32.mxu0 0.0
      %249 = vmatmul.mubr.f32.gmra.mxu0 %v182
      %v250 = vpop.f32.mrf.mxu0
      %v251 = vadd.f32 %v178, %v250
      %v252 = vpop.f32.mrf.mxu0
      %253 = vdwg.mxu0
      %vm254 = vcmask 785408
      %255 = vst.msk [vmem:[%s165] sm:$0xff] %vm254, %v251
      %p256 = scmp.lt.s32.totalorder %s14, 1
      %s257 = scalar_select %p256, %s14, 1
      %s258 = smul.addr %s257, 8
      %s259 = scalar_lea.vmem %s3, %s258
      // Predicated region
      $region33: #{_lambda_.5} parent=31 // pred_check
        %p260 = pneg %p100
      $region34: #{_lambda_.5} parent=31 // pred_check_branch
        %262 = sbr.rel (%p260) target = $region36
      $region35: #{_lambda_.5} parent=31 // pred_region
        _
      $region36: #{_lambda_.5} parent=31 // pred_fallthru
        _
    $region32: #{_lambda_.5} parent=5 // pred_fallthru
      _
    %p263 = scmp.le.s32.totalorder 2, %s9
    // Predicated region
    $region37: #{_lambda_.5} parent=5 // pred_check
      %p264 = pneg %p263
    $region38: #{_lambda_.5} parent=5 // pred_check_branch
      %266 = sbr.rel (%p264) target = $region40
    $region39: #{_lambda_.5} parent=5 // pred_region
      %s267 = ssub.s32 %s9, 2
      // Predicated region
      $region41: #{_lambda_.5} parent=39 // pred_check
        %p268 = pneg %p106
      $region42: #{_lambda_.5} parent=39 // pred_check_branch
        %270 = sbr.rel (%p268) target = $region44
      $region43: #{_lambda_.5} parent=39 // pred_region
        %p271 = scmp.lt.s32.totalorder %s15, 1
        %s272 = scalar_select %p271, %s15, 1
        %s273 = smul.addr %s272, 8
        %s274 = scalar_lea.vmem %s3, %s273
      $region44: #{_lambda_.5} parent=39 // pred_fallthru
        _
    $region40: #{_lambda_.5} parent=5 // pred_fallthru
      _
  $region6: #{_lambda_.5} parent=0 // loop_footer
    %s13 = sadd.s32 1, %s9
  $region7: #{_lambda_.5} parent=0 // loop_footer_branch
    %8 = sbr.rel target = $region3
  $region8: #{_lambda_.5} parent=0 // loop_exit
    _

// kernel: _lambda_.6
$region0: #{_lambda_.6}
  #allocation0 [shape = 'u32[]', space=smem, size = 0x4, offset = 0x4, fixed_abs, tag = 'smem constant byte address 0x4 - core index']
  #allocation1 [shape = 'u32[144,128]{1,0:T(1,128)}', space=vmem, size = 0x12000, scoped, tag = 'internal scratch']
  %s0 = inlined_call_operand.vmem [shape: f32[6,8,32], index: 0, kind: input, shape index: {}]
  %s1 = inlined_call_operand.vmem [shape: f32[6,1,8], index: 1, kind: input, shape index: {}]
  %s2 = inlined_call_operand.vmem [shape: f32[1,32], index: 2, kind: input, shape index: {}]
  %s3 = inlined_call_operand.vmem [shape: f32[1,32], index: 3, kind: input, shape index: {}]
  %s4 = inlined_call_operand.vmem [shape: f32[32,96], index: 4, kind: input, shape index: {}]
  %s5 = inlined_call_operand.vmem [shape: f32[1,96], index: 5, kind: input, shape index: {}]
  %s6 = inlined_call_operand.vmem [shape: f32[32,32], index: 6, kind: input, shape index: {}]
  %s7 = inlined_call_operand.vmem [shape: f32[1,32], index: 7, kind: input, shape index: {}]
  %s8 = inlined_call_operand.vmem [shape: f32[1,32], index: 8, kind: input, shape index: {}]
  %s9 = inlined_call_operand.vmem [shape: f32[1,32], index: 9, kind: input, shape index: {}]
  %s10 = inlined_call_operand.vmem [shape: f32[32,32], index: 10, kind: input, shape index: {}]
  %s11 = inlined_call_operand.vmem [shape: f32[1,32], index: 11, kind: input, shape index: {}]
  %s12 = inlined_call_operand.vmem [shape: f32[32,32], index: 12, kind: input, shape index: {}]
  %s13 = inlined_call_operand.vmem [shape: f32[1,32], index: 13, kind: input, shape index: {}]
  %s14 = inlined_call_operand.vmem [shape: f32[6,8,32], index: 14, kind: output, shape index: {}]
  %s15 = sld [smem:[#allocation0]]
  $region89: #{_lambda_.6} parent=0
    _
  %s17 = ssub.s32 1, %s15
  %s18 = scalar_select 0, %s17, %s15
  loop: start=0, step=1, limit=8
  $region2: #{_lambda_.6} parent=0 // loop_pre_header
    _
  $region3: #{_lambda_.6} parent=0 // loop_header
    %s20 = sphi 0, %s24
    %p21 = scmp.ge.s32.totalorder %s20, 8
    %s30 = sphi 0, %s32
    %s33 = sphi 0, %s30
    %s34 = sphi 0, %s33
    %s50 = sphi 0, %s34
    %s56 = sphi 0, %s58
    %s59 = sphi 0, %s56
    %s60 = sphi 0, %s59
    %s76 = sphi 0, %s60
    %s80 = sphi 0, %s80
    %s82 = sphi 0, %s80
    %s83 = sphi 0, %s82
    %s97 = sphi 0, %s83
    %s101 = sphi 0, %s101
    %s103 = sphi 0, %s101
    %s104 = sphi 0, %s103
    %s118 = sphi 0, %s104
    %s122 = sphi 0, %s122
    %s124 = sphi 0, %s122
    %s125 = sphi 0, %s124
    %s139 = sphi 0, %s125
    %s143 = sphi 0, %s143
    %s145 = sphi 0, %s143
    %s146 = sphi 0, %s145
    %s160 = sphi 0, %s146
    %s164 = sphi 0, %s164
    %s166 = sphi 0, %s164
    %s167 = sphi 0, %s166
    %s181 = sphi 0, %s167
    %s185 = sphi 0, %s185
    %s187 = sphi 0, %s185
    %s188 = sphi 0, %s187
    %s202 = sphi 0, %s188
    %s206 = sphi 0, %s206
    %s208 = sphi 0, %s206
    %s209 = sphi 0, %s208
    %s223 = sphi 0, %s209
    %s227 = sphi 0, %s227
    %s229 = sphi 0, %s227
    %s230 = sphi 0, %s229
    %s244 = sphi 0, %s230
    %s248 = sphi 0, %s248
    %s250 = sphi 0, %s248
    %s251 = sphi 0, %s250
    %s265 = sphi 0, %s251
    %s269 = sphi 0, %s269
    %s271 = sphi 0, %s269
    %s272 = sphi 0, %s271
    %s286 = sphi 0, %s272
    %s290 = sphi 0, %s290
    %s292 = sphi 0, %s290
    %s293 = sphi 0, %s292
    %s307 = sphi 0, %s293
    %s311 = sphi 0, %s311
    %s313 = sphi 0, %s311
    %s314 = sphi 0, %s313
    %s328 = sphi 0, %s314
    %s334 = sphi 0, %s336
    %s337 = sphi 0, %s334
    %s338 = sphi 0, %s337
    %s354 = sphi 0, %s338
  $region4: #{_lambda_.6} parent=0 // loop_header_branch
    %23 = sbr.rel (%p21) target = $region8
  $region5: #{_lambda_.6} parent=0 // loop_body
    %s25 = ssub.s32 %s20, 1
    %s26 = ssub.s32 %s20, 2
    %s27 = sadd.s32 %s20, 1
    %s28 = ssub.s32 %s20, %s27
    %p29 = scmp.eq.s32.totalorder %s28, 0
    %s31 = sadd.s32 %s30, 1
    %s32 = scalar_select %p29, %s30, %s31
    %p35 = pneg %p29
    %p36 = scmp.eq.s32.totalorder %s20, 5
    %p37 = por %p35, %p36
    %p38 = scmp.ne.s32.totalorder %s30, %s33
    %p39 = scmp.eq.s32.totalorder %s20, 0
    %p40 = por %p38, %p39
    %p41 = scmp.ne.s32.totalorder %s30, %s33
    %p42 = scmp.eq.s32.totalorder %s25, 5
    %p43 = por %p41, %p42
    %p44 = scmp.ne.s32.totalorder %s33, %s34
    %p45 = scmp.eq.s32.totalorder %s25, 0
    %p46 = por %p44, %p45
    %p47 = scmp.ne.s32.totalorder %s33, %s34
    %p48 = scmp.eq.s32.totalorder %s26, 5
    %p49 = por %p47, %p48
    %p51 = scmp.ne.s32.totalorder %s34, %s50
    %p52 = scmp.eq.s32.totalorder %s26, 0
    %p53 = por %p51, %p52
    %s54 = ssub.s32 %s20, %s27
    %p55 = scmp.eq.s32.totalorder %s54, 0
    %s57 = sadd.s32 %s56, 1
    %s58 = scalar_select %p55, %s56, %s57
    %p61 = pneg %p55
    %p62 = scmp.eq.s32.totalorder %s20, 5
    %p63 = por %p61, %p62
    %p64 = scmp.ne.s32.totalorder %s56, %s59
    %p65 = scmp.eq.s32.totalorder %s20, 0
    %p66 = por %p64, %p65
    %p67 = scmp.ne.s32.totalorder %s56, %s59
    %p68 = scmp.eq.s32.totalorder %s25, 5
    %p69 = por %p67, %p68
    %p70 = scmp.ne.s32.totalorder %s59, %s60
    %p71 = scmp.eq.s32.totalorder %s25, 0
    %p72 = por %p70, %p71
    %p73 = scmp.ne.s32.totalorder %s59, %s60
    %p74 = scmp.eq.s32.totalorder %s26, 5
    %p75 = por %p73, %p74
    %p77 = scmp.ne.s32.totalorder %s60, %s76
    %p78 = scmp.eq.s32.totalorder %s26, 0
    %p79 = por %p77, %p78
    %s81 = sadd.s32 %s80, 1
    %p84 = scmp.eq.s32.totalorder %s20, 5
    %p85 = scmp.ne.s32.totalorder %s80, %s82
    %p86 = scmp.eq.s32.totalorder %s20, 0
    %p87 = por %p85, %p86
    %p88 = scmp.ne.s32.totalorder %s80, %s82
    %p89 = scmp.eq.s32.totalorder %s25, 5
    %p90 = por %p88, %p89
    %p91 = scmp.ne.s32.totalorder %s82, %s83
    %p92 = scmp.eq.s32.totalorder %s25, 0
    %p93 = por %p91, %p92
    %p94 = scmp.ne.s32.totalorder %s82, %s83
    %p95 = scmp.eq.s32.totalorder %s26, 5
    %p96 = por %p94, %p95
    %p98 = scmp.ne.s32.totalorder %s83, %s97
    %p99 = scmp.eq.s32.totalorder %s26, 0
    %p100 = por %p98, %p99
    %s102 = sadd.s32 %s101, 1
    %p105 = scmp.eq.s32.totalorder %s20, 5
    %p106 = scmp.ne.s32.totalorder %s101, %s103
    %p107 = scmp.eq.s32.totalorder %s20, 0
    %p108 = por %p106, %p107
    %p109 = scmp.ne.s32.totalorder %s101, %s103
    %p110 = scmp.eq.s32.totalorder %s25, 5
    %p111 = por %p109, %p110
    %p112 = scmp.ne.s32.totalorder %s103, %s104
    %p113 = scmp.eq.s32.totalorder %s25, 0
    %p114 = por %p112, %p113
    %p115 = scmp.ne.s32.totalorder %s103, %s104
    %p116 = scmp.eq.s32.totalorder %s26, 5
    %p117 = por %p115, %p116
    %p119 = scmp.ne.s32.totalorder %s104, %s118
    %p120 = scmp.eq.s32.totalorder %s26, 0
    %p121 = por %p119, %p120
    %s123 = sadd.s32 %s122, 1
    %p126 = scmp.eq.s32.totalorder %s20, 5
    %p127 = scmp.ne.s32.totalorder %s122, %s124
    %p128 = scmp.eq.s32.totalorder %s20, 0
    %p129 = por %p127, %p128
    %p130 = scmp.ne.s32.totalorder %s122, %s124
    %p131 = scmp.eq.s32.totalorder %s25, 5
    %p132 = por %p130, %p131
    %p133 = scmp.ne.s32.totalorder %s124, %s125
    %p134 = scmp.eq.s32.totalorder %s25, 0
    %p135 = por %p133, %p134
    %p136 = scmp.ne.s32.totalorder %s124, %s125
    %p137 = scmp.eq.s32.totalorder %s26, 5
    %p138 = por %p136, %p137
    %p140 = scmp.ne.s32.totalorder %s125, %s139
    %p141 = scmp.eq.s32.totalorder %s26, 0
    %p142 = por %p140, %p141
    %s144 = sadd.s32 %s143, 1
    %p147 = scmp.eq.s32.totalorder %s20, 5
    %p148 = scmp.ne.s32.totalorder %s143, %s145
    %p149 = scmp.eq.s32.totalorder %s20, 0
    %p150 = por %p148, %p149
    %p151 = scmp.ne.s32.totalorder %s143, %s145
    %p152 = scmp.eq.s32.totalorder %s25, 5
    %p153 = por %p151, %p152
    %p154 = scmp.ne.s32.totalorder %s145, %s146
    %p155 = scmp.eq.s32.totalorder %s25, 0
    %p156 = por %p154, %p155
    %p157 = scmp.ne.s32.totalorder %s145, %s146
    %p158 = scmp.eq.s32.totalorder %s26, 5
    %p159 = por %p157, %p158
    %p161 = scmp.ne.s32.totalorder %s146, %s160
    %p162 = scmp.eq.s32.totalorder %s26, 0
    %p163 = por %p161, %p162
    %s165 = sadd.s32 %s164, 1
    %p168 = scmp.eq.s32.totalorder %s20, 5
    %p169 = scmp.ne.s32.totalorder %s164, %s166
    %p170 = scmp.eq.s32.totalorder %s20, 0
    %p171 = por %p169, %p170
    %p172 = scmp.ne.s32.totalorder %s164, %s166
    %p173 = scmp.eq.s32.totalorder %s25, 5
    %p174 = por %p172, %p173
    %p175 = scmp.ne.s32.totalorder %s166, %s167
    %p176 = scmp.eq.s32.totalorder %s25, 0
    %p177 = por %p175, %p176
    %p178 = scmp.ne.s32.totalorder %s166, %s167
    %p179 = scmp.eq.s32.totalorder %s26, 5
    %p180 = por %p178, %p179
    %p182 = scmp.ne.s32.totalorder %s167, %s181
    %p183 = scmp.eq.s32.totalorder %s26, 0
    %p184 = por %p182, %p183
    %s186 = sadd.s32 %s185, 1
    %p189 = scmp.eq.s32.totalorder %s20, 5
    %p190 = scmp.ne.s32.totalorder %s185, %s187
    %p191 = scmp.eq.s32.totalorder %s20, 0
    %p192 = por %p190, %p191
    %p193 = scmp.ne.s32.totalorder %s185, %s187
    %p194 = scmp.eq.s32.totalorder %s25, 5
    %p195 = por %p193, %p194
    %p196 = scmp.ne.s32.totalorder %s187, %s188
    %p197 = scmp.eq.s32.totalorder %s25, 0
    %p198 = por %p196, %p197
    %p199 = scmp.ne.s32.totalorder %s187, %s188
    %p200 = scmp.eq.s32.totalorder %s26, 5
    %p201 = por %p199, %p200
    %p203 = scmp.ne.s32.totalorder %s188, %s202
    %p204 = scmp.eq.s32.totalorder %s26, 0
    %p205 = por %p203, %p204
    %s207 = sadd.s32 %s206, 1
    %p210 = scmp.eq.s32.totalorder %s20, 5
    %p211 = scmp.ne.s32.totalorder %s206, %s208
    %p212 = scmp.eq.s32.totalorder %s20, 0
    %p213 = por %p211, %p212
    %p214 = scmp.ne.s32.totalorder %s206, %s208
    %p215 = scmp.eq.s32.totalorder %s25, 5
    %p216 = por %p214, %p215
    %p217 = scmp.ne.s32.totalorder %s208, %s209
    %p218 = scmp.eq.s32.totalorder %s25, 0
    %p219 = por %p217, %p218
    %p220 = scmp.ne.s32.totalorder %s208, %s209
    %p221 = scmp.eq.s32.totalorder %s26, 5
    %p222 = por %p220, %p221
    %p224 = scmp.ne.s32.totalorder %s209, %s223
    %p225 = scmp.eq.s32.totalorder %s26, 0
    %p226 = por %p224, %p225
    %s228 = sadd.s32 %s227, 1
    %p231 = scmp.eq.s32.totalorder %s20, 5
    %p232 = scmp.ne.s32.totalorder %s227, %s229
    %p233 = scmp.eq.s32.totalorder %s20, 0
    %p234 = por %p232, %p233
    %p235 = scmp.ne.s32.totalorder %s227, %s229
    %p236 = scmp.eq.s32.totalorder %s25, 5
    %p237 = por %p235, %p236
    %p238 = scmp.ne.s32.totalorder %s229, %s230
    %p239 = scmp.eq.s32.totalorder %s25, 0
    %p240 = por %p238, %p239
    %p241 = scmp.ne.s32.totalorder %s229, %s230
    %p242 = scmp.eq.s32.totalorder %s26, 5
    %p243 = por %p241, %p242
    %p245 = scmp.ne.s32.totalorder %s230, %s244
    %p246 = scmp.eq.s32.totalorder %s26, 0
    %p247 = por %p245, %p246
    %s249 = sadd.s32 %s248, 1
    %p252 = scmp.eq.s32.totalorder %s20, 5
    %p253 = scmp.ne.s32.totalorder %s248, %s250
    %p254 = scmp.eq.s32.totalorder %s20, 0
    %p255 = por %p253, %p254
    %p256 = scmp.ne.s32.totalorder %s248, %s250
    %p257 = scmp.eq.s32.totalorder %s25, 5
    %p258 = por %p256, %p257
    %p259 = scmp.ne.s32.totalorder %s250, %s251
    %p260 = scmp.eq.s32.totalorder %s25, 0
    %p261 = por %p259, %p260
    %p262 = scmp.ne.s32.totalorder %s250, %s251
    %p263 = scmp.eq.s32.totalorder %s26, 5
    %p264 = por %p262, %p263
    %p266 = scmp.ne.s32.totalorder %s251, %s265
    %p267 = scmp.eq.s32.totalorder %s26, 0
    %p268 = por %p266, %p267
    %s270 = sadd.s32 %s269, 1
    %p273 = scmp.eq.s32.totalorder %s20, 5
    %p274 = scmp.ne.s32.totalorder %s269, %s271
    %p275 = scmp.eq.s32.totalorder %s20, 0
    %p276 = por %p274, %p275
    %p277 = scmp.ne.s32.totalorder %s269, %s271
    %p278 = scmp.eq.s32.totalorder %s25, 5
    %p279 = por %p277, %p278
    %p280 = scmp.ne.s32.totalorder %s271, %s272
    %p281 = scmp.eq.s32.totalorder %s25, 0
    %p282 = por %p280, %p281
    %p283 = scmp.ne.s32.totalorder %s271, %s272
    %p284 = scmp.eq.s32.totalorder %s26, 5
    %p285 = por %p283, %p284
    %p287 = scmp.ne.s32.totalorder %s272, %s286
    %p288 = scmp.eq.s32.totalorder %s26, 0
    %p289 = por %p287, %p288
    %s291 = sadd.s32 %s290, 1
    %p294 = scmp.eq.s32.totalorder %s20, 5
    %p295 = scmp.ne.s32.totalorder %s290, %s292
    %p296 = scmp.eq.s32.totalorder %s20, 0
    %p297 = por %p295, %p296
    %p298 = scmp.ne.s32.totalorder %s290, %s292
    %p299 = scmp.eq.s32.totalorder %s25, 5
    %p300 = por %p298, %p299
    %p301 = scmp.ne.s32.totalorder %s292, %s293
    %p302 = scmp.eq.s32.totalorder %s25, 0
    %p303 = por %p301, %p302
    %p304 = scmp.ne.s32.totalorder %s292, %s293
    %p305 = scmp.eq.s32.totalorder %s26, 5
    %p306 = por %p304, %p305
    %p308 = scmp.ne.s32.totalorder %s293, %s307
    %p309 = scmp.eq.s32.totalorder %s26, 0
    %p310 = por %p308, %p309
    %s312 = sadd.s32 %s311, 1
    %p315 = scmp.eq.s32.totalorder %s20, 5
    %p316 = scmp.ne.s32.totalorder %s311, %s313
    %p317 = scmp.eq.s32.totalorder %s20, 0
    %p318 = por %p316, %p317
    %p319 = scmp.ne.s32.totalorder %s311, %s313
    %p320 = scmp.eq.s32.totalorder %s25, 5
    %p321 = por %p319, %p320
    %p322 = scmp.ne.s32.totalorder %s313, %s314
    %p323 = scmp.eq.s32.totalorder %s25, 0
    %p324 = por %p322, %p323
    %p325 = scmp.ne.s32.totalorder %s313, %s314
    %p326 = scmp.eq.s32.totalorder %s26, 5
    %p327 = por %p325, %p326
    %p329 = scmp.ne.s32.totalorder %s314, %s328
    %p330 = scmp.eq.s32.totalorder %s26, 0
    %p331 = por %p329, %p330
    %s332 = ssub.s32 %s20, %s27
    %p333 = scmp.eq.s32.totalorder %s332, 0
    %s335 = sadd.s32 %s334, 1
    %s336 = scalar_select %p333, %s334, %s335
    %p339 = pneg %p333
    %p340 = scmp.eq.s32.totalorder %s20, 5
    %p341 = por %p339, %p340
    %p342 = scmp.ne.s32.totalorder %s334, %s337
    %p343 = scmp.eq.s32.totalorder %s20, 0
    %p344 = por %p342, %p343
    %p345 = scmp.ne.s32.totalorder %s334, %s337
    %p346 = scmp.eq.s32.totalorder %s25, 5
    %p347 = por %p345, %p346
    %p348 = scmp.ne.s32.totalorder %s337, %s338
    %p349 = scmp.eq.s32.totalorder %s25, 0
    %p350 = por %p348, %p349
    %p351 = scmp.ne.s32.totalorder %s337, %s338
    %p352 = scmp.eq.s32.totalorder %s26, 5
    %p353 = por %p351, %p352
    %p355 = scmp.ne.s32.totalorder %s338, %s354
    %p356 = scmp.eq.s32.totalorder %s26, 0
    %p357 = por %p355, %p356
    %p358 = scmp.le.s32.totalorder 1, %s20
    %p359 = scmp.lt.s32.totalorder %s20, 7
    %p360 = pnand %p358, %p359
    %p361 = pneg %p360
    // Predicated region
    $region9: #{_lambda_.6} parent=5 // pred_check
      _
    $region10: #{_lambda_.6} parent=5 // pred_check_branch
      %363 = sbr.rel (%p360) target = $region12
    $region11: #{_lambda_.6} parent=5 // pred_region
      %s364 = ssub.s32 %s20, 1
      // Predicated region
      $region13: #{_lambda_.6} parent=11 // pred_check
        %p365 = pneg %p93
      $region14: #{_lambda_.6} parent=11 // pred_check_branch
        %367 = sbr.rel (%p365) target = $region16
      $region15: #{_lambda_.6} parent=11 // pred_region
        _
      $region16: #{_lambda_.6} parent=11 // pred_fallthru
        _
      // Predicated region
      $region17: #{_lambda_.6} parent=11 // pred_check
        %p368 = pneg %p114
      $region18: #{_lambda_.6} parent=11 // pred_check_branch
        %370 = sbr.rel (%p368) target = $region20
      $region19: #{_lambda_.6} parent=11 // pred_region
        _
      $region20: #{_lambda_.6} parent=11 // pred_fallthru
        _
      // Predicated region
      $region21: #{_lambda_.6} parent=11 // pred_check
        %p371 = pneg %p135
      $region22: #{_lambda_.6} parent=11 // pred_check_branch
        %373 = sbr.rel (%p371) target = $region24
      $region23: #{_lambda_.6} parent=11 // pred_region
        _
      $region24: #{_lambda_.6} parent=11 // pred_fallthru
        _
      // Predicated region
      $region25: #{_lambda_.6} parent=11 // pred_check
        %p374 = pneg %p156
      $region26: #{_lambda_.6} parent=11 // pred_check_branch
        %376 = sbr.rel (%p374) target = $region28
      $region27: #{_lambda_.6} parent=11 // pred_region
        _
      $region28: #{_lambda_.6} parent=11 // pred_fallthru
        _
      // Predicated region
      $region29: #{_lambda_.6} parent=11 // pred_check
        %p377 = pneg %p177
      $region30: #{_lambda_.6} parent=11 // pred_check_branch
        %379 = sbr.rel (%p377) target = $region32
      $region31: #{_lambda_.6} parent=11 // pred_region
        _
      $region32: #{_lambda_.6} parent=11 // pred_fallthru
        _
      // Predicated region
      $region33: #{_lambda_.6} parent=11 // pred_check
        %p380 = pneg %p198
      $region34: #{_lambda_.6} parent=11 // pred_check_branch
        %382 = sbr.rel (%p380) target = $region36
      $region35: #{_lambda_.6} parent=11 // pred_region
        _
      $region36: #{_lambda_.6} parent=11 // pred_fallthru
        _
      // Predicated region
      $region37: #{_lambda_.6} parent=11 // pred_check
        %p383 = pneg %p219
      $region38: #{_lambda_.6} parent=11 // pred_check_branch
        %385 = sbr.rel (%p383) target = $region40
      $region39: #{_lambda_.6} parent=11 // pred_region
        _
      $region40: #{_lambda_.6} parent=11 // pred_fallthru
        _
      // Predicated region
      $region41: #{_lambda_.6} parent=11 // pred_check
        %p386 = pneg %p240
      $region42: #{_lambda_.6} parent=11 // pred_check_branch
        %388 = sbr.rel (%p386) target = $region44
      $region43: #{_lambda_.6} parent=11 // pred_region
        _
      $region44: #{_lambda_.6} parent=11 // pred_fallthru
        _
      // Predicated region
      $region45: #{_lambda_.6} parent=11 // pred_check
        %p389 = pneg %p261
      $region46: #{_lambda_.6} parent=11 // pred_check_branch
        %391 = sbr.rel (%p389) target = $region48
      $region47: #{_lambda_.6} parent=11 // pred_region
        _
      $region48: #{_lambda_.6} parent=11 // pred_fallthru
        _
      // Predicated region
      $region49: #{_lambda_.6} parent=11 // pred_check
        %p392 = pneg %p282
      $region50: #{_lambda_.6} parent=11 // pred_check_branch
        %394 = sbr.rel (%p392) target = $region52
      $region51: #{_lambda_.6} parent=11 // pred_region
        _
      $region52: #{_lambda_.6} parent=11 // pred_fallthru
        _
      // Predicated region
      $region53: #{_lambda_.6} parent=11 // pred_check
        %p395 = pneg %p303
      $region54: #{_lambda_.6} parent=11 // pred_check_branch
        %397 = sbr.rel (%p395) target = $region56
      $region55: #{_lambda_.6} parent=11 // pred_region
        _
      $region56: #{_lambda_.6} parent=11 // pred_fallthru
        _
      // Predicated region
      $region57: #{_lambda_.6} parent=11 // pred_check
        %p398 = pneg %p324
      $region58: #{_lambda_.6} parent=11 // pred_check_branch
        %400 = sbr.rel (%p398) target = $region60
      $region59: #{_lambda_.6} parent=11 // pred_region
        _
      $region60: #{_lambda_.6} parent=11 // pred_fallthru
        _
    $region12: #{_lambda_.6} parent=5 // pred_fallthru
      _
    %p401 = scmp.lt.s32.totalorder %s20, 6
    // Predicated region
    $region61: #{_lambda_.6} parent=5 // pred_check
      %p402 = pneg %p401
    $region62: #{_lambda_.6} parent=5 // pred_check_branch
      %404 = sbr.rel (%p402) target = $region64
    $region63: #{_lambda_.6} parent=5 // pred_region
      // Predicated region
      $region65: #{_lambda_.6} parent=63 // pred_check
        %p405 = pneg %p40
      $region66: #{_lambda_.6} parent=63 // pred_check_branch
        %407 = sbr.rel (%p405) target = $region68
      $region67: #{_lambda_.6} parent=63 // pred_region
        %p408 = scmp.lt.s32.totalorder %s20, 5
        %s409 = scalar_select %p408, %s20, 5
        %s410 = smul.addr %s409, 8
        %s411 = scalar_lea.vmem %s0, %s410
      $region68: #{_lambda_.6} parent=63 // pred_fallthru
        _
      // Predicated region
      $region69: #{_lambda_.6} parent=63 // pred_check
        %p412 = pneg %p66
      $region70: #{_lambda_.6} parent=63 // pred_check_branch
        %414 = sbr.rel (%p412) target = $region72
      $region71: #{_lambda_.6} parent=63 // pred_region
        %p415 = scmp.lt.s32.totalorder %s20, 5
        %s416 = scalar_select %p415, %s20, 5
        %s417 = scalar_lea.vmem %s1, %s416
      $region72: #{_lambda_.6} parent=63 // pred_fallthru
        _
    $region64: #{_lambda_.6} parent=5 // pred_fallthru
      _
    %p418 = scmp.le.s32.totalorder 1, %s20
    %p419 = scmp.lt.s32.totalorder %s20, 7
    %p420 = pnand %p418, %p419
    %p421 = pneg %p420
    // Predicated region
    $region73: #{_lambda_.6} parent=5 // pred_check
      _
    $region74: #{_lambda_.6} parent=5 // pred_check_branch
      %423 = sbr.rel (%p420) target = $region76
    $region75: #{_lambda_.6} parent=5 // pred_region
      %s424 = ssub.s32 %s20, 1
      %p425 = scmp.lt.s32.totalorder %s25, 5
      %s426 = scalar_select %p425, %s25, 5
      %s427 = smul.addr %s426, 8
      %s428 = scalar_lea.vmem %s0, %s427
      %p429 = pneg %p46
      %p430 = pneg %p43
      %p431 = scmp.lt.s32.totalorder %s25, 5
      %s432 = scalar_select %p431, %s25, 5
      %s433 = scalar_lea.vmem %s1, %s432
      %p434 = pneg %p72
      %p435 = pneg %p69
      %p436 = pneg %p93
      %p437 = pneg %p90
      %p438 = pneg %p114
      %p439 = pneg %p111
      %p440 = pneg %p135
      %p441 = pneg %p132
      %p442 = pneg %p156
      %p443 = pneg %p153
      %p444 = pneg %p177
      %p445 = pneg %p174
      %p446 = pneg %p198
      %p447 = pneg %p195
      %p448 = pneg %p219
      %p449 = pneg %p216
      %p450 = pneg %p240
      %p451 = pneg %p237
      %p452 = pneg %p261
      %p453 = pneg %p258
      %p454 = pneg %p282
      %p455 = pneg %p279
      %p456 = pneg %p303
      %p457 = pneg %p300
      %p458 = pneg %p324
      %p459 = pneg %p321
      %p460 = pneg %p350
      %p461 = pneg %p347
      %p462 = scmp.lt.s32.totalorder %s25, 5
      %s463 = scalar_select %p462, %s25, 5
      %s464 = smul.addr %s463, 8
      %s465 = scalar_lea.vmem %s14, %s464
      %p466 = scmp.lt.s32.totalorder %s25, 5
      %s467 = scalar_select %p466, %s25, 5
      %s468 = smul.addr %s467, 8
      %s469 = scalar_lea.vmem %s0, %s468
      %p470 = scmp.lt.s32.totalorder %s25, 5
      %s471 = scalar_select %p470, %s25, 5
      %s472 = scalar_lea.vmem %s1, %s471
      %p473 = scmp.lt.s32.totalorder %s25, 5
      %s474 = scalar_select %p473, %s25, 5
      %s475 = smul.addr %s474, 8
      %s476 = scalar_lea.vmem %s14, %s475
      %v477 = vld [vmem:[%s469] sm:$0xff]
      %v478 = vld [vmem:[%s2] sm:$0x1]
      %v479 = vld [vmem:[%s3] sm:$0x1]
      %vm480 = vcmask 261120
      %v481 = vsel %vm480, %v477, 0.0
      %482 = vadd.xlane.f32.xlu0 %v481
      %v483 = vpop.xlane.xlu0 %482
      %v484 = vrcp.pop 32.0
      %v485 = vmul.f32 %v483, %v484
      %v486 = vsub.f32 %v477, %v485
      %v487 = vmul.f32 %v486, %v486
      %v488 = vsel %vm480, %v487, 0.0
      %489 = vadd.xlane.f32.xlu0 %v488
      %v490 = vpop.xlane.xlu0 %489
      %v491 = vmul.f32 %v490, %v484
      %v492 = vadd.f32 %v491, 1e-05
      %v493 = vrsqrt.pop %v492
      %v494 = vmul.f32 %v486, %v493
      %v496 = vlaneseq
      %v497 = vshrl.u32 %v496, 7
      %v498 = vsub.s32 0, %v497
      %v499 = vrot.slane %v478, %v498
      %v501 = vmul.f32 %v494, %v499
      %v503 = vlaneseq
      %v504 = vshrl.u32 %v503, 7
      %v505 = vsub.s32 0, %v504
      %v506 = vrot.slane %v479, %v505
      %v508 = vadd.f32 %v501, %v506
      %v509 = vld [vmem:[%s4] sm:$0xff]
      %v510 = vld [vmem:[%s4 + $0x8] sm:$0xff]
      %v511 = vld [vmem:[%s4 + $0x10] sm:$0xff]
      %v512 = vld [vmem:[%s4 + $0x18] sm:$0xff]
      %v513 = vld [vmem:[%s5] sm:$0x1]
      %v515 = vlaneseq
      %v516 = vshrl.u32 %v515, 7
      %v517 = vsub.s32 0, %v516
      %v518 = vrot.slane %v513, %v517
      %v521 = vsel %vm480, %v508, 0
      %523 = vmatprep.subr.mxu0 0.0
      %524 = vmatpush1.msra.mxu0 0.0
      %525 = vmatprep.subr.mxu0 0.0
      %526 = vmatpush1.msra.mxu0 0.0
      %527 = vmatprep.subr.mxu0 0.0
      %528 = vmatpush1.msra.mxu0 0.0
      %529 = vmatprep.subr.mxu0 0.0
      %530 = vmatpush1.msra.mxu0 0.0
      %531 = vmatprep.subr.mxu0 0.0
      %532 = vmatpush1.msra.mxu0 0.0
      %533 = vmatprep.subr.mxu0 0.0
      %534 = vmatpush1.msra.mxu0 0.0
      %535 = vmatprep.subr.mxu0 0.0
      %536 = vmatpush1.msra.mxu0 0.0
      %537 = vmatprep.subr.mxu0 0.0
      %538 = vmatpush1.msra.mxu0 0.0
      %539 = vmatprep.subr.mxu0 0.0
      %540 = vmatpush1.msra.mxu0 0.0
      %541 = vmatprep.subr.mxu0 0.0
      %542 = vmatpush1.msra.mxu0 0.0
      %543 = vmatprep.subr.mxu0 0.0
      %544 = vmatpush1.msra.mxu0 0.0
      %545 = vmatprep.subr.mxu0 0.0
      %546 = vmatpush1.msra.mxu0 0.0
      %547 = vmatprep.subr.mxu0 0.0
      %548 = vmatpush1.msra.mxu0 %v512
      %549 = vmatprep.subr.mxu0 0.0
      %550 = vmatpush1.msra.mxu0 %v511
      %551 = vmatprep.subr.mxu0 0.0
      %552 = vmatpush1.msra.mxu0 %v510
      %553 = vmatprep.subr.mxu0 0.0
      %554 = vmatpush1.msra.mxu0 %v509
      %555 = vmatprep.subr.mxu0 0.0
      %556 = vmatpush2.msra.mxu0 0.0
      %557 = vmatprep.subr.mxu0 0.0
      %558 = vmatpush2.msra.mxu0 0.0
      %559 = vmatprep.subr.mxu0 0.0
      %560 = vmatpush2.msra.mxu0 0.0
      %561 = vmatprep.subr.mxu0 0.0
      %562 = vmatpush2.msra.mxu0 0.0
      %563 = vmatprep.subr.mxu0 0.0
      %564 = vmatpush2.msra.mxu0 0.0
      %565 = vmatprep.subr.mxu0 0.0
      %566 = vmatpush2.msra.mxu0 0.0
      %567 = vmatprep.subr.mxu0 0.0
      %568 = vmatpush2.msra.mxu0 0.0
      %569 = vmatprep.subr.mxu0 0.0
      %570 = vmatpush2.msra.mxu0 0.0
      %571 = vmatprep.subr.mxu0 0.0
      %572 = vmatpush2.msra.mxu0 0.0
      %573 = vmatprep.subr.mxu0 0.0
      %574 = vmatpush2.msra.mxu0 0.0
      %575 = vmatprep.subr.mxu0 0.0
      %576 = vmatpush2.msra.mxu0 0.0
      %577 = vmatprep.subr.mxu0 0.0
      %578 = vmatpush2.msra.mxu0 0.0
      %579 = vmatprep.subr.mxu0 0.0
      %580 = vmatpush2.msra.mxu0 0.0
      %581 = vmatprep.subr.mxu0 0.0
      %582 = vmatpush2.msra.mxu0 0.0
      %583 = vmatprep.subr.mxu0 0.0
      %584 = vmatpush2.msra.mxu0 0.0
      %585 = vmatprep.subr.mxu0 0.0
      %586 = vmatpush2.msra.mxu0 0.0
      %587 = vmatprep.mubr.f32.mxu0 0.0
      %588 = vmatmul.mubr.f32.gmra.mxu0 %v521
      %v589 = vpop.f32.mrf.mxu0
      %v590 = vadd.f32 %v518, %v589
      %v591 = vpop.f32.mrf.mxu0
      %592 = vdwg.mxu0
      %v593 = vld [vmem:[%s472] sm:$0x1]
      %v594 = vlaneseq
      %v595 = vand.u32 %v594, 127
      %vm596 = vcmp.ge.s32.totalorder %v595, 0
      %vm597 = vcmp.lt.s32.totalorder %v595, 8
      %vm598 = vmand %vm596, %vm597
      %v599 = vsel %vm598, 1, 0
      %v600 = vcvt.s32.f32 %v599
      %v601 = vmul.f32 %v590, %v600
      %603 = vrot.lane.b32.xlu0 %v600, 32
      %v604 = vpop.permute.xlu0 %603
      %v606 = vmul.f32 %v590, %v604
      %608 = vrot.lane.b32.xlu0 %v606, 96
      %v609 = vpop.permute.xlu0 %608
      %v611 = vsel %vm480, %v601, 0
      %v613 = vsel %vm480, %v609, 0
      %615 = vmatprep.subr.mxu0 0.0
      %616 = vmatpush1.xpose.msra.mxu0 0.0
      %617 = vmatprep.subr.mxu0 0.0
      %618 = vmatpush1.xpose.msra.mxu0 0.0
      %619 = vmatprep.subr.mxu0 0.0
      %620 = vmatpush1.xpose.msra.mxu0 0.0
      %621 = vmatprep.subr.mxu0 0.0
      %622 = vmatpush1.xpose.msra.mxu0 0.0
      %623 = vmatprep.subr.mxu0 0.0
      %624 = vmatpush1.xpose.msra.mxu0 0.0
      %625 = vmatprep.subr.mxu0 0.0
      %626 = vmatpush1.xpose.msra.mxu0 0.0
      %627 = vmatprep.subr.mxu0 0.0
      %628 = vmatpush1.xpose.msra.mxu0 0.0
      %629 = vmatprep.subr.mxu0 0.0
      %630 = vmatpush1.xpose.msra.mxu0 0.0
      %631 = vmatprep.subr.mxu0 0.0
      %632 = vmatpush1.xpose.msra.mxu0 0.0
      %633 = vmatprep.subr.mxu0 0.0
      %634 = vmatpush1.xpose.msra.mxu0 0.0
      %635 = vmatprep.subr.mxu0 0.0
      %636 = vmatpush1.xpose.msra.mxu0 0.0
      %637 = vmatprep.subr.mxu0 0.0
      %638 = vmatpush1.xpose.msra.mxu0 0.0
      %639 = vmatprep.subr.mxu0 0.0
      %640 = vmatpush1.xpose.msra.mxu0 0.0
      %641 = vmatprep.subr.mxu0 0.0
      %642 = vmatpush1.xpose.msra.mxu0 0.0
      %643 = vmatprep.subr.mxu0 0.0
      %644 = vmatpush1.xpose.msra.mxu0 0.0
      %645 = vmatprep.subr.mxu0 0.0
      %646 = vmatpush1.xpose.msra.mxu0 %v613
      %647 = vmatprep.subr.mxu0 0.0
      %648 = vmatpush2.xpose.msra.mxu0 0.0
      %649 = vmatprep.subr.mxu0 0.0
      %650 = vmatpush2.xpose.msra.mxu0 0.0
      %651 = vmatprep.subr.mxu0 0.0
      %652 = vmatpush2.xpose.msra.mxu0 0.0
      %653 = vmatprep.subr.mxu0 0.0
      %654 = vmatpush2.xpose.msra.mxu0 0.0
      %655 = vmatprep.subr.mxu0 0.0
      %656 = vmatpush2.xpose.msra.mxu0 0.0
      %657 = vmatprep.subr.mxu0 0.0
      %658 = vmatpush2.xpose.msra.mxu0 0.0
      %659 = vmatprep.subr.mxu0 0.0
      %660 = vmatpush2.xpose.msra.mxu0 0.0
      %661 = vmatprep.subr.mxu0 0.0
      %662 = vmatpush2.xpose.msra.mxu0 0.0
      %663 = vmatprep.subr.mxu0 0.0
      %664 = vmatpush2.xpose.msra.mxu0 0.0
      %665 = vmatprep.subr.mxu0 0.0
      %666 = vmatpush2.xpose.msra.mxu0 0.0
      %667 = vmatprep.subr.mxu0 0.0
      %668 = vmatpush2.xpose.msra.mxu0 0.0
      %669 = vmatprep.subr.mxu0 0.0
      %670 = vmatpush2.xpose.msra.mxu0 0.0
      %671 = vmatprep.subr.mxu0 0.0
      %672 = vmatpush2.xpose.msra.mxu0 0.0
      %673 = vmatprep.subr.mxu0 0.0
      %674 = vmatpush2.xpose.msra.mxu0 0.0
      %675 = vmatprep.subr.mxu0 0.0
      %676 = vmatpush2.xpose.msra.mxu0 0.0
      %677 = vmatprep.subr.mxu0 0.0
      %678 = vmatpush2.xpose.msra.mxu0 0.0
      %679 = vmatprep.mubr.f32.mxu0 0.0
      %680 = vmatmul.mubr.f32.gmra.mxu0 %v611
      %v681 = vpop.f32.mrf.mxu0
      %v682 = vadd.f32 0.0, %v681
      %v683 = vpop.f32.mrf.mxu0
      %684 = vdwg.mxu0
      %v685 = vmul.f32 %v682, 0.35355338
      %v687 = vlaneseq
      %v688 = vshrl.u32 %v687, 7
      %v689 = vsub.s32 0, %v688
      %v690 = vrot.slane %v593, %v689
      %v692 = vadd.f32 %v685, %v690
      %vm693 = vcmask 64512
      %v694 = vsel %vm693, %v692, -inf
      %695 = vmax.xlane.f32.xlu0 %v694
      %v696 = vpop.xlane.xlu0 %695
      %v697 = vsub.f32 %v692, %v696
      %v698 = vmul.f32 %v697, 1.442695
      %v699 = vpow.pop %v698
      %v700 = vsel %vm693, %v699, 0.0
      %701 = vadd.xlane.f32.xlu0 %v700
      %v702 = vpop.xlane.xlu0 %701
      %v703 = vrcp.pop %v702
      %v704 = vmul.f32 %v699, %v703
      %705 = vrot.lane.b32.xlu0 %v600, 64
      %v706 = vpop.permute.xlu0 %705
      %v708 = vmul.f32 %v590, %v706
      %vm709 = vcmp.ge.s32.totalorder %v595, 8
      %vm710 = vcmp.lt.s32.totalorder %v595, 16
      %vm711 = vmand %vm709, %vm710
      %v712 = vsel %vm711, 1, 0
      %v713 = vcvt.s32.f32 %v712
      %v714 = vmul.f32 %v590, %v713
      %716 = vrot.lane.b32.xlu0 %v713, 32
      %v717 = vpop.permute.xlu0 %716
      %v719 = vmul.f32 %v590, %v717
      %721 = vrot.lane.b32.xlu0 %v719, 96
      %v722 = vpop.permute.xlu0 %721
      %v724 = vsel %vm480, %v714, 0
      %v726 = vsel %vm480, %v722, 0
      %728 = vmatprep.subr.mxu0 0.0
      %729 = vmatpush1.xpose.msra.mxu0 0.0
      %730 = vmatprep.subr.mxu0 0.0
      %731 = vmatpush1.xpose.msra.mxu0 0.0
      %732 = vmatprep.subr.mxu0 0.0
      %733 = vmatpush1.xpose.msra.mxu0 0.0
      %734 = vmatprep.subr.mxu0 0.0
      %735 = vmatpush1.xpose.msra.mxu0 0.0
      %736 = vmatprep.subr.mxu0 0.0
      %737 = vmatpush1.xpose.msra.mxu0 0.0
      %738 = vmatprep.subr.mxu0 0.0
      %739 = vmatpush1.xpose.msra.mxu0 0.0
      %740 = vmatprep.subr.mxu0 0.0
      %741 = vmatpush1.xpose.msra.mxu0 0.0
      %742 = vmatprep.subr.mxu0 0.0
      %743 = vmatpush1.xpose.msra.mxu0 0.0
      %744 = vmatprep.subr.mxu0 0.0
      %745 = vmatpush1.xpose.msra.mxu0 0.0
      %746 = vmatprep.subr.mxu0 0.0
      %747 = vmatpush1.xpose.msra.mxu0 0.0
      %748 = vmatprep.subr.mxu0 0.0
      %749 = vmatpush1.xpose.msra.mxu0 0.0
      %750 = vmatprep.subr.mxu0 0.0
      %751 = vmatpush1.xpose.msra.mxu0 0.0
      %752 = vmatprep.subr.mxu0 0.0
      %753 = vmatpush1.xpose.msra.mxu0 0.0
      %754 = vmatprep.subr.mxu0 0.0
      %755 = vmatpush1.xpose.msra.mxu0 0.0
      %756 = vmatprep.subr.mxu0 0.0
      %757 = vmatpush1.xpose.msra.mxu0 0.0
      %758 = vmatprep.subr.mxu0 0.0
      %759 = vmatpush1.xpose.msra.mxu0 %v726
      %760 = vmatprep.subr.mxu0 0.0
      %761 = vmatpush2.xpose.msra.mxu0 0.0
      %762 = vmatprep.subr.mxu0 0.0
      %763 = vmatpush2.xpose.msra.mxu0 0.0
      %764 = vmatprep.subr.mxu0 0.0
      %765 = vmatpush2.xpose.msra.mxu0 0.0
      %766 = vmatprep.subr.mxu0 0.0
      %767 = vmatpush2.xpose.msra.mxu0 0.0
      %768 = vmatprep.subr.mxu0 0.0
      %769 = vmatpush2.xpose.msra.mxu0 0.0
      %770 = vmatprep.subr.mxu0 0.0
      %771 = vmatpush2.xpose.msra.mxu0 0.0
      %772 = vmatprep.subr.mxu0 0.0
      %773 = vmatpush2.xpose.msra.mxu0 0.0
      %774 = vmatprep.subr.mxu0 0.0
      %775 = vmatpush2.xpose.msra.mxu0 0.0
      %776 = vmatprep.subr.mxu0 0.0
      %777 = vmatpush2.xpose.msra.mxu0 0.0
      %778 = vmatprep.subr.mxu0 0.0
      %779 = vmatpush2.xpose.msra.mxu0 0.0
      %780 = vmatprep.subr.mxu0 0.0
      %781 = vmatpush2.xpose.msra.mxu0 0.0
      %782 = vmatprep.subr.mxu0 0.0
      %783 = vmatpush2.xpose.msra.mxu0 0.0
      %784 = vmatprep.subr.mxu0 0.0
      %785 = vmatpush2.xpose.msra.mxu0 0.0
      %786 = vmatprep.subr.mxu0 0.0
      %787 = vmatpush2.xpose.msra.mxu0 0.0
      %788 = vmatprep.subr.mxu0 0.0
      %789 = vmatpush2.xpose.msra.mxu0 0.0
      %790 = vmatprep.subr.mxu0 0.0
      %791 = vmatpush2.xpose.msra.mxu0 0.0
      %792 = vmatprep.mubr.f32.mxu0 0.0
      %793 = vmatmul.mubr.f32.gmra.mxu0 %v724
      %v794 = vpop.f32.mrf.mxu0
      %v795 = vadd.f32 0.0, %v794
      %v796 = vpop.f32.mrf.mxu0
      %797 = vdwg.mxu0
      %v798 = vmul.f32 %v795, 0.35355338
      %v799 = vadd.f32 %v798, %v690
      %v800 = vsel %vm693, %v799, -inf
      %801 = vmax.xlane.f32.xlu0 %v800
      %v802 = vpop.xlane.xlu0 %801
      %v803 = vsub.f32 %v799, %v802
      %v804 = vmul.f32 %v803, 1.442695
      %v805 = vpow.pop %v804
      %v806 = vsel %vm693, %v805, 0.0
      %807 = vadd.xlane.f32.xlu0 %v806
      %v808 = vpop.xlane.xlu0 %807
      %v809 = vrcp.pop %v808
      %v810 = vmul.f32 %v805, %v809
      %811 = vrot.lane.b32.xlu0 %v713, 64
      %v812 = vpop.permute.xlu0 %811
      %v814 = vmul.f32 %v590, %v812
      %816 = vrot.lane.b32.xlu0 %v814, 64
      %v817 = vpop.permute.xlu0 %816
      %v820 = vsel %vm693, %v810, 0
      %822 = vmatprep.subr.mxu0 0.0
      %823 = vmatpush1.msra.mxu0 0.0
      %824 = vmatprep.subr.mxu0 0.0
      %825 = vmatpush1.msra.mxu0 0.0
      %826 = vmatprep.subr.mxu0 0.0
      %827 = vmatpush1.msra.mxu0 0.0
      %828 = vmatprep.subr.mxu0 0.0
      %829 = vmatpush1.msra.mxu0 0.0
      %830 = vmatprep.subr.mxu0 0.0
      %831 = vmatpush1.msra.mxu0 0.0
      %832 = vmatprep.subr.mxu0 0.0
      %833 = vmatpush1.msra.mxu0 0.0
      %834 = vmatprep.subr.mxu0 0.0
      %835 = vmatpush1.msra.mxu0 0.0
      %836 = vmatprep.subr.mxu0 0.0
      %837 = vmatpush1.msra.mxu0 0.0
      %838 = vmatprep.subr.mxu0 0.0
      %839 = vmatpush1.msra.mxu0 0.0
      %840 = vmatprep.subr.mxu0 0.0
      %841 = vmatpush1.msra.mxu0 0.0
      %842 = vmatprep.subr.mxu0 0.0
      %843 = vmatpush1.msra.mxu0 0.0
      %844 = vmatprep.subr.mxu0 0.0
      %845 = vmatpush1.msra.mxu0 0.0
      %846 = vmatprep.subr.mxu0 0.0
      %847 = vmatpush1.msra.mxu0 0.0
      %848 = vmatprep.subr.mxu0 0.0
      %849 = vmatpush1.msra.mxu0 0.0
      %850 = vmatprep.subr.mxu0 0.0
      %851 = vmatpush1.msra.mxu0 0.0
      %852 = vmatprep.subr.mxu0 0.0
      %853 = vmatpush1.msra.mxu0 %v817
      %854 = vmatprep.subr.mxu0 0.0
      %855 = vmatpush2.msra.mxu0 0.0
      %856 = vmatprep.subr.mxu0 0.0
      %857 = vmatpush2.msra.mxu0 0.0
      %858 = vmatprep.subr.mxu0 0.0
      %859 = vmatpush2.msra.mxu0 0.0
      %860 = vmatprep.subr.mxu0 0.0
      %861 = vmatpush2.msra.mxu0 0.0
      %862 = vmatprep.subr.mxu0 0.0
      %863 = vmatpush2.msra.mxu0 0.0
      %864 = vmatprep.subr.mxu0 0.0
      %865 = vmatpush2.msra.mxu0 0.0
      %866 = vmatprep.subr.mxu0 0.0
      %867 = vmatpush2.msra.mxu0 0.0
      %868 = vmatprep.subr.mxu0 0.0
      %869 = vmatpush2.msra.mxu0 0.0
      %870 = vmatprep.subr.mxu0 0.0
      %871 = vmatpush2.msra.mxu0 0.0
      %872 = vmatprep.subr.mxu0 0.0
      %873 = vmatpush2.msra.mxu0 0.0
      %874 = vmatprep.subr.mxu0 0.0
      %875 = vmatpush2.msra.mxu0 0.0
      %876 = vmatprep.subr.mxu0 0.0
      %877 = vmatpush2.msra.mxu0 0.0
      %878 = vmatprep.subr.mxu0 0.0
      %879 = vmatpush2.msra.mxu0 0.0
      %880 = vmatprep.subr.mxu0 0.0
      %881 = vmatpush2.msra.mxu0 0.0
      %882 = vmatprep.subr.mxu0 0.0
      %883 = vmatpush2.msra.mxu0 0.0
      %884 = vmatprep.subr.mxu0 0.0
      %885 = vmatpush2.msra.mxu0 0.0
      %886 = vmatprep.mubr.f32.mxu0 0.0
      %887 = vmatmul.mubr.f32.gmra.mxu0 %v820
      %v888 = vpop.f32.mrf.mxu0
      %v889 = vadd.f32 0.0, %v888
      %v890 = vpop.f32.mrf.mxu0
      %891 = vdwg.mxu0
      %893 = vrot.lane.b32.xlu0 %v708, 64
      %v894 = vpop.permute.xlu0 %893
      %v897 = vsel %vm693, %v704, 0
      %899 = vmatprep.subr.mxu0 0.0
      %900 = vmatpush1.msra.mxu0 0.0
      %901 = vmatprep.subr.mxu0 0.0
      %902 = vmatpush1.msra.mxu0 0.0
      %903 = vmatprep.subr.mxu0 0.0
      %904 = vmatpush1.msra.mxu0 0.0
      %905 = vmatprep.subr.mxu0 0.0
      %906 = vmatpush1.msra.mxu0 0.0
      %907 = vmatprep.subr.mxu0 0.0
      %908 = vmatpush1.msra.mxu0 0.0
      %909 = vmatprep.subr.mxu0 0.0
      %910 = vmatpush1.msra.mxu0 0.0
      %911 = vmatprep.subr.mxu0 0.0
      %912 = vmatpush1.msra.mxu0 0.0
      %913 = vmatprep.subr.mxu0 0.0
      %914 = vmatpush1.msra.mxu0 0.0
      %915 = vmatprep.subr.mxu0 0.0
      %916 = vmatpush1.msra.mxu0 0.0
      %917 = vmatprep.subr.mxu0 0.0
      %918 = vmatpush1.msra.mxu0 0.0
      %919 = vmatprep.subr.mxu0 0.0
      %920 = vmatpush1.msra.mxu0 0.0
      %921 = vmatprep.subr.mxu0 0.0
      %922 = vmatpush1.msra.mxu0 0.0
      %923 = vmatprep.subr.mxu0 0.0
      %924 = vmatpush1.msra.mxu0 0.0
      %925 = vmatprep.subr.mxu0 0.0
      %926 = vmatpush1.msra.mxu0 0.0
      %927 = vmatprep.subr.mxu0 0.0
      %928 = vmatpush1.msra.mxu0 0.0
      %929 = vmatprep.subr.mxu0 0.0
      %930 = vmatpush1.msra.mxu0 %v894
      %931 = vmatprep.subr.mxu0 0.0
      %932 = vmatpush2.msra.mxu0 0.0
      %933 = vmatprep.subr.mxu0 0.0
      %934 = vmatpush2.msra.mxu0 0.0
      %935 = vmatprep.subr.mxu0 0.0
      %936 = vmatpush2.msra.mxu0 0.0
      %937 = vmatprep.subr.mxu0 0.0
      %938 = vmatpush2.msra.mxu0 0.0
      %939 = vmatprep.subr.mxu0 0.0
      %940 = vmatpush2.msra.mxu0 0.0
      %941 = vmatprep.subr.mxu0 0.0
      %942 = vmatpush2.msra.mxu0 0.0
      %943 = vmatprep.subr.mxu0 0.0
      %944 = vmatpush2.msra.mxu0 0.0
      %945 = vmatprep.subr.mxu0 0.0
      %946 = vmatpush2.msra.mxu0 0.0
      %947 = vmatprep.subr.mxu0 0.0
      %948 = vmatpush2.msra.mxu0 0.0
      %949 = vmatprep.subr.mxu0 0.0
      %950 = vmatpush2.msra.mxu0 0.0
      %951 = vmatprep.subr.mxu0 0.0
      %952 = vmatpush2.msra.mxu0 0.0
      %953 = vmatprep.subr.mxu0 0.0
      %954 = vmatpush2.msra.mxu0 0.0
      %955 = vmatprep.subr.mxu0 0.0
      %956 = vmatpush2.msra.mxu0 0.0
      %957 = vmatprep.subr.mxu0 0.0
      %958 = vmatpush2.msra.mxu0 0.0
      %959 = vmatprep.subr.mxu0 0.0
      %960 = vmatpush2.msra.mxu0 0.0
      %961 = vmatprep.subr.mxu0 0.0
      %962 = vmatpush2.msra.mxu0 0.0
      %963 = vmatprep.mubr.f32.mxu0 0.0
      %964 = vmatmul.mubr.f32.gmra.mxu0 %v897
      %v965 = vpop.f32.mrf.mxu0
      %v966 = vadd.f32 %v889, %v965
      %v967 = vpop.f32.mrf.mxu0
      %968 = vdwg.mxu0
      %vm969 = vcmp.ge.s32.totalorder %v595, 16
      %vm970 = vcmp.lt.s32.totalorder %v595, 24
      %vm971 = vmand %vm969, %vm970
      %v972 = vsel %vm971, 1, 0
      %v973 = vcvt.s32.f32 %v972
      %v974 = vmul.f32 %v590, %v973
      %976 = vrot.lane.b32.xlu0 %v973, 32
      %v977 = vpop.permute.xlu0 %976
      %v979 = vmul.f32 %v590, %v977
      %981 = vrot.lane.b32.xlu0 %v979, 96
      %v982 = vpop.permute.xlu0 %981
      %v984 = vsel %vm480, %v974, 0
      %v986 = vsel %vm480, %v982, 0
      %988 = vmatprep.subr.mxu0 0.0
      %989 = vmatpush1.xpose.msra.mxu0 0.0
      %990 = vmatprep.subr.mxu0 0.0
      %991 = vmatpush1.xpose.msra.mxu0 0.0
      %992 = vmatprep.subr.mxu0 0.0
      %993 = vmatpush1.xpose.msra.mxu0 0.0
      %994 = vmatprep.subr.mxu0 0.0
      %995 = vmatpush1.xpose.msra.mxu0 0.0
      %996 = vmatprep.subr.mxu0 0.0
      %997 = vmatpush1.xpose.msra.mxu0 0.0
      %998 = vmatprep.subr.mxu0 0.0
      %999 = vmatpush1.xpose.msra.mxu0 0.0
      %1000 = vmatprep.subr.mxu0 0.0
      %1001 = vmatpush1.xpose.msra.mxu0 0.0
      %1002 = vmatprep.subr.mxu0 0.0
      %1003 = vmatpush1.xpose.msra.mxu0 0.0
      %1004 = vmatprep.subr.mxu0 0.0
      %1005 = vmatpush1.xpose.msra.mxu0 0.0
      %1006 = vmatprep.subr.mxu0 0.0
      %1007 = vmatpush1.xpose.msra.mxu0 0.0
      %1008 = vmatprep.subr.mxu0 0.0
      %1009 = vmatpush1.xpose.msra.mxu0 0.0
      %1010 = vmatprep.subr.mxu0 0.0
      %1011 = vmatpush1.xpose.msra.mxu0 0.0
      %1012 = vmatprep.subr.mxu0 0.0
      %1013 = vmatpush1.xpose.msra.mxu0 0.0
      %1014 = vmatprep.subr.mxu0 0.0
      %1015 = vmatpush1.xpose.msra.mxu0 0.0
      %1016 = vmatprep.subr.mxu0 0.0
      %1017 = vmatpush1.xpose.msra.mxu0 0.0
      %1018 = vmatprep.subr.mxu0 0.0
      %1019 = vmatpush1.xpose.msra.mxu0 %v986
      %1020 = vmatprep.subr.mxu0 0.0
      %1021 = vmatpush2.xpose.msra.mxu0 0.0
      %1022 = vmatprep.subr.mxu0 0.0
      %1023 = vmatpush2.xpose.msra.mxu0 0.0
      %1024 = vmatprep.subr.mxu0 0.0
      %1025 = vmatpush2.xpose.msra.mxu0 0.0
      %1026 = vmatprep.subr.mxu0 0.0
      %1027 = vmatpush2.xpose.msra.mxu0 0.0
      %1028 = vmatprep.subr.mxu0 0.0
      %1029 = vmatpush2.xpose.msra.mxu0 0.0
      %1030 = vmatprep.subr.mxu0 0.0
      %1031 = vmatpush2.xpose.msra.mxu0 0.0
      %1032 = vmatprep.subr.mxu0 0.0
      %1033 = vmatpush2.xpose.msra.mxu0 0.0
      %1034 = vmatprep.subr.mxu0 0.0
      %1035 = vmatpush2.xpose.msra.mxu0 0.0
      %1036 = vmatprep.subr.mxu0 0.0
      %1037 = vmatpush2.xpose.msra.mxu0 0.0
      %1038 = vmatprep.subr.mxu0 0.0
      %1039 = vmatpush2.xpose.msra.mxu0 0.0
      %1040 = vmatprep.subr.mxu0 0.0
      %1041 = vmatpush2.xpose.msra.mxu0 0.0
      %1042 = vmatprep.subr.mxu0 0.0
      %1043 = vmatpush2.xpose.msra.mxu0 0.0
      %1044 = vmatprep.subr.mxu0 0.0
      %1045 = vmatpush2.xpose.msra.mxu0 0.0
      %1046 = vmatprep.subr.mxu0 0.0
      %1047 = vmatpush2.xpose.msra.mxu0 0.0
      %1048 = vmatprep.subr.mxu0 0.0
      %1049 = vmatpush2.xpose.msra.mxu0 0.0
      %1050 = vmatprep.subr.mxu0 0.0
      %1051 = vmatpush2.xpose.msra.mxu0 0.0
      %1052 = vmatprep.mubr.f32.mxu0 0.0
      %1053 = vmatmul.mubr.f32.gmra.mxu0 %v984
      %v1054 = vpop.f32.mrf.mxu0
      %v1055 = vadd.f32 0.0, %v1054
      %v1056 = vpop.f32.mrf.mxu0
      %1057 = vdwg.mxu0
      %v1058 = vmul.f32 %v1055, 0.35355338
      %v1059 = vadd.f32 %v1058, %v690
      %v1060 = vsel %vm693, %v1059, -inf
      %1061 = vmax.xlane.f32.xlu0 %v1060
      %v1062 = vpop.xlane.xlu0 %1061
      %v1063 = vsub.f32 %v1059, %v1062
      %v1064 = vmul.f32 %v1063, 1.442695
      %v1065 = vpow.pop %v1064
      %v1066 = vsel %vm693, %v1065, 0.0
      %1067 = vadd.xlane.f32.xlu0 %v1066
      %v1068 = vpop.xlane.xlu0 %1067
      %v1069 = vrcp.pop %v1068
      %v1070 = vmul.f32 %v1065, %v1069
      %1071 = vrot.lane.b32.xlu0 %v973, 64
      %v1072 = vpop.permute.xlu0 %1071
      %v1074 = vmul.f32 %v590, %v1072
      %1076 = vrot.lane.b32.xlu0 %v1074, 64
      %v1077 = vpop.permute.xlu0 %1076
      %v1080 = vsel %vm693, %v1070, 0
      %1082 = vmatprep.subr.mxu0 0.0
      %1083 = vmatpush1.msra.mxu0 0.0
      %1084 = vmatprep.subr.mxu0 0.0
      %1085 = vmatpush1.msra.mxu0 0.0
      %1086 = vmatprep.subr.mxu0 0.0
      %1087 = vmatpush1.msra.mxu0 0.0
      %1088 = vmatprep.subr.mxu0 0.0
      %1089 = vmatpush1.msra.mxu0 0.0
      %1090 = vmatprep.subr.mxu0 0.0
      %1091 = vmatpush1.msra.mxu0 0.0
      %1092 = vmatprep.subr.mxu0 0.0
      %1093 = vmatpush1.msra.mxu0 0.0
      %1094 = vmatprep.subr.mxu0 0.0
      %1095 = vmatpush1.msra.mxu0 0.0
      %1096 = vmatprep.subr.mxu0 0.0
      %1097 = vmatpush1.msra.mxu0 0.0
      %1098 = vmatprep.subr.mxu0 0.0
      %1099 = vmatpush1.msra.mxu0 0.0
      %1100 = vmatprep.subr.mxu0 0.0
      %1101 = vmatpush1.msra.mxu0 0.0
      %1102 = vmatprep.subr.mxu0 0.0
      %1103 = vmatpush1.msra.mxu0 0.0
      %1104 = vmatprep.subr.mxu0 0.0
      %1105 = vmatpush1.msra.mxu0 0.0
      %1106 = vmatprep.subr.mxu0 0.0
      %1107 = vmatpush1.msra.mxu0 0.0
      %1108 = vmatprep.subr.mxu0 0.0
      %1109 = vmatpush1.msra.mxu0 0.0
      %1110 = vmatprep.subr.mxu0 0.0
      %1111 = vmatpush1.msra.mxu0 0.0
      %1112 = vmatprep.subr.mxu0 0.0
      %1113 = vmatpush1.msra.mxu0 %v1077
      %1114 = vmatprep.subr.mxu0 0.0
      %1115 = vmatpush2.msra.mxu0 0.0
      %1116 = vmatprep.subr.mxu0 0.0
      %1117 = vmatpush2.msra.mxu0 0.0
      %1118 = vmatprep.subr.mxu0 0.0
      %1119 = vmatpush2.msra.mxu0 0.0
      %1120 = vmatprep.subr.mxu0 0.0
      %1121 = vmatpush2.msra.mxu0 0.0
      %1122 = vmatprep.subr.mxu0 0.0
      %1123 = vmatpush2.msra.mxu0 0.0
      %1124 = vmatprep.subr.mxu0 0.0
      %1125 = vmatpush2.msra.mxu0 0.0
      %1126 = vmatprep.subr.mxu0 0.0
      %1127 = vmatpush2.msra.mxu0 0.0
      %1128 = vmatprep.subr.mxu0 0.0
      %1129 = vmatpush2.msra.mxu0 0.0
      %1130 = vmatprep.subr.mxu0 0.0
      %1131 = vmatpush2.msra.mxu0 0.0
      %1132 = vmatprep.subr.mxu0 0.0
      %1133 = vmatpush2.msra.mxu0 0.0
      %1134 = vmatprep.subr.mxu0 0.0
      %1135 = vmatpush2.msra.mxu0 0.0
      %1136 = vmatprep.subr.mxu0 0.0
      %1137 = vmatpush2.msra.mxu0 0.0
      %1138 = vmatprep.subr.mxu0 0.0
      %1139 = vmatpush2.msra.mxu0 0.0
      %1140 = vmatprep.subr.mxu0 0.0
      %1141 = vmatpush2.msra.mxu0 0.0
      %1142 = vmatprep.subr.mxu0 0.0
      %1143 = vmatpush2.msra.mxu0 0.0
      %1144 = vmatprep.subr.mxu0 0.0
      %1145 = vmatpush2.msra.mxu0 0.0
      %1146 = vmatprep.mubr.f32.mxu0 0.0
      %1147 = vmatmul.mubr.f32.gmra.mxu0 %v1080
      %v1148 = vpop.f32.mrf.mxu0
      %v1149 = vadd.f32 0.0, %v1148
      %v1150 = vpop.f32.mrf.mxu0
      %1151 = vdwg.mxu0
      %v1152 = vadd.f32 %v966, %v1149
      %vm1153 = vcmp.ge.s32.totalorder %v595, 24
      %vm1154 = vcmp.lt.s32.totalorder %v595, 32
      %vm1155 = vmand %vm1153, %vm1154
      %v1156 = vsel %vm1155, 1, 0
      %v1157 = vcvt.s32.f32 %v1156
      %v1158 = vmul.f32 %v590, %v1157
      %1160 = vrot.lane.b32.xlu0 %v1157, 32
      %v1161 = vpop.permute.xlu0 %1160
      %v1163 = vmul.f32 %v590, %v1161
      %1165 = vrot.lane.b32.xlu0 %v1163, 96
      %v1166 = vpop.permute.xlu0 %1165
      %v1168 = vsel %vm480, %v1158, 0
      %v1170 = vsel %vm480, %v1166, 0
      %1172 = vmatprep.subr.mxu0 0.0
      %1173 = vmatpush1.xpose.msra.mxu0 0.0
      %1174 = vmatprep.subr.mxu0 0.0
      %1175 = vmatpush1.xpose.msra.mxu0 0.0
      %1176 = vmatprep.subr.mxu0 0.0
      %1177 = vmatpush1.xpose.msra.mxu0 0.0
      %1178 = vmatprep.subr.mxu0 0.0
      %1179 = vmatpush1.xpose.msra.mxu0 0.0
      %1180 = vmatprep.subr.mxu0 0.0
      %1181 = vmatpush1.xpose.msra.mxu0 0.0
      %1182 = vmatprep.subr.mxu0 0.0
      %1183 = vmatpush1.xpose.msra.mxu0 0.0
      %1184 = vmatprep.subr.mxu0 0.0
      %1185 = vmatpush1.xpose.msra.mxu0 0.0
      %1186 = vmatprep.subr.mxu0 0.0
      %1187 = vmatpush1.xpose.msra.mxu0 0.0
      %1188 = vmatprep.subr.mxu0 0.0
      %1189 = vmatpush1.xpose.msra.mxu0 0.0
      %1190 = vmatprep.subr.mxu0 0.0
      %1191 = vmatpush1.xpose.msra.mxu0 0.0
      %1192 = vmatprep.subr.mxu0 0.0
      %1193 = vmatpush1.xpose.msra.mxu0 0.0
      %1194 = vmatprep.subr.mxu0 0.0
      %1195 = vmatpush1.xpose.msra.mxu0 0.0
      %1196 = vmatprep.subr.mxu0 0.0
      %1197 = vmatpush1.xpose.msra.mxu0 0.0
      %1198 = vmatprep.subr.mxu0 0.0
      %1199 = vmatpush1.xpose.msra.mxu0 0.0
      %1200 = vmatprep.subr.mxu0 0.0
      %1201 = vmatpush1.xpose.msra.mxu0 0.0
      %1202 = vmatprep.subr.mxu0 0.0
      %1203 = vmatpush1.xpose.msra.mxu0 %v1170
      %1204 = vmatprep.subr.mxu0 0.0
      %1205 = vmatpush2.xpose.msra.mxu0 0.0
      %1206 = vmatprep.subr.mxu0 0.0
      %1207 = vmatpush2.xpose.msra.mxu0 0.0
      %1208 = vmatprep.subr.mxu0 0.0
      %1209 = vmatpush2.xpose.msra.mxu0 0.0
      %1210 = vmatprep.subr.mxu0 0.0
      %1211 = vmatpush2.xpose.msra.mxu0 0.0
      %1212 = vmatprep.subr.mxu0 0.0
      %1213 = vmatpush2.xpose.msra.mxu0 0.0
      %1214 = vmatprep.subr.mxu0 0.0
      %1215 = vmatpush2.xpose.msra.mxu0 0.0
      %1216 = vmatprep.subr.mxu0 0.0
      %1217 = vmatpush2.xpose.msra.mxu0 0.0
      %1218 = vmatprep.subr.mxu0 0.0
      %1219 = vmatpush2.xpose.msra.mxu0 0.0
      %1220 = vmatprep.subr.mxu0 0.0
      %1221 = vmatpush2.xpose.msra.mxu0 0.0
      %1222 = vmatprep.subr.mxu0 0.0
      %1223 = vmatpush2.xpose.msra.mxu0 0.0
      %1224 = vmatprep.subr.mxu0 0.0
      %1225 = vmatpush2.xpose.msra.mxu0 0.0
      %1226 = vmatprep.subr.mxu0 0.0
      %1227 = vmatpush2.xpose.msra.mxu0 0.0
      %1228 = vmatprep.subr.mxu0 0.0
      %1229 = vmatpush2.xpose.msra.mxu0 0.0
      %1230 = vmatprep.subr.mxu0 0.0
      %1231 = vmatpush2.xpose.msra.mxu0 0.0
      %1232 = vmatprep.subr.mxu0 0.0
      %1233 = vmatpush2.xpose.msra.mxu0 0.0
      %1234 = vmatprep.subr.mxu0 0.0
      %1235 = vmatpush2.xpose.msra.mxu0 0.0
      %1236 = vmatprep.mubr.f32.mxu0 0.0
      %1237 = vmatmul.mubr.f32.gmra.mxu0 %v1168
      %v1238 = vpop.f32.mrf.mxu0
      %v1239 = vadd.f32 0.0, %v1238
      %v1240 = vpop.f32.mrf.mxu0
      %1241 = vdwg.mxu0
      %v1242 = vmul.f32 %v1239, 0.35355338
      %v1243 = vadd.f32 %v1242, %v690
      %v1244 = vsel %vm693, %v1243, -inf
      %1245 = vmax.xlane.f32.xlu0 %v1244
      %v1246 = vpop.xlane.xlu0 %1245
      %v1247 = vsub.f32 %v1243, %v1246
      %v1248 = vmul.f32 %v1247, 1.442695
      %v1249 = vpow.pop %v1248
      %v1250 = vsel %vm693, %v1249, 0.0
      %1251 = vadd.xlane.f32.xlu0 %v1250
      %v1252 = vpop.xlane.xlu0 %1251
      %v1253 = vrcp.pop %v1252
      %v1254 = vmul.f32 %v1249, %v1253
      %1255 = vrot.lane.b32.xlu0 %v1157, 64
      %v1256 = vpop.permute.xlu0 %1255
      %v1258 = vmul.f32 %v590, %v1256
      %1260 = vrot.lane.b32.xlu0 %v1258, 64
      %v1261 = vpop.permute.xlu0 %1260
      %v1264 = vsel %vm693, %v1254, 0
      %1266 = vmatprep.subr.mxu0 0.0
      %1267 = vmatpush1.msra.mxu0 0.0
      %1268 = vmatprep.subr.mxu0 0.0
      %1269 = vmatpush1.msra.mxu0 0.0
      %1270 = vmatprep.subr.mxu0 0.0
      %1271 = vmatpush1.msra.mxu0 0.0
      %1272 = vmatprep.subr.mxu0 0.0
      %1273 = vmatpush1.msra.mxu0 0.0
      %1274 = vmatprep.subr.mxu0 0.0
      %1275 = vmatpush1.msra.mxu0 0.0
      %1276 = vmatprep.subr.mxu0 0.0
      %1277 = vmatpush1.msra.mxu0 0.0
      %1278 = vmatprep.subr.mxu0 0.0
      %1279 = vmatpush1.msra.mxu0 0.0
      %1280 = vmatprep.subr.mxu0 0.0
      %1281 = vmatpush1.msra.mxu0 0.0
      %1282 = vmatprep.subr.mxu0 0.0
      %1283 = vmatpush1.msra.mxu0 0.0
      %1284 = vmatprep.subr.mxu0 0.0
      %1285 = vmatpush1.msra.mxu0 0.0
      %1286 = vmatprep.subr.mxu0 0.0
      %1287 = vmatpush1.msra.mxu0 0.0
      %1288 = vmatprep.subr.mxu0 0.0
      %1289 = vmatpush1.msra.mxu0 0.0
      %1290 = vmatprep.subr.mxu0 0.0
      %1291 = vmatpush1.msra.mxu0 0.0
      %1292 = vmatprep.subr.mxu0 0.0
      %1293 = vmatpush1.msra.mxu0 0.0
      %1294 = vmatprep.subr.mxu0 0.0
      %1295 = vmatpush1.msra.mxu0 0.0
      %1296 = vmatprep.subr.mxu0 0.0
      %1297 = vmatpush1.msra.mxu0 %v1261
      %1298 = vmatprep.subr.mxu0 0.0
      %1299 = vmatpush2.msra.mxu0 0.0
      %1300 = vmatprep.subr.mxu0 0.0
      %1301 = vmatpush2.msra.mxu0 0.0
      %1302 = vmatprep.subr.mxu0 0.0
      %1303 = vmatpush2.msra.mxu0 0.0
      %1304 = vmatprep.subr.mxu0 0.0
      %1305 = vmatpush2.msra.mxu0 0.0
      %1306 = vmatprep.subr.mxu0 0.0
      %1307 = vmatpush2.msra.mxu0 0.0
      %1308 = vmatprep.subr.mxu0 0.0
      %1309 = vmatpush2.msra.mxu0 0.0
      %1310 = vmatprep.subr.mxu0 0.0
      %1311 = vmatpush2.msra.mxu0 0.0
      %1312 = vmatprep.subr.mxu0 0.0
      %1313 = vmatpush2.msra.mxu0 0.0
      %1314 = vmatprep.subr.mxu0 0.0
      %1315 = vmatpush2.msra.mxu0 0.0
      %1316 = vmatprep.subr.mxu0 0.0
      %1317 = vmatpush2.msra.mxu0 0.0
      %1318 = vmatprep.subr.mxu0 0.0
      %1319 = vmatpush2.msra.mxu0 0.0
      %1320 = vmatprep.subr.mxu0 0.0
      %1321 = vmatpush2.msra.mxu0 0.0
      %1322 = vmatprep.subr.mxu0 0.0
      %1323 = vmatpush2.msra.mxu0 0.0
      %1324 = vmatprep.subr.mxu0 0.0
      %1325 = vmatpush2.msra.mxu0 0.0
      %1326 = vmatprep.subr.mxu0 0.0
      %1327 = vmatpush2.msra.mxu0 0.0
      %1328 = vmatprep.subr.mxu0 0.0
      %1329 = vmatpush2.msra.mxu0 0.0
      %1330 = vmatprep.mubr.f32.mxu0 0.0
      %1331 = vmatmul.mubr.f32.gmra.mxu0 %v1264
      %v1332 = vpop.f32.mrf.mxu0
      %v1333 = vadd.f32 0.0, %v1332
      %v1334 = vpop.f32.mrf.mxu0
      %1335 = vdwg.mxu0
      %v1336 = vadd.f32 %v1152, %v1333
      %v1337 = vld [vmem:[%s6] sm:$0xff]
      %v1338 = vld [vmem:[%s6 + $0x8] sm:$0xff]
      %v1339 = vld [vmem:[%s6 + $0x10] sm:$0xff]
      %v1340 = vld [vmem:[%s6 + $0x18] sm:$0xff]
      %v1341 = vld [vmem:[%s7] sm:$0x1]
      %v1343 = vlaneseq
      %v1344 = vshrl.u32 %v1343, 7
      %v1345 = vsub.s32 0, %v1344
      %v1346 = vrot.slane %v1341, %v1345
      %v1349 = vsel %vm480, %v1336, 0
      %1351 = vmatprep.subr.mxu0 0.0
      %1352 = vmatpush1.msra.mxu0 0.0
      %1353 = vmatprep.subr.mxu0 0.0
      %1354 = vmatpush1.msra.mxu0 0.0
      %1355 = vmatprep.subr.mxu0 0.0
      %1356 = vmatpush1.msra.mxu0 0.0
      %1357 = vmatprep.subr.mxu0 0.0
      %1358 = vmatpush1.msra.mxu0 0.0
      %1359 = vmatprep.subr.mxu0 0.0
      %1360 = vmatpush1.msra.mxu0 0.0
      %1361 = vmatprep.subr.mxu0 0.0
      %1362 = vmatpush1.msra.mxu0 0.0
      %1363 = vmatprep.subr.mxu0 0.0
      %1364 = vmatpush1.msra.mxu0 0.0
      %1365 = vmatprep.subr.mxu0 0.0
      %1366 = vmatpush1.msra.mxu0 0.0
      %1367 = vmatprep.subr.mxu0 0.0
      %1368 = vmatpush1.msra.mxu0 0.0
      %1369 = vmatprep.subr.mxu0 0.0
      %1370 = vmatpush1.msra.mxu0 0.0
      %1371 = vmatprep.subr.mxu0 0.0
      %1372 = vmatpush1.msra.mxu0 0.0
      %1373 = vmatprep.subr.mxu0 0.0
      %1374 = vmatpush1.msra.mxu0 0.0
      %1375 = vmatprep.subr.mxu0 0.0
      %1376 = vmatpush1.msra.mxu0 %v1340
      %1377 = vmatprep.subr.mxu0 0.0
      %1378 = vmatpush1.msra.mxu0 %v1339
      %1379 = vmatprep.subr.mxu0 0.0
      %1380 = vmatpush1.msra.mxu0 %v1338
      %1381 = vmatprep.subr.mxu0 0.0
      %1382 = vmatpush1.msra.mxu0 %v1337
      %1383 = vmatprep.subr.mxu0 0.0
      %1384 = vmatpush2.msra.mxu0 0.0
      %1385 = vmatprep.subr.mxu0 0.0
      %1386 = vmatpush2.msra.mxu0 0.0
      %1387 = vmatprep.subr.mxu0 0.0
      %1388 = vmatpush2.msra.mxu0 0.0
      %1389 = vmatprep.subr.mxu0 0.0
      %1390 = vmatpush2.msra.mxu0 0.0
      %1391 = vmatprep.subr.mxu0 0.0
      %1392 = vmatpush2.msra.mxu0 0.0
      %1393 = vmatprep.subr.mxu0 0.0
      %1394 = vmatpush2.msra.mxu0 0.0
      %1395 = vmatprep.subr.mxu0 0.0
      %1396 = vmatpush2.msra.mxu0 0.0
      %1397 = vmatprep.subr.mxu0 0.0
      %1398 = vmatpush2.msra.mxu0 0.0
      %1399 = vmatprep.subr.mxu0 0.0
      %1400 = vmatpush2.msra.mxu0 0.0
      %1401 = vmatprep.subr.mxu0 0.0
      %1402 = vmatpush2.msra.mxu0 0.0
      %1403 = vmatprep.subr.mxu0 0.0
      %1404 = vmatpush2.msra.mxu0 0.0
      %1405 = vmatprep.subr.mxu0 0.0
      %1406 = vmatpush2.msra.mxu0 0.0
      %1407 = vmatprep.subr.mxu0 0.0
      %1408 = vmatpush2.msra.mxu0 0.0
      %1409 = vmatprep.subr.mxu0 0.0
      %1410 = vmatpush2.msra.mxu0 0.0
      %1411 = vmatprep.subr.mxu0 0.0
      %1412 = vmatpush2.msra.mxu0 0.0
      %1413 = vmatprep.subr.mxu0 0.0
      %1414 = vmatpush2.msra.mxu0 0.0
      %1415 = vmatprep.mubr.f32.mxu0 0.0
      %1416 = vmatmul.mubr.f32.gmra.mxu0 %v1349
      %v1417 = vpop.f32.mrf.mxu0
      %v1418 = vadd.f32 %v1346, %v1417
      %v1419 = vpop.f32.mrf.mxu0
      %1420 = vdwg.mxu0
      %v1421 = vadd.f32 %v477, %v1418
      %v1422 = vld [vmem:[%s8] sm:$0x1]
      %v1423 = vld [vmem:[%s9] sm:$0x1]
      %v1424 = vsel %vm480, %v1421, 0.0
      %1425 = vadd.xlane.f32.xlu0 %v1424
      %v1426 = vpop.xlane.xlu0 %1425
      %v1427 = vmul.f32 %v1426, %v484
      %v1428 = vsub.f32 %v1421, %v1427
      %v1429 = vmul.f32 %v1428, %v1428
      %v1430 = vsel %vm480, %v1429, 0.0
      %1431 = vadd.xlane.f32.xlu0 %v1430
      %v1432 = vpop.xlane.xlu0 %1431
      %v1433 = vmul.f32 %v1432, %v484
      %v1434 = vadd.f32 %v1433, 1e-05
      %v1435 = vrsqrt.pop %v1434
      %v1436 = vmul.f32 %v1428, %v1435
      %v1438 = vlaneseq
      %v1439 = vshrl.u32 %v1438, 7
      %v1440 = vsub.s32 0, %v1439
      %v1441 = vrot.slane %v1422, %v1440
      %v1443 = vmul.f32 %v1436, %v1441
      %v1445 = vlaneseq
      %v1446 = vshrl.u32 %v1445, 7
      %v1447 = vsub.s32 0, %v1446
      %v1448 = vrot.slane %v1423, %v1447
      %v1450 = vadd.f32 %v1443, %v1448
      %v1451 = vld [vmem:[%s10] sm:$0xff]
      %v1452 = vld [vmem:[%s10 + $0x8] sm:$0xff]
      %v1453 = vld [vmem:[%s10 + $0x10] sm:$0xff]
      %v1454 = vld [vmem:[%s10 + $0x18] sm:$0xff]
      %v1455 = vld [vmem:[%s11] sm:$0x1]
      %v1457 = vlaneseq
      %v1458 = vshrl.u32 %v1457, 7
      %v1459 = vsub.s32 0, %v1458
      %v1460 = vrot.slane %v1455, %v1459
      %v1463 = vsel %vm480, %v1450, 0
      %1465 = vmatprep.subr.mxu0 0.0
      %1466 = vmatpush1.msra.mxu0 0.0
      %1467 = vmatprep.subr.mxu0 0.0
      %1468 = vmatpush1.msra.mxu0 0.0
      %1469 = vmatprep.subr.mxu0 0.0
      %1470 = vmatpush1.msra.mxu0 0.0
      %1471 = vmatprep.subr.mxu0 0.0
      %1472 = vmatpush1.msra.mxu0 0.0
      %1473 = vmatprep.subr.mxu0 0.0
      %1474 = vmatpush1.msra.mxu0 0.0
      %1475 = vmatprep.subr.mxu0 0.0
      %1476 = vmatpush1.msra.mxu0 0.0
      %1477 = vmatprep.subr.mxu0 0.0
      %1478 = vmatpush1.msra.mxu0 0.0
      %1479 = vmatprep.subr.mxu0 0.0
      %1480 = vmatpush1.msra.mxu0 0.0
      %1481 = vmatprep.subr.mxu0 0.0
      %1482 = vmatpush1.msra.mxu0 0.0
      %1483 = vmatprep.subr.mxu0 0.0
      %1484 = vmatpush1.msra.mxu0 0.0
      %1485 = vmatprep.subr.mxu0 0.0
      %1486 = vmatpush1.msra.mxu0 0.0
      %1487 = vmatprep.subr.mxu0 0.0
      %1488 = vmatpush1.msra.mxu0 0.0
      %1489 = vmatprep.subr.mxu0 0.0
      %1490 = vmatpush1.msra.mxu0 %v1454
      %1491 = vmatprep.subr.mxu0 0.0
      %1492 = vmatpush1.msra.mxu0 %v1453
      %1493 = vmatprep.subr.mxu0 0.0
      %1494 = vmatpush1.msra.mxu0 %v1452
      %1495 = vmatprep.subr.mxu0 0.0
      %1496 = vmatpush1.msra.mxu0 %v1451
      %1497 = vmatprep.subr.mxu0 0.0
      %1498 = vmatpush2.msra.mxu0 0.0
      %1499 = vmatprep.subr.mxu0 0.0
      %1500 = vmatpush2.msra.mxu0 0.0
      %1501 = vmatprep.subr.mxu0 0.0
      %1502 = vmatpush2.msra.mxu0 0.0
      %1503 = vmatprep.subr.mxu0 0.0
      %1504 = vmatpush2.msra.mxu0 0.0
      %1505 = vmatprep.subr.mxu0 0.0
      %1506 = vmatpush2.msra.mxu0 0.0
      %1507 = vmatprep.subr.mxu0 0.0
      %1508 = vmatpush2.msra.mxu0 0.0
      %1509 = vmatprep.subr.mxu0 0.0
      %1510 = vmatpush2.msra.mxu0 0.0
      %1511 = vmatprep.subr.mxu0 0.0
      %1512 = vmatpush2.msra.mxu0 0.0
      %1513 = vmatprep.subr.mxu0 0.0
      %1514 = vmatpush2.msra.mxu0 0.0
      %1515 = vmatprep.subr.mxu0 0.0
      %1516 = vmatpush2.msra.mxu0 0.0
      %1517 = vmatprep.subr.mxu0 0.0
      %1518 = vmatpush2.msra.mxu0 0.0
      %1519 = vmatprep.subr.mxu0 0.0
      %1520 = vmatpush2.msra.mxu0 0.0
      %1521 = vmatprep.subr.mxu0 0.0
      %1522 = vmatpush2.msra.mxu0 0.0
      %1523 = vmatprep.subr.mxu0 0.0
      %1524 = vmatpush2.msra.mxu0 0.0
      %1525 = vmatprep.subr.mxu0 0.0
      %1526 = vmatpush2.msra.mxu0 0.0
      %1527 = vmatprep.subr.mxu0 0.0
      %1528 = vmatpush2.msra.mxu0 0.0
      %1529 = vmatprep.mubr.f32.mxu0 0.0
      %1530 = vmatmul.mubr.f32.gmra.mxu0 %v1463
      %v1531 = vpop.f32.mrf.mxu0
      %v1532 = vadd.f32 %v1460, %v1531
      %v1533 = vpop.f32.mrf.mxu0
      %1534 = vdwg.mxu0
      %v1535 = vmax.f32 %v1532, 0.0
      %v1536 = vld [vmem:[%s12] sm:$0xff]
      %v1537 = vld [vmem:[%s12 + $0x8] sm:$0xff]
      %v1538 = vld [vmem:[%s12 + $0x10] sm:$0xff]
      %v1539 = vld [vmem:[%s12 + $0x18] sm:$0xff]
      %v1540 = vld [vmem:[%s13] sm:$0x1]
      %v1542 = vlaneseq
      %v1543 = vshrl.u32 %v1542, 7
      %v1544 = vsub.s32 0, %v1543
      %v1545 = vrot.slane %v1540, %v1544
      %v1548 = vsel %vm480, %v1535, 0
      %1550 = vmatprep.subr.mxu0 0.0
      %1551 = vmatpush1.msra.mxu0 0.0
      %1552 = vmatprep.subr.mxu0 0.0
      %1553 = vmatpush1.msra.mxu0 0.0
      %1554 = vmatprep.subr.mxu0 0.0
      %1555 = vmatpush1.msra.mxu0 0.0
      %1556 = vmatprep.subr.mxu0 0.0
      %1557 = vmatpush1.msra.mxu0 0.0
      %1558 = vmatprep.subr.mxu0 0.0
      %1559 = vmatpush1.msra.mxu0 0.0
      %1560 = vmatprep.subr.mxu0 0.0
      %1561 = vmatpush1.msra.mxu0 0.0
      %1562 = vmatprep.subr.mxu0 0.0
      %1563 = vmatpush1.msra.mxu0 0.0
      %1564 = vmatprep.subr.mxu0 0.0
      %1565 = vmatpush1.msra.mxu0 0.0
      %1566 = vmatprep.subr.mxu0 0.0
      %1567 = vmatpush1.msra.mxu0 0.0
      %1568 = vmatprep.subr.mxu0 0.0
      %1569 = vmatpush1.msra.mxu0 0.0
      %1570 = vmatprep.subr.mxu0 0.0
      %1571 = vmatpush1.msra.mxu0 0.0
      %1572 = vmatprep.subr.mxu0 0.0
      %1573 = vmatpush1.msra.mxu0 0.0
      %1574 = vmatprep.subr.mxu0 0.0
      %1575 = vmatpush1.msra.mxu0 %v1539
      %1576 = vmatprep.subr.mxu0 0.0
      %1577 = vmatpush1.msra.mxu0 %v1538
      %1578 = vmatprep.subr.mxu0 0.0
      %1579 = vmatpush1.msra.mxu0 %v1537
      %1580 = vmatprep.subr.mxu0 0.0
      %1581 = vmatpush1.msra.mxu0 %v1536
      %1582 = vmatprep.subr.mxu0 0.0
      %1583 = vmatpush2.msra.mxu0 0.0
      %1584 = vmatprep.subr.mxu0 0.0
      %1585 = vmatpush2.msra.mxu0 0.0
      %1586 = vmatprep.subr.mxu0 0.0
      %1587 = vmatpush2.msra.mxu0 0.0
      %1588 = vmatprep.subr.mxu0 0.0
      %1589 = vmatpush2.msra.mxu0 0.0
      %1590 = vmatprep.subr.mxu0 0.0
      %1591 = vmatpush2.msra.mxu0 0.0
      %1592 = vmatprep.subr.mxu0 0.0
      %1593 = vmatpush2.msra.mxu0 0.0
      %1594 = vmatprep.subr.mxu0 0.0
      %1595 = vmatpush2.msra.mxu0 0.0
      %1596 = vmatprep.subr.mxu0 0.0
      %1597 = vmatpush2.msra.mxu0 0.0
      %1598 = vmatprep.subr.mxu0 0.0
      %1599 = vmatpush2.msra.mxu0 0.0
      %1600 = vmatprep.subr.mxu0 0.0
      %1601 = vmatpush2.msra.mxu0 0.0
      %1602 = vmatprep.subr.mxu0 0.0
      %1603 = vmatpush2.msra.mxu0 0.0
      %1604 = vmatprep.subr.mxu0 0.0
      %1605 = vmatpush2.msra.mxu0 0.0
      %1606 = vmatprep.subr.mxu0 0.0
      %1607 = vmatpush2.msra.mxu0 0.0
      %1608 = vmatprep.subr.mxu0 0.0
      %1609 = vmatpush2.msra.mxu0 0.0
      %1610 = vmatprep.subr.mxu0 0.0
      %1611 = vmatpush2.msra.mxu0 0.0
      %1612 = vmatprep.subr.mxu0 0.0
      %1613 = vmatpush2.msra.mxu0 0.0
      %1614 = vmatprep.mubr.f32.mxu0 0.0
      %1615 = vmatmul.mubr.f32.gmra.mxu0 %v1548
      %v1616 = vpop.f32.mrf.mxu0
      %v1617 = vadd.f32 %v1545, %v1616
      %v1618 = vpop.f32.mrf.mxu0
      %1619 = vdwg.mxu0
      %v1620 = vadd.f32 %v1421, %v1617
      %1621 = vst.msk [vmem:[%s476] sm:$0xff] %vm480, %v1620
      %p1622 = scmp.lt.s32.totalorder %s25, 5
      %s1623 = scalar_select %p1622, %s25, 5
      %s1624 = smul.addr %s1623, 8
      %s1625 = scalar_lea.vmem %s14, %s1624
      // Predicated region
      $region77: #{_lambda_.6} parent=75 // pred_check
        %p1626 = pneg %p347
      $region78: #{_lambda_.6} parent=75 // pred_check_branch
        %1628 = sbr.rel (%p1626) target = $region80
      $region79: #{_lambda_.6} parent=75 // pred_region
        _
      $region80: #{_lambda_.6} parent=75 // pred_fallthru
        _
    $region76: #{_lambda_.6} parent=5 // pred_fallthru
      _
    %p1629 = scmp.le.s32.totalorder 2, %s20
    // Predicated region
    $region81: #{_lambda_.6} parent=5 // pred_check
      %p1630 = pneg %p1629
    $region82: #{_lambda_.6} parent=5 // pred_check_branch
      %1632 = sbr.rel (%p1630) target = $region84
    $region83: #{_lambda_.6} parent=5 // pred_region
      %s1633 = ssub.s32 %s20, 2
      // Predicated region
      $region85: #{_lambda_.6} parent=83 // pred_check
        %p1634 = pneg %p353
      $region86: #{_lambda_.6} parent=83 // pred_check_branch
        %1636 = sbr.rel (%p1634) target = $region88
      $region87: #{_lambda_.6} parent=83 // pred_region
        %p1637 = scmp.lt.s32.totalorder %s26, 5
        %s1638 = scalar_select %p1637, %s26, 5
        %s1639 = smul.addr %s1638, 8
        %s1640 = scalar_lea.vmem %s14, %s1639
      $region88: #{_lambda_.6} parent=83 // pred_fallthru
        _
    $region84: #{_lambda_.6} parent=5 // pred_fallthru
      _
  $region6: #{_lambda_.6} parent=0 // loop_footer
    %s24 = sadd.s32 1, %s20
  $region7: #{_lambda_.6} parent=0 // loop_footer_branch
    %19 = sbr.rel target = $region3
  $region8: #{_lambda_.6} parent=0 // loop_exit
    _

// kernel: _lambda_.8
$region0: #{_lambda_.8}
  #allocation0 [shape = 'u32[]', space=smem, size = 0x4, offset = 0x4, fixed_abs, tag = 'smem constant byte address 0x4 - core index']
  #allocation1 [shape = 'u32[144,128]{1,0:T(1,128)}', space=vmem, size = 0x12000, scoped, tag = 'internal scratch']
  %s0 = inlined_call_operand.vmem [shape: f32[6,2,8,32], index: 0, kind: input, shape index: {}]
  %s1 = inlined_call_operand.vmem [shape: f32[6,2,8,32], index: 1, kind: input, shape index: {}]
  %s2 = inlined_call_operand.vmem [shape: f32[6,2,1,8], index: 2, kind: input, shape index: {}]
  %s3 = inlined_call_operand.vmem [shape: f32[6,1,32], index: 3, kind: input, shape index: {}]
  %s4 = inlined_call_operand.vmem [shape: f32[6,1,32], index: 4, kind: input, shape index: {}]
  %s5 = inlined_call_operand.vmem [shape: f32[6,1,32], index: 5, kind: input, shape index: {}]
  %s6 = inlined_call_operand.vmem [shape: f32[6,1,32], index: 6, kind: input, shape index: {}]
  %s7 = inlined_call_operand.vmem [shape: f32[6,32,32], index: 7, kind: input, shape index: {}]
  %s8 = inlined_call_operand.vmem [shape: f32[6,1,32], index: 8, kind: input, shape index: {}]
  %s9 = inlined_call_operand.vmem [shape: f32[6,32,64], index: 9, kind: input, shape index: {}]
  %s10 = inlined_call_operand.vmem [shape: f32[6,1,64], index: 10, kind: input, shape index: {}]
  %s11 = inlined_call_operand.vmem [shape: f32[6,32,32], index: 11, kind: input, shape index: {}]
  %s12 = inlined_call_operand.vmem [shape: f32[6,1,32], index: 12, kind: input, shape index: {}]
  %s13 = inlined_call_operand.vmem [shape: f32[6,1,32], index: 13, kind: input, shape index: {}]
  %s14 = inlined_call_operand.vmem [shape: f32[6,1,32], index: 14, kind: input, shape index: {}]
  %s15 = inlined_call_operand.vmem [shape: f32[6,32,32], index: 15, kind: input, shape index: {}]
  %s16 = inlined_call_operand.vmem [shape: f32[6,1,32], index: 16, kind: input, shape index: {}]
  %s17 = inlined_call_operand.vmem [shape: f32[6,32,32], index: 17, kind: input, shape index: {}]
  %s18 = inlined_call_operand.vmem [shape: f32[6,1,32], index: 18, kind: input, shape index: {}]
  %s19 = inlined_call_operand.vmem [shape: f32[6,2,8,32], index: 19, kind: output, shape index: {}]
  %s20 = sld [smem:[#allocation0]]
  $region109: #{_lambda_.8} parent=0
    _
  %s22 = ssub.s32 1, %s20
  %s23 = scalar_select 0, %s22, %s20
  loop: start=0, step=1, limit=14
  $region2: #{_lambda_.8} parent=0 // loop_pre_header
    _
  $region3: #{_lambda_.8} parent=0 // loop_header
    %s25 = sphi 0, %s29
    %p26 = scmp.ge.s32.totalorder %s25, 14
    %s32 = sphi 0, %s44
    %s33 = sphi 0, %s40
    %s34 = sphi 0, %s32
    %s35 = sphi 0, %s33
    %s36 = sphi 0, %s34
    %s37 = sphi 0, %s35
    %s49 = sphi 0, %s51
    %s52 = sphi 0, %s49
    %s53 = sphi 0, %s52
    %s69 = sphi 0, %s53
    %s77 = sphi 0, %s79
    %s80 = sphi 0, %s77
    %s81 = sphi 0, %s80
    %s97 = sphi 0, %s81
    %s105 = sphi 0, %s107
    %s108 = sphi 0, %s105
    %s109 = sphi 0, %s108
    %s125 = sphi 0, %s109
    %s131 = sphi 0, %s133
    %s134 = sphi 0, %s131
    %s135 = sphi 0, %s134
    %s151 = sphi 0, %s135
    %s157 = sphi 0, %s159
    %s160 = sphi 0, %s157
    %s161 = sphi 0, %s160
    %s177 = sphi 0, %s161
    %s183 = sphi 0, %s185
    %s186 = sphi 0, %s183
    %s187 = sphi 0, %s186
    %s203 = sphi 0, %s187
    %s209 = sphi 0, %s211
    %s212 = sphi 0, %s209
    %s213 = sphi 0, %s212
    %s229 = sphi 0, %s213
    %s235 = sphi 0, %s237
    %s238 = sphi 0, %s235
    %s239 = sphi 0, %s238
    %s255 = sphi 0, %s239
    %s261 = sphi 0, %s263
    %s264 = sphi 0, %s261
    %s265 = sphi 0, %s264
    %s281 = sphi 0, %s265
    %s287 = sphi 0, %s289
    %s290 = sphi 0, %s287
    %s291 = sphi 0, %s290
    %s307 = sphi 0, %s291
    %s313 = sphi 0, %s315
    %s316 = sphi 0, %s313
    %s317 = sphi 0, %s316
    %s333 = sphi 0, %s317
    %s339 = sphi 0, %s341
    %s342 = sphi 0, %s339
    %s343 = sphi 0, %s342
    %s359 = sphi 0, %s343
    %s365 = sphi 0, %s367
    %s368 = sphi 0, %s365
    %s369 = sphi 0, %s368
    %s385 = sphi 0, %s369
    %s391 = sphi 0, %s393
    %s394 = sphi 0, %s391
    %s395 = sphi 0, %s394
    %s411 = sphi 0, %s395
    %s417 = sphi 0, %s419
    %s420 = sphi 0, %s417
    %s421 = sphi 0, %s420
    %s437 = sphi 0, %s421
    %s443 = sphi 0, %s445
    %s446 = sphi 0, %s443
    %s447 = sphi 0, %s446
    %s463 = sphi 0, %s447
    %s469 = sphi 0, %s471
    %s472 = sphi 0, %s469
    %s473 = sphi 0, %s472
    %s489 = sphi 0, %s473
    %s495 = sphi 0, %s497
    %s498 = sphi 0, %s495
    %s499 = sphi 0, %s498
    %s515 = sphi 0, %s499
    %s521 = sphi 0, %s523
    %s524 = sphi 0, %s521
    %s525 = sphi 0, %s524
    %s541 = sphi 0, %s525
    %s549 = sphi 0, %s551
    %s552 = sphi 0, %s549
    %s553 = sphi 0, %s552
    %s569 = sphi 0, %s553
  $region4: #{_lambda_.8} parent=0 // loop_header_branch
    %28 = sbr.rel (%p26) target = $region8
  $region5: #{_lambda_.8} parent=0 // loop_body
    %s30 = ssub.s32 %s25, 1
    %s31 = ssub.s32 %s25, 2
    %s38 = sadd.s32 1, %s33
    %p39 = scmp.ge.s32.totalorder %s38, 2
    %s40 = scalar_select %p39, 0, %s38
    %s41 = sadd.s32 1, %s32
    %s42 = scalar_select %p39, %s41, %s32
    %p43 = scmp.ge.s32.totalorder %s42, 6
    %s44 = scalar_select %p43, 0, %s42
    %s45 = ssub.s32 %s32, %s44
    %s46 = ssub.s32 %s33, %s40
    %s47 = sor.u32 %s45, %s46
    %p48 = scmp.eq.s32.totalorder %s47, 0
    %s50 = sadd.s32 %s49, 1
    %s51 = scalar_select %p48, %s49, %s50
    %p54 = pneg %p48
    %p55 = scmp.eq.s32.totalorder %s25, 11
    %p56 = por %p54, %p55
    %p57 = scmp.ne.s32.totalorder %s49, %s52
    %p58 = scmp.eq.s32.totalorder %s25, 0
    %p59 = por %p57, %p58
    %p60 = scmp.ne.s32.totalorder %s49, %s52
    %p61 = scmp.eq.s32.totalorder %s30, 11
    %p62 = por %p60, %p61
    %p63 = scmp.ne.s32.totalorder %s52, %s53
    %p64 = scmp.eq.s32.totalorder %s30, 0
    %p65 = por %p63, %p64
    %p66 = scmp.ne.s32.totalorder %s52, %s53
    %p67 = scmp.eq.s32.totalorder %s31, 11
    %p68 = por %p66, %p67
    %p70 = scmp.ne.s32.totalorder %s53, %s69
    %p71 = scmp.eq.s32.totalorder %s31, 0
    %p72 = por %p70, %p71
    %s73 = ssub.s32 %s32, %s44
    %s74 = ssub.s32 %s33, %s40
    %s75 = sor.u32 %s73, %s74
    %p76 = scmp.eq.s32.totalorder %s75, 0
    %s78 = sadd.s32 %s77, 1
    %s79 = scalar_select %p76, %s77, %s78
    %p82 = pneg %p76
    %p83 = scmp.eq.s32.totalorder %s25, 11
    %p84 = por %p82, %p83
    %p85 = scmp.ne.s32.totalorder %s77, %s80
    %p86 = scmp.eq.s32.totalorder %s25, 0
    %p87 = por %p85, %p86
    %p88 = scmp.ne.s32.totalorder %s77, %s80
    %p89 = scmp.eq.s32.totalorder %s30, 11
    %p90 = por %p88, %p89
    %p91 = scmp.ne.s32.totalorder %s80, %s81
    %p92 = scmp.eq.s32.totalorder %s30, 0
    %p93 = por %p91, %p92
    %p94 = scmp.ne.s32.totalorder %s80, %s81
    %p95 = scmp.eq.s32.totalorder %s31, 11
    %p96 = por %p94, %p95
    %p98 = scmp.ne.s32.totalorder %s81, %s97
    %p99 = scmp.eq.s32.totalorder %s31, 0
    %p100 = por %p98, %p99
    %s101 = ssub.s32 %s32, %s44
    %s102 = ssub.s32 %s33, %s40
    %s103 = sor.u32 %s101, %s102
    %p104 = scmp.eq.s32.totalorder %s103, 0
    %s106 = sadd.s32 %s105, 1
    %s107 = scalar_select %p104, %s105, %s106
    %p110 = pneg %p104
    %p111 = scmp.eq.s32.totalorder %s25, 11
    %p112 = por %p110, %p111
    %p113 = scmp.ne.s32.totalorder %s105, %s108
    %p114 = scmp.eq.s32.totalorder %s25, 0
    %p115 = por %p113, %p114
    %p116 = scmp.ne.s32.totalorder %s105, %s108
    %p117 = scmp.eq.s32.totalorder %s30, 11
    %p118 = por %p116, %p117
    %p119 = scmp.ne.s32.totalorder %s108, %s109
    %p120 = scmp.eq.s32.totalorder %s30, 0
    %p121 = por %p119, %p120
    %p122 = scmp.ne.s32.totalorder %s108, %s109
    %p123 = scmp.eq.s32.totalorder %s31, 11
    %p124 = por %p122, %p123
    %p126 = scmp.ne.s32.totalorder %s109, %s125
    %p127 = scmp.eq.s32.totalorder %s31, 0
    %p128 = por %p126, %p127
    %s129 = ssub.s32 %s32, %s44
    %p130 = scmp.eq.s32.totalorder %s129, 0
    %s132 = sadd.s32 %s131, 1
    %s133 = scalar_select %p130, %s131, %s132
    %p136 = pneg %p130
    %p137 = scmp.eq.s32.totalorder %s25, 11
    %p138 = por %p136, %p137
    %p139 = scmp.ne.s32.totalorder %s131, %s134
    %p140 = scmp.eq.s32.totalorder %s25, 0
    %p141 = por %p139, %p140
    %p142 = scmp.ne.s32.totalorder %s131, %s134
    %p143 = scmp.eq.s32.totalorder %s30, 11
    %p144 = por %p142, %p143
    %p145 = scmp.ne.s32.totalorder %s134, %s135
    %p146 = scmp.eq.s32.totalorder %s30, 0
    %p147 = por %p145, %p146
    %p148 = scmp.ne.s32.totalorder %s134, %s135
    %p149 = scmp.eq.s32.totalorder %s31, 11
    %p150 = por %p148, %p149
    %p152 = scmp.ne.s32.totalorder %s135, %s151
    %p153 = scmp.eq.s32.totalorder %s31, 0
    %p154 = por %p152, %p153
    %s155 = ssub.s32 %s32, %s44
    %p156 = scmp.eq.s32.totalorder %s155, 0
    %s158 = sadd.s32 %s157, 1
    %s159 = scalar_select %p156, %s157, %s158
    %p162 = pneg %p156
    %p163 = scmp.eq.s32.totalorder %s25, 11
    %p164 = por %p162, %p163
    %p165 = scmp.ne.s32.totalorder %s157, %s160
    %p166 = scmp.eq.s32.totalorder %s25, 0
    %p167 = por %p165, %p166
    %p168 = scmp.ne.s32.totalorder %s157, %s160
    %p169 = scmp.eq.s32.totalorder %s30, 11
    %p170 = por %p168, %p169
    %p171 = scmp.ne.s32.totalorder %s160, %s161
    %p172 = scmp.eq.s32.totalorder %s30, 0
    %p173 = por %p171, %p172
    %p174 = scmp.ne.s32.totalorder %s160, %s161
    %p175 = scmp.eq.s32.totalorder %s31, 11
    %p176 = por %p174, %p175
    %p178 = scmp.ne.s32.totalorder %s161, %s177
    %p179 = scmp.eq.s32.totalorder %s31, 0
    %p180 = por %p178, %p179
    %s181 = ssub.s32 %s32, %s44
    %p182 = scmp.eq.s32.totalorder %s181, 0
    %s184 = sadd.s32 %s183, 1
    %s185 = scalar_select %p182, %s183, %s184
    %p188 = pneg %p182
    %p189 = scmp.eq.s32.totalorder %s25, 11
    %p190 = por %p188, %p189
    %p191 = scmp.ne.s32.totalorder %s183, %s186
    %p192 = scmp.eq.s32.totalorder %s25, 0
    %p193 = por %p191, %p192
    %p194 = scmp.ne.s32.totalorder %s183, %s186
    %p195 = scmp.eq.s32.totalorder %s30, 11
    %p196 = por %p194, %p195
    %p197 = scmp.ne.s32.totalorder %s186, %s187
    %p198 = scmp.eq.s32.totalorder %s30, 0
    %p199 = por %p197, %p198
    %p200 = scmp.ne.s32.totalorder %s186, %s187
    %p201 = scmp.eq.s32.totalorder %s31, 11
    %p202 = por %p200, %p201
    %p204 = scmp.ne.s32.totalorder %s187, %s203
    %p205 = scmp.eq.s32.totalorder %s31, 0
    %p206 = por %p204, %p205
    %s207 = ssub.s32 %s32, %s44
    %p208 = scmp.eq.s32.totalorder %s207, 0
    %s210 = sadd.s32 %s209, 1
    %s211 = scalar_select %p208, %s209, %s210
    %p214 = pneg %p208
    %p215 = scmp.eq.s32.totalorder %s25, 11
    %p216 = por %p214, %p215
    %p217 = scmp.ne.s32.totalorder %s209, %s212
    %p218 = scmp.eq.s32.totalorder %s25, 0
    %p219 = por %p217, %p218
    %p220 = scmp.ne.s32.totalorder %s209, %s212
    %p221 = scmp.eq.s32.totalorder %s30, 11
    %p222 = por %p220, %p221
    %p223 = scmp.ne.s32.totalorder %s212, %s213
    %p224 = scmp.eq.s32.totalorder %s30, 0
    %p225 = por %p223, %p224
    %p226 = scmp.ne.s32.totalorder %s212, %s213
    %p227 = scmp.eq.s32.totalorder %s31, 11
    %p228 = por %p226, %p227
    %p230 = scmp.ne.s32.totalorder %s213, %s229
    %p231 = scmp.eq.s32.totalorder %s31, 0
    %p232 = por %p230, %p231
    %s233 = ssub.s32 %s32, %s44
    %p234 = scmp.eq.s32.totalorder %s233, 0
    %s236 = sadd.s32 %s235, 1
    %s237 = scalar_select %p234, %s235, %s236
    %p240 = pneg %p234
    %p241 = scmp.eq.s32.totalorder %s25, 11
    %p242 = por %p240, %p241
    %p243 = scmp.ne.s32.totalorder %s235, %s238
    %p244 = scmp.eq.s32.totalorder %s25, 0
    %p245 = por %p243, %p244
    %p246 = scmp.ne.s32.totalorder %s235, %s238
    %p247 = scmp.eq.s32.totalorder %s30, 11
    %p248 = por %p246, %p247
    %p249 = scmp.ne.s32.totalorder %s238, %s239
    %p250 = scmp.eq.s32.totalorder %s30, 0
    %p251 = por %p249, %p250
    %p252 = scmp.ne.s32.totalorder %s238, %s239
    %p253 = scmp.eq.s32.totalorder %s31, 11
    %p254 = por %p252, %p253
    %p256 = scmp.ne.s32.totalorder %s239, %s255
    %p257 = scmp.eq.s32.totalorder %s31, 0
    %p258 = por %p256, %p257
    %s259 = ssub.s32 %s32, %s44
    %p260 = scmp.eq.s32.totalorder %s259, 0
    %s262 = sadd.s32 %s261, 1
    %s263 = scalar_select %p260, %s261, %s262
    %p266 = pneg %p260
    %p267 = scmp.eq.s32.totalorder %s25, 11
    %p268 = por %p266, %p267
    %p269 = scmp.ne.s32.totalorder %s261, %s264
    %p270 = scmp.eq.s32.totalorder %s25, 0
    %p271 = por %p269, %p270
    %p272 = scmp.ne.s32.totalorder %s261, %s264
    %p273 = scmp.eq.s32.totalorder %s30, 11
    %p274 = por %p272, %p273
    %p275 = scmp.ne.s32.totalorder %s264, %s265
    %p276 = scmp.eq.s32.totalorder %s30, 0
    %p277 = por %p275, %p276
    %p278 = scmp.ne.s32.totalorder %s264, %s265
    %p279 = scmp.eq.s32.totalorder %s31, 11
    %p280 = por %p278, %p279
    %p282 = scmp.ne.s32.totalorder %s265, %s281
    %p283 = scmp.eq.s32.totalorder %s31, 0
    %p284 = por %p282, %p283
    %s285 = ssub.s32 %s32, %s44
    %p286 = scmp.eq.s32.totalorder %s285, 0
    %s288 = sadd.s32 %s287, 1
    %s289 = scalar_select %p286, %s287, %s288
    %p292 = pneg %p286
    %p293 = scmp.eq.s32.totalorder %s25, 11
    %p294 = por %p292, %p293
    %p295 = scmp.ne.s32.totalorder %s287, %s290
    %p296 = scmp.eq.s32.totalorder %s25, 0
    %p297 = por %p295, %p296
    %p298 = scmp.ne.s32.totalorder %s287, %s290
    %p299 = scmp.eq.s32.totalorder %s30, 11
    %p300 = por %p298, %p299
    %p301 = scmp.ne.s32.totalorder %s290, %s291
    %p302 = scmp.eq.s32.totalorder %s30, 0
    %p303 = por %p301, %p302
    %p304 = scmp.ne.s32.totalorder %s290, %s291
    %p305 = scmp.eq.s32.totalorder %s31, 11
    %p306 = por %p304, %p305
    %p308 = scmp.ne.s32.totalorder %s291, %s307
    %p309 = scmp.eq.s32.totalorder %s31, 0
    %p310 = por %p308, %p309
    %s311 = ssub.s32 %s32, %s44
    %p312 = scmp.eq.s32.totalorder %s311, 0
    %s314 = sadd.s32 %s313, 1
    %s315 = scalar_select %p312, %s313, %s314
    %p318 = pneg %p312
    %p319 = scmp.eq.s32.totalorder %s25, 11
    %p320 = por %p318, %p319
    %p321 = scmp.ne.s32.totalorder %s313, %s316
    %p322 = scmp.eq.s32.totalorder %s25, 0
    %p323 = por %p321, %p322
    %p324 = scmp.ne.s32.totalorder %s313, %s316
    %p325 = scmp.eq.s32.totalorder %s30, 11
    %p326 = por %p324, %p325
    %p327 = scmp.ne.s32.totalorder %s316, %s317
    %p328 = scmp.eq.s32.totalorder %s30, 0
    %p329 = por %p327, %p328
    %p330 = scmp.ne.s32.totalorder %s316, %s317
    %p331 = scmp.eq.s32.totalorder %s31, 11
    %p332 = por %p330, %p331
    %p334 = scmp.ne.s32.totalorder %s317, %s333
    %p335 = scmp.eq.s32.totalorder %s31, 0
    %p336 = por %p334, %p335
    %s337 = ssub.s32 %s32, %s44
    %p338 = scmp.eq.s32.totalorder %s337, 0
    %s340 = sadd.s32 %s339, 1
    %s341 = scalar_select %p338, %s339, %s340
    %p344 = pneg %p338
    %p345 = scmp.eq.s32.totalorder %s25, 11
    %p346 = por %p344, %p345
    %p347 = scmp.ne.s32.totalorder %s339, %s342
    %p348 = scmp.eq.s32.totalorder %s25, 0
    %p349 = por %p347, %p348
    %p350 = scmp.ne.s32.totalorder %s339, %s342
    %p351 = scmp.eq.s32.totalorder %s30, 11
    %p352 = por %p350, %p351
    %p353 = scmp.ne.s32.totalorder %s342, %s343
    %p354 = scmp.eq.s32.totalorder %s30, 0
    %p355 = por %p353, %p354
    %p356 = scmp.ne.s32.totalorder %s342, %s343
    %p357 = scmp.eq.s32.totalorder %s31, 11
    %p358 = por %p356, %p357
    %p360 = scmp.ne.s32.totalorder %s343, %s359
    %p361 = scmp.eq.s32.totalorder %s31, 0
    %p362 = por %p360, %p361
    %s363 = ssub.s32 %s32, %s44
    %p364 = scmp.eq.s32.totalorder %s363, 0
    %s366 = sadd.s32 %s365, 1
    %s367 = scalar_select %p364, %s365, %s366
    %p370 = pneg %p364
    %p371 = scmp.eq.s32.totalorder %s25, 11
    %p372 = por %p370, %p371
    %p373 = scmp.ne.s32.totalorder %s365, %s368
    %p374 = scmp.eq.s32.totalorder %s25, 0
    %p375 = por %p373, %p374
    %p376 = scmp.ne.s32.totalorder %s365, %s368
    %p377 = scmp.eq.s32.totalorder %s30, 11
    %p378 = por %p376, %p377
    %p379 = scmp.ne.s32.totalorder %s368, %s369
    %p380 = scmp.eq.s32.totalorder %s30, 0
    %p381 = por %p379, %p380
    %p382 = scmp.ne.s32.totalorder %s368, %s369
    %p383 = scmp.eq.s32.totalorder %s31, 11
    %p384 = por %p382, %p383
    %p386 = scmp.ne.s32.totalorder %s369, %s385
    %p387 = scmp.eq.s32.totalorder %s31, 0
    %p388 = por %p386, %p387
    %s389 = ssub.s32 %s32, %s44
    %p390 = scmp.eq.s32.totalorder %s389, 0
    %s392 = sadd.s32 %s391, 1
    %s393 = scalar_select %p390, %s391, %s392
    %p396 = pneg %p390
    %p397 = scmp.eq.s32.totalorder %s25, 11
    %p398 = por %p396, %p397
    %p399 = scmp.ne.s32.totalorder %s391, %s394
    %p400 = scmp.eq.s32.totalorder %s25, 0
    %p401 = por %p399, %p400
    %p402 = scmp.ne.s32.totalorder %s391, %s394
    %p403 = scmp.eq.s32.totalorder %s30, 11
    %p404 = por %p402, %p403
    %p405 = scmp.ne.s32.totalorder %s394, %s395
    %p406 = scmp.eq.s32.totalorder %s30, 0
    %p407 = por %p405, %p406
    %p408 = scmp.ne.s32.totalorder %s394, %s395
    %p409 = scmp.eq.s32.totalorder %s31, 11
    %p410 = por %p408, %p409
    %p412 = scmp.ne.s32.totalorder %s395, %s411
    %p413 = scmp.eq.s32.totalorder %s31, 0
    %p414 = por %p412, %p413
    %s415 = ssub.s32 %s32, %s44
    %p416 = scmp.eq.s32.totalorder %s415, 0
    %s418 = sadd.s32 %s417, 1
    %s419 = scalar_select %p416, %s417, %s418
    %p422 = pneg %p416
    %p423 = scmp.eq.s32.totalorder %s25, 11
    %p424 = por %p422, %p423
    %p425 = scmp.ne.s32.totalorder %s417, %s420
    %p426 = scmp.eq.s32.totalorder %s25, 0
    %p427 = por %p425, %p426
    %p428 = scmp.ne.s32.totalorder %s417, %s420
    %p429 = scmp.eq.s32.totalorder %s30, 11
    %p430 = por %p428, %p429
    %p431 = scmp.ne.s32.totalorder %s420, %s421
    %p432 = scmp.eq.s32.totalorder %s30, 0
    %p433 = por %p431, %p432
    %p434 = scmp.ne.s32.totalorder %s420, %s421
    %p435 = scmp.eq.s32.totalorder %s31, 11
    %p436 = por %p434, %p435
    %p438 = scmp.ne.s32.totalorder %s421, %s437
    %p439 = scmp.eq.s32.totalorder %s31, 0
    %p440 = por %p438, %p439
    %s441 = ssub.s32 %s32, %s44
    %p442 = scmp.eq.s32.totalorder %s441, 0
    %s444 = sadd.s32 %s443, 1
    %s445 = scalar_select %p442, %s443, %s444
    %p448 = pneg %p442
    %p449 = scmp.eq.s32.totalorder %s25, 11
    %p450 = por %p448, %p449
    %p451 = scmp.ne.s32.totalorder %s443, %s446
    %p452 = scmp.eq.s32.totalorder %s25, 0
    %p453 = por %p451, %p452
    %p454 = scmp.ne.s32.totalorder %s443, %s446
    %p455 = scmp.eq.s32.totalorder %s30, 11
    %p456 = por %p454, %p455
    %p457 = scmp.ne.s32.totalorder %s446, %s447
    %p458 = scmp.eq.s32.totalorder %s30, 0
    %p459 = por %p457, %p458
    %p460 = scmp.ne.s32.totalorder %s446, %s447
    %p461 = scmp.eq.s32.totalorder %s31, 11
    %p462 = por %p460, %p461
    %p464 = scmp.ne.s32.totalorder %s447, %s463
    %p465 = scmp.eq.s32.totalorder %s31, 0
    %p466 = por %p464, %p465
    %s467 = ssub.s32 %s32, %s44
    %p468 = scmp.eq.s32.totalorder %s467, 0
    %s470 = sadd.s32 %s469, 1
    %s471 = scalar_select %p468, %s469, %s470
    %p474 = pneg %p468
    %p475 = scmp.eq.s32.totalorder %s25, 11
    %p476 = por %p474, %p475
    %p477 = scmp.ne.s32.totalorder %s469, %s472
    %p478 = scmp.eq.s32.totalorder %s25, 0
    %p479 = por %p477, %p478
    %p480 = scmp.ne.s32.totalorder %s469, %s472
    %p481 = scmp.eq.s32.totalorder %s30, 11
    %p482 = por %p480, %p481
    %p483 = scmp.ne.s32.totalorder %s472, %s473
    %p484 = scmp.eq.s32.totalorder %s30, 0
    %p485 = por %p483, %p484
    %p486 = scmp.ne.s32.totalorder %s472, %s473
    %p487 = scmp.eq.s32.totalorder %s31, 11
    %p488 = por %p486, %p487
    %p490 = scmp.ne.s32.totalorder %s473, %s489
    %p491 = scmp.eq.s32.totalorder %s31, 0
    %p492 = por %p490, %p491
    %s493 = ssub.s32 %s32, %s44
    %p494 = scmp.eq.s32.totalorder %s493, 0
    %s496 = sadd.s32 %s495, 1
    %s497 = scalar_select %p494, %s495, %s496
    %p500 = pneg %p494
    %p501 = scmp.eq.s32.totalorder %s25, 11
    %p502 = por %p500, %p501
    %p503 = scmp.ne.s32.totalorder %s495, %s498
    %p504 = scmp.eq.s32.totalorder %s25, 0
    %p505 = por %p503, %p504
    %p506 = scmp.ne.s32.totalorder %s495, %s498
    %p507 = scmp.eq.s32.totalorder %s30, 11
    %p508 = por %p506, %p507
    %p509 = scmp.ne.s32.totalorder %s498, %s499
    %p510 = scmp.eq.s32.totalorder %s30, 0
    %p511 = por %p509, %p510
    %p512 = scmp.ne.s32.totalorder %s498, %s499
    %p513 = scmp.eq.s32.totalorder %s31, 11
    %p514 = por %p512, %p513
    %p516 = scmp.ne.s32.totalorder %s499, %s515
    %p517 = scmp.eq.s32.totalorder %s31, 0
    %p518 = por %p516, %p517
    %s519 = ssub.s32 %s32, %s44
    %p520 = scmp.eq.s32.totalorder %s519, 0
    %s522 = sadd.s32 %s521, 1
    %s523 = scalar_select %p520, %s521, %s522
    %p526 = pneg %p520
    %p527 = scmp.eq.s32.totalorder %s25, 11
    %p528 = por %p526, %p527
    %p529 = scmp.ne.s32.totalorder %s521, %s524
    %p530 = scmp.eq.s32.totalorder %s25, 0
    %p531 = por %p529, %p530
    %p532 = scmp.ne.s32.totalorder %s521, %s524
    %p533 = scmp.eq.s32.totalorder %s30, 11
    %p534 = por %p532, %p533
    %p535 = scmp.ne.s32.totalorder %s524, %s525
    %p536 = scmp.eq.s32.totalorder %s30, 0
    %p537 = por %p535, %p536
    %p538 = scmp.ne.s32.totalorder %s524, %s525
    %p539 = scmp.eq.s32.totalorder %s31, 11
    %p540 = por %p538, %p539
    %p542 = scmp.ne.s32.totalorder %s525, %s541
    %p543 = scmp.eq.s32.totalorder %s31, 0
    %p544 = por %p542, %p543
    %s545 = ssub.s32 %s32, %s44
    %s546 = ssub.s32 %s33, %s40
    %s547 = sor.u32 %s545, %s546
    %p548 = scmp.eq.s32.totalorder %s547, 0
    %s550 = sadd.s32 %s549, 1
    %s551 = scalar_select %p548, %s549, %s550
    %p554 = pneg %p548
    %p555 = scmp.eq.s32.totalorder %s25, 11
    %p556 = por %p554, %p555
    %p557 = scmp.ne.s32.totalorder %s549, %s552
    %p558 = scmp.eq.s32.totalorder %s25, 0
    %p559 = por %p557, %p558
    %p560 = scmp.ne.s32.totalorder %s549, %s552
    %p561 = scmp.eq.s32.totalorder %s30, 11
    %p562 = por %p560, %p561
    %p563 = scmp.ne.s32.totalorder %s552, %s553
    %p564 = scmp.eq.s32.totalorder %s30, 0
    %p565 = por %p563, %p564
    %p566 = scmp.ne.s32.totalorder %s552, %s553
    %p567 = scmp.eq.s32.totalorder %s31, 11
    %p568 = por %p566, %p567
    %p570 = scmp.ne.s32.totalorder %s553, %s569
    %p571 = scmp.eq.s32.totalorder %s31, 0
    %p572 = por %p570, %p571
    %p573 = scmp.le.s32.totalorder 1, %s25
    %p574 = scmp.lt.s32.totalorder %s25, 13
    %p575 = pnand %p573, %p574
    %p576 = pneg %p575
    // Predicated region
    $region9: #{_lambda_.8} parent=5 // pred_check
      _
    $region10: #{_lambda_.8} parent=5 // pred_check_branch
      %578 = sbr.rel (%p575) target = $region12
    $region11: #{_lambda_.8} parent=5 // pred_region
      %s579 = ssub.s32 %s25, 1
    $region12: #{_lambda_.8} parent=5 // pred_fallthru
      _
    %p580 = scmp.lt.s32.totalorder %s25, 12
    // Predicated region
    $region13: #{_lambda_.8} parent=5 // pred_check
      %p581 = pneg %p580
    $region14: #{_lambda_.8} parent=5 // pred_check_branch
      %583 = sbr.rel (%p581) target = $region16
    $region15: #{_lambda_.8} parent=5 // pred_region
      // Predicated region
      $region17: #{_lambda_.8} parent=15 // pred_check
        %p584 = pneg %p59
      $region18: #{_lambda_.8} parent=15 // pred_check_branch
        %586 = sbr.rel (%p584) target = $region20
      $region19: #{_lambda_.8} parent=15 // pred_region
        %p587 = scmp.lt.s32.totalorder %s32, 5
        %s588 = scalar_select %p587, %s32, 5
        %p589 = scmp.lt.s32.totalorder %s33, 1
        %s590 = scalar_select %p589, %s33, 1
        %s591 = smul.addr %s588, 2
        %s592 = sadd.s32 %s590, %s591
        %s593 = smul.addr %s592, 8
        %s594 = scalar_lea.vmem %s0, %s593
      $region20: #{_lambda_.8} parent=15 // pred_fallthru
        _
      // Predicated region
      $region21: #{_lambda_.8} parent=15 // pred_check
        %p595 = pneg %p87
      $region22: #{_lambda_.8} parent=15 // pred_check_branch
        %597 = sbr.rel (%p595) target = $region24
      $region23: #{_lambda_.8} parent=15 // pred_region
        %p598 = scmp.lt.s32.totalorder %s32, 5
        %s599 = scalar_select %p598, %s32, 5
        %p600 = scmp.lt.s32.totalorder %s33, 1
        %s601 = scalar_select %p600, %s33, 1
        %s602 = smul.addr %s599, 2
        %s603 = sadd.s32 %s601, %s602
        %s604 = smul.addr %s603, 8
        %s605 = scalar_lea.vmem %s1, %s604
      $region24: #{_lambda_.8} parent=15 // pred_fallthru
        _
      // Predicated region
      $region25: #{_lambda_.8} parent=15 // pred_check
        %p606 = pneg %p115
      $region26: #{_lambda_.8} parent=15 // pred_check_branch
        %608 = sbr.rel (%p606) target = $region28
      $region27: #{_lambda_.8} parent=15 // pred_region
        %p609 = scmp.lt.s32.totalorder %s32, 5
        %s610 = scalar_select %p609, %s32, 5
        %p611 = scmp.lt.s32.totalorder %s33, 1
        %s612 = scalar_select %p611, %s33, 1
        %s613 = smul.addr %s610, 2
        %s614 = sadd.s32 %s612, %s613
        %s615 = scalar_lea.vmem %s2, %s614
      $region28: #{_lambda_.8} parent=15 // pred_fallthru
        _
      // Predicated region
      $region29: #{_lambda_.8} parent=15 // pred_check
        %p616 = pneg %p141
      $region30: #{_lambda_.8} parent=15 // pred_check_branch
        %618 = sbr.rel (%p616) target = $region32
      $region31: #{_lambda_.8} parent=15 // pred_region
        %p619 = scmp.lt.s32.totalorder %s32, 5
        %s620 = scalar_select %p619, %s32, 5
        %s621 = scalar_lea.vmem %s3, %s620
      $region32: #{_lambda_.8} parent=15 // pred_fallthru
        _
      // Predicated region
      $region33: #{_lambda_.8} parent=15 // pred_check
        %p622 = pneg %p167
      $region34: #{_lambda_.8} parent=15 // pred_check_branch
        %624 = sbr.rel (%p622) target = $region36
      $region35: #{_lambda_.8} parent=15 // pred_region
        %p625 = scmp.lt.s32.totalorder %s32, 5
        %s626 = scalar_select %p625, %s32, 5
        %s627 = scalar_lea.vmem %s4, %s626
      $region36: #{_lambda_.8} parent=15 // pred_fallthru
        _
      // Predicated region
      $region37: #{_lambda_.8} parent=15 // pred_check
        %p628 = pneg %p193
      $region38: #{_lambda_.8} parent=15 // pred_check_branch
        %630 = sbr.rel (%p628) target = $region40
      $region39: #{_lambda_.8} parent=15 // pred_region
        %p631 = scmp.lt.s32.totalorder %s32, 5
        %s632 = scalar_select %p631, %s32, 5
        %s633 = scalar_lea.vmem %s5, %s632
      $region40: #{_lambda_.8} parent=15 // pred_fallthru
        _
      // Predicated region
      $region41: #{_lambda_.8} parent=15 // pred_check
        %p634 = pneg %p219
      $region42: #{_lambda_.8} parent=15 // pred_check_branch
        %636 = sbr.rel (%p634) target = $region44
      $region43: #{_lambda_.8} parent=15 // pred_region
        %p637 = scmp.lt.s32.totalorder %s32, 5
        %s638 = scalar_select %p637, %s32, 5
        %s639 = scalar_lea.vmem %s6, %s638
      $region44: #{_lambda_.8} parent=15 // pred_fallthru
        _
      // Predicated region
      $region45: #{_lambda_.8} parent=15 // pred_check
        %p640 = pneg %p245
      $region46: #{_lambda_.8} parent=15 // pred_check_branch
        %642 = sbr.rel (%p640) target = $region48
      $region47: #{_lambda_.8} parent=15 // pred_region
        %p643 = scmp.lt.s32.totalorder %s32, 5
        %s644 = scalar_select %p643, %s32, 5
        %s645 = smul.addr %s644, 4
        %s646 = smul.addr %s645, 8
        %s647 = scalar_lea.vmem %s7, %s646
      $region48: #{_lambda_.8} parent=15 // pred_fallthru
        _
      // Predicated region
      $region49: #{_lambda_.8} parent=15 // pred_check
        %p648 = pneg %p271
      $region50: #{_lambda_.8} parent=15 // pred_check_branch
        %650 = sbr.rel (%p648) target = $region52
      $region51: #{_lambda_.8} parent=15 // pred_region
        %p651 = scmp.lt.s32.totalorder %s32, 5
        %s652 = scalar_select %p651, %s32, 5
        %s653 = scalar_lea.vmem %s8, %s652
      $region52: #{_lambda_.8} parent=15 // pred_fallthru
        _
      // Predicated region
      $region53: #{_lambda_.8} parent=15 // pred_check
        %p654 = pneg %p297
      $region54: #{_lambda_.8} parent=15 // pred_check_branch
        %656 = sbr.rel (%p654) target = $region56
      $region55: #{_lambda_.8} parent=15 // pred_region
        %p657 = scmp.lt.s32.totalorder %s32, 5
        %s658 = scalar_select %p657, %s32, 5
        %s659 = smul.addr %s658, 4
        %s660 = smul.addr %s659, 8
        %s661 = scalar_lea.vmem %s9, %s660
      $region56: #{_lambda_.8} parent=15 // pred_fallthru
        _
      // Predicated region
      $region57: #{_lambda_.8} parent=15 // pred_check
        %p662 = pneg %p323
      $region58: #{_lambda_.8} parent=15 // pred_check_branch
        %664 = sbr.rel (%p662) target = $region60
      $region59: #{_lambda_.8} parent=15 // pred_region
        %p665 = scmp.lt.s32.totalorder %s32, 5
        %s666 = scalar_select %p665, %s32, 5
        %s667 = scalar_lea.vmem %s10, %s666
      $region60: #{_lambda_.8} parent=15 // pred_fallthru
        _
      // Predicated region
      $region61: #{_lambda_.8} parent=15 // pred_check
        %p668 = pneg %p349
      $region62: #{_lambda_.8} parent=15 // pred_check_branch
        %670 = sbr.rel (%p668) target = $region64
      $region63: #{_lambda_.8} parent=15 // pred_region
        %p671 = scmp.lt.s32.totalorder %s32, 5
        %s672 = scalar_select %p671, %s32, 5
        %s673 = smul.addr %s672, 4
        %s674 = smul.addr %s673, 8
        %s675 = scalar_lea.vmem %s11, %s674
      $region64: #{_lambda_.8} parent=15 // pred_fallthru
        _
      // Predicated region
      $region65: #{_lambda_.8} parent=15 // pred_check
        %p676 = pneg %p375
      $region66: #{_lambda_.8} parent=15 // pred_check_branch
        %678 = sbr.rel (%p676) target = $region68
      $region67: #{_lambda_.8} parent=15 // pred_region
        %p679 = scmp.lt.s32.totalorder %s32, 5
        %s680 = scalar_select %p679, %s32, 5
        %s681 = scalar_lea.vmem %s12, %s680
      $region68: #{_lambda_.8} parent=15 // pred_fallthru
        _
      // Predicated region
      $region69: #{_lambda_.8} parent=15 // pred_check
        %p682 = pneg %p401
      $region70: #{_lambda_.8} parent=15 // pred_check_branch
        %684 = sbr.rel (%p682) target = $region72
      $region71: #{_lambda_.8} parent=15 // pred_region
        %p685 = scmp.lt.s32.totalorder %s32, 5
        %s686 = scalar_select %p685, %s32, 5
        %s687 = scalar_lea.vmem %s13, %s686
      $region72: #{_lambda_.8} parent=15 // pred_fallthru
        _
      // Predicated region
      $region73: #{_lambda_.8} parent=15 // pred_check
        %p688 = pneg %p427
      $region74: #{_lambda_.8} parent=15 // pred_check_branch
        %690 = sbr.rel (%p688) target = $region76
      $region75: #{_lambda_.8} parent=15 // pred_region
        %p691 = scmp.lt.s32.totalorder %s32, 5
        %s692 = scalar_select %p691, %s32, 5
        %s693 = scalar_lea.vmem %s14, %s692
      $region76: #{_lambda_.8} parent=15 // pred_fallthru
        _
      // Predicated region
      $region77: #{_lambda_.8} parent=15 // pred_check
        %p694 = pneg %p453
      $region78: #{_lambda_.8} parent=15 // pred_check_branch
        %696 = sbr.rel (%p694) target = $region80
      $region79: #{_lambda_.8} parent=15 // pred_region
        %p697 = scmp.lt.s32.totalorder %s32, 5
        %s698 = scalar_select %p697, %s32, 5
        %s699 = smul.addr %s698, 4
        %s700 = smul.addr %s699, 8
        %s701 = scalar_lea.vmem %s15, %s700
      $region80: #{_lambda_.8} parent=15 // pred_fallthru
        _
      // Predicated region
      $region81: #{_lambda_.8} parent=15 // pred_check
        %p702 = pneg %p479
      $region82: #{_lambda_.8} parent=15 // pred_check_branch
        %704 = sbr.rel (%p702) target = $region84
      $region83: #{_lambda_.8} parent=15 // pred_region
        %p705 = scmp.lt.s32.totalorder %s32, 5
        %s706 = scalar_select %p705, %s32, 5
        %s707 = scalar_lea.vmem %s16, %s706
      $region84: #{_lambda_.8} parent=15 // pred_fallthru
        _
      // Predicated region
      $region85: #{_lambda_.8} parent=15 // pred_check
        %p708 = pneg %p505
      $region86: #{_lambda_.8} parent=15 // pred_check_branch
        %710 = sbr.rel (%p708) target = $region88
      $region87: #{_lambda_.8} parent=15 // pred_region
        %p711 = scmp.lt.s32.totalorder %s32, 5
        %s712 = scalar_select %p711, %s32, 5
        %s713 = smul.addr %s712, 4
        %s714 = smul.addr %s713, 8
        %s715 = scalar_lea.vmem %s17, %s714
      $region88: #{_lambda_.8} parent=15 // pred_fallthru
        _
      // Predicated region
      $region89: #{_lambda_.8} parent=15 // pred_check
        %p716 = pneg %p531
      $region90: #{_lambda_.8} parent=15 // pred_check_branch
        %718 = sbr.rel (%p716) target = $region92
      $region91: #{_lambda_.8} parent=15 // pred_region
        %p719 = scmp.lt.s32.totalorder %s32, 5
        %s720 = scalar_select %p719, %s32, 5
        %s721 = scalar_lea.vmem %s18, %s720
      $region92: #{_lambda_.8} parent=15 // pred_fallthru
        _
    $region16: #{_lambda_.8} parent=5 // pred_fallthru
      _
    %p722 = scmp.le.s32.totalorder 1, %s25
    %p723 = scmp.lt.s32.totalorder %s25, 13
    %p724 = pnand %p722, %p723
    %p725 = pneg %p724
    // Predicated region
    $region93: #{_lambda_.8} parent=5 // pred_check
      _
    $region94: #{_lambda_.8} parent=5 // pred_check_branch
      %727 = sbr.rel (%p724) target = $region96
    $region95: #{_lambda_.8} parent=5 // pred_region
      %s728 = ssub.s32 %s25, 1
      %p729 = scmp.lt.s32.totalorder %s34, 5
      %s730 = scalar_select %p729, %s34, 5
      %p731 = scmp.lt.s32.totalorder %s35, 1
      %s732 = scalar_select %p731, %s35, 1
      %s733 = smul.addr %s730, 2
      %s734 = sadd.s32 %s732, %s733
      %s735 = smul.addr %s734, 8
      %s736 = scalar_lea.vmem %s0, %s735
      %p737 = pneg %p65
      %p738 = pneg %p62
      %p739 = scmp.lt.s32.totalorder %s34, 5
      %s740 = scalar_select %p739, %s34, 5
      %p741 = scmp.lt.s32.totalorder %s35, 1
      %s742 = scalar_select %p741, %s35, 1
      %s743 = smul.addr %s740, 2
      %s744 = sadd.s32 %s742, %s743
      %s745 = smul.addr %s744, 8
      %s746 = scalar_lea.vmem %s1, %s745
      %p747 = pneg %p93
      %p748 = pneg %p90
      %p749 = scmp.lt.s32.totalorder %s34, 5
      %s750 = scalar_select %p749, %s34, 5
      %p751 = scmp.lt.s32.totalorder %s35, 1
      %s752 = scalar_select %p751, %s35, 1
      %s753 = smul.addr %s750, 2
      %s754 = sadd.s32 %s752, %s753
      %s755 = scalar_lea.vmem %s2, %s754
      %p756 = pneg %p121
      %p757 = pneg %p118
      %p758 = scmp.lt.s32.totalorder %s34, 5
      %s759 = scalar_select %p758, %s34, 5
      %s760 = scalar_lea.vmem %s3, %s759
      %p761 = pneg %p147
      %p762 = pneg %p144
      %p763 = scmp.lt.s32.totalorder %s34, 5
      %s764 = scalar_select %p763, %s34, 5
      %s765 = scalar_lea.vmem %s4, %s764
      %p766 = pneg %p173
      %p767 = pneg %p170
      %p768 = scmp.lt.s32.totalorder %s34, 5
      %s769 = scalar_select %p768, %s34, 5
      %s770 = scalar_lea.vmem %s5, %s769
      %p771 = pneg %p199
      %p772 = pneg %p196
      %p773 = scmp.lt.s32.totalorder %s34, 5
      %s774 = scalar_select %p773, %s34, 5
      %s775 = scalar_lea.vmem %s6, %s774
      %p776 = pneg %p225
      %p777 = pneg %p222
      %p778 = scmp.lt.s32.totalorder %s34, 5
      %s779 = scalar_select %p778, %s34, 5
      %s780 = smul.addr %s779, 4
      %s781 = smul.addr %s780, 8
      %s782 = scalar_lea.vmem %s7, %s781
      %p783 = pneg %p251
      %p784 = pneg %p248
      %p785 = scmp.lt.s32.totalorder %s34, 5
      %s786 = scalar_select %p785, %s34, 5
      %s787 = scalar_lea.vmem %s8, %s786
      %p788 = pneg %p277
      %p789 = pneg %p274
      %p790 = scmp.lt.s32.totalorder %s34, 5
      %s791 = scalar_select %p790, %s34, 5
      %s792 = smul.addr %s791, 4
      %s793 = smul.addr %s792, 8
      %s794 = scalar_lea.vmem %s9, %s793
      %p795 = pneg %p303
      %p796 = pneg %p300
      %p797 = scmp.lt.s32.totalorder %s34, 5
      %s798 = scalar_select %p797, %s34, 5
      %s799 = scalar_lea.vmem %s10, %s798
      %p800 = pneg %p329
      %p801 = pneg %p326
      %p802 = scmp.lt.s32.totalorder %s34, 5
      %s803 = scalar_select %p802, %s34, 5
      %s804 = smul.addr %s803, 4
      %s805 = smul.addr %s804, 8
      %s806 = scalar_lea.vmem %s11, %s805
      %p807 = pneg %p355
      %p808 = pneg %p352
      %p809 = scmp.lt.s32.totalorder %s34, 5
      %s810 = scalar_select %p809, %s34, 5
      %s811 = scalar_lea.vmem %s12, %s810
      %p812 = pneg %p381
      %p813 = pneg %p378
      %p814 = scmp.lt.s32.totalorder %s34, 5
      %s815 = scalar_select %p814, %s34, 5
      %s816 = scalar_lea.vmem %s13, %s815
      %p817 = pneg %p407
      %p818 = pneg %p404
      %p819 = scmp.lt.s32.totalorder %s34, 5
      %s820 = scalar_select %p819, %s34, 5
      %s821 = scalar_lea.vmem %s14, %s820
      %p822 = pneg %p433
      %p823 = pneg %p430
      %p824 = scmp.lt.s32.totalorder %s34, 5
      %s825 = scalar_select %p824, %s34, 5
      %s826 = smul.addr %s825, 4
      %s827 = smul.addr %s826, 8
      %s828 = scalar_lea.vmem %s15, %s827
      %p829 = pneg %p459
      %p830 = pneg %p456
      %p831 = scmp.lt.s32.totalorder %s34, 5
      %s832 = scalar_select %p831, %s34, 5
      %s833 = scalar_lea.vmem %s16, %s832
      %p834 = pneg %p485
      %p835 = pneg %p482
      %p836 = scmp.lt.s32.totalorder %s34, 5
      %s837 = scalar_select %p836, %s34, 5
      %s838 = smul.addr %s837, 4
      %s839 = smul.addr %s838, 8
      %s840 = scalar_lea.vmem %s17, %s839
      %p841 = pneg %p511
      %p842 = pneg %p508
      %p843 = scmp.lt.s32.totalorder %s34, 5
      %s844 = scalar_select %p843, %s34, 5
      %s845 = scalar_lea.vmem %s18, %s844
      %p846 = pneg %p537
      %p847 = pneg %p534
      %p848 = pneg %p565
      %p849 = pneg %p562
      %p850 = scmp.lt.s32.totalorder %s34, 5
      %s851 = scalar_select %p850, %s34, 5
      %p852 = scmp.lt.s32.totalorder %s35, 1
      %s853 = scalar_select %p852, %s35, 1
      %s854 = smul.addr %s851, 2
      %s855 = sadd.s32 %s853, %s854
      %s856 = smul.addr %s855, 8
      %s857 = scalar_lea.vmem %s19, %s856
      %p858 = scmp.lt.s32.totalorder %s34, 5
      %s859 = scalar_select %p858, %s34, 5
      %p860 = scmp.lt.s32.totalorder %s35, 1
      %s861 = scalar_select %p860, %s35, 1
      %s862 = smul.addr %s859, 2
      %s863 = sadd.s32 %s861, %s862
      %s864 = smul.addr %s863, 8
      %s865 = scalar_lea.vmem %s0, %s864
      %p866 = scmp.lt.s32.totalorder %s34, 5
      %s867 = scalar_select %p866, %s34, 5
      %p868 = scmp.lt.s32.totalorder %s35, 1
      %s869 = scalar_select %p868, %s35, 1
      %s870 = smul.addr %s867, 2
      %s871 = sadd.s32 %s869, %s870
      %s872 = smul.addr %s871, 8
      %s873 = scalar_lea.vmem %s1, %s872
      %p874 = scmp.lt.s32.totalorder %s34, 5
      %s875 = scalar_select %p874, %s34, 5
      %p876 = scmp.lt.s32.totalorder %s35, 1
      %s877 = scalar_select %p876, %s35, 1
      %s878 = smul.addr %s875, 2
      %s879 = sadd.s32 %s877, %s878
      %s880 = scalar_lea.vmem %s2, %s879
      %p881 = scmp.lt.s32.totalorder %s34, 5
      %s882 = scalar_select %p881, %s34, 5
      %s883 = scalar_lea.vmem %s3, %s882
      %p884 = scmp.lt.s32.totalorder %s34, 5
      %s885 = scalar_select %p884, %s34, 5
      %s886 = scalar_lea.vmem %s4, %s885
      %p887 = scmp.lt.s32.totalorder %s34, 5
      %s888 = scalar_select %p887, %s34, 5
      %s889 = scalar_lea.vmem %s5, %s888
      %p890 = scmp.lt.s32.totalorder %s34, 5
      %s891 = scalar_select %p890, %s34, 5
      %s892 = scalar_lea.vmem %s6, %s891
      %p893 = scmp.lt.s32.totalorder %s34, 5
      %s894 = scalar_select %p893, %s34, 5
      %s895 = smul.addr %s894, 4
      %s896 = smul.addr %s895, 8
      %s897 = scalar_lea.vmem %s7, %s896
      %p898 = scmp.lt.s32.totalorder %s34, 5
      %s899 = scalar_select %p898, %s34, 5
      %s900 = scalar_lea.vmem %s8, %s899
      %p901 = scmp.lt.s32.totalorder %s34, 5
      %s902 = scalar_select %p901, %s34, 5
      %s903 = smul.addr %s902, 4
      %s904 = smul.addr %s903, 8
      %s905 = scalar_lea.vmem %s9, %s904
      %p906 = scmp.lt.s32.totalorder %s34, 5
      %s907 = scalar_select %p906, %s34, 5
      %s908 = scalar_lea.vmem %s10, %s907
      %p909 = scmp.lt.s32.totalorder %s34, 5
      %s910 = scalar_select %p909, %s34, 5
      %s911 = smul.addr %s910, 4
      %s912 = smul.addr %s911, 8
      %s913 = scalar_lea.vmem %s11, %s912
      %p914 = scmp.lt.s32.totalorder %s34, 5
      %s915 = scalar_select %p914, %s34, 5
      %s916 = scalar_lea.vmem %s12, %s915
      %p917 = scmp.lt.s32.totalorder %s34, 5
      %s918 = scalar_select %p917, %s34, 5
      %s919 = scalar_lea.vmem %s13, %s918
      %p920 = scmp.lt.s32.totalorder %s34, 5
      %s921 = scalar_select %p920, %s34, 5
      %s922 = scalar_lea.vmem %s14, %s921
      %p923 = scmp.lt.s32.totalorder %s34, 5
      %s924 = scalar_select %p923, %s34, 5
      %s925 = smul.addr %s924, 4
      %s926 = smul.addr %s925, 8
      %s927 = scalar_lea.vmem %s15, %s926
      %p928 = scmp.lt.s32.totalorder %s34, 5
      %s929 = scalar_select %p928, %s34, 5
      %s930 = scalar_lea.vmem %s16, %s929
      %p931 = scmp.lt.s32.totalorder %s34, 5
      %s932 = scalar_select %p931, %s34, 5
      %s933 = smul.addr %s932, 4
      %s934 = smul.addr %s933, 8
      %s935 = scalar_lea.vmem %s17, %s934
      %p936 = scmp.lt.s32.totalorder %s34, 5
      %s937 = scalar_select %p936, %s34, 5
      %s938 = scalar_lea.vmem %s18, %s937
      %p939 = scmp.lt.s32.totalorder %s34, 5
      %s940 = scalar_select %p939, %s34, 5
      %p941 = scmp.lt.s32.totalorder %s35, 1
      %s942 = scalar_select %p941, %s35, 1
      %s943 = smul.addr %s940, 2
      %s944 = sadd.s32 %s942, %s943
      %s945 = smul.addr %s944, 8
      %s946 = scalar_lea.vmem %s19, %s945
      %v947 = vld [vmem:[%s865] sm:$0xff]
      %v948 = vld [vmem:[%s873] sm:$0xff]
      %v949 = vld [vmem:[%s883] sm:$0x1]
      %v950 = vld [vmem:[%s886] sm:$0x1]
      %vm951 = vcmask 261120
      %v952 = vsel %vm951, %v947, 0.0
      %953 = vadd.xlane.f32.xlu0 %v952
      %v954 = vpop.xlane.xlu0 %953
      %v955 = vrcp.pop 32.0
      %v956 = vmul.f32 %v954, %v955
      %v957 = vsub.f32 %v947, %v956
      %v958 = vmul.f32 %v957, %v957
      %v959 = vsel %vm951, %v958, 0.0
      %960 = vadd.xlane.f32.xlu0 %v959
      %v961 = vpop.xlane.xlu0 %960
      %v962 = vmul.f32 %v961, %v955
      %v963 = vadd.f32 %v962, 1e-05
      %v964 = vrsqrt.pop %v963
      %v965 = vmul.f32 %v957, %v964
      %v967 = vlaneseq
      %v968 = vshrl.u32 %v967, 7
      %v969 = vsub.s32 0, %v968
      %v970 = vrot.slane %v949, %v969
      %v972 = vmul.f32 %v965, %v970
      %v974 = vlaneseq
      %v975 = vshrl.u32 %v974, 7
      %v976 = vsub.s32 0, %v975
      %v977 = vrot.slane %v950, %v976
      %v979 = vadd.f32 %v972, %v977
      %v980 = vld [vmem:[%s889] sm:$0x1]
      %v981 = vld [vmem:[%s892] sm:$0x1]
      %v982 = vsel %vm951, %v948, 0.0
      %983 = vadd.xlane.f32.xlu0 %v982
      %v984 = vpop.xlane.xlu0 %983
      %v985 = vmul.f32 %v984, %v955
      %v986 = vsub.f32 %v948, %v985
      %v987 = vmul.f32 %v986, %v986
      %v988 = vsel %vm951, %v987, 0.0
      %989 = vadd.xlane.f32.xlu0 %v988
      %v990 = vpop.xlane.xlu0 %989
      %v991 = vmul.f32 %v990, %v955
      %v992 = vadd.f32 %v991, 1e-05
      %v993 = vrsqrt.pop %v992
      %v994 = vmul.f32 %v986, %v993
      %v996 = vlaneseq
      %v997 = vshrl.u32 %v996, 7
      %v998 = vsub.s32 0, %v997
      %v999 = vrot.slane %v980, %v998
      %v1001 = vmul.f32 %v994, %v999
      %v1003 = vlaneseq
      %v1004 = vshrl.u32 %v1003, 7
      %v1005 = vsub.s32 0, %v1004
      %v1006 = vrot.slane %v981, %v1005
      %v1008 = vadd.f32 %v1001, %v1006
      %v1009 = vld [vmem:[%s897] sm:$0xff]
      %v1010 = vld [vmem:[%s897 + $0x8] sm:$0xff]
      %v1011 = vld [vmem:[%s897 + $0x10] sm:$0xff]
      %v1012 = vld [vmem:[%s897 + $0x18] sm:$0xff]
      %v1013 = vld [vmem:[%s900] sm:$0x1]
      %v1015 = vlaneseq
      %v1016 = vshrl.u32 %v1015, 7
      %v1017 = vsub.s32 0, %v1016
      %v1018 = vrot.slane %v1013, %v1017
      %v1021 = vsel %vm951, %v979, 0
      %1023 = vmatprep.subr.mxu0 0.0
      %1024 = vmatpush1.msra.mxu0 0.0
      %1025 = vmatprep.subr.mxu0 0.0
      %1026 = vmatpush1.msra.mxu0 0.0
      %1027 = vmatprep.subr.mxu0 0.0
      %1028 = vmatpush1.msra.mxu0 0.0
      %1029 = vmatprep.subr.mxu0 0.0
      %1030 = vmatpush1.msra.mxu0 0.0
      %1031 = vmatprep.subr.mxu0 0.0
      %1032 = vmatpush1.msra.mxu0 0.0
      %1033 = vmatprep.subr.mxu0 0.0
      %1034 = vmatpush1.msra.mxu0 0.0
      %1035 = vmatprep.subr.mxu0 0.0
      %1036 = vmatpush1.msra.mxu0 0.0
      %1037 = vmatprep.subr.mxu0 0.0
      %1038 = vmatpush1.msra.mxu0 0.0
      %1039 = vmatprep.subr.mxu0 0.0
      %1040 = vmatpush1.msra.mxu0 0.0
      %1041 = vmatprep.subr.mxu0 0.0
      %1042 = vmatpush1.msra.mxu0 0.0
      %1043 = vmatprep.subr.mxu0 0.0
      %1044 = vmatpush1.msra.mxu0 0.0
      %1045 = vmatprep.subr.mxu0 0.0
      %1046 = vmatpush1.msra.mxu0 0.0
      %1047 = vmatprep.subr.mxu0 0.0
      %1048 = vmatpush1.msra.mxu0 %v1012
      %1049 = vmatprep.subr.mxu0 0.0
      %1050 = vmatpush1.msra.mxu0 %v1011
      %1051 = vmatprep.subr.mxu0 0.0
      %1052 = vmatpush1.msra.mxu0 %v1010
      %1053 = vmatprep.subr.mxu0 0.0
      %1054 = vmatpush1.msra.mxu0 %v1009
      %1055 = vmatprep.subr.mxu0 0.0
      %1056 = vmatpush2.msra.mxu0 0.0
      %1057 = vmatprep.subr.mxu0 0.0
      %1058 = vmatpush2.msra.mxu0 0.0
      %1059 = vmatprep.subr.mxu0 0.0
      %1060 = vmatpush2.msra.mxu0 0.0
      %1061 = vmatprep.subr.mxu0 0.0
      %1062 = vmatpush2.msra.mxu0 0.0
      %1063 = vmatprep.subr.mxu0 0.0
      %1064 = vmatpush2.msra.mxu0 0.0
      %1065 = vmatprep.subr.mxu0 0.0
      %1066 = vmatpush2.msra.mxu0 0.0
      %1067 = vmatprep.subr.mxu0 0.0
      %1068 = vmatpush2.msra.mxu0 0.0
      %1069 = vmatprep.subr.mxu0 0.0
      %1070 = vmatpush2.msra.mxu0 0.0
      %1071 = vmatprep.subr.mxu0 0.0
      %1072 = vmatpush2.msra.mxu0 0.0
      %1073 = vmatprep.subr.mxu0 0.0
      %1074 = vmatpush2.msra.mxu0 0.0
      %1075 = vmatprep.subr.mxu0 0.0
      %1076 = vmatpush2.msra.mxu0 0.0
      %1077 = vmatprep.subr.mxu0 0.0
      %1078 = vmatpush2.msra.mxu0 0.0
      %1079 = vmatprep.subr.mxu0 0.0
      %1080 = vmatpush2.msra.mxu0 0.0
      %1081 = vmatprep.subr.mxu0 0.0
      %1082 = vmatpush2.msra.mxu0 0.0
      %1083 = vmatprep.subr.mxu0 0.0
      %1084 = vmatpush2.msra.mxu0 0.0
      %1085 = vmatprep.subr.mxu0 0.0
      %1086 = vmatpush2.msra.mxu0 0.0
      %1087 = vmatprep.mubr.f32.mxu0 0.0
      %1088 = vmatmul.mubr.f32.gmra.mxu0 %v1021
      %v1089 = vpop.f32.mrf.mxu0
      %v1090 = vadd.f32 %v1018, %v1089
      %v1091 = vpop.f32.mrf.mxu0
      %1092 = vdwg.mxu0
      %v1093 = vld [vmem:[%s905] sm:$0xff]
      %v1094 = vld [vmem:[%s905 + $0x8] sm:$0xff]
      %v1095 = vld [vmem:[%s905 + $0x10] sm:$0xff]
      %v1096 = vld [vmem:[%s905 + $0x18] sm:$0xff]
      %v1097 = vld [vmem:[%s908] sm:$0x1]
      %v1099 = vlaneseq
      %v1100 = vshrl.u32 %v1099, 7
      %v1101 = vsub.s32 0, %v1100
      %v1102 = vrot.slane %v1097, %v1101
      %v1105 = vsel %vm951, %v1008, 0
      %1107 = vmatprep.subr.mxu0 0.0
      %1108 = vmatpush1.msra.mxu0 0.0
      %1109 = vmatprep.subr.mxu0 0.0
      %1110 = vmatpush1.msra.mxu0 0.0
      %1111 = vmatprep.subr.mxu0 0.0
      %1112 = vmatpush1.msra.mxu0 0.0
      %1113 = vmatprep.subr.mxu0 0.0
      %1114 = vmatpush1.msra.mxu0 0.0
      %1115 = vmatprep.subr.mxu0 0.0
      %1116 = vmatpush1.msra.mxu0 0.0
      %1117 = vmatprep.subr.mxu0 0.0
      %1118 = vmatpush1.msra.mxu0 0.0
      %1119 = vmatprep.subr.mxu0 0.0
      %1120 = vmatpush1.msra.mxu0 0.0
      %1121 = vmatprep.subr.mxu0 0.0
      %1122 = vmatpush1.msra.mxu0 0.0
      %1123 = vmatprep.subr.mxu0 0.0
      %1124 = vmatpush1.msra.mxu0 0.0
      %1125 = vmatprep.subr.mxu0 0.0
      %1126 = vmatpush1.msra.mxu0 0.0
      %1127 = vmatprep.subr.mxu0 0.0
      %1128 = vmatpush1.msra.mxu0 0.0
      %1129 = vmatprep.subr.mxu0 0.0
      %1130 = vmatpush1.msra.mxu0 0.0
      %1131 = vmatprep.subr.mxu0 0.0
      %1132 = vmatpush1.msra.mxu0 %v1096
      %1133 = vmatprep.subr.mxu0 0.0
      %1134 = vmatpush1.msra.mxu0 %v1095
      %1135 = vmatprep.subr.mxu0 0.0
      %1136 = vmatpush1.msra.mxu0 %v1094
      %1137 = vmatprep.subr.mxu0 0.0
      %1138 = vmatpush1.msra.mxu0 %v1093
      %1139 = vmatprep.subr.mxu0 0.0
      %1140 = vmatpush2.msra.mxu0 0.0
      %1141 = vmatprep.subr.mxu0 0.0
      %1142 = vmatpush2.msra.mxu0 0.0
      %1143 = vmatprep.subr.mxu0 0.0
      %1144 = vmatpush2.msra.mxu0 0.0
      %1145 = vmatprep.subr.mxu0 0.0
      %1146 = vmatpush2.msra.mxu0 0.0
      %1147 = vmatprep.subr.mxu0 0.0
      %1148 = vmatpush2.msra.mxu0 0.0
      %1149 = vmatprep.subr.mxu0 0.0
      %1150 = vmatpush2.msra.mxu0 0.0
      %1151 = vmatprep.subr.mxu0 0.0
      %1152 = vmatpush2.msra.mxu0 0.0
      %1153 = vmatprep.subr.mxu0 0.0
      %1154 = vmatpush2.msra.mxu0 0.0
      %1155 = vmatprep.subr.mxu0 0.0
      %1156 = vmatpush2.msra.mxu0 0.0
      %1157 = vmatprep.subr.mxu0 0.0
      %1158 = vmatpush2.msra.mxu0 0.0
      %1159 = vmatprep.subr.mxu0 0.0
      %1160 = vmatpush2.msra.mxu0 0.0
      %1161 = vmatprep.subr.mxu0 0.0
      %1162 = vmatpush2.msra.mxu0 0.0
      %1163 = vmatprep.subr.mxu0 0.0
      %1164 = vmatpush2.msra.mxu0 0.0
      %1165 = vmatprep.subr.mxu0 0.0
      %1166 = vmatpush2.msra.mxu0 0.0
      %1167 = vmatprep.subr.mxu0 0.0
      %1168 = vmatpush2.msra.mxu0 0.0
      %1169 = vmatprep.subr.mxu0 0.0
      %1170 = vmatpush2.msra.mxu0 0.0
      %1171 = vmatprep.mubr.f32.mxu0 0.0
      %1172 = vmatmul.mubr.f32.gmra.mxu0 %v1105
      %v1173 = vpop.f32.mrf.mxu0
      %v1174 = vadd.f32 %v1102, %v1173
      %v1175 = vpop.f32.mrf.mxu0
      %1176 = vdwg.mxu0
      %v1177 = vld [vmem:[%s880] sm:$0x1]
      %v1178 = vlaneseq
      %v1179 = vand.u32 %v1178, 127
      %vm1180 = vcmp.ge.s32.totalorder %v1179, 0
      %vm1181 = vcmp.lt.s32.totalorder %v1179, 8
      %vm1182 = vmand %vm1180, %vm1181
      %v1183 = vsel %vm1182, 1, 0
      %v1184 = vcvt.s32.f32 %v1183
      %v1185 = vmul.f32 %v1090, %v1184
      %v1186 = vmul.f32 %v1174, %v1184
      %v1188 = vsel %vm951, %v1185, 0
      %v1191 = vsel %vm951, %v1186, 0
      %1193 = vmatprep.subr.mxu0 0.0
      %1194 = vmatpush1.xpose.msra.mxu0 0.0
      %1195 = vmatprep.subr.mxu0 0.0
      %1196 = vmatpush1.xpose.msra.mxu0 0.0
      %1197 = vmatprep.subr.mxu0 0.0
      %1198 = vmatpush1.xpose.msra.mxu0 0.0
      %1199 = vmatprep.subr.mxu0 0.0
      %1200 = vmatpush1.xpose.msra.mxu0 0.0
      %1201 = vmatprep.subr.mxu0 0.0
      %1202 = vmatpush1.xpose.msra.mxu0 0.0
      %1203 = vmatprep.subr.mxu0 0.0
      %1204 = vmatpush1.xpose.msra.mxu0 0.0
      %1205 = vmatprep.subr.mxu0 0.0
      %1206 = vmatpush1.xpose.msra.mxu0 0.0
      %1207 = vmatprep.subr.mxu0 0.0
      %1208 = vmatpush1.xpose.msra.mxu0 0.0
      %1209 = vmatprep.subr.mxu0 0.0
      %1210 = vmatpush1.xpose.msra.mxu0 0.0
      %1211 = vmatprep.subr.mxu0 0.0
      %1212 = vmatpush1.xpose.msra.mxu0 0.0
      %1213 = vmatprep.subr.mxu0 0.0
      %1214 = vmatpush1.xpose.msra.mxu0 0.0
      %1215 = vmatprep.subr.mxu0 0.0
      %1216 = vmatpush1.xpose.msra.mxu0 0.0
      %1217 = vmatprep.subr.mxu0 0.0
      %1218 = vmatpush1.xpose.msra.mxu0 0.0
      %1219 = vmatprep.subr.mxu0 0.0
      %1220 = vmatpush1.xpose.msra.mxu0 0.0
      %1221 = vmatprep.subr.mxu0 0.0
      %1222 = vmatpush1.xpose.msra.mxu0 0.0
      %1223 = vmatprep.subr.mxu0 0.0
      %1224 = vmatpush1.xpose.msra.mxu0 %v1191
      %1225 = vmatprep.subr.mxu0 0.0
      %1226 = vmatpush2.xpose.msra.mxu0 0.0
      %1227 = vmatprep.subr.mxu0 0.0
      %1228 = vmatpush2.xpose.msra.mxu0 0.0
      %1229 = vmatprep.subr.mxu0 0.0
      %1230 = vmatpush2.xpose.msra.mxu0 0.0
      %1231 = vmatprep.subr.mxu0 0.0
      %1232 = vmatpush2.xpose.msra.mxu0 0.0
      %1233 = vmatprep.subr.mxu0 0.0
      %1234 = vmatpush2.xpose.msra.mxu0 0.0
      %1235 = vmatprep.subr.mxu0 0.0
      %1236 = vmatpush2.xpose.msra.mxu0 0.0
      %1237 = vmatprep.subr.mxu0 0.0
      %1238 = vmatpush2.xpose.msra.mxu0 0.0
      %1239 = vmatprep.subr.mxu0 0.0
      %1240 = vmatpush2.xpose.msra.mxu0 0.0
      %1241 = vmatprep.subr.mxu0 0.0
      %1242 = vmatpush2.xpose.msra.mxu0 0.0
      %1243 = vmatprep.subr.mxu0 0.0
      %1244 = vmatpush2.xpose.msra.mxu0 0.0
      %1245 = vmatprep.subr.mxu0 0.0
      %1246 = vmatpush2.xpose.msra.mxu0 0.0
      %1247 = vmatprep.subr.mxu0 0.0
      %1248 = vmatpush2.xpose.msra.mxu0 0.0
      %1249 = vmatprep.subr.mxu0 0.0
      %1250 = vmatpush2.xpose.msra.mxu0 0.0
      %1251 = vmatprep.subr.mxu0 0.0
      %1252 = vmatpush2.xpose.msra.mxu0 0.0
      %1253 = vmatprep.subr.mxu0 0.0
      %1254 = vmatpush2.xpose.msra.mxu0 0.0
      %1255 = vmatprep.subr.mxu0 0.0
      %1256 = vmatpush2.xpose.msra.mxu0 0.0
      %1257 = vmatprep.mubr.f32.mxu0 0.0
      %1258 = vmatmul.mubr.f32.gmra.mxu0 %v1188
      %v1259 = vpop.f32.mrf.mxu0
      %v1260 = vadd.f32 0.0, %v1259
      %v1261 = vpop.f32.mrf.mxu0
      %1262 = vdwg.mxu0
      %v1263 = vmul.f32 %v1260, 0.35355338
      %v1265 = vlaneseq
      %v1266 = vshrl.u32 %v1265, 7
      %v1267 = vsub.s32 0, %v1266
      %v1268 = vrot.slane %v1177, %v1267
      %v1270 = vadd.f32 %v1263, %v1268
      %vm1271 = vcmask 64512
      %v1272 = vsel %vm1271, %v1270, -inf
      %1273 = vmax.xlane.f32.xlu0 %v1272
      %v1274 = vpop.xlane.xlu0 %1273
      %v1275 = vsub.f32 %v1270, %v1274
      %v1276 = vmul.f32 %v1275, 1.442695
      %v1277 = vpow.pop %v1276
      %v1278 = vsel %vm1271, %v1277, 0.0
      %1279 = vadd.xlane.f32.xlu0 %v1278
      %v1280 = vpop.xlane.xlu0 %1279
      %v1281 = vrcp.pop %v1280
      %v1282 = vmul.f32 %v1277, %v1281
      %1284 = vrot.lane.b32.xlu0 %v1184, 32
      %v1285 = vpop.permute.xlu0 %1284
      %v1287 = vmul.f32 %v1174, %v1285
      %vm1288 = vcmp.ge.s32.totalorder %v1179, 8
      %vm1289 = vcmp.lt.s32.totalorder %v1179, 16
      %vm1290 = vmand %vm1288, %vm1289
      %v1291 = vsel %vm1290, 1, 0
      %v1292 = vcvt.s32.f32 %v1291
      %v1293 = vmul.f32 %v1090, %v1292
      %v1294 = vmul.f32 %v1174, %v1292
      %v1296 = vsel %vm951, %v1293, 0
      %v1299 = vsel %vm951, %v1294, 0
      %1301 = vmatprep.subr.mxu0 0.0
      %1302 = vmatpush1.xpose.msra.mxu0 0.0
      %1303 = vmatprep.subr.mxu0 0.0
      %1304 = vmatpush1.xpose.msra.mxu0 0.0
      %1305 = vmatprep.subr.mxu0 0.0
      %1306 = vmatpush1.xpose.msra.mxu0 0.0
      %1307 = vmatprep.subr.mxu0 0.0
      %1308 = vmatpush1.xpose.msra.mxu0 0.0
      %1309 = vmatprep.subr.mxu0 0.0
      %1310 = vmatpush1.xpose.msra.mxu0 0.0
      %1311 = vmatprep.subr.mxu0 0.0
      %1312 = vmatpush1.xpose.msra.mxu0 0.0
      %1313 = vmatprep.subr.mxu0 0.0
      %1314 = vmatpush1.xpose.msra.mxu0 0.0
      %1315 = vmatprep.subr.mxu0 0.0
      %1316 = vmatpush1.xpose.msra.mxu0 0.0
      %1317 = vmatprep.subr.mxu0 0.0
      %1318 = vmatpush1.xpose.msra.mxu0 0.0
      %1319 = vmatprep.subr.mxu0 0.0
      %1320 = vmatpush1.xpose.msra.mxu0 0.0
      %1321 = vmatprep.subr.mxu0 0.0
      %1322 = vmatpush1.xpose.msra.mxu0 0.0
      %1323 = vmatprep.subr.mxu0 0.0
      %1324 = vmatpush1.xpose.msra.mxu0 0.0
      %1325 = vmatprep.subr.mxu0 0.0
      %1326 = vmatpush1.xpose.msra.mxu0 0.0
      %1327 = vmatprep.subr.mxu0 0.0
      %1328 = vmatpush1.xpose.msra.mxu0 0.0
      %1329 = vmatprep.subr.mxu0 0.0
      %1330 = vmatpush1.xpose.msra.mxu0 0.0
      %1331 = vmatprep.subr.mxu0 0.0
      %1332 = vmatpush1.xpose.msra.mxu0 %v1299
      %1333 = vmatprep.subr.mxu0 0.0
      %1334 = vmatpush2.xpose.msra.mxu0 0.0
      %1335 = vmatprep.subr.mxu0 0.0
      %1336 = vmatpush2.xpose.msra.mxu0 0.0
      %1337 = vmatprep.subr.mxu0 0.0
      %1338 = vmatpush2.xpose.msra.mxu0 0.0
      %1339 = vmatprep.subr.mxu0 0.0
      %1340 = vmatpush2.xpose.msra.mxu0 0.0
      %1341 = vmatprep.subr.mxu0 0.0
      %1342 = vmatpush2.xpose.msra.mxu0 0.0
      %1343 = vmatprep.subr.mxu0 0.0
      %1344 = vmatpush2.xpose.msra.mxu0 0.0
      %1345 = vmatprep.subr.mxu0 0.0
      %1346 = vmatpush2.xpose.msra.mxu0 0.0
      %1347 = vmatprep.subr.mxu0 0.0
      %1348 = vmatpush2.xpose.msra.mxu0 0.0
      %1349 = vmatprep.subr.mxu0 0.0
      %1350 = vmatpush2.xpose.msra.mxu0 0.0
      %1351 = vmatprep.subr.mxu0 0.0
      %1352 = vmatpush2.xpose.msra.mxu0 0.0
      %1353 = vmatprep.subr.mxu0 0.0
      %1354 = vmatpush2.xpose.msra.mxu0 0.0
      %1355 = vmatprep.subr.mxu0 0.0
      %1356 = vmatpush2.xpose.msra.mxu0 0.0
      %1357 = vmatprep.subr.mxu0 0.0
      %1358 = vmatpush2.xpose.msra.mxu0 0.0
      %1359 = vmatprep.subr.mxu0 0.0
      %1360 = vmatpush2.xpose.msra.mxu0 0.0
      %1361 = vmatprep.subr.mxu0 0.0
      %1362 = vmatpush2.xpose.msra.mxu0 0.0
      %1363 = vmatprep.subr.mxu0 0.0
      %1364 = vmatpush2.xpose.msra.mxu0 0.0
      %1365 = vmatprep.mubr.f32.mxu0 0.0
      %1366 = vmatmul.mubr.f32.gmra.mxu0 %v1296
      %v1367 = vpop.f32.mrf.mxu0
      %v1368 = vadd.f32 0.0, %v1367
      %v1369 = vpop.f32.mrf.mxu0
      %1370 = vdwg.mxu0
      %v1371 = vmul.f32 %v1368, 0.35355338
      %v1372 = vadd.f32 %v1371, %v1268
      %v1373 = vsel %vm1271, %v1372, -inf
      %1374 = vmax.xlane.f32.xlu0 %v1373
      %v1375 = vpop.xlane.xlu0 %1374
      %v1376 = vsub.f32 %v1372, %v1375
      %v1377 = vmul.f32 %v1376, 1.442695
      %v1378 = vpow.pop %v1377
      %v1379 = vsel %vm1271, %v1378, 0.0
      %1380 = vadd.xlane.f32.xlu0 %v1379
      %v1381 = vpop.xlane.xlu0 %1380
      %v1382 = vrcp.pop %v1381
      %v1383 = vmul.f32 %v1378, %v1382
      %1385 = vrot.lane.b32.xlu0 %v1292, 32
      %v1386 = vpop.permute.xlu0 %1385
      %v1388 = vmul.f32 %v1174, %v1386
      %1390 = vrot.lane.b32.xlu0 %v1388, 96
      %v1391 = vpop.permute.xlu0 %1390
      %v1394 = vsel %vm1271, %v1383, 0
      %1396 = vmatprep.subr.mxu0 0.0
      %1397 = vmatpush1.msra.mxu0 0.0
      %1398 = vmatprep.subr.mxu0 0.0
      %1399 = vmatpush1.msra.mxu0 0.0
      %1400 = vmatprep.subr.mxu0 0.0
      %1401 = vmatpush1.msra.mxu0 0.0
      %1402 = vmatprep.subr.mxu0 0.0
      %1403 = vmatpush1.msra.mxu0 0.0
      %1404 = vmatprep.subr.mxu0 0.0
      %1405 = vmatpush1.msra.mxu0 0.0
      %1406 = vmatprep.subr.mxu0 0.0
      %1407 = vmatpush1.msra.mxu0 0.0
      %1408 = vmatprep.subr.mxu0 0.0
      %1409 = vmatpush1.msra.mxu0 0.0
      %1410 = vmatprep.subr.mxu0 0.0
      %1411 = vmatpush1.msra.mxu0 0.0
      %1412 = vmatprep.subr.mxu0 0.0
      %1413 = vmatpush1.msra.mxu0 0.0
      %1414 = vmatprep.subr.mxu0 0.0
      %1415 = vmatpush1.msra.mxu0 0.0
      %1416 = vmatprep.subr.mxu0 0.0
      %1417 = vmatpush1.msra.mxu0 0.0
      %1418 = vmatprep.subr.mxu0 0.0
      %1419 = vmatpush1.msra.mxu0 0.0
      %1420 = vmatprep.subr.mxu0 0.0
      %1421 = vmatpush1.msra.mxu0 0.0
      %1422 = vmatprep.subr.mxu0 0.0
      %1423 = vmatpush1.msra.mxu0 0.0
      %1424 = vmatprep.subr.mxu0 0.0
      %1425 = vmatpush1.msra.mxu0 0.0
      %1426 = vmatprep.subr.mxu0 0.0
      %1427 = vmatpush1.msra.mxu0 %v1391
      %1428 = vmatprep.subr.mxu0 0.0
      %1429 = vmatpush2.msra.mxu0 0.0
      %1430 = vmatprep.subr.mxu0 0.0
      %1431 = vmatpush2.msra.mxu0 0.0
      %1432 = vmatprep.subr.mxu0 0.0
      %1433 = vmatpush2.msra.mxu0 0.0
      %1434 = vmatprep.subr.mxu0 0.0
      %1435 = vmatpush2.msra.mxu0 0.0
      %1436 = vmatprep.subr.mxu0 0.0
      %1437 = vmatpush2.msra.mxu0 0.0
      %1438 = vmatprep.subr.mxu0 0.0
      %1439 = vmatpush2.msra.mxu0 0.0
      %1440 = vmatprep.subr.mxu0 0.0
      %1441 = vmatpush2.msra.mxu0 0.0
      %1442 = vmatprep.subr.mxu0 0.0
      %1443 = vmatpush2.msra.mxu0 0.0
      %1444 = vmatprep.subr.mxu0 0.0
      %1445 = vmatpush2.msra.mxu0 0.0
      %1446 = vmatprep.subr.mxu0 0.0
      %1447 = vmatpush2.msra.mxu0 0.0
      %1448 = vmatprep.subr.mxu0 0.0
      %1449 = vmatpush2.msra.mxu0 0.0
      %1450 = vmatprep.subr.mxu0 0.0
      %1451 = vmatpush2.msra.mxu0 0.0
      %1452 = vmatprep.subr.mxu0 0.0
      %1453 = vmatpush2.msra.mxu0 0.0
      %1454 = vmatprep.subr.mxu0 0.0
      %1455 = vmatpush2.msra.mxu0 0.0
      %1456 = vmatprep.subr.mxu0 0.0
      %1457 = vmatpush2.msra.mxu0 0.0
      %1458 = vmatprep.subr.mxu0 0.0
      %1459 = vmatpush2.msra.mxu0 0.0
      %1460 = vmatprep.mubr.f32.mxu0 0.0
      %1461 = vmatmul.mubr.f32.gmra.mxu0 %v1394
      %v1462 = vpop.f32.mrf.mxu0
      %v1463 = vadd.f32 0.0, %v1462
      %v1464 = vpop.f32.mrf.mxu0
      %1465 = vdwg.mxu0
      %1467 = vrot.lane.b32.xlu0 %v1287, 96
      %v1468 = vpop.permute.xlu0 %1467
      %v1471 = vsel %vm1271, %v1282, 0
      %1473 = vmatprep.subr.mxu0 0.0
      %1474 = vmatpush1.msra.mxu0 0.0
      %1475 = vmatprep.subr.mxu0 0.0
      %1476 = vmatpush1.msra.mxu0 0.0
      %1477 = vmatprep.subr.mxu0 0.0
      %1478 = vmatpush1.msra.mxu0 0.0
      %1479 = vmatprep.subr.mxu0 0.0
      %1480 = vmatpush1.msra.mxu0 0.0
      %1481 = vmatprep.subr.mxu0 0.0
      %1482 = vmatpush1.msra.mxu0 0.0
      %1483 = vmatprep.subr.mxu0 0.0
      %1484 = vmatpush1.msra.mxu0 0.0
      %1485 = vmatprep.subr.mxu0 0.0
      %1486 = vmatpush1.msra.mxu0 0.0
      %1487 = vmatprep.subr.mxu0 0.0
      %1488 = vmatpush1.msra.mxu0 0.0
      %1489 = vmatprep.subr.mxu0 0.0
      %1490 = vmatpush1.msra.mxu0 0.0
      %1491 = vmatprep.subr.mxu0 0.0
      %1492 = vmatpush1.msra.mxu0 0.0
      %1493 = vmatprep.subr.mxu0 0.0
      %1494 = vmatpush1.msra.mxu0 0.0
      %1495 = vmatprep.subr.mxu0 0.0
      %1496 = vmatpush1.msra.mxu0 0.0
      %1497 = vmatprep.subr.mxu0 0.0
      %1498 = vmatpush1.msra.mxu0 0.0
      %1499 = vmatprep.subr.mxu0 0.0
      %1500 = vmatpush1.msra.mxu0 0.0
      %1501 = vmatprep.subr.mxu0 0.0
      %1502 = vmatpush1.msra.mxu0 0.0
      %1503 = vmatprep.subr.mxu0 0.0
      %1504 = vmatpush1.msra.mxu0 %v1468
      %1505 = vmatprep.subr.mxu0 0.0
      %1506 = vmatpush2.msra.mxu0 0.0
      %1507 = vmatprep.subr.mxu0 0.0
      %1508 = vmatpush2.msra.mxu0 0.0
      %1509 = vmatprep.subr.mxu0 0.0
      %1510 = vmatpush2.msra.mxu0 0.0
      %1511 = vmatprep.subr.mxu0 0.0
      %1512 = vmatpush2.msra.mxu0 0.0
      %1513 = vmatprep.subr.mxu0 0.0
      %1514 = vmatpush2.msra.mxu0 0.0
      %1515 = vmatprep.subr.mxu0 0.0
      %1516 = vmatpush2.msra.mxu0 0.0
      %1517 = vmatprep.subr.mxu0 0.0
      %1518 = vmatpush2.msra.mxu0 0.0
      %1519 = vmatprep.subr.mxu0 0.0
      %1520 = vmatpush2.msra.mxu0 0.0
      %1521 = vmatprep.subr.mxu0 0.0
      %1522 = vmatpush2.msra.mxu0 0.0
      %1523 = vmatprep.subr.mxu0 0.0
      %1524 = vmatpush2.msra.mxu0 0.0
      %1525 = vmatprep.subr.mxu0 0.0
      %1526 = vmatpush2.msra.mxu0 0.0
      %1527 = vmatprep.subr.mxu0 0.0
      %1528 = vmatpush2.msra.mxu0 0.0
      %1529 = vmatprep.subr.mxu0 0.0
      %1530 = vmatpush2.msra.mxu0 0.0
      %1531 = vmatprep.subr.mxu0 0.0
      %1532 = vmatpush2.msra.mxu0 0.0
      %1533 = vmatprep.subr.mxu0 0.0
      %1534 = vmatpush2.msra.mxu0 0.0
      %1535 = vmatprep.subr.mxu0 0.0
      %1536 = vmatpush2.msra.mxu0 0.0
      %1537 = vmatprep.mubr.f32.mxu0 0.0
      %1538 = vmatmul.mubr.f32.gmra.mxu0 %v1471
      %v1539 = vpop.f32.mrf.mxu0
      %v1540 = vadd.f32 %v1463, %v1539
      %v1541 = vpop.f32.mrf.mxu0
      %1542 = vdwg.mxu0
      %vm1543 = vcmp.ge.s32.totalorder %v1179, 16
      %vm1544 = vcmp.lt.s32.totalorder %v1179, 24
      %vm1545 = vmand %vm1543, %vm1544
      %v1546 = vsel %vm1545, 1, 0
      %v1547 = vcvt.s32.f32 %v1546
      %v1548 = vmul.f32 %v1090, %v1547
      %v1549 = vmul.f32 %v1174, %v1547
      %v1551 = vsel %vm951, %v1548, 0
      %v1554 = vsel %vm951, %v1549, 0
      %1556 = vmatprep.subr.mxu0 0.0
      %1557 = vmatpush1.xpose.msra.mxu0 0.0
      %1558 = vmatprep.subr.mxu0 0.0
      %1559 = vmatpush1.xpose.msra.mxu0 0.0
      %1560 = vmatprep.subr.mxu0 0.0
      %1561 = vmatpush1.xpose.msra.mxu0 0.0
      %1562 = vmatprep.subr.mxu0 0.0
      %1563 = vmatpush1.xpose.msra.mxu0 0.0
      %1564 = vmatprep.subr.mxu0 0.0
      %1565 = vmatpush1.xpose.msra.mxu0 0.0
      %1566 = vmatprep.subr.mxu0 0.0
      %1567 = vmatpush1.xpose.msra.mxu0 0.0
      %1568 = vmatprep.subr.mxu0 0.0
      %1569 = vmatpush1.xpose.msra.mxu0 0.0
      %1570 = vmatprep.subr.mxu0 0.0
      %1571 = vmatpush1.xpose.msra.mxu0 0.0
      %1572 = vmatprep.subr.mxu0 0.0
      %1573 = vmatpush1.xpose.msra.mxu0 0.0
      %1574 = vmatprep.subr.mxu0 0.0
      %1575 = vmatpush1.xpose.msra.mxu0 0.0
      %1576 = vmatprep.subr.mxu0 0.0
      %1577 = vmatpush1.xpose.msra.mxu0 0.0
      %1578 = vmatprep.subr.mxu0 0.0
      %1579 = vmatpush1.xpose.msra.mxu0 0.0
      %1580 = vmatprep.subr.mxu0 0.0
      %1581 = vmatpush1.xpose.msra.mxu0 0.0
      %1582 = vmatprep.subr.mxu0 0.0
      %1583 = vmatpush1.xpose.msra.mxu0 0.0
      %1584 = vmatprep.subr.mxu0 0.0
      %1585 = vmatpush1.xpose.msra.mxu0 0.0
      %1586 = vmatprep.subr.mxu0 0.0
      %1587 = vmatpush1.xpose.msra.mxu0 %v1554
      %1588 = vmatprep.subr.mxu0 0.0
      %1589 = vmatpush2.xpose.msra.mxu0 0.0
      %1590 = vmatprep.subr.mxu0 0.0
      %1591 = vmatpush2.xpose.msra.mxu0 0.0
      %1592 = vmatprep.subr.mxu0 0.0
      %1593 = vmatpush2.xpose.msra.mxu0 0.0
      %1594 = vmatprep.subr.mxu0 0.0
      %1595 = vmatpush2.xpose.msra.mxu0 0.0
      %1596 = vmatprep.subr.mxu0 0.0
      %1597 = vmatpush2.xpose.msra.mxu0 0.0
      %1598 = vmatprep.subr.mxu0 0.0
      %1599 = vmatpush2.xpose.msra.mxu0 0.0
      %1600 = vmatprep.subr.mxu0 0.0
      %1601 = vmatpush2.xpose.msra.mxu0 0.0
      %1602 = vmatprep.subr.mxu0 0.0
      %1603 = vmatpush2.xpose.msra.mxu0 0.0
      %1604 = vmatprep.subr.mxu0 0.0
      %1605 = vmatpush2.xpose.msra.mxu0 0.0
      %1606 = vmatprep.subr.mxu0 0.0
      %1607 = vmatpush2.xpose.msra.mxu0 0.0
      %1608 = vmatprep.subr.mxu0 0.0
      %1609 = vmatpush2.xpose.msra.mxu0 0.0
      %1610 = vmatprep.subr.mxu0 0.0
      %1611 = vmatpush2.xpose.msra.mxu0 0.0
      %1612 = vmatprep.subr.mxu0 0.0
      %1613 = vmatpush2.xpose.msra.mxu0 0.0
      %1614 = vmatprep.subr.mxu0 0.0
      %1615 = vmatpush2.xpose.msra.mxu0 0.0
      %1616 = vmatprep.subr.mxu0 0.0
      %1617 = vmatpush2.xpose.msra.mxu0 0.0
      %1618 = vmatprep.subr.mxu0 0.0
      %1619 = vmatpush2.xpose.msra.mxu0 0.0
      %1620 = vmatprep.mubr.f32.mxu0 0.0
      %1621 = vmatmul.mubr.f32.gmra.mxu0 %v1551
      %v1622 = vpop.f32.mrf.mxu0
      %v1623 = vadd.f32 0.0, %v1622
      %v1624 = vpop.f32.mrf.mxu0
      %1625 = vdwg.mxu0
      %v1626 = vmul.f32 %v1623, 0.35355338
      %v1627 = vadd.f32 %v1626, %v1268
      %v1628 = vsel %vm1271, %v1627, -inf
      %1629 = vmax.xlane.f32.xlu0 %v1628
      %v1630 = vpop.xlane.xlu0 %1629
      %v1631 = vsub.f32 %v1627, %v1630
      %v1632 = vmul.f32 %v1631, 1.442695
      %v1633 = vpow.pop %v1632
      %v1634 = vsel %vm1271, %v1633, 0.0
      %1635 = vadd.xlane.f32.xlu0 %v1634
      %v1636 = vpop.xlane.xlu0 %1635
      %v1637 = vrcp.pop %v1636
      %v1638 = vmul.f32 %v1633, %v1637
      %1640 = vrot.lane.b32.xlu0 %v1547, 32
      %v1641 = vpop.permute.xlu0 %1640
      %v1643 = vmul.f32 %v1174, %v1641
      %1645 = vrot.lane.b32.xlu0 %v1643, 96
      %v1646 = vpop.permute.xlu0 %1645
      %v1649 = vsel %vm1271, %v1638, 0
      %1651 = vmatprep.subr.mxu0 0.0
      %1652 = vmatpush1.msra.mxu0 0.0
      %1653 = vmatprep.subr.mxu0 0.0
      %1654 = vmatpush1.msra.mxu0 0.0
      %1655 = vmatprep.subr.mxu0 0.0
      %1656 = vmatpush1.msra.mxu0 0.0
      %1657 = vmatprep.subr.mxu0 0.0
      %1658 = vmatpush1.msra.mxu0 0.0
      %1659 = vmatprep.subr.mxu0 0.0
      %1660 = vmatpush1.msra.mxu0 0.0
      %1661 = vmatprep.subr.mxu0 0.0
      %1662 = vmatpush1.msra.mxu0 0.0
      %1663 = vmatprep.subr.mxu0 0.0
      %1664 = vmatpush1.msra.mxu0 0.0
      %1665 = vmatprep.subr.mxu0 0.0
      %1666 = vmatpush1.msra.mxu0 0.0
      %1667 = vmatprep.subr.mxu0 0.0
      %1668 = vmatpush1.msra.mxu0 0.0
      %1669 = vmatprep.subr.mxu0 0.0
      %1670 = vmatpush1.msra.mxu0 0.0
      %1671 = vmatprep.subr.mxu0 0.0
      %1672 = vmatpush1.msra.mxu0 0.0
      %1673 = vmatprep.subr.mxu0 0.0
      %1674 = vmatpush1.msra.mxu0 0.0
      %1675 = vmatprep.subr.mxu0 0.0
      %1676 = vmatpush1.msra.mxu0 0.0
      %1677 = vmatprep.subr.mxu0 0.0
      %1678 = vmatpush1.msra.mxu0 0.0
      %1679 = vmatprep.subr.mxu0 0.0
      %1680 = vmatpush1.msra.mxu0 0.0
      %1681 = vmatprep.subr.mxu0 0.0
      %1682 = vmatpush1.msra.mxu0 %v1646
      %1683 = vmatprep.subr.mxu0 0.0
      %1684 = vmatpush2.msra.mxu0 0.0
      %1685 = vmatprep.subr.mxu0 0.0
      %1686 = vmatpush2.msra.mxu0 0.0
      %1687 = vmatprep.subr.mxu0 0.0
      %1688 = vmatpush2.msra.mxu0 0.0
      %1689 = vmatprep.subr.mxu0 0.0
      %1690 = vmatpush2.msra.mxu0 0.0
      %1691 = vmatprep.subr.mxu0 0.0
      %1692 = vmatpush2.msra.mxu0 0.0
      %1693 = vmatprep.subr.mxu0 0.0
      %1694 = vmatpush2.msra.mxu0 0.0
      %1695 = vmatprep.subr.mxu0 0.0
      %1696 = vmatpush2.msra.mxu0 0.0
      %1697 = vmatprep.subr.mxu0 0.0
      %1698 = vmatpush2.msra.mxu0 0.0
      %1699 = vmatprep.subr.mxu0 0.0
      %1700 = vmatpush2.msra.mxu0 0.0
      %1701 = vmatprep.subr.mxu0 0.0
      %1702 = vmatpush2.msra.mxu0 0.0
      %1703 = vmatprep.subr.mxu0 0.0
      %1704 = vmatpush2.msra.mxu0 0.0
      %1705 = vmatprep.subr.mxu0 0.0
      %1706 = vmatpush2.msra.mxu0 0.0
      %1707 = vmatprep.subr.mxu0 0.0
      %1708 = vmatpush2.msra.mxu0 0.0
      %1709 = vmatprep.subr.mxu0 0.0
      %1710 = vmatpush2.msra.mxu0 0.0
      %1711 = vmatprep.subr.mxu0 0.0
      %1712 = vmatpush2.msra.mxu0 0.0
      %1713 = vmatprep.subr.mxu0 0.0
      %1714 = vmatpush2.msra.mxu0 0.0
      %1715 = vmatprep.mubr.f32.mxu0 0.0
      %1716 = vmatmul.mubr.f32.gmra.mxu0 %v1649
      %v1717 = vpop.f32.mrf.mxu0
      %v1718 = vadd.f32 0.0, %v1717
      %v1719 = vpop.f32.mrf.mxu0
      %1720 = vdwg.mxu0
      %v1721 = vadd.f32 %v1540, %v1718
      %vm1722 = vcmp.ge.s32.totalorder %v1179, 24
      %vm1723 = vcmp.lt.s32.totalorder %v1179, 32
      %vm1724 = vmand %vm1722, %vm1723
      %v1725 = vsel %vm1724, 1, 0
      %v1726 = vcvt.s32.f32 %v1725
      %v1727 = vmul.f32 %v1090, %v1726
      %v1728 = vmul.f32 %v1174, %v1726
      %v1730 = vsel %vm951, %v1727, 0
      %v1733 = vsel %vm951, %v1728, 0
      %1735 = vmatprep.subr.mxu0 0.0
      %1736 = vmatpush1.xpose.msra.mxu0 0.0
      %1737 = vmatprep.subr.mxu0 0.0
      %1738 = vmatpush1.xpose.msra.mxu0 0.0
      %1739 = vmatprep.subr.mxu0 0.0
      %1740 = vmatpush1.xpose.msra.mxu0 0.0
      %1741 = vmatprep.subr.mxu0 0.0
      %1742 = vmatpush1.xpose.msra.mxu0 0.0
      %1743 = vmatprep.subr.mxu0 0.0
      %1744 = vmatpush1.xpose.msra.mxu0 0.0
      %1745 = vmatprep.subr.mxu0 0.0
      %1746 = vmatpush1.xpose.msra.mxu0 0.0
      %1747 = vmatprep.subr.mxu0 0.0
      %1748 = vmatpush1.xpose.msra.mxu0 0.0
      %1749 = vmatprep.subr.mxu0 0.0
      %1750 = vmatpush1.xpose.msra.mxu0 0.0
      %1751 = vmatprep.subr.mxu0 0.0
      %1752 = vmatpush1.xpose.msra.mxu0 0.0
      %1753 = vmatprep.subr.mxu0 0.0
      %1754 = vmatpush1.xpose.msra.mxu0 0.0
      %1755 = vmatprep.subr.mxu0 0.0
      %1756 = vmatpush1.xpose.msra.mxu0 0.0
      %1757 = vmatprep.subr.mxu0 0.0
      %1758 = vmatpush1.xpose.msra.mxu0 0.0
      %1759 = vmatprep.subr.mxu0 0.0
      %1760 = vmatpush1.xpose.msra.mxu0 0.0
      %1761 = vmatprep.subr.mxu0 0.0
      %1762 = vmatpush1.xpose.msra.mxu0 0.0
      %1763 = vmatprep.subr.mxu0 0.0
      %1764 = vmatpush1.xpose.msra.mxu0 0.0
      %1765 = vmatprep.subr.mxu0 0.0
      %1766 = vmatpush1.xpose.msra.mxu0 %v1733
      %1767 = vmatprep.subr.mxu0 0.0
      %1768 = vmatpush2.xpose.msra.mxu0 0.0
      %1769 = vmatprep.subr.mxu0 0.0
      %1770 = vmatpush2.xpose.msra.mxu0 0.0
      %1771 = vmatprep.subr.mxu0 0.0
      %1772 = vmatpush2.xpose.msra.mxu0 0.0
      %1773 = vmatprep.subr.mxu0 0.0
      %1774 = vmatpush2.xpose.msra.mxu0 0.0
      %1775 = vmatprep.subr.mxu0 0.0
      %1776 = vmatpush2.xpose.msra.mxu0 0.0
      %1777 = vmatprep.subr.mxu0 0.0
      %1778 = vmatpush2.xpose.msra.mxu0 0.0
      %1779 = vmatprep.subr.mxu0 0.0
      %1780 = vmatpush2.xpose.msra.mxu0 0.0
      %1781 = vmatprep.subr.mxu0 0.0
      %1782 = vmatpush2.xpose.msra.mxu0 0.0
      %1783 = vmatprep.subr.mxu0 0.0
      %1784 = vmatpush2.xpose.msra.mxu0 0.0
      %1785 = vmatprep.subr.mxu0 0.0
      %1786 = vmatpush2.xpose.msra.mxu0 0.0
      %1787 = vmatprep.subr.mxu0 0.0
      %1788 = vmatpush2.xpose.msra.mxu0 0.0
      %1789 = vmatprep.subr.mxu0 0.0
      %1790 = vmatpush2.xpose.msra.mxu0 0.0
      %1791 = vmatprep.subr.mxu0 0.0
      %1792 = vmatpush2.xpose.msra.mxu0 0.0
      %1793 = vmatprep.subr.mxu0 0.0
      %1794 = vmatpush2.xpose.msra.mxu0 0.0
      %1795 = vmatprep.subr.mxu0 0.0
      %1796 = vmatpush2.xpose.msra.mxu0 0.0
      %1797 = vmatprep.subr.mxu0 0.0
      %1798 = vmatpush2.xpose.msra.mxu0 0.0
      %1799 = vmatprep.mubr.f32.mxu0 0.0
      %1800 = vmatmul.mubr.f32.gmra.mxu0 %v1730
      %v1801 = vpop.f32.mrf.mxu0
      %v1802 = vadd.f32 0.0, %v1801
      %v1803 = vpop.f32.mrf.mxu0
      %1804 = vdwg.mxu0
      %v1805 = vmul.f32 %v1802, 0.35355338
      %v1806 = vadd.f32 %v1805, %v1268
      %v1807 = vsel %vm1271, %v1806, -inf
      %1808 = vmax.xlane.f32.xlu0 %v1807
      %v1809 = vpop.xlane.xlu0 %1808
      %v1810 = vsub.f32 %v1806, %v1809
      %v1811 = vmul.f32 %v1810, 1.442695
      %v1812 = vpow.pop %v1811
      %v1813 = vsel %vm1271, %v1812, 0.0
      %1814 = vadd.xlane.f32.xlu0 %v1813
      %v1815 = vpop.xlane.xlu0 %1814
      %v1816 = vrcp.pop %v1815
      %v1817 = vmul.f32 %v1812, %v1816
      %1819 = vrot.lane.b32.xlu0 %v1726, 32
      %v1820 = vpop.permute.xlu0 %1819
      %v1822 = vmul.f32 %v1174, %v1820
      %1824 = vrot.lane.b32.xlu0 %v1822, 96
      %v1825 = vpop.permute.xlu0 %1824
      %v1828 = vsel %vm1271, %v1817, 0
      %1830 = vmatprep.subr.mxu0 0.0
      %1831 = vmatpush1.msra.mxu0 0.0
      %1832 = vmatprep.subr.mxu0 0.0
      %1833 = vmatpush1.msra.mxu0 0.0
      %1834 = vmatprep.subr.mxu0 0.0
      %1835 = vmatpush1.msra.mxu0 0.0
      %1836 = vmatprep.subr.mxu0 0.0
      %1837 = vmatpush1.msra.mxu0 0.0
      %1838 = vmatprep.subr.mxu0 0.0
      %1839 = vmatpush1.msra.mxu0 0.0
      %1840 = vmatprep.subr.mxu0 0.0
      %1841 = vmatpush1.msra.mxu0 0.0
      %1842 = vmatprep.subr.mxu0 0.0
      %1843 = vmatpush1.msra.mxu0 0.0
      %1844 = vmatprep.subr.mxu0 0.0
      %1845 = vmatpush1.msra.mxu0 0.0
      %1846 = vmatprep.subr.mxu0 0.0
      %1847 = vmatpush1.msra.mxu0 0.0
      %1848 = vmatprep.subr.mxu0 0.0
      %1849 = vmatpush1.msra.mxu0 0.0
      %1850 = vmatprep.subr.mxu0 0.0
      %1851 = vmatpush1.msra.mxu0 0.0
      %1852 = vmatprep.subr.mxu0 0.0
      %1853 = vmatpush1.msra.mxu0 0.0
      %1854 = vmatprep.subr.mxu0 0.0
      %1855 = vmatpush1.msra.mxu0 0.0
      %1856 = vmatprep.subr.mxu0 0.0
      %1857 = vmatpush1.msra.mxu0 0.0
      %1858 = vmatprep.subr.mxu0 0.0
      %1859 = vmatpush1.msra.mxu0 0.0
      %1860 = vmatprep.subr.mxu0 0.0
      %1861 = vmatpush1.msra.mxu0 %v1825
      %1862 = vmatprep.subr.mxu0 0.0
      %1863 = vmatpush2.msra.mxu0 0.0
      %1864 = vmatprep.subr.mxu0 0.0
      %1865 = vmatpush2.msra.mxu0 0.0
      %1866 = vmatprep.subr.mxu0 0.0
      %1867 = vmatpush2.msra.mxu0 0.0
      %1868 = vmatprep.subr.mxu0 0.0
      %1869 = vmatpush2.msra.mxu0 0.0
      %1870 = vmatprep.subr.mxu0 0.0
      %1871 = vmatpush2.msra.mxu0 0.0
      %1872 = vmatprep.subr.mxu0 0.0
      %1873 = vmatpush2.msra.mxu0 0.0
      %1874 = vmatprep.subr.mxu0 0.0
      %1875 = vmatpush2.msra.mxu0 0.0
      %1876 = vmatprep.subr.mxu0 0.0
      %1877 = vmatpush2.msra.mxu0 0.0
      %1878 = vmatprep.subr.mxu0 0.0
      %1879 = vmatpush2.msra.mxu0 0.0
      %1880 = vmatprep.subr.mxu0 0.0
      %1881 = vmatpush2.msra.mxu0 0.0
      %1882 = vmatprep.subr.mxu0 0.0
      %1883 = vmatpush2.msra.mxu0 0.0
      %1884 = vmatprep.subr.mxu0 0.0
      %1885 = vmatpush2.msra.mxu0 0.0
      %1886 = vmatprep.subr.mxu0 0.0
      %1887 = vmatpush2.msra.mxu0 0.0
      %1888 = vmatprep.subr.mxu0 0.0
      %1889 = vmatpush2.msra.mxu0 0.0
      %1890 = vmatprep.subr.mxu0 0.0
      %1891 = vmatpush2.msra.mxu0 0.0
      %1892 = vmatprep.subr.mxu0 0.0
      %1893 = vmatpush2.msra.mxu0 0.0
      %1894 = vmatprep.mubr.f32.mxu0 0.0
      %1895 = vmatmul.mubr.f32.gmra.mxu0 %v1828
      %v1896 = vpop.f32.mrf.mxu0
      %v1897 = vadd.f32 0.0, %v1896
      %v1898 = vpop.f32.mrf.mxu0
      %1899 = vdwg.mxu0
      %v1900 = vadd.f32 %v1721, %v1897
      %v1901 = vld [vmem:[%s913] sm:$0xff]
      %v1902 = vld [vmem:[%s913 + $0x8] sm:$0xff]
      %v1903 = vld [vmem:[%s913 + $0x10] sm:$0xff]
      %v1904 = vld [vmem:[%s913 + $0x18] sm:$0xff]
      %v1905 = vld [vmem:[%s916] sm:$0x1]
      %v1907 = vlaneseq
      %v1908 = vshrl.u32 %v1907, 7
      %v1909 = vsub.s32 0, %v1908
      %v1910 = vrot.slane %v1905, %v1909
      %v1913 = vsel %vm951, %v1900, 0
      %1915 = vmatprep.subr.mxu0 0.0
      %1916 = vmatpush1.msra.mxu0 0.0
      %1917 = vmatprep.subr.mxu0 0.0
      %1918 = vmatpush1.msra.mxu0 0.0
      %1919 = vmatprep.subr.mxu0 0.0
      %1920 = vmatpush1.msra.mxu0 0.0
      %1921 = vmatprep.subr.mxu0 0.0
      %1922 = vmatpush1.msra.mxu0 0.0
      %1923 = vmatprep.subr.mxu0 0.0
      %1924 = vmatpush1.msra.mxu0 0.0
      %1925 = vmatprep.subr.mxu0 0.0
      %1926 = vmatpush1.msra.mxu0 0.0
      %1927 = vmatprep.subr.mxu0 0.0
      %1928 = vmatpush1.msra.mxu0 0.0
      %1929 = vmatprep.subr.mxu0 0.0
      %1930 = vmatpush1.msra.mxu0 0.0
      %1931 = vmatprep.subr.mxu0 0.0
      %1932 = vmatpush1.msra.mxu0 0.0
      %1933 = vmatprep.subr.mxu0 0.0
      %1934 = vmatpush1.msra.mxu0 0.0
      %1935 = vmatprep.subr.mxu0 0.0
      %1936 = vmatpush1.msra.mxu0 0.0
      %1937 = vmatprep.subr.mxu0 0.0
      %1938 = vmatpush1.msra.mxu0 0.0
      %1939 = vmatprep.subr.mxu0 0.0
      %1940 = vmatpush1.msra.mxu0 %v1904
      %1941 = vmatprep.subr.mxu0 0.0
      %1942 = vmatpush1.msra.mxu0 %v1903
      %1943 = vmatprep.subr.mxu0 0.0
      %1944 = vmatpush1.msra.mxu0 %v1902
      %1945 = vmatprep.subr.mxu0 0.0
      %1946 = vmatpush1.msra.mxu0 %v1901
      %1947 = vmatprep.subr.mxu0 0.0
      %1948 = vmatpush2.msra.mxu0 0.0
      %1949 = vmatprep.subr.mxu0 0.0
      %1950 = vmatpush2.msra.mxu0 0.0
      %1951 = vmatprep.subr.mxu0 0.0
      %1952 = vmatpush2.msra.mxu0 0.0
      %1953 = vmatprep.subr.mxu0 0.0
      %1954 = vmatpush2.msra.mxu0 0.0
      %1955 = vmatprep.subr.mxu0 0.0
      %1956 = vmatpush2.msra.mxu0 0.0
      %1957 = vmatprep.subr.mxu0 0.0
      %1958 = vmatpush2.msra.mxu0 0.0
      %1959 = vmatprep.subr.mxu0 0.0
      %1960 = vmatpush2.msra.mxu0 0.0
      %1961 = vmatprep.subr.mxu0 0.0
      %1962 = vmatpush2.msra.mxu0 0.0
      %1963 = vmatprep.subr.mxu0 0.0
      %1964 = vmatpush2.msra.mxu0 0.0
      %1965 = vmatprep.subr.mxu0 0.0
      %1966 = vmatpush2.msra.mxu0 0.0
      %1967 = vmatprep.subr.mxu0 0.0
      %1968 = vmatpush2.msra.mxu0 0.0
      %1969 = vmatprep.subr.mxu0 0.0
      %1970 = vmatpush2.msra.mxu0 0.0
      %1971 = vmatprep.subr.mxu0 0.0
      %1972 = vmatpush2.msra.mxu0 0.0
      %1973 = vmatprep.subr.mxu0 0.0
      %1974 = vmatpush2.msra.mxu0 0.0
      %1975 = vmatprep.subr.mxu0 0.0
      %1976 = vmatpush2.msra.mxu0 0.0
      %1977 = vmatprep.subr.mxu0 0.0
      %1978 = vmatpush2.msra.mxu0 0.0
      %1979 = vmatprep.mubr.f32.mxu0 0.0
      %1980 = vmatmul.mubr.f32.gmra.mxu0 %v1913
      %v1981 = vpop.f32.mrf.mxu0
      %v1982 = vadd.f32 %v1910, %v1981
      %v1983 = vpop.f32.mrf.mxu0
      %1984 = vdwg.mxu0
      %v1985 = vadd.f32 %v947, %v1982
      %v1986 = vld [vmem:[%s919] sm:$0x1]
      %v1987 = vld [vmem:[%s922] sm:$0x1]
      %v1988 = vsel %vm951, %v1985, 0.0
      %1989 = vadd.xlane.f32.xlu0 %v1988
      %v1990 = vpop.xlane.xlu0 %1989
      %v1991 = vmul.f32 %v1990, %v955
      %v1992 = vsub.f32 %v1985, %v1991
      %v1993 = vmul.f32 %v1992, %v1992
      %v1994 = vsel %vm951, %v1993, 0.0
      %1995 = vadd.xlane.f32.xlu0 %v1994
      %v1996 = vpop.xlane.xlu0 %1995
      %v1997 = vmul.f32 %v1996, %v955
      %v1998 = vadd.f32 %v1997, 1e-05
      %v1999 = vrsqrt.pop %v1998
      %v2000 = vmul.f32 %v1992, %v1999
      %v2002 = vlaneseq
      %v2003 = vshrl.u32 %v2002, 7
      %v2004 = vsub.s32 0, %v2003
      %v2005 = vrot.slane %v1986, %v2004
      %v2007 = vmul.f32 %v2000, %v2005
      %v2009 = vlaneseq
      %v2010 = vshrl.u32 %v2009, 7
      %v2011 = vsub.s32 0, %v2010
      %v2012 = vrot.slane %v1987, %v2011
      %v2014 = vadd.f32 %v2007, %v2012
      %v2015 = vld [vmem:[%s927] sm:$0xff]
      %v2016 = vld [vmem:[%s927 + $0x8] sm:$0xff]
      %v2017 = vld [vmem:[%s927 + $0x10] sm:$0xff]
      %v2018 = vld [vmem:[%s927 + $0x18] sm:$0xff]
      %v2019 = vld [vmem:[%s930] sm:$0x1]
      %v2021 = vlaneseq
      %v2022 = vshrl.u32 %v2021, 7
      %v2023 = vsub.s32 0, %v2022
      %v2024 = vrot.slane %v2019, %v2023
      %v2027 = vsel %vm951, %v2014, 0
      %2029 = vmatprep.subr.mxu0 0.0
      %2030 = vmatpush1.msra.mxu0 0.0
      %2031 = vmatprep.subr.mxu0 0.0
      %2032 = vmatpush1.msra.mxu0 0.0
      %2033 = vmatprep.subr.mxu0 0.0
      %2034 = vmatpush1.msra.mxu0 0.0
      %2035 = vmatprep.subr.mxu0 0.0
      %2036 = vmatpush1.msra.mxu0 0.0
      %2037 = vmatprep.subr.mxu0 0.0
      %2038 = vmatpush1.msra.mxu0 0.0
      %2039 = vmatprep.subr.mxu0 0.0
      %2040 = vmatpush1.msra.mxu0 0.0
      %2041 = vmatprep.subr.mxu0 0.0
      %2042 = vmatpush1.msra.mxu0 0.0
      %2043 = vmatprep.subr.mxu0 0.0
      %2044 = vmatpush1.msra.mxu0 0.0
      %2045 = vmatprep.subr.mxu0 0.0
      %2046 = vmatpush1.msra.mxu0 0.0
      %2047 = vmatprep.subr.mxu0 0.0
      %2048 = vmatpush1.msra.mxu0 0.0
      %2049 = vmatprep.subr.mxu0 0.0
      %2050 = vmatpush1.msra.mxu0 0.0
      %2051 = vmatprep.subr.mxu0 0.0
      %2052 = vmatpush1.msra.mxu0 0.0
      %2053 = vmatprep.subr.mxu0 0.0
      %2054 = vmatpush1.msra.mxu0 %v2018
      %2055 = vmatprep.subr.mxu0 0.0
      %2056 = vmatpush1.msra.mxu0 %v2017
      %2057 = vmatprep.subr.mxu0 0.0
      %2058 = vmatpush1.msra.mxu0 %v2016
      %2059 = vmatprep.subr.mxu0 0.0
      %2060 = vmatpush1.msra.mxu0 %v2015
      %2061 = vmatprep.subr.mxu0 0.0
      %2062 = vmatpush2.msra.mxu0 0.0
      %2063 = vmatprep.subr.mxu0 0.0
      %2064 = vmatpush2.msra.mxu0 0.0
      %2065 = vmatprep.subr.mxu0 0.0
      %2066 = vmatpush2.msra.mxu0 0.0
      %2067 = vmatprep.subr.mxu0 0.0
      %2068 = vmatpush2.msra.mxu0 0.0
      %2069 = vmatprep.subr.mxu0 0.0
      %2070 = vmatpush2.msra.mxu0 0.0
      %2071 = vmatprep.subr.mxu0 0.0
      %2072 = vmatpush2.msra.mxu0 0.0
      %2073 = vmatprep.subr.mxu0 0.0
      %2074 = vmatpush2.msra.mxu0 0.0
      %2075 = vmatprep.subr.mxu0 0.0
      %2076 = vmatpush2.msra.mxu0 0.0
      %2077 = vmatprep.subr.mxu0 0.0
      %2078 = vmatpush2.msra.mxu0 0.0
      %2079 = vmatprep.subr.mxu0 0.0
      %2080 = vmatpush2.msra.mxu0 0.0
      %2081 = vmatprep.subr.mxu0 0.0
      %2082 = vmatpush2.msra.mxu0 0.0
      %2083 = vmatprep.subr.mxu0 0.0
      %2084 = vmatpush2.msra.mxu0 0.0
      %2085 = vmatprep.subr.mxu0 0.0
      %2086 = vmatpush2.msra.mxu0 0.0
      %2087 = vmatprep.subr.mxu0 0.0
      %2088 = vmatpush2.msra.mxu0 0.0
      %2089 = vmatprep.subr.mxu0 0.0
      %2090 = vmatpush2.msra.mxu0 0.0
      %2091 = vmatprep.subr.mxu0 0.0
      %2092 = vmatpush2.msra.mxu0 0.0
      %2093 = vmatprep.mubr.f32.mxu0 0.0
      %2094 = vmatmul.mubr.f32.gmra.mxu0 %v2027
      %v2095 = vpop.f32.mrf.mxu0
      %v2096 = vadd.f32 %v2024, %v2095
      %v2097 = vpop.f32.mrf.mxu0
      %2098 = vdwg.mxu0
      %v2099 = vmax.f32 %v2096, 0.0
      %v2100 = vld [vmem:[%s935] sm:$0xff]
      %v2101 = vld [vmem:[%s935 + $0x8] sm:$0xff]
      %v2102 = vld [vmem:[%s935 + $0x10] sm:$0xff]
      %v2103 = vld [vmem:[%s935 + $0x18] sm:$0xff]
      %v2104 = vld [vmem:[%s938] sm:$0x1]
      %v2106 = vlaneseq
      %v2107 = vshrl.u32 %v2106, 7
      %v2108 = vsub.s32 0, %v2107
      %v2109 = vrot.slane %v2104, %v2108
      %v2112 = vsel %vm951, %v2099, 0
      %2114 = vmatprep.subr.mxu0 0.0
      %2115 = vmatpush1.msra.mxu0 0.0
      %2116 = vmatprep.subr.mxu0 0.0
      %2117 = vmatpush1.msra.mxu0 0.0
      %2118 = vmatprep.subr.mxu0 0.0
      %2119 = vmatpush1.msra.mxu0 0.0
      %2120 = vmatprep.subr.mxu0 0.0
      %2121 = vmatpush1.msra.mxu0 0.0
      %2122 = vmatprep.subr.mxu0 0.0
      %2123 = vmatpush1.msra.mxu0 0.0
      %2124 = vmatprep.subr.mxu0 0.0
      %2125 = vmatpush1.msra.mxu0 0.0
      %2126 = vmatprep.subr.mxu0 0.0
      %2127 = vmatpush1.msra.mxu0 0.0
      %2128 = vmatprep.subr.mxu0 0.0
      %2129 = vmatpush1.msra.mxu0 0.0
      %2130 = vmatprep.subr.mxu0 0.0
      %2131 = vmatpush1.msra.mxu0 0.0
      %2132 = vmatprep.subr.mxu0 0.0
      %2133 = vmatpush1.msra.mxu0 0.0
      %2134 = vmatprep.subr.mxu0 0.0
      %2135 = vmatpush1.msra.mxu0 0.0
      %2136 = vmatprep.subr.mxu0 0.0
      %2137 = vmatpush1.msra.mxu0 0.0
      %2138 = vmatprep.subr.mxu0 0.0
      %2139 = vmatpush1.msra.mxu0 %v2103
      %2140 = vmatprep.subr.mxu0 0.0
      %2141 = vmatpush1.msra.mxu0 %v2102
      %2142 = vmatprep.subr.mxu0 0.0
      %2143 = vmatpush1.msra.mxu0 %v2101
      %2144 = vmatprep.subr.mxu0 0.0
      %2145 = vmatpush1.msra.mxu0 %v2100
      %2146 = vmatprep.subr.mxu0 0.0
      %2147 = vmatpush2.msra.mxu0 0.0
      %2148 = vmatprep.subr.mxu0 0.0
      %2149 = vmatpush2.msra.mxu0 0.0
      %2150 = vmatprep.subr.mxu0 0.0
      %2151 = vmatpush2.msra.mxu0 0.0
      %2152 = vmatprep.subr.mxu0 0.0
      %2153 = vmatpush2.msra.mxu0 0.0
      %2154 = vmatprep.subr.mxu0 0.0
      %2155 = vmatpush2.msra.mxu0 0.0
      %2156 = vmatprep.subr.mxu0 0.0
      %2157 = vmatpush2.msra.mxu0 0.0
      %2158 = vmatprep.subr.mxu0 0.0
      %2159 = vmatpush2.msra.mxu0 0.0
      %2160 = vmatprep.subr.mxu0 0.0
      %2161 = vmatpush2.msra.mxu0 0.0
      %2162 = vmatprep.subr.mxu0 0.0
      %2163 = vmatpush2.msra.mxu0 0.0
      %2164 = vmatprep.subr.mxu0 0.0
      %2165 = vmatpush2.msra.mxu0 0.0
      %2166 = vmatprep.subr.mxu0 0.0
      %2167 = vmatpush2.msra.mxu0 0.0
      %2168 = vmatprep.subr.mxu0 0.0
      %2169 = vmatpush2.msra.mxu0 0.0
      %2170 = vmatprep.subr.mxu0 0.0
      %2171 = vmatpush2.msra.mxu0 0.0
      %2172 = vmatprep.subr.mxu0 0.0
      %2173 = vmatpush2.msra.mxu0 0.0
      %2174 = vmatprep.subr.mxu0 0.0
      %2175 = vmatpush2.msra.mxu0 0.0
      %2176 = vmatprep.subr.mxu0 0.0
      %2177 = vmatpush2.msra.mxu0 0.0
      %2178 = vmatprep.mubr.f32.mxu0 0.0
      %2179 = vmatmul.mubr.f32.gmra.mxu0 %v2112
      %v2180 = vpop.f32.mrf.mxu0
      %v2181 = vadd.f32 %v2109, %v2180
      %v2182 = vpop.f32.mrf.mxu0
      %2183 = vdwg.mxu0
      %v2184 = vadd.f32 %v1985, %v2181
      %2185 = vst.msk [vmem:[%s946] sm:$0xff] %vm951, %v2184
      %p2186 = scmp.lt.s32.totalorder %s34, 5
      %s2187 = scalar_select %p2186, %s34, 5
      %p2188 = scmp.lt.s32.totalorder %s35, 1
      %s2189 = scalar_select %p2188, %s35, 1
      %s2190 = smul.addr %s2187, 2
      %s2191 = sadd.s32 %s2189, %s2190
      %s2192 = smul.addr %s2191, 8
      %s2193 = scalar_lea.vmem %s19, %s2192
      // Predicated region
      $region97: #{_lambda_.8} parent=95 // pred_check
        %p2194 = pneg %p562
      $region98: #{_lambda_.8} parent=95 // pred_check_branch
        %2196 = sbr.rel (%p2194) target = $region100
      $region99: #{_lambda_.8} parent=95 // pred_region
        _
      $region100: #{_lambda_.8} parent=95 // pred_fallthru
        _
    $region96: #{_lambda_.8} parent=5 // pred_fallthru
      _
    %p2197 = scmp.le.s32.totalorder 2, %s25
    // Predicated region
    $region101: #{_lambda_.8} parent=5 // pred_check
      %p2198 = pneg %p2197
    $region102: #{_lambda_.8} parent=5 // pred_check_branch
      %2200 = sbr.rel (%p2198) target = $region104
    $region103: #{_lambda_.8} parent=5 // pred_region
      %s2201 = ssub.s32 %s25, 2
      // Predicated region
      $region105: #{_lambda_.8} parent=103 // pred_check
        %p2202 = pneg %p568
      $region106: #{_lambda_.8} parent=103 // pred_check_branch
        %2204 = sbr.rel (%p2202) target = $region108
      $region107: #{_lambda_.8} parent=103 // pred_region
        %p2205 = scmp.lt.s32.totalorder %s36, 5
        %s2206 = scalar_select %p2205, %s36, 5
        %p2207 = scmp.lt.s32.totalorder %s37, 1
        %s2208 = scalar_select %p2207, %s37, 1
        %s2209 = smul.addr %s2206, 2
        %s2210 = sadd.s32 %s2208, %s2209
        %s2211 = smul.addr %s2210, 8
        %s2212 = scalar_lea.vmem %s19, %s2211
      $region108: #{_lambda_.8} parent=103 // pred_fallthru
        _
    $region104: #{_lambda_.8} parent=5 // pred_fallthru
      _
  $region6: #{_lambda_.8} parent=0 // loop_footer
    %s29 = sadd.s32 1, %s25
  $region7: #{_lambda_.8} parent=0 // loop_footer_branch
    %24 = sbr.rel target = $region3
  $region8: #{_lambda_.8} parent=0 // loop_exit
    _

// kernel: _lambda_.9
$region0: #{_lambda_.9}
  #allocation0 [shape = 'u32[]', space=smem, size = 0x4, offset = 0x4, fixed_abs, tag = 'smem constant byte address 0x4 - core index']
  #allocation1 [shape = 'u32[144,128]{1,0:T(1,128)}', space=vmem, size = 0x12000, scoped, tag = 'internal scratch']
  %s0 = inlined_call_operand.vmem [shape: f32[2,8,96], index: 0, kind: input, shape index: {}]
  %s1 = inlined_call_operand.vmem [shape: f32[2,8,96], index: 1, kind: input, shape index: {}]
  %s2 = inlined_call_operand.vmem [shape: f32[96,12], index: 2, kind: input, shape index: {}]
  %s3 = inlined_call_operand.vmem [shape: f32[1,12], index: 3, kind: input, shape index: {}]
  %s4 = inlined_call_operand.vmem [shape: f32[96,96], index: 4, kind: input, shape index: {}]
  %s5 = inlined_call_operand.vmem [shape: f32[1,96], index: 5, kind: input, shape index: {}]
  %s6 = inlined_call_operand.vmem [shape: f32[96,4], index: 6, kind: input, shape index: {}]
  %s7 = inlined_call_operand.vmem [shape: f32[1,4], index: 7, kind: input, shape index: {}]
  %s8 = inlined_call_operand.vmem [shape: f32[96,1024], index: 8, kind: input, shape index: {}]
  %s9 = inlined_call_operand.vmem [shape: f32[1,1024], index: 9, kind: input, shape index: {}]
  %s10 = inlined_call_operand.vmem [shape: f32[1024,48], index: 10, kind: input, shape index: {}]
  %s11 = inlined_call_operand.vmem [shape: f32[1,48], index: 11, kind: input, shape index: {}]
  %s12 = inlined_call_operand.vmem [shape: f32[2,8,12], index: 12, kind: output, shape index: {0}]
  %s13 = inlined_call_operand.vmem [shape: f32[2,8,4], index: 13, kind: output, shape index: {1}]
  %s14 = inlined_call_operand.vmem [shape: f32[2,8,48], index: 14, kind: output, shape index: {2}]
  %15 = xla_tuple %s12, %s13, %s14
  %s16 = sld [smem:[#allocation0]]
  $region97: #{_lambda_.9} parent=0
    _
  %s18 = ssub.s32 1, %s16
  %s19 = scalar_select 0, %s18, %s16
  loop: start=0, step=1, limit=4
  $region2: #{_lambda_.9} parent=0 // loop_pre_header
    _
  $region3: #{_lambda_.9} parent=0 // loop_header
    %s21 = sphi 0, %s25
    %p22 = scmp.ge.s32.totalorder %s21, 4
    %s31 = sphi 0, %s33
    %s34 = sphi 0, %s31
    %s35 = sphi 0, %s34
    %s51 = sphi 0, %s35
    %s57 = sphi 0, %s59
    %s60 = sphi 0, %s57
    %s61 = sphi 0, %s60
    %s77 = sphi 0, %s61
    %s81 = sphi 0, %s81
    %s83 = sphi 0, %s81
    %s84 = sphi 0, %s83
    %s98 = sphi 0, %s84
    %s102 = sphi 0, %s102
    %s104 = sphi 0, %s102
    %s105 = sphi 0, %s104
    %s119 = sphi 0, %s105
    %s123 = sphi 0, %s123
    %s125 = sphi 0, %s123
    %s126 = sphi 0, %s125
    %s140 = sphi 0, %s126
    %s144 = sphi 0, %s144
    %s146 = sphi 0, %s144
    %s147 = sphi 0, %s146
    %s161 = sphi 0, %s147
    %s165 = sphi 0, %s165
    %s167 = sphi 0, %s165
    %s168 = sphi 0, %s167
    %s182 = sphi 0, %s168
    %s186 = sphi 0, %s186
    %s188 = sphi 0, %s186
    %s189 = sphi 0, %s188
    %s203 = sphi 0, %s189
    %s207 = sphi 0, %s207
    %s209 = sphi 0, %s207
    %s210 = sphi 0, %s209
    %s224 = sphi 0, %s210
    %s228 = sphi 0, %s228
    %s230 = sphi 0, %s228
    %s231 = sphi 0, %s230
    %s245 = sphi 0, %s231
    %s249 = sphi 0, %s249
    %s251 = sphi 0, %s249
    %s252 = sphi 0, %s251
    %s266 = sphi 0, %s252
    %s270 = sphi 0, %s270
    %s272 = sphi 0, %s270
    %s273 = sphi 0, %s272
    %s287 = sphi 0, %s273
    %s293 = sphi 0, %s295
    %s296 = sphi 0, %s293
    %s297 = sphi 0, %s296
    %s313 = sphi 0, %s297
    %s319 = sphi 0, %s321
    %s322 = sphi 0, %s319
    %s323 = sphi 0, %s322
    %s339 = sphi 0, %s323
    %s345 = sphi 0, %s347
    %s348 = sphi 0, %s345
    %s349 = sphi 0, %s348
    %s365 = sphi 0, %s349
  $region4: #{_lambda_.9} parent=0 // loop_header_branch
    %24 = sbr.rel (%p22) target = $region8
  $region5: #{_lambda_.9} parent=0 // loop_body
    %s26 = ssub.s32 %s21, 1
    %s27 = ssub.s32 %s21, 2
    %s28 = sadd.s32 %s21, 1
    %s29 = ssub.s32 %s21, %s28
    %p30 = scmp.eq.s32.totalorder %s29, 0
    %s32 = sadd.s32 %s31, 1
    %s33 = scalar_select %p30, %s31, %s32
    %p36 = pneg %p30
    %p37 = scmp.eq.s32.totalorder %s21, 1
    %p38 = por %p36, %p37
    %p39 = scmp.ne.s32.totalorder %s31, %s34
    %p40 = scmp.eq.s32.totalorder %s21, 0
    %p41 = por %p39, %p40
    %p42 = scmp.ne.s32.totalorder %s31, %s34
    %p43 = scmp.eq.s32.totalorder %s26, 1
    %p44 = por %p42, %p43
    %p45 = scmp.ne.s32.totalorder %s34, %s35
    %p46 = scmp.eq.s32.totalorder %s26, 0
    %p47 = por %p45, %p46
    %p48 = scmp.ne.s32.totalorder %s34, %s35
    %p49 = scmp.eq.s32.totalorder %s27, 1
    %p50 = por %p48, %p49
    %p52 = scmp.ne.s32.totalorder %s35, %s51
    %p53 = scmp.eq.s32.totalorder %s27, 0
    %p54 = por %p52, %p53
    %s55 = ssub.s32 %s21, %s28
    %p56 = scmp.eq.s32.totalorder %s55, 0
    %s58 = sadd.s32 %s57, 1
    %s59 = scalar_select %p56, %s57, %s58
    %p62 = pneg %p56
    %p63 = scmp.eq.s32.totalorder %s21, 1
    %p64 = por %p62, %p63
    %p65 = scmp.ne.s32.totalorder %s57, %s60
    %p66 = scmp.eq.s32.totalorder %s21, 0
    %p67 = por %p65, %p66
    %p68 = scmp.ne.s32.totalorder %s57, %s60
    %p69 = scmp.eq.s32.totalorder %s26, 1
    %p70 = por %p68, %p69
    %p71 = scmp.ne.s32.totalorder %s60, %s61
    %p72 = scmp.eq.s32.totalorder %s26, 0
    %p73 = por %p71, %p72
    %p74 = scmp.ne.s32.totalorder %s60, %s61
    %p75 = scmp.eq.s32.totalorder %s27, 1
    %p76 = por %p74, %p75
    %p78 = scmp.ne.s32.totalorder %s61, %s77
    %p79 = scmp.eq.s32.totalorder %s27, 0
    %p80 = por %p78, %p79
    %s82 = sadd.s32 %s81, 1
    %p85 = scmp.eq.s32.totalorder %s21, 1
    %p86 = scmp.ne.s32.totalorder %s81, %s83
    %p87 = scmp.eq.s32.totalorder %s21, 0
    %p88 = por %p86, %p87
    %p89 = scmp.ne.s32.totalorder %s81, %s83
    %p90 = scmp.eq.s32.totalorder %s26, 1
    %p91 = por %p89, %p90
    %p92 = scmp.ne.s32.totalorder %s83, %s84
    %p93 = scmp.eq.s32.totalorder %s26, 0
    %p94 = por %p92, %p93
    %p95 = scmp.ne.s32.totalorder %s83, %s84
    %p96 = scmp.eq.s32.totalorder %s27, 1
    %p97 = por %p95, %p96
    %p99 = scmp.ne.s32.totalorder %s84, %s98
    %p100 = scmp.eq.s32.totalorder %s27, 0
    %p101 = por %p99, %p100
    %s103 = sadd.s32 %s102, 1
    %p106 = scmp.eq.s32.totalorder %s21, 1
    %p107 = scmp.ne.s32.totalorder %s102, %s104
    %p108 = scmp.eq.s32.totalorder %s21, 0
    %p109 = por %p107, %p108
    %p110 = scmp.ne.s32.totalorder %s102, %s104
    %p111 = scmp.eq.s32.totalorder %s26, 1
    %p112 = por %p110, %p111
    %p113 = scmp.ne.s32.totalorder %s104, %s105
    %p114 = scmp.eq.s32.totalorder %s26, 0
    %p115 = por %p113, %p114
    %p116 = scmp.ne.s32.totalorder %s104, %s105
    %p117 = scmp.eq.s32.totalorder %s27, 1
    %p118 = por %p116, %p117
    %p120 = scmp.ne.s32.totalorder %s105, %s119
    %p121 = scmp.eq.s32.totalorder %s27, 0
    %p122 = por %p120, %p121
    %s124 = sadd.s32 %s123, 1
    %p127 = scmp.eq.s32.totalorder %s21, 1
    %p128 = scmp.ne.s32.totalorder %s123, %s125
    %p129 = scmp.eq.s32.totalorder %s21, 0
    %p130 = por %p128, %p129
    %p131 = scmp.ne.s32.totalorder %s123, %s125
    %p132 = scmp.eq.s32.totalorder %s26, 1
    %p133 = por %p131, %p132
    %p134 = scmp.ne.s32.totalorder %s125, %s126
    %p135 = scmp.eq.s32.totalorder %s26, 0
    %p136 = por %p134, %p135
    %p137 = scmp.ne.s32.totalorder %s125, %s126
    %p138 = scmp.eq.s32.totalorder %s27, 1
    %p139 = por %p137, %p138
    %p141 = scmp.ne.s32.totalorder %s126, %s140
    %p142 = scmp.eq.s32.totalorder %s27, 0
    %p143 = por %p141, %p142
    %s145 = sadd.s32 %s144, 1
    %p148 = scmp.eq.s32.totalorder %s21, 1
    %p149 = scmp.ne.s32.totalorder %s144, %s146
    %p150 = scmp.eq.s32.totalorder %s21, 0
    %p151 = por %p149, %p150
    %p152 = scmp.ne.s32.totalorder %s144, %s146
    %p153 = scmp.eq.s32.totalorder %s26, 1
    %p154 = por %p152, %p153
    %p155 = scmp.ne.s32.totalorder %s146, %s147
    %p156 = scmp.eq.s32.totalorder %s26, 0
    %p157 = por %p155, %p156
    %p158 = scmp.ne.s32.totalorder %s146, %s147
    %p159 = scmp.eq.s32.totalorder %s27, 1
    %p160 = por %p158, %p159
    %p162 = scmp.ne.s32.totalorder %s147, %s161
    %p163 = scmp.eq.s32.totalorder %s27, 0
    %p164 = por %p162, %p163
    %s166 = sadd.s32 %s165, 1
    %p169 = scmp.eq.s32.totalorder %s21, 1
    %p170 = scmp.ne.s32.totalorder %s165, %s167
    %p171 = scmp.eq.s32.totalorder %s21, 0
    %p172 = por %p170, %p171
    %p173 = scmp.ne.s32.totalorder %s165, %s167
    %p174 = scmp.eq.s32.totalorder %s26, 1
    %p175 = por %p173, %p174
    %p176 = scmp.ne.s32.totalorder %s167, %s168
    %p177 = scmp.eq.s32.totalorder %s26, 0
    %p178 = por %p176, %p177
    %p179 = scmp.ne.s32.totalorder %s167, %s168
    %p180 = scmp.eq.s32.totalorder %s27, 1
    %p181 = por %p179, %p180
    %p183 = scmp.ne.s32.totalorder %s168, %s182
    %p184 = scmp.eq.s32.totalorder %s27, 0
    %p185 = por %p183, %p184
    %s187 = sadd.s32 %s186, 1
    %p190 = scmp.eq.s32.totalorder %s21, 1
    %p191 = scmp.ne.s32.totalorder %s186, %s188
    %p192 = scmp.eq.s32.totalorder %s21, 0
    %p193 = por %p191, %p192
    %p194 = scmp.ne.s32.totalorder %s186, %s188
    %p195 = scmp.eq.s32.totalorder %s26, 1
    %p196 = por %p194, %p195
    %p197 = scmp.ne.s32.totalorder %s188, %s189
    %p198 = scmp.eq.s32.totalorder %s26, 0
    %p199 = por %p197, %p198
    %p200 = scmp.ne.s32.totalorder %s188, %s189
    %p201 = scmp.eq.s32.totalorder %s27, 1
    %p202 = por %p200, %p201
    %p204 = scmp.ne.s32.totalorder %s189, %s203
    %p205 = scmp.eq.s32.totalorder %s27, 0
    %p206 = por %p204, %p205
    %s208 = sadd.s32 %s207, 1
    %p211 = scmp.eq.s32.totalorder %s21, 1
    %p212 = scmp.ne.s32.totalorder %s207, %s209
    %p213 = scmp.eq.s32.totalorder %s21, 0
    %p214 = por %p212, %p213
    %p215 = scmp.ne.s32.totalorder %s207, %s209
    %p216 = scmp.eq.s32.totalorder %s26, 1
    %p217 = por %p215, %p216
    %p218 = scmp.ne.s32.totalorder %s209, %s210
    %p219 = scmp.eq.s32.totalorder %s26, 0
    %p220 = por %p218, %p219
    %p221 = scmp.ne.s32.totalorder %s209, %s210
    %p222 = scmp.eq.s32.totalorder %s27, 1
    %p223 = por %p221, %p222
    %p225 = scmp.ne.s32.totalorder %s210, %s224
    %p226 = scmp.eq.s32.totalorder %s27, 0
    %p227 = por %p225, %p226
    %s229 = sadd.s32 %s228, 1
    %p232 = scmp.eq.s32.totalorder %s21, 1
    %p233 = scmp.ne.s32.totalorder %s228, %s230
    %p234 = scmp.eq.s32.totalorder %s21, 0
    %p235 = por %p233, %p234
    %p236 = scmp.ne.s32.totalorder %s228, %s230
    %p237 = scmp.eq.s32.totalorder %s26, 1
    %p238 = por %p236, %p237
    %p239 = scmp.ne.s32.totalorder %s230, %s231
    %p240 = scmp.eq.s32.totalorder %s26, 0
    %p241 = por %p239, %p240
    %p242 = scmp.ne.s32.totalorder %s230, %s231
    %p243 = scmp.eq.s32.totalorder %s27, 1
    %p244 = por %p242, %p243
    %p246 = scmp.ne.s32.totalorder %s231, %s245
    %p247 = scmp.eq.s32.totalorder %s27, 0
    %p248 = por %p246, %p247
    %s250 = sadd.s32 %s249, 1
    %p253 = scmp.eq.s32.totalorder %s21, 1
    %p254 = scmp.ne.s32.totalorder %s249, %s251
    %p255 = scmp.eq.s32.totalorder %s21, 0
    %p256 = por %p254, %p255
    %p257 = scmp.ne.s32.totalorder %s249, %s251
    %p258 = scmp.eq.s32.totalorder %s26, 1
    %p259 = por %p257, %p258
    %p260 = scmp.ne.s32.totalorder %s251, %s252
    %p261 = scmp.eq.s32.totalorder %s26, 0
    %p262 = por %p260, %p261
    %p263 = scmp.ne.s32.totalorder %s251, %s252
    %p264 = scmp.eq.s32.totalorder %s27, 1
    %p265 = por %p263, %p264
    %p267 = scmp.ne.s32.totalorder %s252, %s266
    %p268 = scmp.eq.s32.totalorder %s27, 0
    %p269 = por %p267, %p268
    %s271 = sadd.s32 %s270, 1
    %p274 = scmp.eq.s32.totalorder %s21, 1
    %p275 = scmp.ne.s32.totalorder %s270, %s272
    %p276 = scmp.eq.s32.totalorder %s21, 0
    %p277 = por %p275, %p276
    %p278 = scmp.ne.s32.totalorder %s270, %s272
    %p279 = scmp.eq.s32.totalorder %s26, 1
    %p280 = por %p278, %p279
    %p281 = scmp.ne.s32.totalorder %s272, %s273
    %p282 = scmp.eq.s32.totalorder %s26, 0
    %p283 = por %p281, %p282
    %p284 = scmp.ne.s32.totalorder %s272, %s273
    %p285 = scmp.eq.s32.totalorder %s27, 1
    %p286 = por %p284, %p285
    %p288 = scmp.ne.s32.totalorder %s273, %s287
    %p289 = scmp.eq.s32.totalorder %s27, 0
    %p290 = por %p288, %p289
    %s291 = ssub.s32 %s21, %s28
    %p292 = scmp.eq.s32.totalorder %s291, 0
    %s294 = sadd.s32 %s293, 1
    %s295 = scalar_select %p292, %s293, %s294
    %p298 = pneg %p292
    %p299 = scmp.eq.s32.totalorder %s21, 1
    %p300 = por %p298, %p299
    %p301 = scmp.ne.s32.totalorder %s293, %s296
    %p302 = scmp.eq.s32.totalorder %s21, 0
    %p303 = por %p301, %p302
    %p304 = scmp.ne.s32.totalorder %s293, %s296
    %p305 = scmp.eq.s32.totalorder %s26, 1
    %p306 = por %p304, %p305
    %p307 = scmp.ne.s32.totalorder %s296, %s297
    %p308 = scmp.eq.s32.totalorder %s26, 0
    %p309 = por %p307, %p308
    %p310 = scmp.ne.s32.totalorder %s296, %s297
    %p311 = scmp.eq.s32.totalorder %s27, 1
    %p312 = por %p310, %p311
    %p314 = scmp.ne.s32.totalorder %s297, %s313
    %p315 = scmp.eq.s32.totalorder %s27, 0
    %p316 = por %p314, %p315
    %s317 = ssub.s32 %s21, %s28
    %p318 = scmp.eq.s32.totalorder %s317, 0
    %s320 = sadd.s32 %s319, 1
    %s321 = scalar_select %p318, %s319, %s320
    %p324 = pneg %p318
    %p325 = scmp.eq.s32.totalorder %s21, 1
    %p326 = por %p324, %p325
    %p327 = scmp.ne.s32.totalorder %s319, %s322
    %p328 = scmp.eq.s32.totalorder %s21, 0
    %p329 = por %p327, %p328
    %p330 = scmp.ne.s32.totalorder %s319, %s322
    %p331 = scmp.eq.s32.totalorder %s26, 1
    %p332 = por %p330, %p331
    %p333 = scmp.ne.s32.totalorder %s322, %s323
    %p334 = scmp.eq.s32.totalorder %s26, 0
    %p335 = por %p333, %p334
    %p336 = scmp.ne.s32.totalorder %s322, %s323
    %p337 = scmp.eq.s32.totalorder %s27, 1
    %p338 = por %p336, %p337
    %p340 = scmp.ne.s32.totalorder %s323, %s339
    %p341 = scmp.eq.s32.totalorder %s27, 0
    %p342 = por %p340, %p341
    %s343 = ssub.s32 %s21, %s28
    %p344 = scmp.eq.s32.totalorder %s343, 0
    %s346 = sadd.s32 %s345, 1
    %s347 = scalar_select %p344, %s345, %s346
    %p350 = pneg %p344
    %p351 = scmp.eq.s32.totalorder %s21, 1
    %p352 = por %p350, %p351
    %p353 = scmp.ne.s32.totalorder %s345, %s348
    %p354 = scmp.eq.s32.totalorder %s21, 0
    %p355 = por %p353, %p354
    %p356 = scmp.ne.s32.totalorder %s345, %s348
    %p357 = scmp.eq.s32.totalorder %s26, 1
    %p358 = por %p356, %p357
    %p359 = scmp.ne.s32.totalorder %s348, %s349
    %p360 = scmp.eq.s32.totalorder %s26, 0
    %p361 = por %p359, %p360
    %p362 = scmp.ne.s32.totalorder %s348, %s349
    %p363 = scmp.eq.s32.totalorder %s27, 1
    %p364 = por %p362, %p363
    %p366 = scmp.ne.s32.totalorder %s349, %s365
    %p367 = scmp.eq.s32.totalorder %s27, 0
    %p368 = por %p366, %p367
    %p369 = scmp.le.s32.totalorder 1, %s21
    %p370 = scmp.lt.s32.totalorder %s21, 3
    %p371 = pnand %p369, %p370
    %p372 = pneg %p371
    // Predicated region
    $region9: #{_lambda_.9} parent=5 // pred_check
      _
    $region10: #{_lambda_.9} parent=5 // pred_check_branch
      %374 = sbr.rel (%p371) target = $region12
    $region11: #{_lambda_.9} parent=5 // pred_region
      %s375 = ssub.s32 %s21, 1
      // Predicated region
      $region13: #{_lambda_.9} parent=11 // pred_check
        %p376 = pneg %p94
      $region14: #{_lambda_.9} parent=11 // pred_check_branch
        %378 = sbr.rel (%p376) target = $region16
      $region15: #{_lambda_.9} parent=11 // pred_region
        _
      $region16: #{_lambda_.9} parent=11 // pred_fallthru
        _
      // Predicated region
      $region17: #{_lambda_.9} parent=11 // pred_check
        %p379 = pneg %p115
      $region18: #{_lambda_.9} parent=11 // pred_check_branch
        %381 = sbr.rel (%p379) target = $region20
      $region19: #{_lambda_.9} parent=11 // pred_region
        _
      $region20: #{_lambda_.9} parent=11 // pred_fallthru
        _
      // Predicated region
      $region21: #{_lambda_.9} parent=11 // pred_check
        %p382 = pneg %p136
      $region22: #{_lambda_.9} parent=11 // pred_check_branch
        %384 = sbr.rel (%p382) target = $region24
      $region23: #{_lambda_.9} parent=11 // pred_region
        _
      $region24: #{_lambda_.9} parent=11 // pred_fallthru
        _
      // Predicated region
      $region25: #{_lambda_.9} parent=11 // pred_check
        %p385 = pneg %p157
      $region26: #{_lambda_.9} parent=11 // pred_check_branch
        %387 = sbr.rel (%p385) target = $region28
      $region27: #{_lambda_.9} parent=11 // pred_region
        _
      $region28: #{_lambda_.9} parent=11 // pred_fallthru
        _
      // Predicated region
      $region29: #{_lambda_.9} parent=11 // pred_check
        %p388 = pneg %p178
      $region30: #{_lambda_.9} parent=11 // pred_check_branch
        %390 = sbr.rel (%p388) target = $region32
      $region31: #{_lambda_.9} parent=11 // pred_region
        _
      $region32: #{_lambda_.9} parent=11 // pred_fallthru
        _
      // Predicated region
      $region33: #{_lambda_.9} parent=11 // pred_check
        %p391 = pneg %p199
      $region34: #{_lambda_.9} parent=11 // pred_check_branch
        %393 = sbr.rel (%p391) target = $region36
      $region35: #{_lambda_.9} parent=11 // pred_region
        _
      $region36: #{_lambda_.9} parent=11 // pred_fallthru
        _
      // Predicated region
      $region37: #{_lambda_.9} parent=11 // pred_check
        %p394 = pneg %p220
      $region38: #{_lambda_.9} parent=11 // pred_check_branch
        %396 = sbr.rel (%p394) target = $region40
      $region39: #{_lambda_.9} parent=11 // pred_region
        _
      $region40: #{_lambda_.9} parent=11 // pred_fallthru
        _
      // Predicated region
      $region41: #{_lambda_.9} parent=11 // pred_check
        %p397 = pneg %p241
      $region42: #{_lambda_.9} parent=11 // pred_check_branch
        %399 = sbr.rel (%p397) target = $region44
      $region43: #{_lambda_.9} parent=11 // pred_region
        _
      $region44: #{_lambda_.9} parent=11 // pred_fallthru
        _
      // Predicated region
      $region45: #{_lambda_.9} parent=11 // pred_check
        %p400 = pneg %p262
      $region46: #{_lambda_.9} parent=11 // pred_check_branch
        %402 = sbr.rel (%p400) target = $region48
      $region47: #{_lambda_.9} parent=11 // pred_region
        _
      $region48: #{_lambda_.9} parent=11 // pred_fallthru
        _
      // Predicated region
      $region49: #{_lambda_.9} parent=11 // pred_check
        %p403 = pneg %p283
      $region50: #{_lambda_.9} parent=11 // pred_check_branch
        %405 = sbr.rel (%p403) target = $region52
      $region51: #{_lambda_.9} parent=11 // pred_region
        _
      $region52: #{_lambda_.9} parent=11 // pred_fallthru
        _
    $region12: #{_lambda_.9} parent=5 // pred_fallthru
      _
    %p406 = scmp.lt.s32.totalorder %s21, 2
    // Predicated region
    $region53: #{_lambda_.9} parent=5 // pred_check
      %p407 = pneg %p406
    $region54: #{_lambda_.9} parent=5 // pred_check_branch
      %409 = sbr.rel (%p407) target = $region56
    $region55: #{_lambda_.9} parent=5 // pred_region
      // Predicated region
      $region57: #{_lambda_.9} parent=55 // pred_check
        %p410 = pneg %p41
      $region58: #{_lambda_.9} parent=55 // pred_check_branch
        %412 = sbr.rel (%p410) target = $region60
      $region59: #{_lambda_.9} parent=55 // pred_region
        %p413 = scmp.lt.s32.totalorder %s21, 1
        %s414 = scalar_select %p413, %s21, 1
        %s415 = smul.addr %s414, 8
        %s416 = scalar_lea.vmem %s0, %s415
      $region60: #{_lambda_.9} parent=55 // pred_fallthru
        _
      // Predicated region
      $region61: #{_lambda_.9} parent=55 // pred_check
        %p417 = pneg %p67
      $region62: #{_lambda_.9} parent=55 // pred_check_branch
        %419 = sbr.rel (%p417) target = $region64
      $region63: #{_lambda_.9} parent=55 // pred_region
        %p420 = scmp.lt.s32.totalorder %s21, 1
        %s421 = scalar_select %p420, %s21, 1
        %s422 = smul.addr %s421, 8
        %s423 = scalar_lea.vmem %s1, %s422
      $region64: #{_lambda_.9} parent=55 // pred_fallthru
        _
    $region56: #{_lambda_.9} parent=5 // pred_fallthru
      _
    %p424 = scmp.le.s32.totalorder 1, %s21
    %p425 = scmp.lt.s32.totalorder %s21, 3
    %p426 = pnand %p424, %p425
    %p427 = pneg %p426
    // Predicated region
    $region65: #{_lambda_.9} parent=5 // pred_check
      _
    $region66: #{_lambda_.9} parent=5 // pred_check_branch
      %429 = sbr.rel (%p426) target = $region68
    $region67: #{_lambda_.9} parent=5 // pred_region
      %s430 = ssub.s32 %s21, 1
      %p431 = scmp.lt.s32.totalorder %s26, 1
      %s432 = scalar_select %p431, %s26, 1
      %s433 = smul.addr %s432, 8
      %s434 = scalar_lea.vmem %s0, %s433
      %p435 = pneg %p47
      %p436 = pneg %p44
      %p437 = scmp.lt.s32.totalorder %s26, 1
      %s438 = scalar_select %p437, %s26, 1
      %s439 = smul.addr %s438, 8
      %s440 = scalar_lea.vmem %s1, %s439
      %p441 = pneg %p73
      %p442 = pneg %p70
      %p443 = pneg %p94
      %p444 = pneg %p91
      %p445 = pneg %p115
      %p446 = pneg %p112
      %p447 = pneg %p136
      %p448 = pneg %p133
      %p449 = pneg %p157
      %p450 = pneg %p154
      %p451 = pneg %p178
      %p452 = pneg %p175
      %p453 = pneg %p199
      %p454 = pneg %p196
      %p455 = pneg %p220
      %p456 = pneg %p217
      %p457 = pneg %p241
      %p458 = pneg %p238
      %p459 = pneg %p262
      %p460 = pneg %p259
      %p461 = pneg %p283
      %p462 = pneg %p280
      %p463 = pneg %p309
      %p464 = pneg %p306
      %p465 = scmp.lt.s32.totalorder %s26, 1
      %s466 = scalar_select %p465, %s26, 1
      %s467 = smul.addr %s466, 8
      %s468 = scalar_lea.vmem %s12, %s467
      %p469 = pneg %p335
      %p470 = pneg %p332
      %p471 = scmp.lt.s32.totalorder %s26, 1
      %s472 = scalar_select %p471, %s26, 1
      %s473 = smul.addr %s472, 8
      %s474 = scalar_lea.vmem %s13, %s473
      %p475 = pneg %p361
      %p476 = pneg %p358
      %p477 = scmp.lt.s32.totalorder %s26, 1
      %s478 = scalar_select %p477, %s26, 1
      %s479 = smul.addr %s478, 8
      %s480 = scalar_lea.vmem %s14, %s479
      %p481 = scmp.lt.s32.totalorder %s26, 1
      %s482 = scalar_select %p481, %s26, 1
      %s483 = smul.addr %s482, 8
      %s484 = scalar_lea.vmem %s0, %s483
      %p485 = scmp.lt.s32.totalorder %s26, 1
      %s486 = scalar_select %p485, %s26, 1
      %s487 = smul.addr %s486, 8
      %s488 = scalar_lea.vmem %s1, %s487
      %p489 = scmp.lt.s32.totalorder %s26, 1
      %s490 = scalar_select %p489, %s26, 1
      %s491 = smul.addr %s490, 8
      %s492 = scalar_lea.vmem %s12, %s491
      %p493 = scmp.lt.s32.totalorder %s26, 1
      %s494 = scalar_select %p493, %s26, 1
      %s495 = smul.addr %s494, 8
      %s496 = scalar_lea.vmem %s13, %s495
      %p497 = scmp.lt.s32.totalorder %s26, 1
      %s498 = scalar_select %p497, %s26, 1
      %s499 = smul.addr %s498, 8
      %s500 = scalar_lea.vmem %s14, %s499
      %v501 = vld [vmem:[%s484] sm:$0xff]
      %v502 = vld [vmem:[%s2] sm:$0xff]
      %v503 = vld [vmem:[%s2 + $0x8] sm:$0xff]
      %v504 = vld [vmem:[%s2 + $0x10] sm:$0xff]
      %v505 = vld [vmem:[%s2 + $0x18] sm:$0xff]
      %v506 = vld [vmem:[%s2 + $0x20] sm:$0xff]
      %v507 = vld [vmem:[%s2 + $0x28] sm:$0xff]
      %v508 = vld [vmem:[%s2 + $0x30] sm:$0xff]
      %v509 = vld [vmem:[%s2 + $0x38] sm:$0xff]
      %v510 = vld [vmem:[%s2 + $0x40] sm:$0xff]
      %v511 = vld [vmem:[%s2 + $0x48] sm:$0xff]
      %v512 = vld [vmem:[%s2 + $0x50] sm:$0xff]
      %v513 = vld [vmem:[%s2 + $0x58] sm:$0xff]
      %v514 = vld [vmem:[%s3] sm:$0x1]
      %v516 = vlaneseq
      %v517 = vshrl.u32 %v516, 7
      %v518 = vsub.s32 0, %v517
      %v519 = vrot.slane %v514, %v518
      %vm521 = vcmask 785408
      %v523 = vsel %vm521, %v501, 0
      %525 = vmatprep.subr.mxu0 0.0
      %526 = vmatpush1.msra.mxu0 0.0
      %527 = vmatprep.subr.mxu0 0.0
      %528 = vmatpush1.msra.mxu0 0.0
      %529 = vmatprep.subr.mxu0 0.0
      %530 = vmatpush1.msra.mxu0 0.0
      %531 = vmatprep.subr.mxu0 0.0
      %532 = vmatpush1.msra.mxu0 0.0
      %533 = vmatprep.subr.mxu0 0.0
      %534 = vmatpush1.msra.mxu0 %v513
      %535 = vmatprep.subr.mxu0 0.0
      %536 = vmatpush1.msra.mxu0 %v512
      %537 = vmatprep.subr.mxu0 0.0
      %538 = vmatpush1.msra.mxu0 %v511
      %539 = vmatprep.subr.mxu0 0.0
      %540 = vmatpush1.msra.mxu0 %v510
      %541 = vmatprep.subr.mxu0 0.0
      %542 = vmatpush1.msra.mxu0 %v509
      %543 = vmatprep.subr.mxu0 0.0
      %544 = vmatpush1.msra.mxu0 %v508
      %545 = vmatprep.subr.mxu0 0.0
      %546 = vmatpush1.msra.mxu0 %v507
      %547 = vmatprep.subr.mxu0 0.0
      %548 = vmatpush1.msra.mxu0 %v506
      %549 = vmatprep.subr.mxu0 0.0
      %550 = vmatpush1.msra.mxu0 %v505
      %551 = vmatprep.subr.mxu0 0.0
      %552 = vmatpush1.msra.mxu0 %v504
      %553 = vmatprep.subr.mxu0 0.0
      %554 = vmatpush1.msra.mxu0 %v503
      %555 = vmatprep.subr.mxu0 0.0
      %556 = vmatpush1.msra.mxu0 %v502
      %557 = vmatprep.subr.mxu0 0.0
      %558 = vmatpush2.msra.mxu0 0.0
      %559 = vmatprep.subr.mxu0 0.0
      %560 = vmatpush2.msra.mxu0 0.0
      %561 = vmatprep.subr.mxu0 0.0
      %562 = vmatpush2.msra.mxu0 0.0
      %563 = vmatprep.subr.mxu0 0.0
      %564 = vmatpush2.msra.mxu0 0.0
      %565 = vmatprep.subr.mxu0 0.0
      %566 = vmatpush2.msra.mxu0 0.0
      %567 = vmatprep.subr.mxu0 0.0
      %568 = vmatpush2.msra.mxu0 0.0
      %569 = vmatprep.subr.mxu0 0.0
      %570 = vmatpush2.msra.mxu0 0.0
      %571 = vmatprep.subr.mxu0 0.0
      %572 = vmatpush2.msra.mxu0 0.0
      %573 = vmatprep.subr.mxu0 0.0
      %574 = vmatpush2.msra.mxu0 0.0
      %575 = vmatprep.subr.mxu0 0.0
      %576 = vmatpush2.msra.mxu0 0.0
      %577 = vmatprep.subr.mxu0 0.0
      %578 = vmatpush2.msra.mxu0 0.0
      %579 = vmatprep.subr.mxu0 0.0
      %580 = vmatpush2.msra.mxu0 0.0
      %581 = vmatprep.subr.mxu0 0.0
      %582 = vmatpush2.msra.mxu0 0.0
      %583 = vmatprep.subr.mxu0 0.0
      %584 = vmatpush2.msra.mxu0 0.0
      %585 = vmatprep.subr.mxu0 0.0
      %586 = vmatpush2.msra.mxu0 0.0
      %587 = vmatprep.subr.mxu0 0.0
      %588 = vmatpush2.msra.mxu0 0.0
      %589 = vmatprep.mubr.f32.mxu0 0.0
      %590 = vmatmul.mubr.f32.gmra.mxu0 %v523
      %v591 = vpop.f32.mrf.mxu0
      %v592 = vadd.f32 %v519, %v591
      %v593 = vpop.f32.mrf.mxu0
      %594 = vdwg.mxu0
      %vm595 = vcmask 97280
      %596 = vst.msk [vmem:[%s492] sm:$0xff] %vm595, %v592
      %v597 = vld [vmem:[%s488] sm:$0xff]
      %v598 = vmul.f32 %v501, %v597
      %v599 = vld [vmem:[%s4] sm:$0xff]
      %v600 = vld [vmem:[%s4 + $0x8] sm:$0xff]
      %v601 = vld [vmem:[%s4 + $0x10] sm:$0xff]
      %v602 = vld [vmem:[%s4 + $0x18] sm:$0xff]
      %v603 = vld [vmem:[%s4 + $0x20] sm:$0xff]
      %v604 = vld [vmem:[%s4 + $0x28] sm:$0xff]
      %v605 = vld [vmem:[%s4 + $0x30] sm:$0xff]
      %v606 = vld [vmem:[%s4 + $0x38] sm:$0xff]
      %v607 = vld [vmem:[%s4 + $0x40] sm:$0xff]
      %v608 = vld [vmem:[%s4 + $0x48] sm:$0xff]
      %v609 = vld [vmem:[%s4 + $0x50] sm:$0xff]
      %v610 = vld [vmem:[%s4 + $0x58] sm:$0xff]
      %v611 = vld [vmem:[%s5] sm:$0x1]
      %v613 = vlaneseq
      %v614 = vshrl.u32 %v613, 7
      %v615 = vsub.s32 0, %v614
      %v616 = vrot.slane %v611, %v615
      %v619 = vsel %vm521, %v598, 0
      %621 = vmatprep.subr.mxu0 0.0
      %622 = vmatpush1.msra.mxu0 0.0
      %623 = vmatprep.subr.mxu0 0.0
      %624 = vmatpush1.msra.mxu0 0.0
      %625 = vmatprep.subr.mxu0 0.0
      %626 = vmatpush1.msra.mxu0 0.0
      %627 = vmatprep.subr.mxu0 0.0
      %628 = vmatpush1.msra.mxu0 0.0
      %629 = vmatprep.subr.mxu0 0.0
      %630 = vmatpush1.msra.mxu0 %v610
      %631 = vmatprep.subr.mxu0 0.0
      %632 = vmatpush1.msra.mxu0 %v609
      %633 = vmatprep.subr.mxu0 0.0
      %634 = vmatpush1.msra.mxu0 %v608
      %635 = vmatprep.subr.mxu0 0.0
      %636 = vmatpush1.msra.mxu0 %v607
      %637 = vmatprep.subr.mxu0 0.0
      %638 = vmatpush1.msra.mxu0 %v606
      %639 = vmatprep.subr.mxu0 0.0
      %640 = vmatpush1.msra.mxu0 %v605
      %641 = vmatprep.subr.mxu0 0.0
      %642 = vmatpush1.msra.mxu0 %v604
      %643 = vmatprep.subr.mxu0 0.0
      %644 = vmatpush1.msra.mxu0 %v603
      %645 = vmatprep.subr.mxu0 0.0
      %646 = vmatpush1.msra.mxu0 %v602
      %647 = vmatprep.subr.mxu0 0.0
      %648 = vmatpush1.msra.mxu0 %v601
      %649 = vmatprep.subr.mxu0 0.0
      %650 = vmatpush1.msra.mxu0 %v600
      %651 = vmatprep.subr.mxu0 0.0
      %652 = vmatpush1.msra.mxu0 %v599
      %653 = vmatprep.subr.mxu0 0.0
      %654 = vmatpush2.msra.mxu0 0.0
      %655 = vmatprep.subr.mxu0 0.0
      %656 = vmatpush2.msra.mxu0 0.0
      %657 = vmatprep.subr.mxu0 0.0
      %658 = vmatpush2.msra.mxu0 0.0
      %659 = vmatprep.subr.mxu0 0.0
      %660 = vmatpush2.msra.mxu0 0.0
      %661 = vmatprep.subr.mxu0 0.0
      %662 = vmatpush2.msra.mxu0 0.0
      %663 = vmatprep.subr.mxu0 0.0
      %664 = vmatpush2.msra.mxu0 0.0
      %665 = vmatprep.subr.mxu0 0.0
      %666 = vmatpush2.msra.mxu0 0.0
      %667 = vmatprep.subr.mxu0 0.0
      %668 = vmatpush2.msra.mxu0 0.0
      %669 = vmatprep.subr.mxu0 0.0
      %670 = vmatpush2.msra.mxu0 0.0
      %671 = vmatprep.subr.mxu0 0.0
      %672 = vmatpush2.msra.mxu0 0.0
      %673 = vmatprep.subr.mxu0 0.0
      %674 = vmatpush2.msra.mxu0 0.0
      %675 = vmatprep.subr.mxu0 0.0
      %676 = vmatpush2.msra.mxu0 0.0
      %677 = vmatprep.subr.mxu0 0.0
      %678 = vmatpush2.msra.mxu0 0.0
      %679 = vmatprep.subr.mxu0 0.0
      %680 = vmatpush2.msra.mxu0 0.0
      %681 = vmatprep.subr.mxu0 0.0
      %682 = vmatpush2.msra.mxu0 0.0
      %683 = vmatprep.subr.mxu0 0.0
      %684 = vmatpush2.msra.mxu0 0.0
      %685 = vmatprep.mubr.f32.mxu0 0.0
      %686 = vmatmul.mubr.f32.gmra.mxu0 %v619
      %v687 = vpop.f32.mrf.mxu0
      %v688 = vadd.f32 %v616, %v687
      %v689 = vpop.f32.mrf.mxu0
      %690 = vdwg.mxu0
      %v691 = vmax.f32 %v688, 0.0
      %v692 = vadd.f32 %v691, %v598
      %v693 = vld [vmem:[%s6] sm:$0xff]
      %v694 = vld [vmem:[%s6 + $0x8] sm:$0xff]
      %v695 = vld [vmem:[%s6 + $0x10] sm:$0xff]
      %v696 = vld [vmem:[%s6 + $0x18] sm:$0xff]
      %v697 = vld [vmem:[%s6 + $0x20] sm:$0xff]
      %v698 = vld [vmem:[%s6 + $0x28] sm:$0xff]
      %v699 = vld [vmem:[%s6 + $0x30] sm:$0xff]
      %v700 = vld [vmem:[%s6 + $0x38] sm:$0xff]
      %v701 = vld [vmem:[%s6 + $0x40] sm:$0xff]
      %v702 = vld [vmem:[%s6 + $0x48] sm:$0xff]
      %v703 = vld [vmem:[%s6 + $0x50] sm:$0xff]
      %v704 = vld [vmem:[%s6 + $0x58] sm:$0xff]
      %v705 = vld [vmem:[%s7] sm:$0x1]
      %v707 = vlaneseq
      %v708 = vshrl.u32 %v707, 7
      %v709 = vsub.s32 0, %v708
      %v710 = vrot.slane %v705, %v709
      %v713 = vsel %vm521, %v692, 0
      %715 = vmatprep.subr.mxu0 0.0
      %716 = vmatpush1.msra.mxu0 0.0
      %717 = vmatprep.subr.mxu0 0.0
      %718 = vmatpush1.msra.mxu0 0.0
      %719 = vmatprep.subr.mxu0 0.0
      %720 = vmatpush1.msra.mxu0 0.0
      %721 = vmatprep.subr.mxu0 0.0
      %722 = vmatpush1.msra.mxu0 0.0
      %723 = vmatprep.subr.mxu0 0.0
      %724 = vmatpush1.msra.mxu0 %v704
      %725 = vmatprep.subr.mxu0 0.0
      %726 = vmatpush1.msra.mxu0 %v703
      %727 = vmatprep.subr.mxu0 0.0
      %728 = vmatpush1.msra.mxu0 %v702
      %729 = vmatprep.subr.mxu0 0.0
      %730 = vmatpush1.msra.mxu0 %v701
      %731 = vmatprep.subr.mxu0 0.0
      %732 = vmatpush1.msra.mxu0 %v700
      %733 = vmatprep.subr.mxu0 0.0
      %734 = vmatpush1.msra.mxu0 %v699
      %735 = vmatprep.subr.mxu0 0.0
      %736 = vmatpush1.msra.mxu0 %v698
      %737 = vmatprep.subr.mxu0 0.0
      %738 = vmatpush1.msra.mxu0 %v697
      %739 = vmatprep.subr.mxu0 0.0
      %740 = vmatpush1.msra.mxu0 %v696
      %741 = vmatprep.subr.mxu0 0.0
      %742 = vmatpush1.msra.mxu0 %v695
      %743 = vmatprep.subr.mxu0 0.0
      %744 = vmatpush1.msra.mxu0 %v694
      %745 = vmatprep.subr.mxu0 0.0
      %746 = vmatpush1.msra.mxu0 %v693
      %747 = vmatprep.subr.mxu0 0.0
      %748 = vmatpush2.msra.mxu0 0.0
      %749 = vmatprep.subr.mxu0 0.0
      %750 = vmatpush2.msra.mxu0 0.0
      %751 = vmatprep.subr.mxu0 0.0
      %752 = vmatpush2.msra.mxu0 0.0
      %753 = vmatprep.subr.mxu0 0.0
      %754 = vmatpush2.msra.mxu0 0.0
      %755 = vmatprep.subr.mxu0 0.0
      %756 = vmatpush2.msra.mxu0 0.0
      %757 = vmatprep.subr.mxu0 0.0
      %758 = vmatpush2.msra.mxu0 0.0
      %759 = vmatprep.subr.mxu0 0.0
      %760 = vmatpush2.msra.mxu0 0.0
      %761 = vmatprep.subr.mxu0 0.0
      %762 = vmatpush2.msra.mxu0 0.0
      %763 = vmatprep.subr.mxu0 0.0
      %764 = vmatpush2.msra.mxu0 0.0
      %765 = vmatprep.subr.mxu0 0.0
      %766 = vmatpush2.msra.mxu0 0.0
      %767 = vmatprep.subr.mxu0 0.0
      %768 = vmatpush2.msra.mxu0 0.0
      %769 = vmatprep.subr.mxu0 0.0
      %770 = vmatpush2.msra.mxu0 0.0
      %771 = vmatprep.subr.mxu0 0.0
      %772 = vmatpush2.msra.mxu0 0.0
      %773 = vmatprep.subr.mxu0 0.0
      %774 = vmatpush2.msra.mxu0 0.0
      %775 = vmatprep.subr.mxu0 0.0
      %776 = vmatpush2.msra.mxu0 0.0
      %777 = vmatprep.subr.mxu0 0.0
      %778 = vmatpush2.msra.mxu0 0.0
      %779 = vmatprep.mubr.f32.mxu0 0.0
      %780 = vmatmul.mubr.f32.gmra.mxu0 %v713
      %v781 = vpop.f32.mrf.mxu0
      %v782 = vadd.f32 %v710, %v781
      %v783 = vpop.f32.mrf.mxu0
      %784 = vdwg.mxu0
      %vm785 = vcmask 31744
      %786 = vst.msk [vmem:[%s496] sm:$0xff] %vm785, %v782
      %v787 = vld [vmem:[%s8] sm:$0xff]
      %v788 = vld [vmem:[%s8 + $0x8] sm:$0xff]
      %v789 = vld [vmem:[%s8 + $0x10] sm:$0xff]
      %v790 = vld [vmem:[%s8 + $0x18] sm:$0xff]
      %v791 = vld [vmem:[%s8 + $0x20] sm:$0xff]
      %v792 = vld [vmem:[%s8 + $0x28] sm:$0xff]
      %v793 = vld [vmem:[%s8 + $0x30] sm:$0xff]
      %v794 = vld [vmem:[%s8 + $0x38] sm:$0xff]
      %v795 = vld [vmem:[%s8 + $0x40] sm:$0xff]
      %v796 = vld [vmem:[%s8 + $0x48] sm:$0xff]
      %v797 = vld [vmem:[%s8 + $0x50] sm:$0xff]
      %v798 = vld [vmem:[%s8 + $0x58] sm:$0xff]
      %v799 = vld [vmem:[%s8 + $0x60] sm:$0xff]
      %v800 = vld [vmem:[%s8 + $0x68] sm:$0xff]
      %v801 = vld [vmem:[%s8 + $0x70] sm:$0xff]
      %v802 = vld [vmem:[%s8 + $0x78] sm:$0xff]
      %v803 = vld [vmem:[%s8 + $0x80] sm:$0xff]
      %v804 = vld [vmem:[%s8 + $0x88] sm:$0xff]
      %v805 = vld [vmem:[%s8 + $0x90] sm:$0xff]
      %v806 = vld [vmem:[%s8 + $0x98] sm:$0xff]
      %v807 = vld [vmem:[%s8 + $0xa0] sm:$0xff]
      %v808 = vld [vmem:[%s8 + $0xa8] sm:$0xff]
      %v809 = vld [vmem:[%s8 + $0xb0] sm:$0xff]
      %v810 = vld [vmem:[%s8 + $0xb8] sm:$0xff]
      %v811 = vld [vmem:[%s8 + $0xc0] sm:$0xff]
      %v812 = vld [vmem:[%s8 + $0xc8] sm:$0xff]
      %v813 = vld [vmem:[%s8 + $0xd0] sm:$0xff]
      %v814 = vld [vmem:[%s8 + $0xd8] sm:$0xff]
      %v815 = vld [vmem:[%s8 + $0xe0] sm:$0xff]
      %v816 = vld [vmem:[%s8 + $0xe8] sm:$0xff]
      %v817 = vld [vmem:[%s8 + $0xf0] sm:$0xff]
      %v818 = vld [vmem:[%s8 + $0xf8] sm:$0xff]
      %v819 = vld [vmem:[%s8 + $0x100] sm:$0xff]
      %v820 = vld [vmem:[%s8 + $0x108] sm:$0xff]
      %v821 = vld [vmem:[%s8 + $0x110] sm:$0xff]
      %v822 = vld [vmem:[%s8 + $0x118] sm:$0xff]
      %v823 = vld [vmem:[%s8 + $0x120] sm:$0xff]
      %v824 = vld [vmem:[%s8 + $0x128] sm:$0xff]
      %v825 = vld [vmem:[%s8 + $0x130] sm:$0xff]
      %v826 = vld [vmem:[%s8 + $0x138] sm:$0xff]
      %v827 = vld [vmem:[%s8 + $0x140] sm:$0xff]
      %v828 = vld [vmem:[%s8 + $0x148] sm:$0xff]
      %v829 = vld [vmem:[%s8 + $0x150] sm:$0xff]
      %v830 = vld [vmem:[%s8 + $0x158] sm:$0xff]
      %v831 = vld [vmem:[%s8 + $0x160] sm:$0xff]
      %v832 = vld [vmem:[%s8 + $0x168] sm:$0xff]
      %v833 = vld [vmem:[%s8 + $0x170] sm:$0xff]
      %v834 = vld [vmem:[%s8 + $0x178] sm:$0xff]
      %v835 = vld [vmem:[%s8 + $0x180] sm:$0xff]
      %v836 = vld [vmem:[%s8 + $0x188] sm:$0xff]
      %v837 = vld [vmem:[%s8 + $0x190] sm:$0xff]
      %v838 = vld [vmem:[%s8 + $0x198] sm:$0xff]
      %v839 = vld [vmem:[%s8 + $0x1a0] sm:$0xff]
      %v840 = vld [vmem:[%s8 + $0x1a8] sm:$0xff]
      %v841 = vld [vmem:[%s8 + $0x1b0] sm:$0xff]
      %v842 = vld [vmem:[%s8 + $0x1b8] sm:$0xff]
      %v843 = vld [vmem:[%s8 + $0x1c0] sm:$0xff]
      %v844 = vld [vmem:[%s8 + $0x1c8] sm:$0xff]
      %v845 = vld [vmem:[%s8 + $0x1d0] sm:$0xff]
      %v846 = vld [vmem:[%s8 + $0x1d8] sm:$0xff]
      %v847 = vld [vmem:[%s8 + $0x1e0] sm:$0xff]
      %v848 = vld [vmem:[%s8 + $0x1e8] sm:$0xff]
      %v849 = vld [vmem:[%s8 + $0x1f0] sm:$0xff]
      %v850 = vld [vmem:[%s8 + $0x1f8] sm:$0xff]
      %v851 = vld [vmem:[%s8 + $0x200] sm:$0xff]
      %v852 = vld [vmem:[%s8 + $0x208] sm:$0xff]
      %v853 = vld [vmem:[%s8 + $0x210] sm:$0xff]
      %v854 = vld [vmem:[%s8 + $0x218] sm:$0xff]
      %v855 = vld [vmem:[%s8 + $0x220] sm:$0xff]
      %v856 = vld [vmem:[%s8 + $0x228] sm:$0xff]
      %v857 = vld [vmem:[%s8 + $0x230] sm:$0xff]
      %v858 = vld [vmem:[%s8 + $0x238] sm:$0xff]
      %v859 = vld [vmem:[%s8 + $0x240] sm:$0xff]
      %v860 = vld [vmem:[%s8 + $0x248] sm:$0xff]
      %v861 = vld [vmem:[%s8 + $0x250] sm:$0xff]
      %v862 = vld [vmem:[%s8 + $0x258] sm:$0xff]
      %v863 = vld [vmem:[%s8 + $0x260] sm:$0xff]
      %v864 = vld [vmem:[%s8 + $0x268] sm:$0xff]
      %v865 = vld [vmem:[%s8 + $0x270] sm:$0xff]
      %v866 = vld [vmem:[%s8 + $0x278] sm:$0xff]
      %v867 = vld [vmem:[%s8 + $0x280] sm:$0xff]
      %v868 = vld [vmem:[%s8 + $0x288] sm:$0xff]
      %v869 = vld [vmem:[%s8 + $0x290] sm:$0xff]
      %v870 = vld [vmem:[%s8 + $0x298] sm:$0xff]
      %v871 = vld [vmem:[%s8 + $0x2a0] sm:$0xff]
      %v872 = vld [vmem:[%s8 + $0x2a8] sm:$0xff]
      %v873 = vld [vmem:[%s8 + $0x2b0] sm:$0xff]
      %v874 = vld [vmem:[%s8 + $0x2b8] sm:$0xff]
      %v875 = vld [vmem:[%s8 + $0x2c0] sm:$0xff]
      %v876 = vld [vmem:[%s8 + $0x2c8] sm:$0xff]
      %v877 = vld [vmem:[%s8 + $0x2d0] sm:$0xff]
      %v878 = vld [vmem:[%s8 + $0x2d8] sm:$0xff]
      %v879 = vld [vmem:[%s8 + $0x2e0] sm:$0xff]
      %v880 = vld [vmem:[%s8 + $0x2e8] sm:$0xff]
      %v881 = vld [vmem:[%s8 + $0x2f0] sm:$0xff]
      %v882 = vld [vmem:[%s8 + $0x2f8] sm:$0xff]
      %v883 = vld [vmem:[%s9] sm:$0xff]
      %v885 = vlaneseq
      %v886 = vshrl.u32 %v885, 7
      %v887 = vsub.s32 0, %v886
      %v888 = vrot.slane %v883, %v887
      %v889 = vlaneseq
      %v890 = vshrl.u32 %v889, 7
      %v891 = vsub.s32 1, %v890
      %v892 = vrot.slane %v883, %v891
      %v893 = vlaneseq
      %v894 = vshrl.u32 %v893, 7
      %v895 = vsub.s32 2, %v894
      %v896 = vrot.slane %v883, %v895
      %v897 = vlaneseq
      %v898 = vshrl.u32 %v897, 7
      %v899 = vsub.s32 3, %v898
      %v900 = vrot.slane %v883, %v899
      %v901 = vlaneseq
      %v902 = vshrl.u32 %v901, 7
      %v903 = vsub.s32 4, %v902
      %v904 = vrot.slane %v883, %v903
      %v905 = vlaneseq
      %v906 = vshrl.u32 %v905, 7
      %v907 = vsub.s32 5, %v906
      %v908 = vrot.slane %v883, %v907
      %v909 = vlaneseq
      %v910 = vshrl.u32 %v909, 7
      %v911 = vsub.s32 6, %v910
      %v912 = vrot.slane %v883, %v911
      %v913 = vlaneseq
      %v914 = vshrl.u32 %v913, 7
      %v915 = vsub.s32 7, %v914
      %v916 = vrot.slane %v883, %v915
      %925 = vmatprep.subr.mxu0 0.0
      %926 = vmatpush1.msra.mxu0 0.0
      %927 = vmatprep.subr.mxu0 0.0
      %928 = vmatpush1.msra.mxu0 0.0
      %929 = vmatprep.subr.mxu0 0.0
      %930 = vmatpush1.msra.mxu0 0.0
      %931 = vmatprep.subr.mxu0 0.0
      %932 = vmatpush1.msra.mxu0 0.0
      %933 = vmatprep.subr.mxu0 %v876
      %934 = vmatpush1.msra.mxu0 %v875
      %935 = vmatprep.subr.mxu0 %v868
      %936 = vmatpush1.msra.mxu0 %v867
      %937 = vmatprep.subr.mxu0 %v860
      %938 = vmatpush1.msra.mxu0 %v859
      %939 = vmatprep.subr.mxu0 %v852
      %940 = vmatpush1.msra.mxu0 %v851
      %941 = vmatprep.subr.mxu0 %v844
      %942 = vmatpush1.msra.mxu0 %v843
      %943 = vmatprep.subr.mxu0 %v836
      %944 = vmatpush1.msra.mxu0 %v835
      %945 = vmatprep.subr.mxu0 %v828
      %946 = vmatpush1.msra.mxu0 %v827
      %947 = vmatprep.subr.mxu0 %v820
      %948 = vmatpush1.msra.mxu0 %v819
      %949 = vmatprep.subr.mxu0 %v812
      %950 = vmatpush1.msra.mxu0 %v811
      %951 = vmatprep.subr.mxu0 %v804
      %952 = vmatpush1.msra.mxu0 %v803
      %953 = vmatprep.subr.mxu0 %v796
      %954 = vmatpush1.msra.mxu0 %v795
      %955 = vmatprep.subr.mxu0 %v788
      %956 = vmatpush1.msra.mxu0 %v787
      %957 = vmatprep.subr.mxu0 0.0
      %958 = vmatpush2.msra.mxu0 0.0
      %959 = vmatprep.subr.mxu0 0.0
      %960 = vmatpush2.msra.mxu0 0.0
      %961 = vmatprep.subr.mxu0 0.0
      %962 = vmatpush2.msra.mxu0 0.0
      %963 = vmatprep.subr.mxu0 0.0
      %964 = vmatpush2.msra.mxu0 0.0
      %965 = vmatprep.subr.mxu0 0.0
      %966 = vmatpush2.msra.mxu0 0.0
      %967 = vmatprep.subr.mxu0 0.0
      %968 = vmatpush2.msra.mxu0 0.0
      %969 = vmatprep.subr.mxu0 0.0
      %970 = vmatpush2.msra.mxu0 0.0
      %971 = vmatprep.subr.mxu0 0.0
      %972 = vmatpush2.msra.mxu0 0.0
      %973 = vmatprep.subr.mxu0 0.0
      %974 = vmatpush2.msra.mxu0 0.0
      %975 = vmatprep.subr.mxu0 0.0
      %976 = vmatpush2.msra.mxu0 0.0
      %977 = vmatprep.subr.mxu0 0.0
      %978 = vmatpush2.msra.mxu0 0.0
      %979 = vmatprep.subr.mxu0 0.0
      %980 = vmatpush2.msra.mxu0 0.0
      %981 = vmatprep.subr.mxu0 0.0
      %982 = vmatpush2.msra.mxu0 0.0
      %983 = vmatprep.subr.mxu0 0.0
      %984 = vmatpush2.msra.mxu0 0.0
      %985 = vmatprep.subr.mxu0 0.0
      %986 = vmatpush2.msra.mxu0 0.0
      %987 = vmatprep.subr.mxu0 0.0
      %988 = vmatpush2.msra.mxu0 0.0
      %989 = vmatprep.mubr.f32.mxu0 0.0
      %990 = vmatmul.mubr.f32.gmra.mxu0 %v713
      %v991 = vpop.f32.mrf.mxu0
      %v992 = vadd.f32 %v888, %v991
      %v993 = vpop.f32.mrf.mxu0
      %v994 = vadd.f32 %v892, %v993
      %995 = vdwg.mxu0
      %996 = vmatprep.subr.mxu0 0.0
      %997 = vmatpush1.msra.mxu0 0.0
      %998 = vmatprep.subr.mxu0 0.0
      %999 = vmatpush1.msra.mxu0 0.0
      %1000 = vmatprep.subr.mxu0 0.0
      %1001 = vmatpush1.msra.mxu0 0.0
      %1002 = vmatprep.subr.mxu0 0.0
      %1003 = vmatpush1.msra.mxu0 0.0
      %1004 = vmatprep.subr.mxu0 %v878
      %1005 = vmatpush1.msra.mxu0 %v877
      %1006 = vmatprep.subr.mxu0 %v870
      %1007 = vmatpush1.msra.mxu0 %v869
      %1008 = vmatprep.subr.mxu0 %v862
      %1009 = vmatpush1.msra.mxu0 %v861
      %1010 = vmatprep.subr.mxu0 %v854
      %1011 = vmatpush1.msra.mxu0 %v853
      %1012 = vmatprep.subr.mxu0 %v846
      %1013 = vmatpush1.msra.mxu0 %v845
      %1014 = vmatprep.subr.mxu0 %v838
      %1015 = vmatpush1.msra.mxu0 %v837
      %1016 = vmatprep.subr.mxu0 %v830
      %1017 = vmatpush1.msra.mxu0 %v829
      %1018 = vmatprep.subr.mxu0 %v822
      %1019 = vmatpush1.msra.mxu0 %v821
      %1020 = vmatprep.subr.mxu0 %v814
      %1021 = vmatpush1.msra.mxu0 %v813
      %1022 = vmatprep.subr.mxu0 %v806
      %1023 = vmatpush1.msra.mxu0 %v805
      %1024 = vmatprep.subr.mxu0 %v798
      %1025 = vmatpush1.msra.mxu0 %v797
      %1026 = vmatprep.subr.mxu0 %v790
      %1027 = vmatpush1.msra.mxu0 %v789
      %1028 = vmatprep.subr.mxu0 0.0
      %1029 = vmatpush2.msra.mxu0 0.0
      %1030 = vmatprep.subr.mxu0 0.0
      %1031 = vmatpush2.msra.mxu0 0.0
      %1032 = vmatprep.subr.mxu0 0.0
      %1033 = vmatpush2.msra.mxu0 0.0
      %1034 = vmatprep.subr.mxu0 0.0
      %1035 = vmatpush2.msra.mxu0 0.0
      %1036 = vmatprep.subr.mxu0 0.0
      %1037 = vmatpush2.msra.mxu0 0.0
      %1038 = vmatprep.subr.mxu0 0.0
      %1039 = vmatpush2.msra.mxu0 0.0
      %1040 = vmatprep.subr.mxu0 0.0
      %1041 = vmatpush2.msra.mxu0 0.0
      %1042 = vmatprep.subr.mxu0 0.0
      %1043 = vmatpush2.msra.mxu0 0.0
      %1044 = vmatprep.subr.mxu0 0.0
      %1045 = vmatpush2.msra.mxu0 0.0
      %1046 = vmatprep.subr.mxu0 0.0
      %1047 = vmatpush2.msra.mxu0 0.0
      %1048 = vmatprep.subr.mxu0 0.0
      %1049 = vmatpush2.msra.mxu0 0.0
      %1050 = vmatprep.subr.mxu0 0.0
      %1051 = vmatpush2.msra.mxu0 0.0
      %1052 = vmatprep.subr.mxu0 0.0
      %1053 = vmatpush2.msra.mxu0 0.0
      %1054 = vmatprep.subr.mxu0 0.0
      %1055 = vmatpush2.msra.mxu0 0.0
      %1056 = vmatprep.subr.mxu0 0.0
      %1057 = vmatpush2.msra.mxu0 0.0
      %1058 = vmatprep.subr.mxu0 0.0
      %1059 = vmatpush2.msra.mxu0 0.0
      %1060 = vmatprep.mubr.f32.mxu0 0.0
      %1061 = vmatmul.mubr.f32.gmra.mxu0 %v713
      %v1062 = vpop.f32.mrf.mxu0
      %v1063 = vadd.f32 %v896, %v1062
      %v1064 = vpop.f32.mrf.mxu0
      %v1065 = vadd.f32 %v900, %v1064
      %1066 = vdwg.mxu0
      %1067 = vmatprep.subr.mxu0 0.0
      %1068 = vmatpush1.msra.mxu0 0.0
      %1069 = vmatprep.subr.mxu0 0.0
      %1070 = vmatpush1.msra.mxu0 0.0
      %1071 = vmatprep.subr.mxu0 0.0
      %1072 = vmatpush1.msra.mxu0 0.0
      %1073 = vmatprep.subr.mxu0 0.0
      %1074 = vmatpush1.msra.mxu0 0.0
      %1075 = vmatprep.subr.mxu0 %v880
      %1076 = vmatpush1.msra.mxu0 %v879
      %1077 = vmatprep.subr.mxu0 %v872
      %1078 = vmatpush1.msra.mxu0 %v871
      %1079 = vmatprep.subr.mxu0 %v864
      %1080 = vmatpush1.msra.mxu0 %v863
      %1081 = vmatprep.subr.mxu0 %v856
      %1082 = vmatpush1.msra.mxu0 %v855
      %1083 = vmatprep.subr.mxu0 %v848
      %1084 = vmatpush1.msra.mxu0 %v847
      %1085 = vmatprep.subr.mxu0 %v840
      %1086 = vmatpush1.msra.mxu0 %v839
      %1087 = vmatprep.subr.mxu0 %v832
      %1088 = vmatpush1.msra.mxu0 %v831
      %1089 = vmatprep.subr.mxu0 %v824
      %1090 = vmatpush1.msra.mxu0 %v823
      %1091 = vmatprep.subr.mxu0 %v816
      %1092 = vmatpush1.msra.mxu0 %v815
      %1093 = vmatprep.subr.mxu0 %v808
      %1094 = vmatpush1.msra.mxu0 %v807
      %1095 = vmatprep.subr.mxu0 %v800
      %1096 = vmatpush1.msra.mxu0 %v799
      %1097 = vmatprep.subr.mxu0 %v792
      %1098 = vmatpush1.msra.mxu0 %v791
      %1099 = vmatprep.subr.mxu0 0.0
      %1100 = vmatpush2.msra.mxu0 0.0
      %1101 = vmatprep.subr.mxu0 0.0
      %1102 = vmatpush2.msra.mxu0 0.0
      %1103 = vmatprep.subr.mxu0 0.0
      %1104 = vmatpush2.msra.mxu0 0.0
      %1105 = vmatprep.subr.mxu0 0.0
      %1106 = vmatpush2.msra.mxu0 0.0
      %1107 = vmatprep.subr.mxu0 0.0
      %1108 = vmatpush2.msra.mxu0 0.0
      %1109 = vmatprep.subr.mxu0 0.0
      %1110 = vmatpush2.msra.mxu0 0.0
      %1111 = vmatprep.subr.mxu0 0.0
      %1112 = vmatpush2.msra.mxu0 0.0
      %1113 = vmatprep.subr.mxu0 0.0
      %1114 = vmatpush2.msra.mxu0 0.0
      %1115 = vmatprep.subr.mxu0 0.0
      %1116 = vmatpush2.msra.mxu0 0.0
      %1117 = vmatprep.subr.mxu0 0.0
      %1118 = vmatpush2.msra.mxu0 0.0
      %1119 = vmatprep.subr.mxu0 0.0
      %1120 = vmatpush2.msra.mxu0 0.0
      %1121 = vmatprep.subr.mxu0 0.0
      %1122 = vmatpush2.msra.mxu0 0.0
      %1123 = vmatprep.subr.mxu0 0.0
      %1124 = vmatpush2.msra.mxu0 0.0
      %1125 = vmatprep.subr.mxu0 0.0
      %1126 = vmatpush2.msra.mxu0 0.0
      %1127 = vmatprep.subr.mxu0 0.0
      %1128 = vmatpush2.msra.mxu0 0.0
      %1129 = vmatprep.subr.mxu0 0.0
      %1130 = vmatpush2.msra.mxu0 0.0
      %1131 = vmatprep.mubr.f32.mxu0 0.0
      %1132 = vmatmul.mubr.f32.gmra.mxu0 %v713
      %v1133 = vpop.f32.mrf.mxu0
      %v1134 = vadd.f32 %v904, %v1133
      %v1135 = vpop.f32.mrf.mxu0
      %v1136 = vadd.f32 %v908, %v1135
      %1137 = vdwg.mxu0
      %1138 = vmatprep.subr.mxu0 0.0
      %1139 = vmatpush1.msra.mxu0 0.0
      %1140 = vmatprep.subr.mxu0 0.0
      %1141 = vmatpush1.msra.mxu0 0.0
      %1142 = vmatprep.subr.mxu0 0.0
      %1143 = vmatpush1.msra.mxu0 0.0
      %1144 = vmatprep.subr.mxu0 0.0
      %1145 = vmatpush1.msra.mxu0 0.0
      %1146 = vmatprep.subr.mxu0 %v882
      %1147 = vmatpush1.msra.mxu0 %v881
      %1148 = vmatprep.subr.mxu0 %v874
      %1149 = vmatpush1.msra.mxu0 %v873
      %1150 = vmatprep.subr.mxu0 %v866
      %1151 = vmatpush1.msra.mxu0 %v865
      %1152 = vmatprep.subr.mxu0 %v858
      %1153 = vmatpush1.msra.mxu0 %v857
      %1154 = vmatprep.subr.mxu0 %v850
      %1155 = vmatpush1.msra.mxu0 %v849
      %1156 = vmatprep.subr.mxu0 %v842
      %1157 = vmatpush1.msra.mxu0 %v841
      %1158 = vmatprep.subr.mxu0 %v834
      %1159 = vmatpush1.msra.mxu0 %v833
      %1160 = vmatprep.subr.mxu0 %v826
      %1161 = vmatpush1.msra.mxu0 %v825
      %1162 = vmatprep.subr.mxu0 %v818
      %1163 = vmatpush1.msra.mxu0 %v817
      %1164 = vmatprep.subr.mxu0 %v810
      %1165 = vmatpush1.msra.mxu0 %v809
      %1166 = vmatprep.subr.mxu0 %v802
      %1167 = vmatpush1.msra.mxu0 %v801
      %1168 = vmatprep.subr.mxu0 %v794
      %1169 = vmatpush1.msra.mxu0 %v793
      %1170 = vmatprep.subr.mxu0 0.0
      %1171 = vmatpush2.msra.mxu0 0.0
      %1172 = vmatprep.subr.mxu0 0.0
      %1173 = vmatpush2.msra.mxu0 0.0
      %1174 = vmatprep.subr.mxu0 0.0
      %1175 = vmatpush2.msra.mxu0 0.0
      %1176 = vmatprep.subr.mxu0 0.0
      %1177 = vmatpush2.msra.mxu0 0.0
      %1178 = vmatprep.subr.mxu0 0.0
      %1179 = vmatpush2.msra.mxu0 0.0
      %1180 = vmatprep.subr.mxu0 0.0
      %1181 = vmatpush2.msra.mxu0 0.0
      %1182 = vmatprep.subr.mxu0 0.0
      %1183 = vmatpush2.msra.mxu0 0.0
      %1184 = vmatprep.subr.mxu0 0.0
      %1185 = vmatpush2.msra.mxu0 0.0
      %1186 = vmatprep.subr.mxu0 0.0
      %1187 = vmatpush2.msra.mxu0 0.0
      %1188 = vmatprep.subr.mxu0 0.0
      %1189 = vmatpush2.msra.mxu0 0.0
      %1190 = vmatprep.subr.mxu0 0.0
      %1191 = vmatpush2.msra.mxu0 0.0
      %1192 = vmatprep.subr.mxu0 0.0
      %1193 = vmatpush2.msra.mxu0 0.0
      %1194 = vmatprep.subr.mxu0 0.0
      %1195 = vmatpush2.msra.mxu0 0.0
      %1196 = vmatprep.subr.mxu0 0.0
      %1197 = vmatpush2.msra.mxu0 0.0
      %1198 = vmatprep.subr.mxu0 0.0
      %1199 = vmatpush2.msra.mxu0 0.0
      %1200 = vmatprep.subr.mxu0 0.0
      %1201 = vmatpush2.msra.mxu0 0.0
      %1202 = vmatprep.mubr.f32.mxu0 0.0
      %1203 = vmatmul.mubr.f32.gmra.mxu0 %v713
      %v1204 = vpop.f32.mrf.mxu0
      %v1205 = vadd.f32 %v912, %v1204
      %v1206 = vpop.f32.mrf.mxu0
      %v1207 = vadd.f32 %v916, %v1206
      %1208 = vdwg.mxu0
      %v1209 = vmax.f32 %v992, 0.0
      %v1210 = vmax.f32 %v994, 0.0
      %v1211 = vmax.f32 %v1063, 0.0
      %v1212 = vmax.f32 %v1065, 0.0
      %v1213 = vmax.f32 %v1134, 0.0
      %v1214 = vmax.f32 %v1136, 0.0
      %v1215 = vmax.f32 %v1205, 0.0
      %v1216 = vmax.f32 %v1207, 0.0
      %v1217 = vld [vmem:[%s10] sm:$0xff]
      %v1218 = vld [vmem:[%s10 + $0x8] sm:$0xff]
      %v1219 = vld [vmem:[%s10 + $0x10] sm:$0xff]
      %v1220 = vld [vmem:[%s10 + $0x18] sm:$0xff]
      %v1221 = vld [vmem:[%s10 + $0x20] sm:$0xff]
      %v1222 = vld [vmem:[%s10 + $0x28] sm:$0xff]
      %v1223 = vld [vmem:[%s10 + $0x30] sm:$0xff]
      %v1224 = vld [vmem:[%s10 + $0x38] sm:$0xff]
      %v1225 = vld [vmem:[%s10 + $0x40] sm:$0xff]
      %v1226 = vld [vmem:[%s10 + $0x48] sm:$0xff]
      %v1227 = vld [vmem:[%s10 + $0x50] sm:$0xff]
      %v1228 = vld [vmem:[%s10 + $0x58] sm:$0xff]
      %v1229 = vld [vmem:[%s10 + $0x60] sm:$0xff]
      %v1230 = vld [vmem:[%s10 + $0x68] sm:$0xff]
      %v1231 = vld [vmem:[%s10 + $0x70] sm:$0xff]
      %v1232 = vld [vmem:[%s10 + $0x78] sm:$0xff]
      %v1233 = vld [vmem:[%s10 + $0x80] sm:$0xff]
      %v1234 = vld [vmem:[%s10 + $0x88] sm:$0xff]
      %v1235 = vld [vmem:[%s10 + $0x90] sm:$0xff]
      %v1236 = vld [vmem:[%s10 + $0x98] sm:$0xff]
      %v1237 = vld [vmem:[%s10 + $0xa0] sm:$0xff]
      %v1238 = vld [vmem:[%s10 + $0xa8] sm:$0xff]
      %v1239 = vld [vmem:[%s10 + $0xb0] sm:$0xff]
      %v1240 = vld [vmem:[%s10 + $0xb8] sm:$0xff]
      %v1241 = vld [vmem:[%s10 + $0xc0] sm:$0xff]
      %v1242 = vld [vmem:[%s10 + $0xc8] sm:$0xff]
      %v1243 = vld [vmem:[%s10 + $0xd0] sm:$0xff]
      %v1244 = vld [vmem:[%s10 + $0xd8] sm:$0xff]
      %v1245 = vld [vmem:[%s10 + $0xe0] sm:$0xff]
      %v1246 = vld [vmem:[%s10 + $0xe8] sm:$0xff]
      %v1247 = vld [vmem:[%s10 + $0xf0] sm:$0xff]
      %v1248 = vld [vmem:[%s10 + $0xf8] sm:$0xff]
      %v1249 = vld [vmem:[%s10 + $0x100] sm:$0xff]
      %v1250 = vld [vmem:[%s10 + $0x108] sm:$0xff]
      %v1251 = vld [vmem:[%s10 + $0x110] sm:$0xff]
      %v1252 = vld [vmem:[%s10 + $0x118] sm:$0xff]
      %v1253 = vld [vmem:[%s10 + $0x120] sm:$0xff]
      %v1254 = vld [vmem:[%s10 + $0x128] sm:$0xff]
      %v1255 = vld [vmem:[%s10 + $0x130] sm:$0xff]
      %v1256 = vld [vmem:[%s10 + $0x138] sm:$0xff]
      %v1257 = vld [vmem:[%s10 + $0x140] sm:$0xff]
      %v1258 = vld [vmem:[%s10 + $0x148] sm:$0xff]
      %v1259 = vld [vmem:[%s10 + $0x150] sm:$0xff]
      %v1260 = vld [vmem:[%s10 + $0x158] sm:$0xff]
      %v1261 = vld [vmem:[%s10 + $0x160] sm:$0xff]
      %v1262 = vld [vmem:[%s10 + $0x168] sm:$0xff]
      %v1263 = vld [vmem:[%s10 + $0x170] sm:$0xff]
      %v1264 = vld [vmem:[%s10 + $0x178] sm:$0xff]
      %v1265 = vld [vmem:[%s10 + $0x180] sm:$0xff]
      %v1266 = vld [vmem:[%s10 + $0x188] sm:$0xff]
      %v1267 = vld [vmem:[%s10 + $0x190] sm:$0xff]
      %v1268 = vld [vmem:[%s10 + $0x198] sm:$0xff]
      %v1269 = vld [vmem:[%s10 + $0x1a0] sm:$0xff]
      %v1270 = vld [vmem:[%s10 + $0x1a8] sm:$0xff]
      %v1271 = vld [vmem:[%s10 + $0x1b0] sm:$0xff]
      %v1272 = vld [vmem:[%s10 + $0x1b8] sm:$0xff]
      %v1273 = vld [vmem:[%s10 + $0x1c0] sm:$0xff]
      %v1274 = vld [vmem:[%s10 + $0x1c8] sm:$0xff]
      %v1275 = vld [vmem:[%s10 + $0x1d0] sm:$0xff]
      %v1276 = vld [vmem:[%s10 + $0x1d8] sm:$0xff]
      %v1277 = vld [vmem:[%s10 + $0x1e0] sm:$0xff]
      %v1278 = vld [vmem:[%s10 + $0x1e8] sm:$0xff]
      %v1279 = vld [vmem:[%s10 + $0x1f0] sm:$0xff]
      %v1280 = vld [vmem:[%s10 + $0x1f8] sm:$0xff]
      %v1281 = vld [vmem:[%s10 + $0x200] sm:$0xff]
      %v1282 = vld [vmem:[%s10 + $0x208] sm:$0xff]
      %v1283 = vld [vmem:[%s10 + $0x210] sm:$0xff]
      %v1284 = vld [vmem:[%s10 + $0x218] sm:$0xff]
      %v1285 = vld [vmem:[%s10 + $0x220] sm:$0xff]
      %v1286 = vld [vmem:[%s10 + $0x228] sm:$0xff]
      %v1287 = vld [vmem:[%s10 + $0x230] sm:$0xff]
      %v1288 = vld [vmem:[%s10 + $0x238] sm:$0xff]
      %v1289 = vld [vmem:[%s10 + $0x240] sm:$0xff]
      %v1290 = vld [vmem:[%s10 + $0x248] sm:$0xff]
      %v1291 = vld [vmem:[%s10 + $0x250] sm:$0xff]
      %v1292 = vld [vmem:[%s10 + $0x258] sm:$0xff]
      %v1293 = vld [vmem:[%s10 + $0x260] sm:$0xff]
      %v1294 = vld [vmem:[%s10 + $0x268] sm:$0xff]
      %v1295 = vld [vmem:[%s10 + $0x270] sm:$0xff]
      %v1296 = vld [vmem:[%s10 + $0x278] sm:$0xff]
      %v1297 = vld [vmem:[%s10 + $0x280] sm:$0xff]
      %v1298 = vld [vmem:[%s10 + $0x288] sm:$0xff]
      %v1299 = vld [vmem:[%s10 + $0x290] sm:$0xff]
      %v1300 = vld [vmem:[%s10 + $0x298] sm:$0xff]
      %v1301 = vld [vmem:[%s10 + $0x2a0] sm:$0xff]
      %v1302 = vld [vmem:[%s10 + $0x2a8] sm:$0xff]
      %v1303 = vld [vmem:[%s10 + $0x2b0] sm:$0xff]
      %v1304 = vld [vmem:[%s10 + $0x2b8] sm:$0xff]
      %v1305 = vld [vmem:[%s10 + $0x2c0] sm:$0xff]
      %v1306 = vld [vmem:[%s10 + $0x2c8] sm:$0xff]
      %v1307 = vld [vmem:[%s10 + $0x2d0] sm:$0xff]
      %v1308 = vld [vmem:[%s10 + $0x2d8] sm:$0xff]
      %v1309 = vld [vmem:[%s10 + $0x2e0] sm:$0xff]
      %v1310 = vld [vmem:[%s10 + $0x2e8] sm:$0xff]
      %v1311 = vld [vmem:[%s10 + $0x2f0] sm:$0xff]
      %v1312 = vld [vmem:[%s10 + $0x2f8] sm:$0xff]
      %v1313 = vld [vmem:[%s10 + $0x300] sm:$0xff]
      %v1314 = vld [vmem:[%s10 + $0x308] sm:$0xff]
      %v1315 = vld [vmem:[%s10 + $0x310] sm:$0xff]
      %v1316 = vld [vmem:[%s10 + $0x318] sm:$0xff]
      %v1317 = vld [vmem:[%s10 + $0x320] sm:$0xff]
      %v1318 = vld [vmem:[%s10 + $0x328] sm:$0xff]
      %v1319 = vld [vmem:[%s10 + $0x330] sm:$0xff]
      %v1320 = vld [vmem:[%s10 + $0x338] sm:$0xff]
      %v1321 = vld [vmem:[%s10 + $0x340] sm:$0xff]
      %v1322 = vld [vmem:[%s10 + $0x348] sm:$0xff]
      %v1323 = vld [vmem:[%s10 + $0x350] sm:$0xff]
      %v1324 = vld [vmem:[%s10 + $0x358] sm:$0xff]
      %v1325 = vld [vmem:[%s10 + $0x360] sm:$0xff]
      %v1326 = vld [vmem:[%s10 + $0x368] sm:$0xff]
      %v1327 = vld [vmem:[%s10 + $0x370] sm:$0xff]
      %v1328 = vld [vmem:[%s10 + $0x378] sm:$0xff]
      %v1329 = vld [vmem:[%s10 + $0x380] sm:$0xff]
      %v1330 = vld [vmem:[%s10 + $0x388] sm:$0xff]
      %v1331 = vld [vmem:[%s10 + $0x390] sm:$0xff]
      %v1332 = vld [vmem:[%s10 + $0x398] sm:$0xff]
      %v1333 = vld [vmem:[%s10 + $0x3a0] sm:$0xff]
      %v1334 = vld [vmem:[%s10 + $0x3a8] sm:$0xff]
      %v1335 = vld [vmem:[%s10 + $0x3b0] sm:$0xff]
      %v1336 = vld [vmem:[%s10 + $0x3b8] sm:$0xff]
      %v1337 = vld [vmem:[%s10 + $0x3c0] sm:$0xff]
      %v1338 = vld [vmem:[%s10 + $0x3c8] sm:$0xff]
      %v1339 = vld [vmem:[%s10 + $0x3d0] sm:$0xff]
      %v1340 = vld [vmem:[%s10 + $0x3d8] sm:$0xff]
      %v1341 = vld [vmem:[%s10 + $0x3e0] sm:$0xff]
      %v1342 = vld [vmem:[%s10 + $0x3e8] sm:$0xff]
      %v1343 = vld [vmem:[%s10 + $0x3f0] sm:$0xff]
      %v1344 = vld [vmem:[%s10 + $0x3f8] sm:$0xff]
      %v1345 = vld [vmem:[%s11] sm:$0x1]
      %v1347 = vlaneseq
      %v1348 = vshrl.u32 %v1347, 7
      %v1349 = vsub.s32 0, %v1348
      %v1350 = vrot.slane %v1345, %v1349
      %1352 = vmatprep.subr.mxu0 0.0
      %1353 = vmatpush1.msra.mxu0 %v1232
      %1354 = vmatprep.subr.mxu0 0.0
      %1355 = vmatpush1.msra.mxu0 %v1231
      %1356 = vmatprep.subr.mxu0 0.0
      %1357 = vmatpush1.msra.mxu0 %v1230
      %1358 = vmatprep.subr.mxu0 0.0
      %1359 = vmatpush1.msra.mxu0 %v1229
      %1360 = vmatprep.subr.mxu0 0.0
      %1361 = vmatpush1.msra.mxu0 %v1228
      %1362 = vmatprep.subr.mxu0 0.0
      %1363 = vmatpush1.msra.mxu0 %v1227
      %1364 = vmatprep.subr.mxu0 0.0
      %1365 = vmatpush1.msra.mxu0 %v1226
      %1366 = vmatprep.subr.mxu0 0.0
      %1367 = vmatpush1.msra.mxu0 %v1225
      %1368 = vmatprep.subr.mxu0 0.0
      %1369 = vmatpush1.msra.mxu0 %v1224
      %1370 = vmatprep.subr.mxu0 0.0
      %1371 = vmatpush1.msra.mxu0 %v1223
      %1372 = vmatprep.subr.mxu0 0.0
      %1373 = vmatpush1.msra.mxu0 %v1222
      %1374 = vmatprep.subr.mxu0 0.0
      %1375 = vmatpush1.msra.mxu0 %v1221
      %1376 = vmatprep.subr.mxu0 0.0
      %1377 = vmatpush1.msra.mxu0 %v1220
      %1378 = vmatprep.subr.mxu0 0.0
      %1379 = vmatpush1.msra.mxu0 %v1219
      %1380 = vmatprep.subr.mxu0 0.0
      %1381 = vmatpush1.msra.mxu0 %v1218
      %1382 = vmatprep.subr.mxu0 0.0
      %1383 = vmatpush1.msra.mxu0 %v1217
      %1384 = vmatprep.subr.mxu0 0.0
      %1385 = vmatpush2.msra.mxu0 %v1248
      %1386 = vmatprep.subr.mxu0 0.0
      %1387 = vmatpush2.msra.mxu0 %v1247
      %1388 = vmatprep.subr.mxu0 0.0
      %1389 = vmatpush2.msra.mxu0 %v1246
      %1390 = vmatprep.subr.mxu0 0.0
      %1391 = vmatpush2.msra.mxu0 %v1245
      %1392 = vmatprep.subr.mxu0 0.0
      %1393 = vmatpush2.msra.mxu0 %v1244
      %1394 = vmatprep.subr.mxu0 0.0
      %1395 = vmatpush2.msra.mxu0 %v1243
      %1396 = vmatprep.subr.mxu0 0.0
      %1397 = vmatpush2.msra.mxu0 %v1242
      %1398 = vmatprep.subr.mxu0 0.0
      %1399 = vmatpush2.msra.mxu0 %v1241
      %1400 = vmatprep.subr.mxu0 0.0
      %1401 = vmatpush2.msra.mxu0 %v1240
      %1402 = vmatprep.subr.mxu0 0.0
      %1403 = vmatpush2.msra.mxu0 %v1239
      %1404 = vmatprep.subr.mxu0 0.0
      %1405 = vmatpush2.msra.mxu0 %v1238
      %1406 = vmatprep.subr.mxu0 0.0
      %1407 = vmatpush2.msra.mxu0 %v1237
      %1408 = vmatprep.subr.mxu0 0.0
      %1409 = vmatpush2.msra.mxu0 %v1236
      %1410 = vmatprep.subr.mxu0 0.0
      %1411 = vmatpush2.msra.mxu0 %v1235
      %1412 = vmatprep.subr.mxu0 0.0
      %1413 = vmatpush2.msra.mxu0 %v1234
      %1414 = vmatprep.subr.mxu0 0.0
      %1415 = vmatpush2.msra.mxu0 %v1233
      %1416 = vmatprep.mubr.f32.mxu0 %v1210
      %1417 = vmatmul.mubr.f32.gmra.mxu0 %v1209
      %v1418 = vpop.f32.mrf.mxu0
      %v1419 = vadd.f32 %v1350, %v1418
      %v1420 = vpop.f32.mrf.mxu0
      %1421 = vdwg.mxu0
      %1422 = vmatprep.subr.mxu0 0.0
      %1423 = vmatpush1.msra.mxu0 %v1264
      %1424 = vmatprep.subr.mxu0 0.0
      %1425 = vmatpush1.msra.mxu0 %v1263
      %1426 = vmatprep.subr.mxu0 0.0
      %1427 = vmatpush1.msra.mxu0 %v1262
      %1428 = vmatprep.subr.mxu0 0.0
      %1429 = vmatpush1.msra.mxu0 %v1261
      %1430 = vmatprep.subr.mxu0 0.0
      %1431 = vmatpush1.msra.mxu0 %v1260
      %1432 = vmatprep.subr.mxu0 0.0
      %1433 = vmatpush1.msra.mxu0 %v1259
      %1434 = vmatprep.subr.mxu0 0.0
      %1435 = vmatpush1.msra.mxu0 %v1258
      %1436 = vmatprep.subr.mxu0 0.0
      %1437 = vmatpush1.msra.mxu0 %v1257
      %1438 = vmatprep.subr.mxu0 0.0
      %1439 = vmatpush1.msra.mxu0 %v1256
      %1440 = vmatprep.subr.mxu0 0.0
      %1441 = vmatpush1.msra.mxu0 %v1255
      %1442 = vmatprep.subr.mxu0 0.0
      %1443 = vmatpush1.msra.mxu0 %v1254
      %1444 = vmatprep.subr.mxu0 0.0
      %1445 = vmatpush1.msra.mxu0 %v1253
      %1446 = vmatprep.subr.mxu0 0.0
      %1447 = vmatpush1.msra.mxu0 %v1252
      %1448 = vmatprep.subr.mxu0 0.0
      %1449 = vmatpush1.msra.mxu0 %v1251
      %1450 = vmatprep.subr.mxu0 0.0
      %1451 = vmatpush1.msra.mxu0 %v1250
      %1452 = vmatprep.subr.mxu0 0.0
      %1453 = vmatpush1.msra.mxu0 %v1249
      %1454 = vmatprep.subr.mxu0 0.0
      %1455 = vmatpush2.msra.mxu0 %v1280
      %1456 = vmatprep.subr.mxu0 0.0
      %1457 = vmatpush2.msra.mxu0 %v1279
      %1458 = vmatprep.subr.mxu0 0.0
      %1459 = vmatpush2.msra.mxu0 %v1278
      %1460 = vmatprep.subr.mxu0 0.0
      %1461 = vmatpush2.msra.mxu0 %v1277
      %1462 = vmatprep.subr.mxu0 0.0
      %1463 = vmatpush2.msra.mxu0 %v1276
      %1464 = vmatprep.subr.mxu0 0.0
      %1465 = vmatpush2.msra.mxu0 %v1275
      %1466 = vmatprep.subr.mxu0 0.0
      %1467 = vmatpush2.msra.mxu0 %v1274
      %1468 = vmatprep.subr.mxu0 0.0
      %1469 = vmatpush2.msra.mxu0 %v1273
      %1470 = vmatprep.subr.mxu0 0.0
      %1471 = vmatpush2.msra.mxu0 %v1272
      %1472 = vmatprep.subr.mxu0 0.0
      %1473 = vmatpush2.msra.mxu0 %v1271
      %1474 = vmatprep.subr.mxu0 0.0
      %1475 = vmatpush2.msra.mxu0 %v1270
      %1476 = vmatprep.subr.mxu0 0.0
      %1477 = vmatpush2.msra.mxu0 %v1269
      %1478 = vmatprep.subr.mxu0 0.0
      %1479 = vmatpush2.msra.mxu0 %v1268
      %1480 = vmatprep.subr.mxu0 0.0
      %1481 = vmatpush2.msra.mxu0 %v1267
      %1482 = vmatprep.subr.mxu0 0.0
      %1483 = vmatpush2.msra.mxu0 %v1266
      %1484 = vmatprep.subr.mxu0 0.0
      %1485 = vmatpush2.msra.mxu0 %v1265
      %1486 = vmatprep.mubr.f32.mxu0 %v1212
      %1487 = vmatmul.mubr.f32.gmra.mxu0 %v1211
      %v1488 = vpop.f32.mrf.mxu0
      %v1489 = vadd.f32 %v1419, %v1488
      %v1490 = vpop.f32.mrf.mxu0
      %1491 = vdwg.mxu0
      %1492 = vmatprep.subr.mxu0 0.0
      %1493 = vmatpush1.msra.mxu0 %v1296
      %1494 = vmatprep.subr.mxu0 0.0
      %1495 = vmatpush1.msra.mxu0 %v1295
      %1496 = vmatprep.subr.mxu0 0.0
      %1497 = vmatpush1.msra.mxu0 %v1294
      %1498 = vmatprep.subr.mxu0 0.0
      %1499 = vmatpush1.msra.mxu0 %v1293
      %1500 = vmatprep.subr.mxu0 0.0
      %1501 = vmatpush1.msra.mxu0 %v1292
      %1502 = vmatprep.subr.mxu0 0.0
      %1503 = vmatpush1.msra.mxu0 %v1291
      %1504 = vmatprep.subr.mxu0 0.0
      %1505 = vmatpush1.msra.mxu0 %v1290
      %1506 = vmatprep.subr.mxu0 0.0
      %1507 = vmatpush1.msra.mxu0 %v1289
      %1508 = vmatprep.subr.mxu0 0.0
      %1509 = vmatpush1.msra.mxu0 %v1288
      %1510 = vmatprep.subr.mxu0 0.0
      %1511 = vmatpush1.msra.mxu0 %v1287
      %1512 = vmatprep.subr.mxu0 0.0
      %1513 = vmatpush1.msra.mxu0 %v1286
      %1514 = vmatprep.subr.mxu0 0.0
      %1515 = vmatpush1.msra.mxu0 %v1285
      %1516 = vmatprep.subr.mxu0 0.0
      %1517 = vmatpush1.msra.mxu0 %v1284
      %1518 = vmatprep.subr.mxu0 0.0
      %1519 = vmatpush1.msra.mxu0 %v1283
      %1520 = vmatprep.subr.mxu0 0.0
      %1521 = vmatpush1.msra.mxu0 %v1282
      %1522 = vmatprep.subr.mxu0 0.0
      %1523 = vmatpush1.msra.mxu0 %v1281
      %1524 = vmatprep.subr.mxu0 0.0
      %1525 = vmatpush2.msra.mxu0 %v1312
      %1526 = vmatprep.subr.mxu0 0.0
      %1527 = vmatpush2.msra.mxu0 %v1311
      %1528 = vmatprep.subr.mxu0 0.0
      %1529 = vmatpush2.msra.mxu0 %v1310
      %1530 = vmatprep.subr.mxu0 0.0
      %1531 = vmatpush2.msra.mxu0 %v1309
      %1532 = vmatprep.subr.mxu0 0.0
      %1533 = vmatpush2.msra.mxu0 %v1308
      %1534 = vmatprep.subr.mxu0 0.0
      %1535 = vmatpush2.msra.mxu0 %v1307
      %1536 = vmatprep.subr.mxu0 0.0
      %1537 = vmatpush2.msra.mxu0 %v1306
      %1538 = vmatprep.subr.mxu0 0.0
      %1539 = vmatpush2.msra.mxu0 %v1305
      %1540 = vmatprep.subr.mxu0 0.0
      %1541 = vmatpush2.msra.mxu0 %v1304
      %1542 = vmatprep.subr.mxu0 0.0
      %1543 = vmatpush2.msra.mxu0 %v1303
      %1544 = vmatprep.subr.mxu0 0.0
      %1545 = vmatpush2.msra.mxu0 %v1302
      %1546 = vmatprep.subr.mxu0 0.0
      %1547 = vmatpush2.msra.mxu0 %v1301
      %1548 = vmatprep.subr.mxu0 0.0
      %1549 = vmatpush2.msra.mxu0 %v1300
      %1550 = vmatprep.subr.mxu0 0.0
      %1551 = vmatpush2.msra.mxu0 %v1299
      %1552 = vmatprep.subr.mxu0 0.0
      %1553 = vmatpush2.msra.mxu0 %v1298
      %1554 = vmatprep.subr.mxu0 0.0
      %1555 = vmatpush2.msra.mxu0 %v1297
      %1556 = vmatprep.mubr.f32.mxu0 %v1214
      %1557 = vmatmul.mubr.f32.gmra.mxu0 %v1213
      %v1558 = vpop.f32.mrf.mxu0
      %v1559 = vadd.f32 %v1489, %v1558
      %v1560 = vpop.f32.mrf.mxu0
      %1561 = vdwg.mxu0
      %1562 = vmatprep.subr.mxu0 0.0
      %1563 = vmatpush1.msra.mxu0 %v1328
      %1564 = vmatprep.subr.mxu0 0.0
      %1565 = vmatpush1.msra.mxu0 %v1327
      %1566 = vmatprep.subr.mxu0 0.0
      %1567 = vmatpush1.msra.mxu0 %v1326
      %1568 = vmatprep.subr.mxu0 0.0
      %1569 = vmatpush1.msra.mxu0 %v1325
      %1570 = vmatprep.subr.mxu0 0.0
      %1571 = vmatpush1.msra.mxu0 %v1324
      %1572 = vmatprep.subr.mxu0 0.0
      %1573 = vmatpush1.msra.mxu0 %v1323
      %1574 = vmatprep.subr.mxu0 0.0
      %1575 = vmatpush1.msra.mxu0 %v1322
      %1576 = vmatprep.subr.mxu0 0.0
      %1577 = vmatpush1.msra.mxu0 %v1321
      %1578 = vmatprep.subr.mxu0 0.0
      %1579 = vmatpush1.msra.mxu0 %v1320
      %1580 = vmatprep.subr.mxu0 0.0
      %1581 = vmatpush1.msra.mxu0 %v1319
      %1582 = vmatprep.subr.mxu0 0.0
      %1583 = vmatpush1.msra.mxu0 %v1318
      %1584 = vmatprep.subr.mxu0 0.0
      %1585 = vmatpush1.msra.mxu0 %v1317
      %1586 = vmatprep.subr.mxu0 0.0
      %1587 = vmatpush1.msra.mxu0 %v1316
      %1588 = vmatprep.subr.mxu0 0.0
      %1589 = vmatpush1.msra.mxu0 %v1315
      %1590 = vmatprep.subr.mxu0 0.0
      %1591 = vmatpush1.msra.mxu0 %v1314
      %1592 = vmatprep.subr.mxu0 0.0
      %1593 = vmatpush1.msra.mxu0 %v1313
      %1594 = vmatprep.subr.mxu0 0.0
      %1595 = vmatpush2.msra.mxu0 %v1344
      %1596 = vmatprep.subr.mxu0 0.0
      %1597 = vmatpush2.msra.mxu0 %v1343
      %1598 = vmatprep.subr.mxu0 0.0
      %1599 = vmatpush2.msra.mxu0 %v1342
      %1600 = vmatprep.subr.mxu0 0.0
      %1601 = vmatpush2.msra.mxu0 %v1341
      %1602 = vmatprep.subr.mxu0 0.0
      %1603 = vmatpush2.msra.mxu0 %v1340
      %1604 = vmatprep.subr.mxu0 0.0
      %1605 = vmatpush2.msra.mxu0 %v1339
      %1606 = vmatprep.subr.mxu0 0.0
      %1607 = vmatpush2.msra.mxu0 %v1338
      %1608 = vmatprep.subr.mxu0 0.0
      %1609 = vmatpush2.msra.mxu0 %v1337
      %1610 = vmatprep.subr.mxu0 0.0
      %1611 = vmatpush2.msra.mxu0 %v1336
      %1612 = vmatprep.subr.mxu0 0.0
      %1613 = vmatpush2.msra.mxu0 %v1335
      %1614 = vmatprep.subr.mxu0 0.0
      %1615 = vmatpush2.msra.mxu0 %v1334
      %1616 = vmatprep.subr.mxu0 0.0
      %1617 = vmatpush2.msra.mxu0 %v1333
      %1618 = vmatprep.subr.mxu0 0.0
      %1619 = vmatpush2.msra.mxu0 %v1332
      %1620 = vmatprep.subr.mxu0 0.0
      %1621 = vmatpush2.msra.mxu0 %v1331
      %1622 = vmatprep.subr.mxu0 0.0
      %1623 = vmatpush2.msra.mxu0 %v1330
      %1624 = vmatprep.subr.mxu0 0.0
      %1625 = vmatpush2.msra.mxu0 %v1329
      %1626 = vmatprep.mubr.f32.mxu0 %v1216
      %1627 = vmatmul.mubr.f32.gmra.mxu0 %v1215
      %v1628 = vpop.f32.mrf.mxu0
      %v1629 = vadd.f32 %v1559, %v1628
      %v1630 = vpop.f32.mrf.mxu0
      %1631 = vdwg.mxu0
      %vm1632 = vcmask 392192
      %1633 = vst.msk [vmem:[%s500] sm:$0xff] %vm1632, %v1629
      %p1634 = scmp.lt.s32.totalorder %s26, 1
      %s1635 = scalar_select %p1634, %s26, 1
      %s1636 = smul.addr %s1635, 8
      %s1637 = scalar_lea.vmem %s12, %s1636
      %p1638 = scmp.lt.s32.totalorder %s26, 1
      %s1639 = scalar_select %p1638, %s26, 1
      %s1640 = smul.addr %s1639, 8
      %s1641 = scalar_lea.vmem %s13, %s1640
      %p1642 = scmp.lt.s32.totalorder %s26, 1
      %s1643 = scalar_select %p1642, %s26, 1
      %s1644 = smul.addr %s1643, 8
      %s1645 = scalar_lea.vmem %s14, %s1644
      // Predicated region
      $region69: #{_lambda_.9} parent=67 // pred_check
        %p1646 = pneg %p306
      $region70: #{_lambda_.9} parent=67 // pred_check_branch
        %1648 = sbr.rel (%p1646) target = $region72
      $region71: #{_lambda_.9} parent=67 // pred_region
        _
      $region72: #{_lambda_.9} parent=67 // pred_fallthru
        _
      // Predicated region
      $region73: #{_lambda_.9} parent=67 // pred_check
        %p1649 = pneg %p332
      $region74: #{_lambda_.9} parent=67 // pred_check_branch
        %1651 = sbr.rel (%p1649) target = $region76
      $region75: #{_lambda_.9} parent=67 // pred_region
        _
      $region76: #{_lambda_.9} parent=67 // pred_fallthru
        _
      // Predicated region
      $region77: #{_lambda_.9} parent=67 // pred_check
        %p1652 = pneg %p358
      $region78: #{_lambda_.9} parent=67 // pred_check_branch
        %1654 = sbr.rel (%p1652) target = $region80
      $region79: #{_lambda_.9} parent=67 // pred_region
        _
      $region80: #{_lambda_.9} parent=67 // pred_fallthru
        _
    $region68: #{_lambda_.9} parent=5 // pred_fallthru
      _
    %p1655 = scmp.le.s32.totalorder 2, %s21
    // Predicated region
    $region81: #{_lambda_.9} parent=5 // pred_check
      %p1656 = pneg %p1655
    $region82: #{_lambda_.9} parent=5 // pred_check_branch
      %1658 = sbr.rel (%p1656) target = $region84
    $region83: #{_lambda_.9} parent=5 // pred_region
      %s1659 = ssub.s32 %s21, 2
      // Predicated region
      $region85: #{_lambda_.9} parent=83 // pred_check
        %p1660 = pneg %p312
      $region86: #{_lambda_.9} parent=83 // pred_check_branch
        %1662 = sbr.rel (%p1660) target = $region88
      $region87: #{_lambda_.9} parent=83 // pred_region
        %p1663 = scmp.lt.s32.totalorder %s27, 1
        %s1664 = scalar_select %p1663, %s27, 1
        %s1665 = smul.addr %s1664, 8
        %s1666 = scalar_lea.vmem %s12, %s1665
      $region88: #{_lambda_.9} parent=83 // pred_fallthru
        _
      // Predicated region
      $region89: #{_lambda_.9} parent=83 // pred_check
        %p1667 = pneg %p338
      $region90: #{_lambda_.9} parent=83 // pred_check_branch
        %1669 = sbr.rel (%p1667) target = $region92
      $region91: #{_lambda_.9} parent=83 // pred_region
        %p1670 = scmp.lt.s32.totalorder %s27, 1
        %s1671 = scalar_select %p1670, %s27, 1
        %s1672 = smul.addr %s1671, 8
        %s1673 = scalar_lea.vmem %s13, %s1672
      $region92: #{_lambda_.9} parent=83 // pred_fallthru
        _
      // Predicated region
      $region93: #{_lambda_.9} parent=83 // pred_check
        %p1674 = pneg %p364
      $region94: #{_lambda_.9} parent=83 // pred_check_branch
        %1676 = sbr.rel (%p1674) target = $region96
      $region95: #{_lambda_.9} parent=83 // pred_region
        %p1677 = scmp.lt.s32.totalorder %s27, 1
        %s1678 = scalar_select %p1677, %s27, 1
        %s1679 = smul.addr %s1678, 8
        %s1680 = scalar_lea.vmem %s14, %s1679
      $region96: #{_lambda_.9} parent=83 // pred_fallthru
        _
    $region84: #{_lambda_.9} parent=5 // pred_fallthru
      _
  $region6: #{_lambda_.9} parent=0 // loop_footer
    %s25 = sadd.s32 1, %s21
  $region7: #{_lambda_.9} parent=0 // loop_footer_branch
    %20 = sbr.rel target = $region3
  $region8: #{_lambda_.9} parent=0 // loop_exit
    _

</llo_original>
